<compile_context>
chip_gen: v6e
topology: v6e:2x2x1
jax: 0.10.0
libtpu: 0.0.40
codegen_flags: <defaults>
</compile_context>

<pallas_src>
import functools
import math

import jax
import jax.numpy as jnp
from jax.experimental import pallas as pl
from jax.experimental.pallas import tpu as pltpu


# ---------------------------------------------------------------------------
# Fused multi-layer kernel: grid = (N // Bn,), layers + GS folded into the body.
# ---------------------------------------------------------------------------
def _fused_graph_mat_res_kernel(x_ref, g_ref, win_ref, bin_ref, wres_ref,
                                bres_ref, wout_ref, bout_ref, o_ref,
                                *, n_layers, gs, depth, m, resnet):
    rows, _ = x_ref.shape                  # rows = Bn * M (wrapper-side flattened)
    bn = rows // m
    p = o_ref.shape[-1]

    # All GS graph channels of this batch block, already bf16 from HBM.
    # Merge (Bn, GS) into one batch dim (leading-dim reshape: free).
    g2 = g_ref[...].reshape(bn * gs, m, m)                       # (Bn*GS, M, M) bf16

    x2d = x_ref[...].astype(jnp.float32)                         # (rows, C) f32 activation
    inv_gs = 1.0 / gs

    for l in range(n_layers):              # layers fused: activation stays VMEM-resident
        c_l = x2d.shape[-1]
        xb = x2d.astype(jnp.bfloat16)      # bf16 only at MXU inputs
        ys = []
        for g in range(gs):                # GS is small -> static unroll
            w = l * gs + g                 # weights stacked as (L*GS, ...)
            # ---- per-node ResNet MLP over all Bn*M rows (bf16 MXU, f32 accumulate) ----
            h = jnp.dot(xb, win_ref[w], preferred_element_type=jnp.float32) + bin_ref[w]
            # TODO(synk): switch to lax.fori_loop(..., unroll=True) if depth/H grow large
            # (live-range bounding); depth is tiny here so the static unroll is fine.
            for d in range(depth):
                z = jnp.dot(h.astype(jnp.bfloat16), wres_ref[w, d],
                            preferred_element_type=jnp.float32) + bres_ref[w, d]
                h = h + jnp.maximum(z, 0.0)                      # residual block (f32 VPU)
            y = jnp.dot(h.astype(jnp.bfloat16), wout_ref[w],
                        preferred_element_type=jnp.float32) + bout_ref[w]   # (rows, P)
            ys.append(y.astype(jnp.bfloat16).reshape(bn, m, p))

        # ---- graph propagation, batched over all (Bn, GS) pairs in one einsum ----
        y2 = jnp.stack(ys, axis=1).reshape(bn * gs, m, p)        # (Bn*GS, M, P) bf16
        prop = jnp.einsum('kij,kjp->kip', g2, y2,
                          preferred_element_type=jnp.float32)    # (Bn*GS, M, P) f32
        prop = jnp.maximum(prop, 0.0)                            # ReLU BEFORE aggregation
        agg = prop.reshape(bn, gs, m, p).sum(axis=1) * inv_gs    # mean over GS -> (Bn,M,P)

        out2d = agg.reshape(rows, p)
        if resnet and c_l == p:            # GraphMatResLayers skip (shapes match)
            out2d = out2d + x2d
        x2d = out2d

    o_ref[...] = x2d.astype(o_ref.dtype)


# ---------------------------------------------------------------------------
# Sizing helpers
# ---------------------------------------------------------------------------
def _vmem_limit_bytes():
    """~75% of physical VMEM: ~96 MiB on 128 MiB v5e/v6e parts, ~48 MiB on 64 MiB v7x."""
    try:
        cap = int(pltpu.get_tpu_info().vmem_capacity_bytes)
    except Exception:
        cap = 128 * 1024 * 1024
    return int(min(cap * 3 // 4, 100 * 1024 * 1024))


def _pick_batch_block(N, M, C, P, GS, H, L, depth, vmem_limit, row_target=512):
    """Pick Bn (batches per grid step).

    Targets >= `row_target` MXU rows per step (fills the 256-wide MXU on v6e/v7x and
    amortizes the ~0.35us per-step overhead), bounded by the VMEM budget; keeps >=2
    (and preferably an even number of) grid steps for v7x's two TensorCores when that
    doesn't shrink the block below ~256 rows.  On single-TC v5e/v6e a single large
    step is allowed.
    """
    weight_bytes = 2 * L * GS * ((C * H + depth * H * H + H * P) * 2
                                 + (H + depth * H + P) * 4)
    per_batch = (2 * (M * C * 4 + GS * M * M * 2 + M * P * 4)      # double-buffered IO
                 + 4 * M * (3 * H + 3 * GS * P + C))               # live values (h, y, prop)
    budget = int(vmem_limit * 0.8) - weight_bytes
    cap = max(1, budget // max(per_batch, 1))

    divisors = [d for d in range(1, N + 1) if N % d == 0 and d <= cap]
    if not divisors:
        divisors = [1]

    bn = divisors[-1]                       # largest block that fits VMEM
    for d in divisors:
        if d * M >= row_target:
            bn = d                          # smallest block that reaches the row target
            break

    # v7x (2 TCs): prefer >=2 grid steps if each step still gets >=256 MXU rows.
    if N // bn < 2 and N % 2 == 0 and (N // 2) in divisors and (N // 2) * M >= 256:
        bn = N // 2
    # Prefer an even step count so both TCs get balanced work.
    if (N // bn) % 2 == 1 and N // bn > 1:
        for d in reversed(divisors):
            if d <= bn and (N // d) % 2 == 0 and d * M >= 256:
                bn = d
                break
    return bn


# ---------------------------------------------------------------------------
# Wrapper: one fused pallas_call per run of layers with identical param shapes.
# ---------------------------------------------------------------------------
def _graph_mat_res_block(G_bf16, x, stacked, *, resnet, batch_block=None):
    win, b_in, wres, bres, wout, bout = stacked
    N, M, C = x.shape
    GS = G_bf16.shape[1]
    L = win.shape[0] // GS
    H = win.shape[-1]
    depth = wres.shape[1]
    P = wout.shape[-1]

    vmem_limit = _vmem_limit_bytes()
    Bn = batch_block if batch_block is not None else _pick_batch_block(
        N, M, C, P, GS, H, L, depth, vmem_limit)
    assert N % Bn == 0, "batch block must divide N"
    rows_blk = Bn * M

    # Wrapper-side flatten: kernel x/out blocks are tile-aligned row slabs, no in-kernel
    # relayout of the MLP input.
    x2d = x.reshape(N * M, C)

    kernel = functools.partial(
        _fused_graph_mat_res_kernel,
        n_layers=L, gs=GS, depth=depth, m=M, resnet=bool(resnet))

    flops = (2 * N * M * GS * L * (C * H + depth * H * H + H * P)
             + 2 * N * GS * L * M * M * P)
    bytes_accessed = (x2d.size * x2d.dtype.itemsize
                      + G_bf16.size * G_bf16.dtype.itemsize
                      + N * M * P * x.dtype.itemsize
                      + sum(int(w.size) * w.dtype.itemsize for w in stacked))
    cost = pl.CostEstimate(flops=int(flops), transcendentals=0,
                           bytes_accessed=int(bytes_accessed))

    def build(single_buffer_weights):
        def wspec(shape):
            idx = lambda nb, _n=len(shape): (0,) * _n     # constant block index
            if single_buffer_weights:
                # block index never changes across the grid -> one buffer is enough
                return pl.BlockSpec(shape, idx, pipeline_mode=pl.Buffered(1))
            return pl.BlockSpec(shape, idx)

        grid_spec = pltpu.PrefetchScalarGridSpec(
            num_scalar_prefetch=0,
            grid=(N // Bn,),
            in_specs=[
                pl.BlockSpec((rows_blk, C), lambda nb: (nb, 0)),            # x rows
                pl.BlockSpec((Bn, GS, M, M), lambda nb: (nb, 0, 0, 0)),     # G (bf16)
                wspec(win.shape),   # W_in  (L*GS, C, H)  bf16
                wspec(b_in.shape),  # b_in  (L*GS, 1, H)  f32
                wspec(wres.shape),  # W_res (L*GS, depth, H, H) bf16
                wspec(bres.shape),  # b_res (L*GS, depth, 1, H) f32
                wspec(wout.shape),  # W_out (L*GS, H, P)  bf16
                wspec(bout.shape),  # b_out (L*GS, 1, P)  f32
            ],
            out_specs=pl.BlockSpec((rows_blk, P), lambda nb: (nb, 0)),
        )
        return pl.pallas_call(
            kernel,
            out_shape=jax.ShapeDtypeStruct((N * M, P), x.dtype),
            grid_spec=grid_spec,
            compiler_params=pltpu.CompilerParams(
                dimension_semantics=("parallel",),       # batch blocks -> 2 TCs on v7x
                vmem_limit_bytes=vmem_limit),
            cost_estimate=cost,
        )

    args = (x2d, G_bf16, win, b_in, wres, bres, wout, bout)
    try:
        out2d = build(True)(*args)       # single-buffered weights (preferred)
    except Exception:
        out2d = build(False)(*args)      # fallback: default double-buffering
    return out2d.reshape(N, M, P)


def _stack_params(group):
    """Concatenate per-layer params along the existing GS axis -> leading dim L*GS."""
    return tuple(jnp.concatenate([layer[i] for layer in group], axis=0)
                 for i in range(6))


def graph_mat_res_layers(G, x, all_params, resnet=True):
    """GraphMatResLayers.forward: fused chain of GraphMatResLayer.

    Consecutive layers with identical parameter shapes are fused into a single
    pallas_call (G read once, inter-layer activations never leave VMEM).
    """
    # Halve the dominant HBM traffic once for the whole stack (review item).
    G_bf16 = G.astype(jnp.bfloat16)
    i, n = 0, len(all_params)
    while i < n:
        sig = tuple(p.shape for p in all_params[i])
        j = i + 1
        while j < n and tuple(p.shape for p in all_params[j]) == sig:
            j += 1
        stacked = _stack_params(all_params[i:j])
        x = _graph_mat_res_block(G_bf16, x, stacked, resnet=resnet)
        i = j
    return x


# ---------------------------------------------------------------------------
# Parameter init (deterministic, synthetic)
# ---------------------------------------------------------------------------
def init_layer_params(key, C, P, GS, depth, H):
    """Weights stored bf16 (MXU-native, half the DMA); biases kept f32 (VPU math)."""
    ks = jax.random.split(key, 3)
    s_in = 1.0 / math.sqrt(C)
    s_h = 1.0 / math.sqrt(H)
    win = (jax.random.normal(ks[0], (GS, C, H), jnp.float32) * s_in).astype(jnp.bfloat16)
    b_in = jnp.zeros((GS, 1, H), jnp.float32)
    wres = (jax.random.normal(ks[1], (GS, depth, H, H), jnp.float32) * s_h).astype(jnp.bfloat16)
    bres = jnp.zeros((GS, depth, 1, H), jnp.float32)
    wout = (jax.random.normal(ks[2], (GS, H, P), jnp.float32) * s_h).astype(jnp.bfloat16)
    bout = jnp.zeros((GS, 1, P), jnp.float32)
    return (win, b_in, wres, bres, wout, bout)


# ---------------------------------------------------------------------------
if __name__ == "__main__":
    # Small, module-consistent shapes (g_res_int_d=128 is the module default, lane-dense).
    N, M = 8, 8                   # batch, nodes
    GS = 2                        # graph channels
    input_feature_n = 16
    output_features_n = [16, 16]  # two GraphMatResLayer stages (fused into one kernel)
    g_res_depth = 2
    g_res_int_d = 128

    key = jax.random.PRNGKey(0)
    kx, kg, kp = jax.random.split(key, 3)

    x = jax.random.normal(kx, (N, M, input_feature_n), jnp.float32)
    G = jax.random.normal(kg, (N, GS, M, M), jnp.float32)

    all_params = []
    C = input_feature_n
    for P in output_features_n:
        kp, sub = jax.random.split(kp)
        all_params.append(init_layer_params(sub, C, P, GS, g_res_depth, g_res_int_d))
        C = P

    out = graph_mat_res_layers(G, x, all_params, resnet=True)
    out = jax.block_until_ready(out)
    assert out.shape == (N, M, output_features_n[-1])
    assert bool(jnp.all(jnp.isfinite(out)))
    print("KERNEL_OK")
</pallas_src>

<mosaic_0001>
module attributes {stable_mosaic.version = 11 : i64} {
  func.func @_fused_graph_mat_res_kernel(%arg0: i32, %arg1: memref<64x16xf32, #tpu.memory_space<vmem>>, %arg2: memref<8x2x8x8xbf16, #tpu.memory_space<vmem>>, %arg3: memref<4x16x128xbf16, #tpu.memory_space<vmem>>, %arg4: memref<4x1x128xf32, #tpu.memory_space<vmem>>, %arg5: memref<4x2x128x128xbf16, #tpu.memory_space<vmem>>, %arg6: memref<4x2x1x128xf32, #tpu.memory_space<vmem>>, %arg7: memref<4x128x16xbf16, #tpu.memory_space<vmem>>, %arg8: memref<4x1x16xf32, #tpu.memory_space<vmem>>, %arg9: memref<64x16xf32, #tpu.memory_space<vmem>>) attributes {dimension_semantics = [#tpu.dimension_semantics<parallel>], iteration_bounds = array<i64: 1>, scalar_prefetch = 0 : i64, scratch_operands = 0 : i64, tpu.core_type = #tpu.core_type<tc>, window_params = [{transform_indices = @transform_0, window_bounds = array<i64: 64, 16>}, {transform_indices = @transform_1, window_bounds = array<i64: 8, 2, 8, 8>}, {pipeline_mode = #tpu.pipeline_mode<synchronous>, transform_indices = @transform_2, window_bounds = array<i64: 4, 16, 128>}, {pipeline_mode = #tpu.pipeline_mode<synchronous>, transform_indices = @transform_3, window_bounds = array<i64: 4, 1, 128>}, {pipeline_mode = #tpu.pipeline_mode<synchronous>, transform_indices = @transform_4, window_bounds = array<i64: 4, 2, 128, 128>}, {pipeline_mode = #tpu.pipeline_mode<synchronous>, transform_indices = @transform_5, window_bounds = array<i64: 4, 2, 1, 128>}, {pipeline_mode = #tpu.pipeline_mode<synchronous>, transform_indices = @transform_6, window_bounds = array<i64: 4, 128, 16>}, {pipeline_mode = #tpu.pipeline_mode<synchronous>, transform_indices = @transform_7, window_bounds = array<i64: 4, 1, 16>}, {transform_indices = @transform_8, window_bounds = array<i64: 64, 16>}]} {
    %c0 = arith.constant 0 : index
    %c0_0 = arith.constant 0 : index
    %c0_1 = arith.constant 0 : index
    %c0_2 = arith.constant 0 : index
    %0 = vector.load %arg2[%c0, %c0_0, %c0_1, %c0_2] : memref<8x2x8x8xbf16, #tpu.memory_space<vmem>>, vector<8x2x8x8xbf16>
    %1 = vector.shape_cast %0 : vector<8x2x8x8xbf16> to vector<16x8x8xbf16>
    %c0_3 = arith.constant 0 : index
    %c0_4 = arith.constant 0 : index
    %2 = vector.load %arg1[%c0_3, %c0_4] : memref<64x16xf32, #tpu.memory_space<vmem>>, vector<64x16xf32>
    %3 = arith.truncf %2 : vector<64x16xf32> to vector<64x16xbf16>
    %c0_5 = arith.constant 0 : index
    %c0_6 = arith.constant 0 : index
    %c0_7 = arith.constant 0 : index
    %4 = vector.load %arg3[%c0_5, %c0_6, %c0_7] : memref<4x16x128xbf16, #tpu.memory_space<vmem>>, vector<1x16x128xbf16>
    %5 = vector.shape_cast %4 : vector<1x16x128xbf16> to vector<16x128xbf16>
    %cst = arith.constant dense<0.000000e+00> : vector<64x128xf32>
    %6 = tpu.matmul %3, %5, %cst {dimension_numbers = #tpu.dot_dimension_numbers<[1], [0], [0], [1], [0, 0, 1, 1], [], []>} : vector<64x16xbf16>, vector<16x128xbf16>, vector<64x128xf32> -> vector<64x128xf32>
    %c0_8 = arith.constant 0 : index
    %c0_9 = arith.constant 0 : index
    %c0_10 = arith.constant 0 : index
    %7 = vector.load %arg4[%c0_8, %c0_9, %c0_10] : memref<4x1x128xf32, #tpu.memory_space<vmem>>, vector<1x1x128xf32>
    %8 = vector.shape_cast %7 : vector<1x1x128xf32> to vector<1x128xf32>
    %9 = vector.broadcast %8 : vector<1x128xf32> to vector<64x128xf32>
    %10 = arith.addf %6, %9 : vector<64x128xf32>
    %11 = arith.truncf %10 : vector<64x128xf32> to vector<64x128xbf16>
    %c0_11 = arith.constant 0 : index
    %c0_12 = arith.constant 0 : index
    %c0_13 = arith.constant 0 : index
    %c0_14 = arith.constant 0 : index
    %12 = vector.load %arg5[%c0_11, %c0_12, %c0_13, %c0_14] : memref<4x2x128x128xbf16, #tpu.memory_space<vmem>>, vector<1x1x128x128xbf16>
    %13 = vector.shape_cast %12 : vector<1x1x128x128xbf16> to vector<128x128xbf16>
    %cst_15 = arith.constant dense<0.000000e+00> : vector<64x128xf32>
    %14 = tpu.matmul %11, %13, %cst_15 {dimension_numbers = #tpu.dot_dimension_numbers<[1], [0], [0], [1], [0, 0, 1, 1], [], []>} : vector<64x128xbf16>, vector<128x128xbf16>, vector<64x128xf32> -> vector<64x128xf32>
    %c0_16 = arith.constant 0 : index
    %c0_17 = arith.constant 0 : index
    %c0_18 = arith.constant 0 : index
    %c0_19 = arith.constant 0 : index
    %15 = vector.load %arg6[%c0_16, %c0_17, %c0_18, %c0_19] : memref<4x2x1x128xf32, #tpu.memory_space<vmem>>, vector<1x1x1x128xf32>
    %16 = vector.shape_cast %15 : vector<1x1x1x128xf32> to vector<1x128xf32>
    %17 = vector.broadcast %16 : vector<1x128xf32> to vector<64x128xf32>
    %18 = arith.addf %14, %17 : vector<64x128xf32>
    %cst_20 = arith.constant 0.000000e+00 : f32
    %19 = vector.broadcast %cst_20 : f32 to vector<64x128xf32>
    %20 = arith.maximumf %18, %19 : vector<64x128xf32>
    %21 = arith.addf %10, %20 : vector<64x128xf32>
    %22 = arith.truncf %21 : vector<64x128xf32> to vector<64x128xbf16>
    %c0_21 = arith.constant 0 : index
    %c1 = arith.constant 1 : index
    %c0_22 = arith.constant 0 : index
    %c0_23 = arith.constant 0 : index
    %23 = vector.load %arg5[%c0_21, %c1, %c0_22, %c0_23] : memref<4x2x128x128xbf16, #tpu.memory_space<vmem>>, vector<1x1x128x128xbf16>
    %24 = vector.shape_cast %23 : vector<1x1x128x128xbf16> to vector<128x128xbf16>
    %cst_24 = arith.constant dense<0.000000e+00> : vector<64x128xf32>
    %25 = tpu.matmul %22, %24, %cst_24 {dimension_numbers = #tpu.dot_dimension_numbers<[1], [0], [0], [1], [0, 0, 1, 1], [], []>} : vector<64x128xbf16>, vector<128x128xbf16>, vector<64x128xf32> -> vector<64x128xf32>
    %c0_25 = arith.constant 0 : index
    %c1_26 = arith.constant 1 : index
    %c0_27 = arith.constant 0 : index
    %c0_28 = arith.constant 0 : index
    %26 = vector.load %arg6[%c0_25, %c1_26, %c0_27, %c0_28] : memref<4x2x1x128xf32, #tpu.memory_space<vmem>>, vector<1x1x1x128xf32>
    %27 = vector.shape_cast %26 : vector<1x1x1x128xf32> to vector<1x128xf32>
    %28 = vector.broadcast %27 : vector<1x128xf32> to vector<64x128xf32>
    %29 = arith.addf %25, %28 : vector<64x128xf32>
    %cst_29 = arith.constant 0.000000e+00 : f32
    %30 = vector.broadcast %cst_29 : f32 to vector<64x128xf32>
    %31 = arith.maximumf %29, %30 : vector<64x128xf32>
    %32 = arith.addf %21, %31 : vector<64x128xf32>
    %33 = arith.truncf %32 : vector<64x128xf32> to vector<64x128xbf16>
    %c0_30 = arith.constant 0 : index
    %c0_31 = arith.constant 0 : index
    %c0_32 = arith.constant 0 : index
    %34 = vector.load %arg7[%c0_30, %c0_31, %c0_32] : memref<4x128x16xbf16, #tpu.memory_space<vmem>>, vector<1x128x16xbf16>
    %35 = vector.shape_cast %34 : vector<1x128x16xbf16> to vector<128x16xbf16>
    %cst_33 = arith.constant dense<0.000000e+00> : vector<64x16xf32>
    %36 = tpu.matmul %33, %35, %cst_33 {dimension_numbers = #tpu.dot_dimension_numbers<[1], [0], [0], [1], [0, 0, 1, 1], [], []>} : vector<64x128xbf16>, vector<128x16xbf16>, vector<64x16xf32> -> vector<64x16xf32>
    %c0_34 = arith.constant 0 : index
    %c0_35 = arith.constant 0 : index
    %c0_36 = arith.constant 0 : index
    %37 = vector.load %arg8[%c0_34, %c0_35, %c0_36] : memref<4x1x16xf32, #tpu.memory_space<vmem>>, vector<1x1x16xf32>
    %38 = vector.shape_cast %37 : vector<1x1x16xf32> to vector<1x16xf32>
    %39 = vector.broadcast %38 : vector<1x16xf32> to vector<64x16xf32>
    %40 = arith.addf %36, %39 : vector<64x16xf32>
    %41 = arith.truncf %40 : vector<64x16xf32> to vector<64x16xbf16>
    %42 = vector.shape_cast %41 : vector<64x16xbf16> to vector<8x8x16xbf16>
    %c1_37 = arith.constant 1 : index
    %c0_38 = arith.constant 0 : index
    %c0_39 = arith.constant 0 : index
    %43 = vector.load %arg3[%c1_37, %c0_38, %c0_39] : memref<4x16x128xbf16, #tpu.memory_space<vmem>>, vector<1x16x128xbf16>
    %44 = vector.shape_cast %43 : vector<1x16x128xbf16> to vector<16x128xbf16>
    %cst_40 = arith.constant dense<0.000000e+00> : vector<64x128xf32>
    %45 = tpu.matmul %3, %44, %cst_40 {dimension_numbers = #tpu.dot_dimension_numbers<[1], [0], [0], [1], [0, 0, 1, 1], [], []>} : vector<64x16xbf16>, vector<16x128xbf16>, vector<64x128xf32> -> vector<64x128xf32>
    %c1_41 = arith.constant 1 : index
    %c0_42 = arith.constant 0 : index
    %c0_43 = arith.constant 0 : index
    %46 = vector.load %arg4[%c1_41, %c0_42, %c0_43] : memref<4x1x128xf32, #tpu.memory_space<vmem>>, vector<1x1x128xf32>
    %47 = vector.shape_cast %46 : vector<1x1x128xf32> to vector<1x128xf32>
    %48 = vector.broadcast %47 : vector<1x128xf32> to vector<64x128xf32>
    %49 = arith.addf %45, %48 : vector<64x128xf32>
    %50 = arith.truncf %49 : vector<64x128xf32> to vector<64x128xbf16>
    %c1_44 = arith.constant 1 : index
    %c0_45 = arith.constant 0 : index
    %c0_46 = arith.constant 0 : index
    %c0_47 = arith.constant 0 : index
    %51 = vector.load %arg5[%c1_44, %c0_45, %c0_46, %c0_47] : memref<4x2x128x128xbf16, #tpu.memory_space<vmem>>, vector<1x1x128x128xbf16>
    %52 = vector.shape_cast %51 : vector<1x1x128x128xbf16> to vector<128x128xbf16>
    %cst_48 = arith.constant dense<0.000000e+00> : vector<64x128xf32>
    %53 = tpu.matmul %50, %52, %cst_48 {dimension_numbers = #tpu.dot_dimension_numbers<[1], [0], [0], [1], [0, 0, 1, 1], [], []>} : vector<64x128xbf16>, vector<128x128xbf16>, vector<64x128xf32> -> vector<64x128xf32>
    %c1_49 = arith.constant 1 : index
    %c0_50 = arith.constant 0 : index
    %c0_51 = arith.constant 0 : index
    %c0_52 = arith.constant 0 : index
    %54 = vector.load %arg6[%c1_49, %c0_50, %c0_51, %c0_52] : memref<4x2x1x128xf32, #tpu.memory_space<vmem>>, vector<1x1x1x128xf32>
    %55 = vector.shape_cast %54 : vector<1x1x1x128xf32> to vector<1x128xf32>
    %56 = vector.broadcast %55 : vector<1x128xf32> to vector<64x128xf32>
    %57 = arith.addf %53, %56 : vector<64x128xf32>
    %cst_53 = arith.constant 0.000000e+00 : f32
    %58 = vector.broadcast %cst_53 : f32 to vector<64x128xf32>
    %59 = arith.maximumf %57, %58 : vector<64x128xf32>
    %60 = arith.addf %49, %59 : vector<64x128xf32>
    %61 = arith.truncf %60 : vector<64x128xf32> to vector<64x128xbf16>
    %c1_54 = arith.constant 1 : index
    %c1_55 = arith.constant 1 : index
    %c0_56 = arith.constant 0 : index
    %c0_57 = arith.constant 0 : index
    %62 = vector.load %arg5[%c1_54, %c1_55, %c0_56, %c0_57] : memref<4x2x128x128xbf16, #tpu.memory_space<vmem>>, vector<1x1x128x128xbf16>
    %63 = vector.shape_cast %62 : vector<1x1x128x128xbf16> to vector<128x128xbf16>
    %cst_58 = arith.constant dense<0.000000e+00> : vector<64x128xf32>
    %64 = tpu.matmul %61, %63, %cst_58 {dimension_numbers = #tpu.dot_dimension_numbers<[1], [0], [0], [1], [0, 0, 1, 1], [], []>} : vector<64x128xbf16>, vector<128x128xbf16>, vector<64x128xf32> -> vector<64x128xf32>
    %c1_59 = arith.constant 1 : index
    %c1_60 = arith.constant 1 : index
    %c0_61 = arith.constant 0 : index
    %c0_62 = arith.constant 0 : index
    %65 = vector.load %arg6[%c1_59, %c1_60, %c0_61, %c0_62] : memref<4x2x1x128xf32, #tpu.memory_space<vmem>>, vector<1x1x1x128xf32>
    %66 = vector.shape_cast %65 : vector<1x1x1x128xf32> to vector<1x128xf32>
    %67 = vector.broadcast %66 : vector<1x128xf32> to vector<64x128xf32>
    %68 = arith.addf %64, %67 : vector<64x128xf32>
    %cst_63 = arith.constant 0.000000e+00 : f32
    %69 = vector.broadcast %cst_63 : f32 to vector<64x128xf32>
    %70 = arith.maximumf %68, %69 : vector<64x128xf32>
    %71 = arith.addf %60, %70 : vector<64x128xf32>
    %72 = arith.truncf %71 : vector<64x128xf32> to vector<64x128xbf16>
    %c1_64 = arith.constant 1 : index
    %c0_65 = arith.constant 0 : index
    %c0_66 = arith.constant 0 : index
    %73 = vector.load %arg7[%c1_64, %c0_65, %c0_66] : memref<4x128x16xbf16, #tpu.memory_space<vmem>>, vector<1x128x16xbf16>
    %74 = vector.shape_cast %73 : vector<1x128x16xbf16> to vector<128x16xbf16>
    %cst_67 = arith.constant dense<0.000000e+00> : vector<64x16xf32>
    %75 = tpu.matmul %72, %74, %cst_67 {dimension_numbers = #tpu.dot_dimension_numbers<[1], [0], [0], [1], [0, 0, 1, 1], [], []>} : vector<64x128xbf16>, vector<128x16xbf16>, vector<64x16xf32> -> vector<64x16xf32>
    %c1_68 = arith.constant 1 : index
    %c0_69 = arith.constant 0 : index
    %c0_70 = arith.constant 0 : index
    %76 = vector.load %arg8[%c1_68, %c0_69, %c0_70] : memref<4x1x16xf32, #tpu.memory_space<vmem>>, vector<1x1x16xf32>
    %77 = vector.shape_cast %76 : vector<1x1x16xf32> to vector<1x16xf32>
    %78 = vector.broadcast %77 : vector<1x16xf32> to vector<64x16xf32>
    %79 = arith.addf %75, %78 : vector<64x16xf32>
    %80 = arith.truncf %79 : vector<64x16xf32> to vector<64x16xbf16>
    %81 = vector.shape_cast %80 : vector<64x16xbf16> to vector<8x8x16xbf16>
    %82 = vector.shape_cast %42 : vector<8x8x16xbf16> to vector<8x1x8x16xbf16>
    %83 = vector.shape_cast %81 : vector<8x8x16xbf16> to vector<8x1x8x16xbf16>
    %84 = tpu.concatenate %82, %83 in 1 : vector<8x1x8x16xbf16>, vector<8x1x8x16xbf16> -> vector<8x2x8x16xbf16>
    %85 = vector.shape_cast %84 : vector<8x2x8x16xbf16> to vector<16x8x16xbf16>
    "tpu.trace_start"() <{level = 10 : i32, message = "kij,kjp->kip"}> : () -> ()
    %cst_71 = arith.constant dense<0.000000e+00> : vector<16x8x16xf32>
    %86 = tpu.matmul %1, %85, %cst_71 {dimension_numbers = #tpu.dot_dimension_numbers<[2], [1], [1], [2], [0, 0, 0, 1, 1, 2], [0], [0]>} : vector<16x8x8xbf16>, vector<16x8x16xbf16>, vector<16x8x16xf32> -> vector<16x8x16xf32>
    "tpu.trace_stop"() : () -> ()
    %cst_72 = arith.constant 0.000000e+00 : f32
    %87 = vector.broadcast %cst_72 : f32 to vector<16x8x16xf32>
    %88 = arith.maximumf %86, %87 : vector<16x8x16xf32>
    %89 = vector.shape_cast %88 : vector<16x8x16xf32> to vector<8x2x8x16xf32>
    %cst_73 = arith.constant dense<0.000000e+00> : vector<8x8x16xf32>
    %90 = vector.multi_reduction <add>, %89, %cst_73 [1] : vector<8x2x8x16xf32> to vector<8x8x16xf32>
    %cst_74 = arith.constant 5.000000e-01 : f32
    %91 = vector.broadcast %cst_74 : f32 to vector<8x8x16xf32>
    %92 = arith.mulf %90, %91 : vector<8x8x16xf32>
    %93 = vector.shape_cast %92 : vector<8x8x16xf32> to vector<64x16xf32>
    %94 = arith.addf %93, %2 : vector<64x16xf32>
    %95 = arith.truncf %94 : vector<64x16xf32> to vector<64x16xbf16>
    %c2 = arith.constant 2 : index
    %c0_75 = arith.constant 0 : index
    %c0_76 = arith.constant 0 : index
    %96 = vector.load %arg3[%c2, %c0_75, %c0_76] : memref<4x16x128xbf16, #tpu.memory_space<vmem>>, vector<1x16x128xbf16>
    %97 = vector.shape_cast %96 : vector<1x16x128xbf16> to vector<16x128xbf16>
    %cst_77 = arith.constant dense<0.000000e+00> : vector<64x128xf32>
    %98 = tpu.matmul %95, %97, %cst_77 {dimension_numbers = #tpu.dot_dimension_numbers<[1], [0], [0], [1], [0, 0, 1, 1], [], []>} : vector<64x16xbf16>, vector<16x128xbf16>, vector<64x128xf32> -> vector<64x128xf32>
    %c2_78 = arith.constant 2 : index
    %c0_79 = arith.constant 0 : index
    %c0_80 = arith.constant 0 : index
    %99 = vector.load %arg4[%c2_78, %c0_79, %c0_80] : memref<4x1x128xf32, #tpu.memory_space<vmem>>, vector<1x1x128xf32>
    %100 = vector.shape_cast %99 : vector<1x1x128xf32> to vector<1x128xf32>
    %101 = vector.broadcast %100 : vector<1x128xf32> to vector<64x128xf32>
    %102 = arith.addf %98, %101 : vector<64x128xf32>
    %103 = arith.truncf %102 : vector<64x128xf32> to vector<64x128xbf16>
    %c2_81 = arith.constant 2 : index
    %c0_82 = arith.constant 0 : index
    %c0_83 = arith.constant 0 : index
    %c0_84 = arith.constant 0 : index
    %104 = vector.load %arg5[%c2_81, %c0_82, %c0_83, %c0_84] : memref<4x2x128x128xbf16, #tpu.memory_space<vmem>>, vector<1x1x128x128xbf16>
    %105 = vector.shape_cast %104 : vector<1x1x128x128xbf16> to vector<128x128xbf16>
    %cst_85 = arith.constant dense<0.000000e+00> : vector<64x128xf32>
    %106 = tpu.matmul %103, %105, %cst_85 {dimension_numbers = #tpu.dot_dimension_numbers<[1], [0], [0], [1], [0, 0, 1, 1], [], []>} : vector<64x128xbf16>, vector<128x128xbf16>, vector<64x128xf32> -> vector<64x128xf32>
    %c2_86 = arith.constant 2 : index
    %c0_87 = arith.constant 0 : index
    %c0_88 = arith.constant 0 : index
    %c0_89 = arith.constant 0 : index
    %107 = vector.load %arg6[%c2_86, %c0_87, %c0_88, %c0_89] : memref<4x2x1x128xf32, #tpu.memory_space<vmem>>, vector<1x1x1x128xf32>
    %108 = vector.shape_cast %107 : vector<1x1x1x128xf32> to vector<1x128xf32>
    %109 = vector.broadcast %108 : vector<1x128xf32> to vector<64x128xf32>
    %110 = arith.addf %106, %109 : vector<64x128xf32>
    %cst_90 = arith.constant 0.000000e+00 : f32
    %111 = vector.broadcast %cst_90 : f32 to vector<64x128xf32>
    %112 = arith.maximumf %110, %111 : vector<64x128xf32>
    %113 = arith.addf %102, %112 : vector<64x128xf32>
    %114 = arith.truncf %113 : vector<64x128xf32> to vector<64x128xbf16>
    %c2_91 = arith.constant 2 : index
    %c1_92 = arith.constant 1 : index
    %c0_93 = arith.constant 0 : index
    %c0_94 = arith.constant 0 : index
    %115 = vector.load %arg5[%c2_91, %c1_92, %c0_93, %c0_94] : memref<4x2x128x128xbf16, #tpu.memory_space<vmem>>, vector<1x1x128x128xbf16>
    %116 = vector.shape_cast %115 : vector<1x1x128x128xbf16> to vector<128x128xbf16>
    %cst_95 = arith.constant dense<0.000000e+00> : vector<64x128xf32>
    %117 = tpu.matmul %114, %116, %cst_95 {dimension_numbers = #tpu.dot_dimension_numbers<[1], [0], [0], [1], [0, 0, 1, 1], [], []>} : vector<64x128xbf16>, vector<128x128xbf16>, vector<64x128xf32> -> vector<64x128xf32>
    %c2_96 = arith.constant 2 : index
    %c1_97 = arith.constant 1 : index
    %c0_98 = arith.constant 0 : index
    %c0_99 = arith.constant 0 : index
    %118 = vector.load %arg6[%c2_96, %c1_97, %c0_98, %c0_99] : memref<4x2x1x128xf32, #tpu.memory_space<vmem>>, vector<1x1x1x128xf32>
    %119 = vector.shape_cast %118 : vector<1x1x1x128xf32> to vector<1x128xf32>
    %120 = vector.broadcast %119 : vector<1x128xf32> to vector<64x128xf32>
    %121 = arith.addf %117, %120 : vector<64x128xf32>
    %cst_100 = arith.constant 0.000000e+00 : f32
    %122 = vector.broadcast %cst_100 : f32 to vector<64x128xf32>
    %123 = arith.maximumf %121, %122 : vector<64x128xf32>
    %124 = arith.addf %113, %123 : vector<64x128xf32>
    %125 = arith.truncf %124 : vector<64x128xf32> to vector<64x128xbf16>
    %c2_101 = arith.constant 2 : index
    %c0_102 = arith.constant 0 : index
    %c0_103 = arith.constant 0 : index
    %126 = vector.load %arg7[%c2_101, %c0_102, %c0_103] : memref<4x128x16xbf16, #tpu.memory_space<vmem>>, vector<1x128x16xbf16>
    %127 = vector.shape_cast %126 : vector<1x128x16xbf16> to vector<128x16xbf16>
    %cst_104 = arith.constant dense<0.000000e+00> : vector<64x16xf32>
    %128 = tpu.matmul %125, %127, %cst_104 {dimension_numbers = #tpu.dot_dimension_numbers<[1], [0], [0], [1], [0, 0, 1, 1], [], []>} : vector<64x128xbf16>, vector<128x16xbf16>, vector<64x16xf32> -> vector<64x16xf32>
    %c2_105 = arith.constant 2 : index
    %c0_106 = arith.constant 0 : index
    %c0_107 = arith.constant 0 : index
    %129 = vector.load %arg8[%c2_105, %c0_106, %c0_107] : memref<4x1x16xf32, #tpu.memory_space<vmem>>, vector<1x1x16xf32>
    %130 = vector.shape_cast %129 : vector<1x1x16xf32> to vector<1x16xf32>
    %131 = vector.broadcast %130 : vector<1x16xf32> to vector<64x16xf32>
    %132 = arith.addf %128, %131 : vector<64x16xf32>
    %133 = arith.truncf %132 : vector<64x16xf32> to vector<64x16xbf16>
    %134 = vector.shape_cast %133 : vector<64x16xbf16> to vector<8x8x16xbf16>
    %c3 = arith.constant 3 : index
    %c0_108 = arith.constant 0 : index
    %c0_109 = arith.constant 0 : index
    %135 = vector.load %arg3[%c3, %c0_108, %c0_109] : memref<4x16x128xbf16, #tpu.memory_space<vmem>>, vector<1x16x128xbf16>
    %136 = vector.shape_cast %135 : vector<1x16x128xbf16> to vector<16x128xbf16>
    %cst_110 = arith.constant dense<0.000000e+00> : vector<64x128xf32>
    %137 = tpu.matmul %95, %136, %cst_110 {dimension_numbers = #tpu.dot_dimension_numbers<[1], [0], [0], [1], [0, 0, 1, 1], [], []>} : vector<64x16xbf16>, vector<16x128xbf16>, vector<64x128xf32> -> vector<64x128xf32>
    %c3_111 = arith.constant 3 : index
    %c0_112 = arith.constant 0 : index
    %c0_113 = arith.constant 0 : index
    %138 = vector.load %arg4[%c3_111, %c0_112, %c0_113] : memref<4x1x128xf32, #tpu.memory_space<vmem>>, vector<1x1x128xf32>
    %139 = vector.shape_cast %138 : vector<1x1x128xf32> to vector<1x128xf32>
    %140 = vector.broadcast %139 : vector<1x128xf32> to vector<64x128xf32>
    %141 = arith.addf %137, %140 : vector<64x128xf32>
    %142 = arith.truncf %141 : vector<64x128xf32> to vector<64x128xbf16>
    %c3_114 = arith.constant 3 : index
    %c0_115 = arith.constant 0 : index
    %c0_116 = arith.constant 0 : index
    %c0_117 = arith.constant 0 : index
    %143 = vector.load %arg5[%c3_114, %c0_115, %c0_116, %c0_117] : memref<4x2x128x128xbf16, #tpu.memory_space<vmem>>, vector<1x1x128x128xbf16>
    %144 = vector.shape_cast %143 : vector<1x1x128x128xbf16> to vector<128x128xbf16>
    %cst_118 = arith.constant dense<0.000000e+00> : vector<64x128xf32>
    %145 = tpu.matmul %142, %144, %cst_118 {dimension_numbers = #tpu.dot_dimension_numbers<[1], [0], [0], [1], [0, 0, 1, 1], [], []>} : vector<64x128xbf16>, vector<128x128xbf16>, vector<64x128xf32> -> vector<64x128xf32>
    %c3_119 = arith.constant 3 : index
    %c0_120 = arith.constant 0 : index
    %c0_121 = arith.constant 0 : index
    %c0_122 = arith.constant 0 : index
    %146 = vector.load %arg6[%c3_119, %c0_120, %c0_121, %c0_122] : memref<4x2x1x128xf32, #tpu.memory_space<vmem>>, vector<1x1x1x128xf32>
    %147 = vector.shape_cast %146 : vector<1x1x1x128xf32> to vector<1x128xf32>
    %148 = vector.broadcast %147 : vector<1x128xf32> to vector<64x128xf32>
    %149 = arith.addf %145, %148 : vector<64x128xf32>
    %cst_123 = arith.constant 0.000000e+00 : f32
    %150 = vector.broadcast %cst_123 : f32 to vector<64x128xf32>
    %151 = arith.maximumf %149, %150 : vector<64x128xf32>
    %152 = arith.addf %141, %151 : vector<64x128xf32>
    %153 = arith.truncf %152 : vector<64x128xf32> to vector<64x128xbf16>
    %c3_124 = arith.constant 3 : index
    %c1_125 = arith.constant 1 : index
    %c0_126 = arith.constant 0 : index
    %c0_127 = arith.constant 0 : index
    %154 = vector.load %arg5[%c3_124, %c1_125, %c0_126, %c0_127] : memref<4x2x128x128xbf16, #tpu.memory_space<vmem>>, vector<1x1x128x128xbf16>
    %155 = vector.shape_cast %154 : vector<1x1x128x128xbf16> to vector<128x128xbf16>
    %cst_128 = arith.constant dense<0.000000e+00> : vector<64x128xf32>
    %156 = tpu.matmul %153, %155, %cst_128 {dimension_numbers = #tpu.dot_dimension_numbers<[1], [0], [0], [1], [0, 0, 1, 1], [], []>} : vector<64x128xbf16>, vector<128x128xbf16>, vector<64x128xf32> -> vector<64x128xf32>
    %c3_129 = arith.constant 3 : index
    %c1_130 = arith.constant 1 : index
    %c0_131 = arith.constant 0 : index
    %c0_132 = arith.constant 0 : index
    %157 = vector.load %arg6[%c3_129, %c1_130, %c0_131, %c0_132] : memref<4x2x1x128xf32, #tpu.memory_space<vmem>>, vector<1x1x1x128xf32>
    %158 = vector.shape_cast %157 : vector<1x1x1x128xf32> to vector<1x128xf32>
    %159 = vector.broadcast %158 : vector<1x128xf32> to vector<64x128xf32>
    %160 = arith.addf %156, %159 : vector<64x128xf32>
    %cst_133 = arith.constant 0.000000e+00 : f32
    %161 = vector.broadcast %cst_133 : f32 to vector<64x128xf32>
    %162 = arith.maximumf %160, %161 : vector<64x128xf32>
    %163 = arith.addf %152, %162 : vector<64x128xf32>
    %164 = arith.truncf %163 : vector<64x128xf32> to vector<64x128xbf16>
    %c3_134 = arith.constant 3 : index
    %c0_135 = arith.constant 0 : index
    %c0_136 = arith.constant 0 : index
    %165 = vector.load %arg7[%c3_134, %c0_135, %c0_136] : memref<4x128x16xbf16, #tpu.memory_space<vmem>>, vector<1x128x16xbf16>
    %166 = vector.shape_cast %165 : vector<1x128x16xbf16> to vector<128x16xbf16>
    %cst_137 = arith.constant dense<0.000000e+00> : vector<64x16xf32>
    %167 = tpu.matmul %164, %166, %cst_137 {dimension_numbers = #tpu.dot_dimension_numbers<[1], [0], [0], [1], [0, 0, 1, 1], [], []>} : vector<64x128xbf16>, vector<128x16xbf16>, vector<64x16xf32> -> vector<64x16xf32>
    %c3_138 = arith.constant 3 : index
    %c0_139 = arith.constant 0 : index
    %c0_140 = arith.constant 0 : index
    %168 = vector.load %arg8[%c3_138, %c0_139, %c0_140] : memref<4x1x16xf32, #tpu.memory_space<vmem>>, vector<1x1x16xf32>
    %169 = vector.shape_cast %168 : vector<1x1x16xf32> to vector<1x16xf32>
    %170 = vector.broadcast %169 : vector<1x16xf32> to vector<64x16xf32>
    %171 = arith.addf %167, %170 : vector<64x16xf32>
    %172 = arith.truncf %171 : vector<64x16xf32> to vector<64x16xbf16>
    %173 = vector.shape_cast %172 : vector<64x16xbf16> to vector<8x8x16xbf16>
    %174 = vector.shape_cast %134 : vector<8x8x16xbf16> to vector<8x1x8x16xbf16>
    %175 = vector.shape_cast %173 : vector<8x8x16xbf16> to vector<8x1x8x16xbf16>
    %176 = tpu.concatenate %174, %175 in 1 : vector<8x1x8x16xbf16>, vector<8x1x8x16xbf16> -> vector<8x2x8x16xbf16>
    %177 = vector.shape_cast %176 : vector<8x2x8x16xbf16> to vector<16x8x16xbf16>
    "tpu.trace_start"() <{level = 10 : i32, message = "kij,kjp->kip"}> : () -> ()
    %cst_141 = arith.constant dense<0.000000e+00> : vector<16x8x16xf32>
    %178 = tpu.matmul %1, %177, %cst_141 {dimension_numbers = #tpu.dot_dimension_numbers<[2], [1], [1], [2], [0, 0, 0, 1, 1, 2], [0], [0]>} : vector<16x8x8xbf16>, vector<16x8x16xbf16>, vector<16x8x16xf32> -> vector<16x8x16xf32>
    "tpu.trace_stop"() : () -> ()
    %cst_142 = arith.constant 0.000000e+00 : f32
    %179 = vector.broadcast %cst_142 : f32 to vector<16x8x16xf32>
    %180 = arith.maximumf %178, %179 : vector<16x8x16xf32>
    %181 = vector.shape_cast %180 : vector<16x8x16xf32> to vector<8x2x8x16xf32>
    %cst_143 = arith.constant dense<0.000000e+00> : vector<8x8x16xf32>
    %182 = vector.multi_reduction <add>, %181, %cst_143 [1] : vector<8x2x8x16xf32> to vector<8x8x16xf32>
    %cst_144 = arith.constant 5.000000e-01 : f32
    %183 = vector.broadcast %cst_144 : f32 to vector<8x8x16xf32>
    %184 = arith.mulf %182, %183 : vector<8x8x16xf32>
    %185 = vector.shape_cast %184 : vector<8x8x16xf32> to vector<64x16xf32>
    %186 = arith.addf %185, %94 : vector<64x16xf32>
    %c0_145 = arith.constant 0 : index
    %c0_146 = arith.constant 0 : index
    %187 = vector.load %arg9[%c0_145, %c0_146] : memref<64x16xf32, #tpu.memory_space<vmem>>, vector<64x16xf32>
    tpu.vector_store %arg9[%c0_145, %c0_146], %186 {strides = array<i32>} : memref<64x16xf32, #tpu.memory_space<vmem>>, vector<64x16xf32>,
    return
  }
  func.func @transform_0(%arg0: i32) -> (i32, i32) {
    %c0_i32 = arith.constant 0 : i32
    %c0_i32_0 = arith.constant 0 : i32
    return %arg0, %c0_i32 : i32, i32
  }
  func.func @transform_1(%arg0: i32) -> (i32, i32, i32, i32) {
    %c0_i32 = arith.constant 0 : i32
    %c0_i32_0 = arith.constant 0 : i32
    %c0_i32_1 = arith.constant 0 : i32
    %c0_i32_2 = arith.constant 0 : i32
    return %arg0, %c0_i32, %c0_i32_0, %c0_i32_1 : i32, i32, i32, i32
  }
  func.func @transform_2(%arg0: i32) -> (i32, i32, i32) {
    %c0_i32 = arith.constant 0 : i32
    %c0_i32_0 = arith.constant 0 : i32
    %c0_i32_1 = arith.constant 0 : i32
    %c0_i32_2 = arith.constant 0 : i32
    return %c0_i32, %c0_i32_0, %c0_i32_1 : i32, i32, i32
  }
  func.func @transform_3(%arg0: i32) -> (i32, i32, i32) {
    %c0_i32 = arith.constant 0 : i32
    %c0_i32_0 = arith.constant 0 : i32
    %c0_i32_1 = arith.constant 0 : i32
    %c0_i32_2 = arith.constant 0 : i32
    return %c0_i32, %c0_i32_0, %c0_i32_1 : i32, i32, i32
  }
  func.func @transform_4(%arg0: i32) -> (i32, i32, i32, i32) {
    %c0_i32 = arith.constant 0 : i32
    %c0_i32_0 = arith.constant 0 : i32
    %c0_i32_1 = arith.constant 0 : i32
    %c0_i32_2 = arith.constant 0 : i32
    %c0_i32_3 = arith.constant 0 : i32
    return %c0_i32, %c0_i32_0, %c0_i32_1, %c0_i32_2 : i32, i32, i32, i32
  }
  func.func @transform_5(%arg0: i32) -> (i32, i32, i32, i32) {
    %c0_i32 = arith.constant 0 : i32
    %c0_i32_0 = arith.constant 0 : i32
    %c0_i32_1 = arith.constant 0 : i32
    %c0_i32_2 = arith.constant 0 : i32
    %c0_i32_3 = arith.constant 0 : i32
    return %c0_i32, %c0_i32_0, %c0_i32_1, %c0_i32_2 : i32, i32, i32, i32
  }
  func.func @transform_6(%arg0: i32) -> (i32, i32, i32) {
    %c0_i32 = arith.constant 0 : i32
    %c0_i32_0 = arith.constant 0 : i32
    %c0_i32_1 = arith.constant 0 : i32
    %c0_i32_2 = arith.constant 0 : i32
    return %c0_i32, %c0_i32_0, %c0_i32_1 : i32, i32, i32
  }
  func.func @transform_7(%arg0: i32) -> (i32, i32, i32) {
    %c0_i32 = arith.constant 0 : i32
    %c0_i32_0 = arith.constant 0 : i32
    %c0_i32_1 = arith.constant 0 : i32
    %c0_i32_2 = arith.constant 0 : i32
    return %c0_i32, %c0_i32_0, %c0_i32_1 : i32, i32, i32
  }
  func.func @transform_8(%arg0: i32) -> (i32, i32) {
    %c0_i32 = arith.constant 0 : i32
    %c0_i32_0 = arith.constant 0 : i32
    return %arg0, %c0_i32 : i32, i32
  }
}

module attributes {stable_mosaic.version = 11 : i64} {
  func.func @_fused_graph_mat_res_kernel(%arg0: i32, %arg1: memref<64x16xf32, #tpu.memory_space<vmem>>, %arg2: memref<8x2x8x8xbf16, #tpu.memory_space<vmem>>, %arg3: memref<4x16x128xbf16, #tpu.memory_space<vmem>>, %arg4: memref<4x1x128xf32, #tpu.memory_space<vmem>>, %arg5: memref<4x2x128x128xbf16, #tpu.memory_space<vmem>>, %arg6: memref<4x2x1x128xf32, #tpu.memory_space<vmem>>, %arg7: memref<4x128x16xbf16, #tpu.memory_space<vmem>>, %arg8: memref<4x1x16xf32, #tpu.memory_space<vmem>>, %arg9: memref<64x16xf32, #tpu.memory_space<vmem>>) attributes {dimension_semantics = [#tpu.dimension_semantics<parallel>], iteration_bounds = array<i64: 1>, scalar_prefetch = 0 : i64, scratch_operands = 0 : i64, tpu.core_type = #tpu.core_type<tc>, window_params = [{transform_indices = @transform_0, window_bounds = array<i64: 64, 16>}, {transform_indices = @transform_1, window_bounds = array<i64: 8, 2, 8, 8>}, {pipeline_mode = #tpu.pipeline_mode<synchronous>, transform_indices = @transform_2, window_bounds = array<i64: 4, 16, 128>}, {pipeline_mode = #tpu.pipeline_mode<synchronous>, transform_indices = @transform_3, window_bounds = array<i64: 4, 1, 128>}, {pipeline_mode = #tpu.pipeline_mode<synchronous>, transform_indices = @transform_4, window_bounds = array<i64: 4, 2, 128, 128>}, {pipeline_mode = #tpu.pipeline_mode<synchronous>, transform_indices = @transform_5, window_bounds = array<i64: 4, 2, 1, 128>}, {pipeline_mode = #tpu.pipeline_mode<synchronous>, transform_indices = @transform_6, window_bounds = array<i64: 4, 128, 16>}, {pipeline_mode = #tpu.pipeline_mode<synchronous>, transform_indices = @transform_7, window_bounds = array<i64: 4, 1, 16>}, {transform_indices = @transform_8, window_bounds = array<i64: 64, 16>}]} {
    %c0 = arith.constant 0 : index
    %c0_0 = arith.constant 0 : index
    %c0_1 = arith.constant 0 : index
    %c0_2 = arith.constant 0 : index
    %0 = vector.load %arg2[%c0, %c0_0, %c0_1, %c0_2] : memref<8x2x8x8xbf16, #tpu.memory_space<vmem>>, vector<8x2x8x8xbf16>
    %1 = vector.shape_cast %0 : vector<8x2x8x8xbf16> to vector<16x8x8xbf16>
    %c0_3 = arith.constant 0 : index
    %c0_4 = arith.constant 0 : index
    %2 = vector.load %arg1[%c0_3, %c0_4] : memref<64x16xf32, #tpu.memory_space<vmem>>, vector<64x16xf32>
    %3 = arith.truncf %2 : vector<64x16xf32> to vector<64x16xbf16>
    %c0_5 = arith.constant 0 : index
    %c0_6 = arith.constant 0 : index
    %c0_7 = arith.constant 0 : index
    %4 = vector.load %arg3[%c0_5, %c0_6, %c0_7] : memref<4x16x128xbf16, #tpu.memory_space<vmem>>, vector<1x16x128xbf16>
    %5 = vector.shape_cast %4 : vector<1x16x128xbf16> to vector<16x128xbf16>
    %cst = arith.constant dense<0.000000e+00> : vector<64x128xf32>
    %6 = tpu.matmul %3, %5, %cst {dimension_numbers = #tpu.dot_dimension_numbers<[1], [0], [0], [1], [0, 0, 1, 1], [], []>} : vector<64x16xbf16>, vector<16x128xbf16>, vector<64x128xf32> -> vector<64x128xf32>
    %c0_8 = arith.constant 0 : index
    %c0_9 = arith.constant 0 : index
    %c0_10 = arith.constant 0 : index
    %7 = vector.load %arg4[%c0_8, %c0_9, %c0_10] : memref<4x1x128xf32, #tpu.memory_space<vmem>>, vector<1x1x128xf32>
    %8 = vector.shape_cast %7 : vector<1x1x128xf32> to vector<1x128xf32>
    %9 = vector.broadcast %8 : vector<1x128xf32> to vector<64x128xf32>
    %10 = arith.addf %6, %9 : vector<64x128xf32>
    %11 = arith.truncf %10 : vector<64x128xf32> to vector<64x128xbf16>
    %c0_11 = arith.constant 0 : index
    %c0_12 = arith.constant 0 : index
    %c0_13 = arith.constant 0 : index
    %c0_14 = arith.constant 0 : index
    %12 = vector.load %arg5[%c0_11, %c0_12, %c0_13, %c0_14] : memref<4x2x128x128xbf16, #tpu.memory_space<vmem>>, vector<1x1x128x128xbf16>
    %13 = vector.shape_cast %12 : vector<1x1x128x128xbf16> to vector<128x128xbf16>
    %cst_15 = arith.constant dense<0.000000e+00> : vector<64x128xf32>
    %14 = tpu.matmul %11, %13, %cst_15 {dimension_numbers = #tpu.dot_dimension_numbers<[1], [0], [0], [1], [0, 0, 1, 1], [], []>} : vector<64x128xbf16>, vector<128x128xbf16>, vector<64x128xf32> -> vector<64x128xf32>
    %c0_16 = arith.constant 0 : index
    %c0_17 = arith.constant 0 : index
    %c0_18 = arith.constant 0 : index
    %c0_19 = arith.constant 0 : index
    %15 = vector.load %arg6[%c0_16, %c0_17, %c0_18, %c0_19] : memref<4x2x1x128xf32, #tpu.memory_space<vmem>>, vector<1x1x1x128xf32>
    %16 = vector.shape_cast %15 : vector<1x1x1x128xf32> to vector<1x128xf32>
    %17 = vector.broadcast %16 : vector<1x128xf32> to vector<64x128xf32>
    %18 = arith.addf %14, %17 : vector<64x128xf32>
    %cst_20 = arith.constant 0.000000e+00 : f32
    %19 = vector.broadcast %cst_20 : f32 to vector<64x128xf32>
    %20 = arith.maximumf %18, %19 : vector<64x128xf32>
    %21 = arith.addf %10, %20 : vector<64x128xf32>
    %22 = arith.truncf %21 : vector<64x128xf32> to vector<64x128xbf16>
    %c0_21 = arith.constant 0 : index
    %c1 = arith.constant 1 : index
    %c0_22 = arith.constant 0 : index
    %c0_23 = arith.constant 0 : index
    %23 = vector.load %arg5[%c0_21, %c1, %c0_22, %c0_23] : memref<4x2x128x128xbf16, #tpu.memory_space<vmem>>, vector<1x1x128x128xbf16>
    %24 = vector.shape_cast %23 : vector<1x1x128x128xbf16> to vector<128x128xbf16>
    %cst_24 = arith.constant dense<0.000000e+00> : vector<64x128xf32>
    %25 = tpu.matmul %22, %24, %cst_24 {dimension_numbers = #tpu.dot_dimension_numbers<[1], [0], [0], [1], [0, 0, 1, 1], [], []>} : vector<64x128xbf16>, vector<128x128xbf16>, vector<64x128xf32> -> vector<64x128xf32>
    %c0_25 = arith.constant 0 : index
    %c1_26 = arith.constant 1 : index
    %c0_27 = arith.constant 0 : index
    %c0_28 = arith.constant 0 : index
    %26 = vector.load %arg6[%c0_25, %c1_26, %c0_27, %c0_28] : memref<4x2x1x128xf32, #tpu.memory_space<vmem>>, vector<1x1x1x128xf32>
    %27 = vector.shape_cast %26 : vector<1x1x1x128xf32> to vector<1x128xf32>
    %28 = vector.broadcast %27 : vector<1x128xf32> to vector<64x128xf32>
    %29 = arith.addf %25, %28 : vector<64x128xf32>
    %cst_29 = arith.constant 0.000000e+00 : f32
    %30 = vector.broadcast %cst_29 : f32 to vector<64x128xf32>
    %31 = arith.maximumf %29, %30 : vector<64x128xf32>
    %32 = arith.addf %21, %31 : vector<64x128xf32>
    %33 = arith.truncf %32 : vector<64x128xf32> to vector<64x128xbf16>
    %c0_30 = arith.constant 0 : index
    %c0_31 = arith.constant 0 : index
    %c0_32 = arith.constant 0 : index
    %34 = vector.load %arg7[%c0_30, %c0_31, %c0_32] : memref<4x128x16xbf16, #tpu.memory_space<vmem>>, vector<1x128x16xbf16>
    %35 = vector.shape_cast %34 : vector<1x128x16xbf16> to vector<128x16xbf16>
    %cst_33 = arith.constant dense<0.000000e+00> : vector<64x16xf32>
    %36 = tpu.matmul %33, %35, %cst_33 {dimension_numbers = #tpu.dot_dimension_numbers<[1], [0], [0], [1], [0, 0, 1, 1], [], []>} : vector<64x128xbf16>, vector<128x16xbf16>, vector<64x16xf32> -> vector<64x16xf32>
    %c0_34 = arith.constant 0 : index
    %c0_35 = arith.constant 0 : index
    %c0_36 = arith.constant 0 : index
    %37 = vector.load %arg8[%c0_34, %c0_35, %c0_36] : memref<4x1x16xf32, #tpu.memory_space<vmem>>, vector<1x1x16xf32>
    %38 = vector.shape_cast %37 : vector<1x1x16xf32> to vector<1x16xf32>
    %39 = vector.broadcast %38 : vector<1x16xf32> to vector<64x16xf32>
    %40 = arith.addf %36, %39 : vector<64x16xf32>
    %41 = arith.truncf %40 : vector<64x16xf32> to vector<64x16xbf16>
    %42 = vector.shape_cast %41 : vector<64x16xbf16> to vector<8x8x16xbf16>
    %c1_37 = arith.constant 1 : index
    %c0_38 = arith.constant 0 : index
    %c0_39 = arith.constant 0 : index
    %43 = vector.load %arg3[%c1_37, %c0_38, %c0_39] : memref<4x16x128xbf16, #tpu.memory_space<vmem>>, vector<1x16x128xbf16>
    %44 = vector.shape_cast %43 : vector<1x16x128xbf16> to vector<16x128xbf16>
    %cst_40 = arith.constant dense<0.000000e+00> : vector<64x128xf32>
    %45 = tpu.matmul %3, %44, %cst_40 {dimension_numbers = #tpu.dot_dimension_numbers<[1], [0], [0], [1], [0, 0, 1, 1], [], []>} : vector<64x16xbf16>, vector<16x128xbf16>, vector<64x128xf32> -> vector<64x128xf32>
    %c1_41 = arith.constant 1 : index
    %c0_42 = arith.constant 0 : index
    %c0_43 = arith.constant 0 : index
    %46 = vector.load %arg4[%c1_41, %c0_42, %c0_43] : memref<4x1x128xf32, #tpu.memory_space<vmem>>, vector<1x1x128xf32>
    %47 = vector.shape_cast %46 : vector<1x1x128xf32> to vector<1x128xf32>
    %48 = vector.broadcast %47 : vector<1x128xf32> to vector<64x128xf32>
    %49 = arith.addf %45, %48 : vector<64x128xf32>
    %50 = arith.truncf %49 : vector<64x128xf32> to vector<64x128xbf16>
    %c1_44 = arith.constant 1 : index
    %c0_45 = arith.constant 0 : index
    %c0_46 = arith.constant 0 : index
    %c0_47 = arith.constant 0 : index
    %51 = vector.load %arg5[%c1_44, %c0_45, %c0_46, %c0_47] : memref<4x2x128x128xbf16, #tpu.memory_space<vmem>>, vector<1x1x128x128xbf16>
    %52 = vector.shape_cast %51 : vector<1x1x128x128xbf16> to vector<128x128xbf16>
    %cst_48 = arith.constant dense<0.000000e+00> : vector<64x128xf32>
    %53 = tpu.matmul %50, %52, %cst_48 {dimension_numbers = #tpu.dot_dimension_numbers<[1], [0], [0], [1], [0, 0, 1, 1], [], []>} : vector<64x128xbf16>, vector<128x128xbf16>, vector<64x128xf32> -> vector<64x128xf32>
    %c1_49 = arith.constant 1 : index
    %c0_50 = arith.constant 0 : index
    %c0_51 = arith.constant 0 : index
    %c0_52 = arith.constant 0 : index
    %54 = vector.load %arg6[%c1_49, %c0_50, %c0_51, %c0_52] : memref<4x2x1x128xf32, #tpu.memory_space<vmem>>, vector<1x1x1x128xf32>
    %55 = vector.shape_cast %54 : vector<1x1x1x128xf32> to vector<1x128xf32>
    %56 = vector.broadcast %55 : vector<1x128xf32> to vector<64x128xf32>
    %57 = arith.addf %53, %56 : vector<64x128xf32>
    %cst_53 = arith.constant 0.000000e+00 : f32
    %58 = vector.broadcast %cst_53 : f32 to vector<64x128xf32>
    %59 = arith.maximumf %57, %58 : vector<64x128xf32>
    %60 = arith.addf %49, %59 : vector<64x128xf32>
    %61 = arith.truncf %60 : vector<64x128xf32> to vector<64x128xbf16>
    %c1_54 = arith.constant 1 : index
    %c1_55 = arith.constant 1 : index
    %c0_56 = arith.constant 0 : index
    %c0_57 = arith.constant 0 : index
    %62 = vector.load %arg5[%c1_54, %c1_55, %c0_56, %c0_57] : memref<4x2x128x128xbf16, #tpu.memory_space<vmem>>, vector<1x1x128x128xbf16>
    %63 = vector.shape_cast %62 : vector<1x1x128x128xbf16> to vector<128x128xbf16>
    %cst_58 = arith.constant dense<0.000000e+00> : vector<64x128xf32>
    %64 = tpu.matmul %61, %63, %cst_58 {dimension_numbers = #tpu.dot_dimension_numbers<[1], [0], [0], [1], [0, 0, 1, 1], [], []>} : vector<64x128xbf16>, vector<128x128xbf16>, vector<64x128xf32> -> vector<64x128xf32>
    %c1_59 = arith.constant 1 : index
    %c1_60 = arith.constant 1 : index
    %c0_61 = arith.constant 0 : index
    %c0_62 = arith.constant 0 : index
    %65 = vector.load %arg6[%c1_59, %c1_60, %c0_61, %c0_62] : memref<4x2x1x128xf32, #tpu.memory_space<vmem>>, vector<1x1x1x128xf32>
    %66 = vector.shape_cast %65 : vector<1x1x1x128xf32> to vector<1x128xf32>
    %67 = vector.broadcast %66 : vector<1x128xf32> to vector<64x128xf32>
    %68 = arith.addf %64, %67 : vector<64x128xf32>
    %cst_63 = arith.constant 0.000000e+00 : f32
    %69 = vector.broadcast %cst_63 : f32 to vector<64x128xf32>
    %70 = arith.maximumf %68, %69 : vector<64x128xf32>
    %71 = arith.addf %60, %70 : vector<64x128xf32>
    %72 = arith.truncf %71 : vector<64x128xf32> to vector<64x128xbf16>
    %c1_64 = arith.constant 1 : index
    %c0_65 = arith.constant 0 : index
    %c0_66 = arith.constant 0 : index
    %73 = vector.load %arg7[%c1_64, %c0_65, %c0_66] : memref<4x128x16xbf16, #tpu.memory_space<vmem>>, vector<1x128x16xbf16>
    %74 = vector.shape_cast %73 : vector<1x128x16xbf16> to vector<128x16xbf16>
    %cst_67 = arith.constant dense<0.000000e+00> : vector<64x16xf32>
    %75 = tpu.matmul %72, %74, %cst_67 {dimension_numbers = #tpu.dot_dimension_numbers<[1], [0], [0], [1], [0, 0, 1, 1], [], []>} : vector<64x128xbf16>, vector<128x16xbf16>, vector<64x16xf32> -> vector<64x16xf32>
    %c1_68 = arith.constant 1 : index
    %c0_69 = arith.constant 0 : index
    %c0_70 = arith.constant 0 : index
    %76 = vector.load %arg8[%c1_68, %c0_69, %c0_70] : memref<4x1x16xf32, #tpu.memory_space<vmem>>, vector<1x1x16xf32>
    %77 = vector.shape_cast %76 : vector<1x1x16xf32> to vector<1x16xf32>
    %78 = vector.broadcast %77 : vector<1x16xf32> to vector<64x16xf32>
    %79 = arith.addf %75, %78 : vector<64x16xf32>
    %80 = arith.truncf %79 : vector<64x16xf32> to vector<64x16xbf16>
    %81 = vector.shape_cast %80 : vector<64x16xbf16> to vector<8x8x16xbf16>
    %82 = vector.shape_cast %42 : vector<8x8x16xbf16> to vector<8x1x8x16xbf16>
    %83 = vector.shape_cast %81 : vector<8x8x16xbf16> to vector<8x1x8x16xbf16>
    %84 = tpu.concatenate %82, %83 in 1 : vector<8x1x8x16xbf16>, vector<8x1x8x16xbf16> -> vector<8x2x8x16xbf16>
    %85 = vector.shape_cast %84 : vector<8x2x8x16xbf16> to vector<16x8x16xbf16>
    "tpu.trace_start"() <{level = 10 : i32, message = "kij,kjp->kip"}> : () -> ()
    %cst_71 = arith.constant dense<0.000000e+00> : vector<16x8x16xf32>
    %86 = tpu.matmul %1, %85, %cst_71 {dimension_numbers = #tpu.dot_dimension_numbers<[2], [1], [1], [2], [0, 0, 0, 1, 1, 2], [0], [0]>} : vector<16x8x8xbf16>, vector<16x8x16xbf16>, vector<16x8x16xf32> -> vector<16x8x16xf32>
    "tpu.trace_stop"() : () -> ()
    %cst_72 = arith.constant 0.000000e+00 : f32
    %87 = vector.broadcast %cst_72 : f32 to vector<16x8x16xf32>
    %88 = arith.maximumf %86, %87 : vector<16x8x16xf32>
    %89 = vector.shape_cast %88 : vector<16x8x16xf32> to vector<8x2x8x16xf32>
    %cst_73 = arith.constant dense<0.000000e+00> : vector<8x8x16xf32>
    %90 = vector.multi_reduction <add>, %89, %cst_73 [1] : vector<8x2x8x16xf32> to vector<8x8x16xf32>
    %cst_74 = arith.constant 5.000000e-01 : f32
    %91 = vector.broadcast %cst_74 : f32 to vector<8x8x16xf32>
    %92 = arith.mulf %90, %91 : vector<8x8x16xf32>
    %93 = vector.shape_cast %92 : vector<8x8x16xf32> to vector<64x16xf32>
    %94 = arith.addf %93, %2 : vector<64x16xf32>
    %95 = arith.truncf %94 : vector<64x16xf32> to vector<64x16xbf16>
    %c2 = arith.constant 2 : index
    %c0_75 = arith.constant 0 : index
    %c0_76 = arith.constant 0 : index
    %96 = vector.load %arg3[%c2, %c0_75, %c0_76] : memref<4x16x128xbf16, #tpu.memory_space<vmem>>, vector<1x16x128xbf16>
    %97 = vector.shape_cast %96 : vector<1x16x128xbf16> to vector<16x128xbf16>
    %cst_77 = arith.constant dense<0.000000e+00> : vector<64x128xf32>
    %98 = tpu.matmul %95, %97, %cst_77 {dimension_numbers = #tpu.dot_dimension_numbers<[1], [0], [0], [1], [0, 0, 1, 1], [], []>} : vector<64x16xbf16>, vector<16x128xbf16>, vector<64x128xf32> -> vector<64x128xf32>
    %c2_78 = arith.constant 2 : index
    %c0_79 = arith.constant 0 : index
    %c0_80 = arith.constant 0 : index
    %99 = vector.load %arg4[%c2_78, %c0_79, %c0_80] : memref<4x1x128xf32, #tpu.memory_space<vmem>>, vector<1x1x128xf32>
    %100 = vector.shape_cast %99 : vector<1x1x128xf32> to vector<1x128xf32>
    %101 = vector.broadcast %100 : vector<1x128xf32> to vector<64x128xf32>
    %102 = arith.addf %98, %101 : vector<64x128xf32>
    %103 = arith.truncf %102 : vector<64x128xf32> to vector<64x128xbf16>
    %c2_81 = arith.constant 2 : index
    %c0_82 = arith.constant 0 : index
    %c0_83 = arith.constant 0 : index
    %c0_84 = arith.constant 0 : index
    %104 = vector.load %arg5[%c2_81, %c0_82, %c0_83, %c0_84] : memref<4x2x128x128xbf16, #tpu.memory_space<vmem>>, vector<1x1x128x128xbf16>
    %105 = vector.shape_cast %104 : vector<1x1x128x128xbf16> to vector<128x128xbf16>
    %cst_85 = arith.constant dense<0.000000e+00> : vector<64x128xf32>
    %106 = tpu.matmul %103, %105, %cst_85 {dimension_numbers = #tpu.dot_dimension_numbers<[1], [0], [0], [1], [0, 0, 1, 1], [], []>} : vector<64x128xbf16>, vector<128x128xbf16>, vector<64x128xf32> -> vector<64x128xf32>
    %c2_86 = arith.constant 2 : index
    %c0_87 = arith.constant 0 : index
    %c0_88 = arith.constant 0 : index
    %c0_89 = arith.constant 0 : index
    %107 = vector.load %arg6[%c2_86, %c0_87, %c0_88, %c0_89] : memref<4x2x1x128xf32, #tpu.memory_space<vmem>>, vector<1x1x1x128xf32>
    %108 = vector.shape_cast %107 : vector<1x1x1x128xf32> to vector<1x128xf32>
    %109 = vector.broadcast %108 : vector<1x128xf32> to vector<64x128xf32>
    %110 = arith.addf %106, %109 : vector<64x128xf32>
    %cst_90 = arith.constant 0.000000e+00 : f32
    %111 = vector.broadcast %cst_90 : f32 to vector<64x128xf32>
    %112 = arith.maximumf %110, %111 : vector<64x128xf32>
    %113 = arith.addf %102, %112 : vector<64x128xf32>
    %114 = arith.truncf %113 : vector<64x128xf32> to vector<64x128xbf16>
    %c2_91 = arith.constant 2 : index
    %c1_92 = arith.constant 1 : index
    %c0_93 = arith.constant 0 : index
    %c0_94 = arith.constant 0 : index
    %115 = vector.load %arg5[%c2_91, %c1_92, %c0_93, %c0_94] : memref<4x2x128x128xbf16, #tpu.memory_space<vmem>>, vector<1x1x128x128xbf16>
    %116 = vector.shape_cast %115 : vector<1x1x128x128xbf16> to vector<128x128xbf16>
    %cst_95 = arith.constant dense<0.000000e+00> : vector<64x128xf32>
    %117 = tpu.matmul %114, %116, %cst_95 {dimension_numbers = #tpu.dot_dimension_numbers<[1], [0], [0], [1], [0, 0, 1, 1], [], []>} : vector<64x128xbf16>, vector<128x128xbf16>, vector<64x128xf32> -> vector<64x128xf32>
    %c2_96 = arith.constant 2 : index
    %c1_97 = arith.constant 1 : index
    %c0_98 = arith.constant 0 : index
    %c0_99 = arith.constant 0 : index
    %118 = vector.load %arg6[%c2_96, %c1_97, %c0_98, %c0_99] : memref<4x2x1x128xf32, #tpu.memory_space<vmem>>, vector<1x1x1x128xf32>
    %119 = vector.shape_cast %118 : vector<1x1x1x128xf32> to vector<1x128xf32>
    %120 = vector.broadcast %119 : vector<1x128xf32> to vector<64x128xf32>
    %121 = arith.addf %117, %120 : vector<64x128xf32>
    %cst_100 = arith.constant 0.000000e+00 : f32
    %122 = vector.broadcast %cst_100 : f32 to vector<64x128xf32>
    %123 = arith.maximumf %121, %122 : vector<64x128xf32>
    %124 = arith.addf %113, %123 : vector<64x128xf32>
    %125 = arith.truncf %124 : vector<64x128xf32> to vector<64x128xbf16>
    %c2_101 = arith.constant 2 : index
    %c0_102 = arith.constant 0 : index
    %c0_103 = arith.constant 0 : index
    %126 = vector.load %arg7[%c2_101, %c0_102, %c0_103] : memref<4x128x16xbf16, #tpu.memory_space<vmem>>, vector<1x128x16xbf16>
    %127 = vector.shape_cast %126 : vector<1x128x16xbf16> to vector<128x16xbf16>
    %cst_104 = arith.constant dense<0.000000e+00> : vector<64x16xf32>
    %128 = tpu.matmul %125, %127, %cst_104 {dimension_numbers = #tpu.dot_dimension_numbers<[1], [0], [0], [1], [0, 0, 1, 1], [], []>} : vector<64x128xbf16>, vector<128x16xbf16>, vector<64x16xf32> -> vector<64x16xf32>
    %c2_105 = arith.constant 2 : index
    %c0_106 = arith.constant 0 : index
    %c0_107 = arith.constant 0 : index
    %129 = vector.load %arg8[%c2_105, %c0_106, %c0_107] : memref<4x1x16xf32, #tpu.memory_space<vmem>>, vector<1x1x16xf32>
    %130 = vector.shape_cast %129 : vector<1x1x16xf32> to vector<1x16xf32>
    %131 = vector.broadcast %130 : vector<1x16xf32> to vector<64x16xf32>
    %132 = arith.addf %128, %131 : vector<64x16xf32>
    %133 = arith.truncf %132 : vector<64x16xf32> to vector<64x16xbf16>
    %134 = vector.shape_cast %133 : vector<64x16xbf16> to vector<8x8x16xbf16>
    %c3 = arith.constant 3 : index
    %c0_108 = arith.constant 0 : index
    %c0_109 = arith.constant 0 : index
    %135 = vector.load %arg3[%c3, %c0_108, %c0_109] : memref<4x16x128xbf16, #tpu.memory_space<vmem>>, vector<1x16x128xbf16>
    %136 = vector.shape_cast %135 : vector<1x16x128xbf16> to vector<16x128xbf16>
    %cst_110 = arith.constant dense<0.000000e+00> : vector<64x128xf32>
    %137 = tpu.matmul %95, %136, %cst_110 {dimension_numbers = #tpu.dot_dimension_numbers<[1], [0], [0], [1], [0, 0, 1, 1], [], []>} : vector<64x16xbf16>, vector<16x128xbf16>, vector<64x128xf32> -> vector<64x128xf32>
    %c3_111 = arith.constant 3 : index
    %c0_112 = arith.constant 0 : index
    %c0_113 = arith.constant 0 : index
    %138 = vector.load %arg4[%c3_111, %c0_112, %c0_113] : memref<4x1x128xf32, #tpu.memory_space<vmem>>, vector<1x1x128xf32>
    %139 = vector.shape_cast %138 : vector<1x1x128xf32> to vector<1x128xf32>
    %140 = vector.broadcast %139 : vector<1x128xf32> to vector<64x128xf32>
    %141 = arith.addf %137, %140 : vector<64x128xf32>
    %142 = arith.truncf %141 : vector<64x128xf32> to vector<64x128xbf16>
    %c3_114 = arith.constant 3 : index
    %c0_115 = arith.constant 0 : index
    %c0_116 = arith.constant 0 : index
    %c0_117 = arith.constant 0 : index
    %143 = vector.load %arg5[%c3_114, %c0_115, %c0_116, %c0_117] : memref<4x2x128x128xbf16, #tpu.memory_space<vmem>>, vector<1x1x128x128xbf16>
    %144 = vector.shape_cast %143 : vector<1x1x128x128xbf16> to vector<128x128xbf16>
    %cst_118 = arith.constant dense<0.000000e+00> : vector<64x128xf32>
    %145 = tpu.matmul %142, %144, %cst_118 {dimension_numbers = #tpu.dot_dimension_numbers<[1], [0], [0], [1], [0, 0, 1, 1], [], []>} : vector<64x128xbf16>, vector<128x128xbf16>, vector<64x128xf32> -> vector<64x128xf32>
    %c3_119 = arith.constant 3 : index
    %c0_120 = arith.constant 0 : index
    %c0_121 = arith.constant 0 : index
    %c0_122 = arith.constant 0 : index
    %146 = vector.load %arg6[%c3_119, %c0_120, %c0_121, %c0_122] : memref<4x2x1x128xf32, #tpu.memory_space<vmem>>, vector<1x1x1x128xf32>
    %147 = vector.shape_cast %146 : vector<1x1x1x128xf32> to vector<1x128xf32>
    %148 = vector.broadcast %147 : vector<1x128xf32> to vector<64x128xf32>
    %149 = arith.addf %145, %148 : vector<64x128xf32>
    %cst_123 = arith.constant 0.000000e+00 : f32
    %150 = vector.broadcast %cst_123 : f32 to vector<64x128xf32>
    %151 = arith.maximumf %149, %150 : vector<64x128xf32>
    %152 = arith.addf %141, %151 : vector<64x128xf32>
    %153 = arith.truncf %152 : vector<64x128xf32> to vector<64x128xbf16>
    %c3_124 = arith.constant 3 : index
    %c1_125 = arith.constant 1 : index
    %c0_126 = arith.constant 0 : index
    %c0_127 = arith.constant 0 : index
    %154 = vector.load %arg5[%c3_124, %c1_125, %c0_126, %c0_127] : memref<4x2x128x128xbf16, #tpu.memory_space<vmem>>, vector<1x1x128x128xbf16>
    %155 = vector.shape_cast %154 : vector<1x1x128x128xbf16> to vector<128x128xbf16>
    %cst_128 = arith.constant dense<0.000000e+00> : vector<64x128xf32>
    %156 = tpu.matmul %153, %155, %cst_128 {dimension_numbers = #tpu.dot_dimension_numbers<[1], [0], [0], [1], [0, 0, 1, 1], [], []>} : vector<64x128xbf16>, vector<128x128xbf16>, vector<64x128xf32> -> vector<64x128xf32>
    %c3_129 = arith.constant 3 : index
    %c1_130 = arith.constant 1 : index
    %c0_131 = arith.constant 0 : index
    %c0_132 = arith.constant 0 : index
    %157 = vector.load %arg6[%c3_129, %c1_130, %c0_131, %c0_132] : memref<4x2x1x128xf32, #tpu.memory_space<vmem>>, vector<1x1x1x128xf32>
    %158 = vector.shape_cast %157 : vector<1x1x1x128xf32> to vector<1x128xf32>
    %159 = vector.broadcast %158 : vector<1x128xf32> to vector<64x128xf32>
    %160 = arith.addf %156, %159 : vector<64x128xf32>
    %cst_133 = arith.constant 0.000000e+00 : f32
    %161 = vector.broadcast %cst_133 : f32 to vector<64x128xf32>
    %162 = arith.maximumf %160, %161 : vector<64x128xf32>
    %163 = arith.addf %152, %162 : vector<64x128xf32>
    %164 = arith.truncf %163 : vector<64x128xf32> to vector<64x128xbf16>
    %c3_134 = arith.constant 3 : index
    %c0_135 = arith.constant 0 : index
    %c0_136 = arith.constant 0 : index
    %165 = vector.load %arg7[%c3_134, %c0_135, %c0_136] : memref<4x128x16xbf16, #tpu.memory_space<vmem>>, vector<1x128x16xbf16>
    %166 = vector.shape_cast %165 : vector<1x128x16xbf16> to vector<128x16xbf16>
    %cst_137 = arith.constant dense<0.000000e+00> : vector<64x16xf32>
    %167 = tpu.matmul %164, %166, %cst_137 {dimension_numbers = #tpu.dot_dimension_numbers<[1], [0], [0], [1], [0, 0, 1, 1], [], []>} : vector<64x128xbf16>, vector<128x16xbf16>, vector<64x16xf32> -> vector<64x16xf32>
    %c3_138 = arith.constant 3 : index
    %c0_139 = arith.constant 0 : index
    %c0_140 = arith.constant 0 : index
    %168 = vector.load %arg8[%c3_138, %c0_139, %c0_140] : memref<4x1x16xf32, #tpu.memory_space<vmem>>, vector<1x1x16xf32>
    %169 = vector.shape_cast %168 : vector<1x1x16xf32> to vector<1x16xf32>
    %170 = vector.broadcast %169 : vector<1x16xf32> to vector<64x16xf32>
    %171 = arith.addf %167, %170 : vector<64x16xf32>
    %172 = arith.truncf %171 : vector<64x16xf32> to vector<64x16xbf16>
    %173 = vector.shape_cast %172 : vector<64x16xbf16> to vector<8x8x16xbf16>
    %174 = vector.shape_cast %134 : vector<8x8x16xbf16> to vector<8x1x8x16xbf16>
    %175 = vector.shape_cast %173 : vector<8x8x16xbf16> to vector<8x1x8x16xbf16>
    %176 = tpu.concatenate %174, %175 in 1 : vector<8x1x8x16xbf16>, vector<8x1x8x16xbf16> -> vector<8x2x8x16xbf16>
    %177 = vector.shape_cast %176 : vector<8x2x8x16xbf16> to vector<16x8x16xbf16>
    "tpu.trace_start"() <{level = 10 : i32, message = "kij,kjp->kip"}> : () -> ()
    %cst_141 = arith.constant dense<0.000000e+00> : vector<16x8x16xf32>
    %178 = tpu.matmul %1, %177, %cst_141 {dimension_numbers = #tpu.dot_dimension_numbers<[2], [1], [1], [2], [0, 0, 0, 1, 1, 2], [0], [0]>} : vector<16x8x8xbf16>, vector<16x8x16xbf16>, vector<16x8x16xf32> -> vector<16x8x16xf32>
    "tpu.trace_stop"() : () -> ()
    %cst_142 = arith.constant 0.000000e+00 : f32
    %179 = vector.broadcast %cst_142 : f32 to vector<16x8x16xf32>
    %180 = arith.maximumf %178, %179 : vector<16x8x16xf32>
    %181 = vector.shape_cast %180 : vector<16x8x16xf32> to vector<8x2x8x16xf32>
    %cst_143 = arith.constant dense<0.000000e+00> : vector<8x8x16xf32>
    %182 = vector.multi_reduction <add>, %181, %cst_143 [1] : vector<8x2x8x16xf32> to vector<8x8x16xf32>
    %cst_144 = arith.constant 5.000000e-01 : f32
    %183 = vector.broadcast %cst_144 : f32 to vector<8x8x16xf32>
    %184 = arith.mulf %182, %183 : vector<8x8x16xf32>
    %185 = vector.shape_cast %184 : vector<8x8x16xf32> to vector<64x16xf32>
    %186 = arith.addf %185, %94 : vector<64x16xf32>
    %c0_145 = arith.constant 0 : index
    %c0_146 = arith.constant 0 : index
    %187 = vector.load %arg9[%c0_145, %c0_146] : memref<64x16xf32, #tpu.memory_space<vmem>>, vector<64x16xf32>
    tpu.vector_store %arg9[%c0_145, %c0_146], %186 {strides = array<i32>} : memref<64x16xf32, #tpu.memory_space<vmem>>, vector<64x16xf32>,
    return
  }
  func.func @transform_0(%arg0: i32) -> (i32, i32) {
    %c0_i32 = arith.constant 0 : i32
    %c0_i32_0 = arith.constant 0 : i32
    return %arg0, %c0_i32 : i32, i32
  }
  func.func @transform_1(%arg0: i32) -> (i32, i32, i32, i32) {
    %c0_i32 = arith.constant 0 : i32
    %c0_i32_0 = arith.constant 0 : i32
    %c0_i32_1 = arith.constant 0 : i32
    %c0_i32_2 = arith.constant 0 : i32
    return %arg0, %c0_i32, %c0_i32_0, %c0_i32_1 : i32, i32, i32, i32
  }
  func.func @transform_2(%arg0: i32) -> (i32, i32, i32) {
    %c0_i32 = arith.constant 0 : i32
    %c0_i32_0 = arith.constant 0 : i32
    %c0_i32_1 = arith.constant 0 : i32
    %c0_i32_2 = arith.constant 0 : i32
    return %c0_i32, %c0_i32_0, %c0_i32_1 : i32, i32, i32
  }
  func.func @transform_3(%arg0: i32) -> (i32, i32, i32) {
    %c0_i32 = arith.constant 0 : i32
    %c0_i32_0 = arith.constant 0 : i32
    %c0_i32_1 = arith.constant 0 : i32
    %c0_i32_2 = arith.constant 0 : i32
    return %c0_i32, %c0_i32_0, %c0_i32_1 : i32, i32, i32
  }
  func.func @transform_4(%arg0: i32) -> (i32, i32, i32, i32) {
    %c0_i32 = arith.constant 0 : i32
    %c0_i32_0 = arith.constant 0 : i32
    %c0_i32_1 = arith.constant 0 : i32
    %c0_i32_2 = arith.constant 0 : i32
    %c0_i32_3 = arith.constant 0 : i32
    return %c0_i32, %c0_i32_0, %c0_i32_1, %c0_i32_2 : i32, i32, i32, i32
  }
  func.func @transform_5(%arg0: i32) -> (i32, i32, i32, i32) {
    %c0_i32 = arith.constant 0 : i32
    %c0_i32_0 = arith.constant 0 : i32
    %c0_i32_1 = arith.constant 0 : i32
    %c0_i32_2 = arith.constant 0 : i32
    %c0_i32_3 = arith.constant 0 : i32
    return %c0_i32, %c0_i32_0, %c0_i32_1, %c0_i32_2 : i32, i32, i32, i32
  }
  func.func @transform_6(%arg0: i32) -> (i32, i32, i32) {
    %c0_i32 = arith.constant 0 : i32
    %c0_i32_0 = arith.constant 0 : i32
    %c0_i32_1 = arith.constant 0 : i32
    %c0_i32_2 = arith.constant 0 : i32
    return %c0_i32, %c0_i32_0, %c0_i32_1 : i32, i32, i32
  }
  func.func @transform_7(%arg0: i32) -> (i32, i32, i32) {
    %c0_i32 = arith.constant 0 : i32
    %c0_i32_0 = arith.constant 0 : i32
    %c0_i32_1 = arith.constant 0 : i32
    %c0_i32_2 = arith.constant 0 : i32
    return %c0_i32, %c0_i32_0, %c0_i32_1 : i32, i32, i32
  }
  func.func @transform_8(%arg0: i32) -> (i32, i32) {
    %c0_i32 = arith.constant 0 : i32
    %c0_i32_0 = arith.constant 0 : i32
    return %arg0, %c0_i32 : i32, i32
  }
}

</mosaic_0001>

<llo_original>
// kernel: tpu_custom_call.1
$region0: #{tpu_custom_call.1}
  #allocation0 [shape = 'u32[]', space=smem, size = 0x4, offset = 0x4, fixed_abs, tag = 'smem constant byte address 0x4 - core index']
  #allocation1 [shape = 'u32[144,128]{1,0:T(1,128)}', space=vmem, size = 0x12000, scoped, tag = 'internal scratch']
  %s0 = inlined_call_operand.vmem [shape: f32[64,16], index: 0, kind: input, shape index: {}]
  %s1 = inlined_call_operand.vmem [shape: bf16[8,2,8,8], index: 1, kind: input, shape index: {}]
  %s2 = inlined_call_operand.vmem [shape: bf16[4,16,128], index: 2, kind: input, shape index: {}]
  %s3 = inlined_call_operand.vmem [shape: f32[4,1,128], index: 3, kind: input, shape index: {}]
  %s4 = inlined_call_operand.hbm [shape: bf16[4,2,128,128], index: 4, kind: input, shape index: {}]
  %s5 = inlined_call_operand.vmem [shape: f32[4,2,1,128], index: 5, kind: input, shape index: {}]
  %s6 = inlined_call_operand.vmem [shape: bf16[4,128,16], index: 6, kind: input, shape index: {}]
  %s7 = inlined_call_operand.vmem [shape: f32[4,1,16], index: 7, kind: input, shape index: {}]
  %s8 = inlined_call_operand.vmem [shape: f32[64,16], index: 8, kind: output, shape index: {}]
  %s9 = sld [smem:[#allocation0]]
  $region46: #{tpu_custom_call.1} parent=0
    _
  %s11 = ssub.s32 1, %s9
  %s12 = scalar_select 0, %s11, %s9
  $region1: #{tpu_custom_call.1} parent=0
    #allocation2 [shape = 'u8[262144]{0}', space=vmem, size = 0x40000, scoped, tag = 'input window, operand 4, single buffered']
    #allocation3 [shape = 's32[1]{0}', space=sflag, size = 0x4, scoped, tag = 'scoped memory for tpu_custom_call.1']
    %13 = vsyncpa [#allocation3], 0
    // Predicated region
    $region2: #{tpu_custom_call.1} parent=1 // pred_check
      _
    $region3: #{tpu_custom_call.1} parent=1 // pred_check_branch
      %15 = sbr.rel (0) target = $region5
    $region4: #{tpu_custom_call.1} parent=1 // pred_region
      _
    $region5: #{tpu_custom_call.1} parent=1 // pred_fallthru
      _
    // Predicated region
    $region6: #{tpu_custom_call.1} parent=1 // pred_check
      _
    $region7: #{tpu_custom_call.1} parent=1 // pred_check_branch
      %17 = sbr.rel (0) target = $region9
    $region8: #{tpu_custom_call.1} parent=1 // pred_region
      _
    $region9: #{tpu_custom_call.1} parent=1 // pred_fallthru
      _
    // Predicated region
    $region10: #{tpu_custom_call.1} parent=1 // pred_check
      _
    $region11: #{tpu_custom_call.1} parent=1 // pred_check_branch
      %19 = sbr.rel (0) target = $region13
    $region12: #{tpu_custom_call.1} parent=1 // pred_region
      _
    $region13: #{tpu_custom_call.1} parent=1 // pred_fallthru
      _
    // Predicated region
    $region14: #{tpu_custom_call.1} parent=1 // pred_check
      _
    $region15: #{tpu_custom_call.1} parent=1 // pred_check_branch
      %21 = sbr.rel (0) target = $region17
    $region16: #{tpu_custom_call.1} parent=1 // pred_region
      _
    $region17: #{tpu_custom_call.1} parent=1 // pred_fallthru
      _
    // Predicated region
    $region18: #{tpu_custom_call.1} parent=1 // pred_check
      _
    $region19: #{tpu_custom_call.1} parent=1 // pred_check_branch
      %23 = sbr.rel (0) target = $region21
    $region20: #{tpu_custom_call.1} parent=1 // pred_region
      %s25 = ssub.s32 8192, 8192
      %26 = vsyncadd [#allocation3], %s25
      %s27 = sshll.u32 [#allocation2], 4
      %s28 = int_to_ptr.vmem [resolvable:$true] %s27
      %33 = dma.hbm_to_vmem [thread:$0]  %s4, 8192, %s28, [#allocation3], 64, 64, 4
    $region21: #{tpu_custom_call.1} parent=1 // pred_fallthru
      _
    // Predicated region
    $region22: #{tpu_custom_call.1} parent=1 // pred_check
      _
    $region23: #{tpu_custom_call.1} parent=1 // pred_check_branch
      %35 = sbr.rel (0) target = $region25
    $region24: #{tpu_custom_call.1} parent=1 // pred_region
      _
    $region25: #{tpu_custom_call.1} parent=1 // pred_fallthru
      _
    // Predicated region
    $region26: #{tpu_custom_call.1} parent=1 // pred_check
      _
    $region27: #{tpu_custom_call.1} parent=1 // pred_check_branch
      %37 = sbr.rel (0) target = $region29
    $region28: #{tpu_custom_call.1} parent=1 // pred_region
      _
    $region29: #{tpu_custom_call.1} parent=1 // pred_fallthru
      _
    // Predicated region
    $region30: #{tpu_custom_call.1} parent=1 // pred_check
      _
    $region31: #{tpu_custom_call.1} parent=1 // pred_check_branch
      %39 = sbr.rel (0) target = $region33
    $region32: #{tpu_custom_call.1} parent=1 // pred_region
      _
    $region33: #{tpu_custom_call.1} parent=1 // pred_fallthru
      _
    // Predicated region
    $region34: #{tpu_custom_call.1} parent=1 // pred_check
      _
    $region35: #{tpu_custom_call.1} parent=1 // pred_check_branch
      %41 = sbr.rel (0) target = $region37
    $region36: #{tpu_custom_call.1} parent=1 // pred_region
      %42 = dma.done [#allocation3], 8192
    $region37: #{tpu_custom_call.1} parent=1 // pred_fallthru
      _
    %v44 = vld [vmem:[%s1] sm:$0xf]
    %v45 = vld [vmem:[%s1 + $0x4] sm:$0xf]
    %v46 = vld [vmem:[%s1 + $0x8] sm:$0xf]
    %v47 = vld [vmem:[%s1 + $0xc] sm:$0xf]
    %v48 = vld [vmem:[%s1 + $0x10] sm:$0xf]
    %v49 = vld [vmem:[%s1 + $0x14] sm:$0xf]
    %v50 = vld [vmem:[%s1 + $0x18] sm:$0xf]
    %v51 = vld [vmem:[%s1 + $0x1c] sm:$0xf]
    %v52 = vld [vmem:[%s1 + $0x20] sm:$0xf]
    %v53 = vld [vmem:[%s1 + $0x24] sm:$0xf]
    %v54 = vld [vmem:[%s1 + $0x28] sm:$0xf]
    %v55 = vld [vmem:[%s1 + $0x2c] sm:$0xf]
    %v56 = vld [vmem:[%s1 + $0x30] sm:$0xf]
    %v57 = vld [vmem:[%s1 + $0x34] sm:$0xf]
    %v58 = vld [vmem:[%s1 + $0x38] sm:$0xf]
    %v59 = vld [vmem:[%s1 + $0x3c] sm:$0xf]
    %v60 = vld [vmem:[%s0] sm:$0xff]
    %v61 = vld [vmem:[%s0 + $0x8] sm:$0xff]
    %v62 = vld [vmem:[%s0 + $0x10] sm:$0xff]
    %v63 = vld [vmem:[%s0 + $0x18] sm:$0xff]
    %v64 = vld [vmem:[%s0 + $0x20] sm:$0xff]
    %v65 = vld [vmem:[%s0 + $0x28] sm:$0xff]
    %v66 = vld [vmem:[%s0 + $0x30] sm:$0xff]
    %v67 = vld [vmem:[%s0 + $0x38] sm:$0xff]
    %v68 = vpack.c.bf16 %v61, %v60
    %v69 = vpack.c.bf16 %v63, %v62
    %v70 = vpack.c.bf16 %v65, %v64
    %v71 = vpack.c.bf16 %v67, %v66
    %v72 = vld [vmem:[%s2] sm:$0xf]
    %v73 = vld [vmem:[%s2 + $0x4] sm:$0xf]
    %v74 = vld [vmem:[%s3] sm:$0x1]
    %v76 = vlaneseq
    %v77 = vshrl.u32 %v76, 7
    %v78 = vsub.s32 0, %v77
    %v79 = vrot.slane %v74, %v78
    %v83 = vunpack.c.l.b16 %v72
    %v84 = vunpack.c.l.b16 %v73
    %v85 = vpack.c.b16 %v84, %v83
    %vm87 = vcmask 130048
    %v89 = vsel %vm87, %v68, 0
    %v92 = vsel %vm87, %v69, 0
    %v95 = vsel %vm87, %v70, 0
    %v98 = vsel %vm87, %v71, 0
    %100 = vmatprep.subr.bf16.mxu0 0
    %101 = vmatpush1.bf16.msra.mxu0 0
    %102 = vmatprep.subr.bf16.mxu0 0
    %103 = vmatpush1.bf16.msra.mxu0 0
    %104 = vmatprep.subr.bf16.mxu0 0
    %105 = vmatpush1.bf16.msra.mxu0 0
    %106 = vmatprep.subr.bf16.mxu0 0
    %107 = vmatpush1.bf16.msra.mxu0 0
    %108 = vmatprep.subr.bf16.mxu0 0
    %109 = vmatpush1.bf16.msra.mxu0 0
    %110 = vmatprep.subr.bf16.mxu0 0
    %111 = vmatpush1.bf16.msra.mxu0 0
    %112 = vmatprep.subr.bf16.mxu0 0
    %113 = vmatpush1.bf16.msra.mxu0 0
    %114 = vmatprep.subr.bf16.mxu0 0
    %115 = vmatpush1.bf16.msra.mxu0 %v85
    %116 = vmatprep.subr.bf16.mxu0 0
    %117 = vmatpush2.bf16.msra.mxu0 0
    %118 = vmatprep.subr.bf16.mxu0 0
    %119 = vmatpush2.bf16.msra.mxu0 0
    %120 = vmatprep.subr.bf16.mxu0 0
    %121 = vmatpush2.bf16.msra.mxu0 0
    %122 = vmatprep.subr.bf16.mxu0 0
    %123 = vmatpush2.bf16.msra.mxu0 0
    %124 = vmatprep.subr.bf16.mxu0 0
    %125 = vmatpush2.bf16.msra.mxu0 0
    %126 = vmatprep.subr.bf16.mxu0 0
    %127 = vmatpush2.bf16.msra.mxu0 0
    %128 = vmatprep.subr.bf16.mxu0 0
    %129 = vmatpush2.bf16.msra.mxu0 0
    %130 = vmatprep.subr.bf16.mxu0 0
    %131 = vmatpush2.bf16.msra.mxu0 0
    %132 = vmatprep.mubr.bf16.mxu0 0
    %133 = vmatmul.mubr.bf16.gmra.mxu0 %v89
    %v134 = vpop.f32.mrf.mxu0
    %v135 = vadd.f32 %v79, %v134
    %v136 = vpop.f32.mrf.mxu0
    %v137 = vpop.f32.mrf.mxu0
    %v138 = vadd.f32 %v79, %v137
    %v139 = vpop.f32.mrf.mxu0
    %140 = vmatprep.mubr.bf16.mxu0 0
    %141 = vmatmul.mubr.bf16.gmra.mxu0 %v92
    %v142 = vpop.f32.mrf.mxu0
    %v143 = vadd.f32 %v79, %v142
    %v144 = vpop.f32.mrf.mxu0
    %v145 = vpop.f32.mrf.mxu0
    %v146 = vadd.f32 %v79, %v145
    %v147 = vpop.f32.mrf.mxu0
    %148 = vmatprep.mubr.bf16.mxu0 0
    %149 = vmatmul.mubr.bf16.gmra.mxu0 %v95
    %v150 = vpop.f32.mrf.mxu0
    %v151 = vadd.f32 %v79, %v150
    %v152 = vpop.f32.mrf.mxu0
    %v153 = vpop.f32.mrf.mxu0
    %v154 = vadd.f32 %v79, %v153
    %v155 = vpop.f32.mrf.mxu0
    %156 = vmatprep.mubr.bf16.mxu0 0
    %157 = vmatmul.mubr.bf16.gmra.mxu0 %v98
    %v158 = vpop.f32.mrf.mxu0
    %v159 = vadd.f32 %v79, %v158
    %v160 = vpop.f32.mrf.mxu0
    %v161 = vpop.f32.mrf.mxu0
    %v162 = vadd.f32 %v79, %v161
    %v163 = vpop.f32.mrf.mxu0
    %164 = vdwg.mxu0
    %v165 = vpack.c.bf16 %v138, %v135
    %v166 = vpack.c.bf16 %v146, %v143
    %v167 = vpack.c.bf16 %v154, %v151
    %v168 = vpack.c.bf16 %v162, %v159
    %v169 = vld [vmem:[#allocation2] sm:$0xf]
    %v170 = vld [vmem:[#allocation2 + $0x4] sm:$0xf]
    %v171 = vld [vmem:[#allocation2 + $0x8] sm:$0xf]
    %v172 = vld [vmem:[#allocation2 + $0xc] sm:$0xf]
    %v173 = vld [vmem:[#allocation2 + $0x10] sm:$0xf]
    %v174 = vld [vmem:[#allocation2 + $0x14] sm:$0xf]
    %v175 = vld [vmem:[#allocation2 + $0x18] sm:$0xf]
    %v176 = vld [vmem:[#allocation2 + $0x1c] sm:$0xf]
    %v177 = vld [vmem:[#allocation2 + $0x20] sm:$0xf]
    %v178 = vld [vmem:[#allocation2 + $0x24] sm:$0xf]
    %v179 = vld [vmem:[#allocation2 + $0x28] sm:$0xf]
    %v180 = vld [vmem:[#allocation2 + $0x2c] sm:$0xf]
    %v181 = vld [vmem:[#allocation2 + $0x30] sm:$0xf]
    %v182 = vld [vmem:[#allocation2 + $0x34] sm:$0xf]
    %v183 = vld [vmem:[#allocation2 + $0x38] sm:$0xf]
    %v184 = vld [vmem:[#allocation2 + $0x3c] sm:$0xf]
    %v185 = vld [vmem:[%s5] sm:$0x1]
    %v187 = vlaneseq
    %v188 = vshrl.u32 %v187, 7
    %v189 = vsub.s32 0, %v188
    %v190 = vrot.slane %v185, %v189
    %v208 = vunpack.c.l.b16 %v169
    %v209 = vunpack.c.l.b16 %v170
    %v210 = vunpack.c.l.b16 %v171
    %v211 = vunpack.c.l.b16 %v172
    %v212 = vunpack.c.l.b16 %v173
    %v213 = vunpack.c.l.b16 %v174
    %v214 = vunpack.c.l.b16 %v175
    %v215 = vunpack.c.l.b16 %v176
    %v216 = vunpack.c.l.b16 %v177
    %v217 = vunpack.c.l.b16 %v178
    %v218 = vunpack.c.l.b16 %v179
    %v219 = vunpack.c.l.b16 %v180
    %v220 = vunpack.c.l.b16 %v181
    %v221 = vunpack.c.l.b16 %v182
    %v222 = vunpack.c.l.b16 %v183
    %v223 = vunpack.c.l.b16 %v184
    %v224 = vpack.c.b16 %v209, %v208
    %v225 = vpack.c.b16 %v211, %v210
    %v226 = vpack.c.b16 %v213, %v212
    %v227 = vpack.c.b16 %v215, %v214
    %v228 = vpack.c.b16 %v217, %v216
    %v229 = vpack.c.b16 %v219, %v218
    %v230 = vpack.c.b16 %v221, %v220
    %v231 = vpack.c.b16 %v223, %v222
    %240 = vmatprep.subr.bf16.mxu0 0
    %241 = vmatpush1.bf16.msra.mxu0 %v231
    %242 = vmatprep.subr.bf16.mxu0 0
    %243 = vmatpush1.bf16.msra.mxu0 %v230
    %244 = vmatprep.subr.bf16.mxu0 0
    %245 = vmatpush1.bf16.msra.mxu0 %v229
    %246 = vmatprep.subr.bf16.mxu0 0
    %247 = vmatpush1.bf16.msra.mxu0 %v228
    %248 = vmatprep.subr.bf16.mxu0 0
    %249 = vmatpush1.bf16.msra.mxu0 %v227
    %250 = vmatprep.subr.bf16.mxu0 0
    %251 = vmatpush1.bf16.msra.mxu0 %v226
    %252 = vmatprep.subr.bf16.mxu0 0
    %253 = vmatpush1.bf16.msra.mxu0 %v225
    %254 = vmatprep.subr.bf16.mxu0 0
    %255 = vmatpush1.bf16.msra.mxu0 %v224
    %256 = vmatprep.subr.bf16.mxu0 0
    %257 = vmatpush2.bf16.msra.mxu0 0
    %258 = vmatprep.subr.bf16.mxu0 0
    %259 = vmatpush2.bf16.msra.mxu0 0
    %260 = vmatprep.subr.bf16.mxu0 0
    %261 = vmatpush2.bf16.msra.mxu0 0
    %262 = vmatprep.subr.bf16.mxu0 0
    %263 = vmatpush2.bf16.msra.mxu0 0
    %264 = vmatprep.subr.bf16.mxu0 0
    %265 = vmatpush2.bf16.msra.mxu0 0
    %266 = vmatprep.subr.bf16.mxu0 0
    %267 = vmatpush2.bf16.msra.mxu0 0
    %268 = vmatprep.subr.bf16.mxu0 0
    %269 = vmatpush2.bf16.msra.mxu0 0
    %270 = vmatprep.subr.bf16.mxu0 0
    %271 = vmatpush2.bf16.msra.mxu0 0
    %272 = vmatprep.mubr.bf16.mxu0 0
    %273 = vmatmul.mubr.bf16.gmra.mxu0 %v165
    %v274 = vpop.f32.mrf.mxu0
    %v275 = vadd.f32 %v190, %v274
    %v276 = vpop.f32.mrf.mxu0
    %v277 = vpop.f32.mrf.mxu0
    %v278 = vadd.f32 %v190, %v277
    %v279 = vpop.f32.mrf.mxu0
    %280 = vmatprep.mubr.bf16.mxu0 0
    %281 = vmatmul.mubr.bf16.gmra.mxu0 %v166
    %v282 = vpop.f32.mrf.mxu0
    %v283 = vadd.f32 %v190, %v282
    %v284 = vpop.f32.mrf.mxu0
    %v285 = vpop.f32.mrf.mxu0
    %v286 = vadd.f32 %v190, %v285
    %v287 = vpop.f32.mrf.mxu0
    %288 = vmatprep.mubr.bf16.mxu0 0
    %289 = vmatmul.mubr.bf16.gmra.mxu0 %v167
    %v290 = vpop.f32.mrf.mxu0
    %v291 = vadd.f32 %v190, %v290
    %v292 = vpop.f32.mrf.mxu0
    %v293 = vpop.f32.mrf.mxu0
    %v294 = vadd.f32 %v190, %v293
    %v295 = vpop.f32.mrf.mxu0
    %296 = vmatprep.mubr.bf16.mxu0 0
    %297 = vmatmul.mubr.bf16.gmra.mxu0 %v168
    %v298 = vpop.f32.mrf.mxu0
    %v299 = vadd.f32 %v190, %v298
    %v300 = vpop.f32.mrf.mxu0
    %v301 = vpop.f32.mrf.mxu0
    %v302 = vadd.f32 %v190, %v301
    %v303 = vpop.f32.mrf.mxu0
    %304 = vdwg.mxu0
    %v305 = vmax.f32 %v275, 0.0
    %v306 = vmax.f32 %v278, 0.0
    %v307 = vmax.f32 %v283, 0.0
    %v308 = vmax.f32 %v286, 0.0
    %v309 = vmax.f32 %v291, 0.0
    %v310 = vmax.f32 %v294, 0.0
    %v311 = vmax.f32 %v299, 0.0
    %v312 = vmax.f32 %v302, 0.0
    %v313 = vadd.f32 %v135, %v305
    %v314 = vadd.f32 %v138, %v306
    %v315 = vadd.f32 %v143, %v307
    %v316 = vadd.f32 %v146, %v308
    %v317 = vadd.f32 %v151, %v309
    %v318 = vadd.f32 %v154, %v310
    %v319 = vadd.f32 %v159, %v311
    %v320 = vadd.f32 %v162, %v312
    %v321 = vpack.c.bf16 %v314, %v313
    %v322 = vpack.c.bf16 %v316, %v315
    %v323 = vpack.c.bf16 %v318, %v317
    %v324 = vpack.c.bf16 %v320, %v319
    %s325 = scalar_lea.vmem [#allocation2], 64
    %v326 = vld [vmem:[%s325] sm:$0xf]
    %v327 = vld [vmem:[%s325 + $0x4] sm:$0xf]
    %v328 = vld [vmem:[%s325 + $0x8] sm:$0xf]
    %v329 = vld [vmem:[%s325 + $0xc] sm:$0xf]
    %v330 = vld [vmem:[%s325 + $0x10] sm:$0xf]
    %v331 = vld [vmem:[%s325 + $0x14] sm:$0xf]
    %v332 = vld [vmem:[%s325 + $0x18] sm:$0xf]
    %v333 = vld [vmem:[%s325 + $0x1c] sm:$0xf]
    %v334 = vld [vmem:[%s325 + $0x20] sm:$0xf]
    %v335 = vld [vmem:[%s325 + $0x24] sm:$0xf]
    %v336 = vld [vmem:[%s325 + $0x28] sm:$0xf]
    %v337 = vld [vmem:[%s325 + $0x2c] sm:$0xf]
    %v338 = vld [vmem:[%s325 + $0x30] sm:$0xf]
    %v339 = vld [vmem:[%s325 + $0x34] sm:$0xf]
    %v340 = vld [vmem:[%s325 + $0x38] sm:$0xf]
    %v341 = vld [vmem:[%s325 + $0x3c] sm:$0xf]
    %s342 = scalar_lea.vmem %s5, 1
    %v343 = vld [vmem:[%s342] sm:$0x1]
    %v345 = vlaneseq
    %v346 = vshrl.u32 %v345, 7
    %v347 = vsub.s32 0, %v346
    %v348 = vrot.slane %v343, %v347
    %v366 = vunpack.c.l.b16 %v326
    %v367 = vunpack.c.l.b16 %v327
    %v368 = vunpack.c.l.b16 %v328
    %v369 = vunpack.c.l.b16 %v329
    %v370 = vunpack.c.l.b16 %v330
    %v371 = vunpack.c.l.b16 %v331
    %v372 = vunpack.c.l.b16 %v332
    %v373 = vunpack.c.l.b16 %v333
    %v374 = vunpack.c.l.b16 %v334
    %v375 = vunpack.c.l.b16 %v335
    %v376 = vunpack.c.l.b16 %v336
    %v377 = vunpack.c.l.b16 %v337
    %v378 = vunpack.c.l.b16 %v338
    %v379 = vunpack.c.l.b16 %v339
    %v380 = vunpack.c.l.b16 %v340
    %v381 = vunpack.c.l.b16 %v341
    %v382 = vpack.c.b16 %v367, %v366
    %v383 = vpack.c.b16 %v369, %v368
    %v384 = vpack.c.b16 %v371, %v370
    %v385 = vpack.c.b16 %v373, %v372
    %v386 = vpack.c.b16 %v375, %v374
    %v387 = vpack.c.b16 %v377, %v376
    %v388 = vpack.c.b16 %v379, %v378
    %v389 = vpack.c.b16 %v381, %v380
    %398 = vmatprep.subr.bf16.mxu0 0
    %399 = vmatpush1.bf16.msra.mxu0 %v389
    %400 = vmatprep.subr.bf16.mxu0 0
    %401 = vmatpush1.bf16.msra.mxu0 %v388
    %402 = vmatprep.subr.bf16.mxu0 0
    %403 = vmatpush1.bf16.msra.mxu0 %v387
    %404 = vmatprep.subr.bf16.mxu0 0
    %405 = vmatpush1.bf16.msra.mxu0 %v386
    %406 = vmatprep.subr.bf16.mxu0 0
    %407 = vmatpush1.bf16.msra.mxu0 %v385
    %408 = vmatprep.subr.bf16.mxu0 0
    %409 = vmatpush1.bf16.msra.mxu0 %v384
    %410 = vmatprep.subr.bf16.mxu0 0
    %411 = vmatpush1.bf16.msra.mxu0 %v383
    %412 = vmatprep.subr.bf16.mxu0 0
    %413 = vmatpush1.bf16.msra.mxu0 %v382
    %414 = vmatprep.subr.bf16.mxu0 0
    %415 = vmatpush2.bf16.msra.mxu0 0
    %416 = vmatprep.subr.bf16.mxu0 0
    %417 = vmatpush2.bf16.msra.mxu0 0
    %418 = vmatprep.subr.bf16.mxu0 0
    %419 = vmatpush2.bf16.msra.mxu0 0
    %420 = vmatprep.subr.bf16.mxu0 0
    %421 = vmatpush2.bf16.msra.mxu0 0
    %422 = vmatprep.subr.bf16.mxu0 0
    %423 = vmatpush2.bf16.msra.mxu0 0
    %424 = vmatprep.subr.bf16.mxu0 0
    %425 = vmatpush2.bf16.msra.mxu0 0
    %426 = vmatprep.subr.bf16.mxu0 0
    %427 = vmatpush2.bf16.msra.mxu0 0
    %428 = vmatprep.subr.bf16.mxu0 0
    %429 = vmatpush2.bf16.msra.mxu0 0
    %430 = vmatprep.mubr.bf16.mxu0 0
    %431 = vmatmul.mubr.bf16.gmra.mxu0 %v321
    %v432 = vpop.f32.mrf.mxu0
    %v433 = vadd.f32 %v348, %v432
    %v434 = vpop.f32.mrf.mxu0
    %v435 = vpop.f32.mrf.mxu0
    %v436 = vadd.f32 %v348, %v435
    %v437 = vpop.f32.mrf.mxu0
    %438 = vmatprep.mubr.bf16.mxu0 0
    %439 = vmatmul.mubr.bf16.gmra.mxu0 %v322
    %v440 = vpop.f32.mrf.mxu0
    %v441 = vadd.f32 %v348, %v440
    %v442 = vpop.f32.mrf.mxu0
    %v443 = vpop.f32.mrf.mxu0
    %v444 = vadd.f32 %v348, %v443
    %v445 = vpop.f32.mrf.mxu0
    %446 = vmatprep.mubr.bf16.mxu0 0
    %447 = vmatmul.mubr.bf16.gmra.mxu0 %v323
    %v448 = vpop.f32.mrf.mxu0
    %v449 = vadd.f32 %v348, %v448
    %v450 = vpop.f32.mrf.mxu0
    %v451 = vpop.f32.mrf.mxu0
    %v452 = vadd.f32 %v348, %v451
    %v453 = vpop.f32.mrf.mxu0
    %454 = vmatprep.mubr.bf16.mxu0 0
    %455 = vmatmul.mubr.bf16.gmra.mxu0 %v324
    %v456 = vpop.f32.mrf.mxu0
    %v457 = vadd.f32 %v348, %v456
    %v458 = vpop.f32.mrf.mxu0
    %v459 = vpop.f32.mrf.mxu0
    %v460 = vadd.f32 %v348, %v459
    %v461 = vpop.f32.mrf.mxu0
    %462 = vdwg.mxu0
    %v463 = vmax.f32 %v433, 0.0
    %v464 = vmax.f32 %v436, 0.0
    %v465 = vmax.f32 %v441, 0.0
    %v466 = vmax.f32 %v444, 0.0
    %v467 = vmax.f32 %v449, 0.0
    %v468 = vmax.f32 %v452, 0.0
    %v469 = vmax.f32 %v457, 0.0
    %v470 = vmax.f32 %v460, 0.0
    %v471 = vadd.f32 %v313, %v463
    %v472 = vadd.f32 %v314, %v464
    %v473 = vadd.f32 %v315, %v465
    %v474 = vadd.f32 %v316, %v466
    %v475 = vadd.f32 %v317, %v467
    %v476 = vadd.f32 %v318, %v468
    %v477 = vadd.f32 %v319, %v469
    %v478 = vadd.f32 %v320, %v470
    %v479 = vpack.c.bf16 %v472, %v471
    %v480 = vpack.c.bf16 %v474, %v473
    %v481 = vpack.c.bf16 %v476, %v475
    %v482 = vpack.c.bf16 %v478, %v477
    %v483 = vld [vmem:[%s6] sm:$0xf]
    %v484 = vld [vmem:[%s6 + $0x4] sm:$0xf]
    %v485 = vld [vmem:[%s6 + $0x8] sm:$0xf]
    %v486 = vld [vmem:[%s6 + $0xc] sm:$0xf]
    %v487 = vld [vmem:[%s6 + $0x10] sm:$0xf]
    %v488 = vld [vmem:[%s6 + $0x14] sm:$0xf]
    %v489 = vld [vmem:[%s6 + $0x18] sm:$0xf]
    %v490 = vld [vmem:[%s6 + $0x1c] sm:$0xf]
    %v491 = vld [vmem:[%s6 + $0x20] sm:$0xf]
    %v492 = vld [vmem:[%s6 + $0x24] sm:$0xf]
    %v493 = vld [vmem:[%s6 + $0x28] sm:$0xf]
    %v494 = vld [vmem:[%s6 + $0x2c] sm:$0xf]
    %v495 = vld [vmem:[%s6 + $0x30] sm:$0xf]
    %v496 = vld [vmem:[%s6 + $0x34] sm:$0xf]
    %v497 = vld [vmem:[%s6 + $0x38] sm:$0xf]
    %v498 = vld [vmem:[%s6 + $0x3c] sm:$0xf]
    %v499 = vld [vmem:[%s7] sm:$0x1]
    %v501 = vlaneseq
    %v502 = vshrl.u32 %v501, 7
    %v503 = vsub.s32 0, %v502
    %v504 = vrot.slane %v499, %v503
    %v522 = vunpack.c.l.b16 %v483
    %v523 = vunpack.c.l.b16 %v484
    %v524 = vunpack.c.l.b16 %v485
    %v525 = vunpack.c.l.b16 %v486
    %v526 = vunpack.c.l.b16 %v487
    %v527 = vunpack.c.l.b16 %v488
    %v528 = vunpack.c.l.b16 %v489
    %v529 = vunpack.c.l.b16 %v490
    %v530 = vunpack.c.l.b16 %v491
    %v531 = vunpack.c.l.b16 %v492
    %v532 = vunpack.c.l.b16 %v493
    %v533 = vunpack.c.l.b16 %v494
    %v534 = vunpack.c.l.b16 %v495
    %v535 = vunpack.c.l.b16 %v496
    %v536 = vunpack.c.l.b16 %v497
    %v537 = vunpack.c.l.b16 %v498
    %v538 = vpack.c.b16 %v523, %v522
    %v539 = vpack.c.b16 %v525, %v524
    %v540 = vpack.c.b16 %v527, %v526
    %v541 = vpack.c.b16 %v529, %v528
    %v542 = vpack.c.b16 %v531, %v530
    %v543 = vpack.c.b16 %v533, %v532
    %v544 = vpack.c.b16 %v535, %v534
    %v545 = vpack.c.b16 %v537, %v536
    %554 = vmatprep.subr.bf16.mxu0 0
    %555 = vmatpush1.bf16.msra.mxu0 %v545
    %556 = vmatprep.subr.bf16.mxu0 0
    %557 = vmatpush1.bf16.msra.mxu0 %v544
    %558 = vmatprep.subr.bf16.mxu0 0
    %559 = vmatpush1.bf16.msra.mxu0 %v543
    %560 = vmatprep.subr.bf16.mxu0 0
    %561 = vmatpush1.bf16.msra.mxu0 %v542
    %562 = vmatprep.subr.bf16.mxu0 0
    %563 = vmatpush1.bf16.msra.mxu0 %v541
    %564 = vmatprep.subr.bf16.mxu0 0
    %565 = vmatpush1.bf16.msra.mxu0 %v540
    %566 = vmatprep.subr.bf16.mxu0 0
    %567 = vmatpush1.bf16.msra.mxu0 %v539
    %568 = vmatprep.subr.bf16.mxu0 0
    %569 = vmatpush1.bf16.msra.mxu0 %v538
    %570 = vmatprep.subr.bf16.mxu0 0
    %571 = vmatpush2.bf16.msra.mxu0 0
    %572 = vmatprep.subr.bf16.mxu0 0
    %573 = vmatpush2.bf16.msra.mxu0 0
    %574 = vmatprep.subr.bf16.mxu0 0
    %575 = vmatpush2.bf16.msra.mxu0 0
    %576 = vmatprep.subr.bf16.mxu0 0
    %577 = vmatpush2.bf16.msra.mxu0 0
    %578 = vmatprep.subr.bf16.mxu0 0
    %579 = vmatpush2.bf16.msra.mxu0 0
    %580 = vmatprep.subr.bf16.mxu0 0
    %581 = vmatpush2.bf16.msra.mxu0 0
    %582 = vmatprep.subr.bf16.mxu0 0
    %583 = vmatpush2.bf16.msra.mxu0 0
    %584 = vmatprep.subr.bf16.mxu0 0
    %585 = vmatpush2.bf16.msra.mxu0 0
    %586 = vmatprep.mubr.bf16.mxu0 0
    %587 = vmatmul.mubr.bf16.gmra.mxu0 %v479
    %v588 = vpop.f32.mrf.mxu0
    %v589 = vadd.f32 %v504, %v588
    %v590 = vpop.f32.mrf.mxu0
    %v591 = vpop.f32.mrf.mxu0
    %v592 = vadd.f32 %v504, %v591
    %v593 = vpop.f32.mrf.mxu0
    %594 = vmatprep.mubr.bf16.mxu0 0
    %595 = vmatmul.mubr.bf16.gmra.mxu0 %v480
    %v596 = vpop.f32.mrf.mxu0
    %v597 = vadd.f32 %v504, %v596
    %v598 = vpop.f32.mrf.mxu0
    %v599 = vpop.f32.mrf.mxu0
    %v600 = vadd.f32 %v504, %v599
    %v601 = vpop.f32.mrf.mxu0
    %602 = vmatprep.mubr.bf16.mxu0 0
    %603 = vmatmul.mubr.bf16.gmra.mxu0 %v481
    %v604 = vpop.f32.mrf.mxu0
    %v605 = vadd.f32 %v504, %v604
    %v606 = vpop.f32.mrf.mxu0
    %v607 = vpop.f32.mrf.mxu0
    %v608 = vadd.f32 %v504, %v607
    %v609 = vpop.f32.mrf.mxu0
    %610 = vmatprep.mubr.bf16.mxu0 0
    %611 = vmatmul.mubr.bf16.gmra.mxu0 %v482
    %v612 = vpop.f32.mrf.mxu0
    %v613 = vadd.f32 %v504, %v612
    %v614 = vpop.f32.mrf.mxu0
    %v615 = vpop.f32.mrf.mxu0
    %v616 = vadd.f32 %v504, %v615
    %v617 = vpop.f32.mrf.mxu0
    %618 = vdwg.mxu0
    %v619 = vpack.c.bf16 %v592, %v589
    %v620 = vpack.c.bf16 %v600, %v597
    %v621 = vpack.c.bf16 %v608, %v605
    %v622 = vpack.c.bf16 %v616, %v613
    %s623 = scalar_lea.vmem %s2, 8
    %v624 = vld [vmem:[%s623] sm:$0xf]
    %v625 = vld [vmem:[%s623 + $0x4] sm:$0xf]
    %s626 = scalar_lea.vmem %s3, 1
    %v627 = vld [vmem:[%s626] sm:$0x1]
    %v629 = vlaneseq
    %v630 = vshrl.u32 %v629, 7
    %v631 = vsub.s32 0, %v630
    %v632 = vrot.slane %v627, %v631
    %v636 = vunpack.c.l.b16 %v624
    %v637 = vunpack.c.l.b16 %v625
    %v638 = vpack.c.b16 %v637, %v636
    %640 = vmatprep.subr.bf16.mxu0 0
    %641 = vmatpush1.bf16.msra.mxu0 0
    %642 = vmatprep.subr.bf16.mxu0 0
    %643 = vmatpush1.bf16.msra.mxu0 0
    %644 = vmatprep.subr.bf16.mxu0 0
    %645 = vmatpush1.bf16.msra.mxu0 0
    %646 = vmatprep.subr.bf16.mxu0 0
    %647 = vmatpush1.bf16.msra.mxu0 0
    %648 = vmatprep.subr.bf16.mxu0 0
    %649 = vmatpush1.bf16.msra.mxu0 0
    %650 = vmatprep.subr.bf16.mxu0 0
    %651 = vmatpush1.bf16.msra.mxu0 0
    %652 = vmatprep.subr.bf16.mxu0 0
    %653 = vmatpush1.bf16.msra.mxu0 0
    %654 = vmatprep.subr.bf16.mxu0 0
    %655 = vmatpush1.bf16.msra.mxu0 %v638
    %656 = vmatprep.subr.bf16.mxu0 0
    %657 = vmatpush2.bf16.msra.mxu0 0
    %658 = vmatprep.subr.bf16.mxu0 0
    %659 = vmatpush2.bf16.msra.mxu0 0
    %660 = vmatprep.subr.bf16.mxu0 0
    %661 = vmatpush2.bf16.msra.mxu0 0
    %662 = vmatprep.subr.bf16.mxu0 0
    %663 = vmatpush2.bf16.msra.mxu0 0
    %664 = vmatprep.subr.bf16.mxu0 0
    %665 = vmatpush2.bf16.msra.mxu0 0
    %666 = vmatprep.subr.bf16.mxu0 0
    %667 = vmatpush2.bf16.msra.mxu0 0
    %668 = vmatprep.subr.bf16.mxu0 0
    %669 = vmatpush2.bf16.msra.mxu0 0
    %670 = vmatprep.subr.bf16.mxu0 0
    %671 = vmatpush2.bf16.msra.mxu0 0
    %672 = vmatprep.mubr.bf16.mxu0 0
    %673 = vmatmul.mubr.bf16.gmra.mxu0 %v89
    %v674 = vpop.f32.mrf.mxu0
    %v675 = vadd.f32 %v632, %v674
    %v676 = vpop.f32.mrf.mxu0
    %v677 = vpop.f32.mrf.mxu0
    %v678 = vadd.f32 %v632, %v677
    %v679 = vpop.f32.mrf.mxu0
    %680 = vmatprep.mubr.bf16.mxu0 0
    %681 = vmatmul.mubr.bf16.gmra.mxu0 %v92
    %v682 = vpop.f32.mrf.mxu0
    %v683 = vadd.f32 %v632, %v682
    %v684 = vpop.f32.mrf.mxu0
    %v685 = vpop.f32.mrf.mxu0
    %v686 = vadd.f32 %v632, %v685
    %v687 = vpop.f32.mrf.mxu0
    %688 = vmatprep.mubr.bf16.mxu0 0
    %689 = vmatmul.mubr.bf16.gmra.mxu0 %v95
    %v690 = vpop.f32.mrf.mxu0
    %v691 = vadd.f32 %v632, %v690
    %v692 = vpop.f32.mrf.mxu0
    %v693 = vpop.f32.mrf.mxu0
    %v694 = vadd.f32 %v632, %v693
    %v695 = vpop.f32.mrf.mxu0
    %696 = vmatprep.mubr.bf16.mxu0 0
    %697 = vmatmul.mubr.bf16.gmra.mxu0 %v98
    %v698 = vpop.f32.mrf.mxu0
    %v699 = vadd.f32 %v632, %v698
    %v700 = vpop.f32.mrf.mxu0
    %v701 = vpop.f32.mrf.mxu0
    %v702 = vadd.f32 %v632, %v701
    %v703 = vpop.f32.mrf.mxu0
    %704 = vdwg.mxu0
    %v705 = vpack.c.bf16 %v678, %v675
    %v706 = vpack.c.bf16 %v686, %v683
    %v707 = vpack.c.bf16 %v694, %v691
    %v708 = vpack.c.bf16 %v702, %v699
    %s709 = scalar_lea.vmem [#allocation2], 128
    %v710 = vld [vmem:[%s709] sm:$0xf]
    %v711 = vld [vmem:[%s709 + $0x4] sm:$0xf]
    %v712 = vld [vmem:[%s709 + $0x8] sm:$0xf]
    %v713 = vld [vmem:[%s709 + $0xc] sm:$0xf]
    %v714 = vld [vmem:[%s709 + $0x10] sm:$0xf]
    %v715 = vld [vmem:[%s709 + $0x14] sm:$0xf]
    %v716 = vld [vmem:[%s709 + $0x18] sm:$0xf]
    %v717 = vld [vmem:[%s709 + $0x1c] sm:$0xf]
    %v718 = vld [vmem:[%s709 + $0x20] sm:$0xf]
    %v719 = vld [vmem:[%s709 + $0x24] sm:$0xf]
    %v720 = vld [vmem:[%s709 + $0x28] sm:$0xf]
    %v721 = vld [vmem:[%s709 + $0x2c] sm:$0xf]
    %v722 = vld [vmem:[%s709 + $0x30] sm:$0xf]
    %v723 = vld [vmem:[%s709 + $0x34] sm:$0xf]
    %v724 = vld [vmem:[%s709 + $0x38] sm:$0xf]
    %v725 = vld [vmem:[%s709 + $0x3c] sm:$0xf]
    %s726 = scalar_lea.vmem %s5, 2
    %v727 = vld [vmem:[%s726] sm:$0x1]
    %v729 = vlaneseq
    %v730 = vshrl.u32 %v729, 7
    %v731 = vsub.s32 0, %v730
    %v732 = vrot.slane %v727, %v731
    %v750 = vunpack.c.l.b16 %v710
    %v751 = vunpack.c.l.b16 %v711
    %v752 = vunpack.c.l.b16 %v712
    %v753 = vunpack.c.l.b16 %v713
    %v754 = vunpack.c.l.b16 %v714
    %v755 = vunpack.c.l.b16 %v715
    %v756 = vunpack.c.l.b16 %v716
    %v757 = vunpack.c.l.b16 %v717
    %v758 = vunpack.c.l.b16 %v718
    %v759 = vunpack.c.l.b16 %v719
    %v760 = vunpack.c.l.b16 %v720
    %v761 = vunpack.c.l.b16 %v721
    %v762 = vunpack.c.l.b16 %v722
    %v763 = vunpack.c.l.b16 %v723
    %v764 = vunpack.c.l.b16 %v724
    %v765 = vunpack.c.l.b16 %v725
    %v766 = vpack.c.b16 %v751, %v750
    %v767 = vpack.c.b16 %v753, %v752
    %v768 = vpack.c.b16 %v755, %v754
    %v769 = vpack.c.b16 %v757, %v756
    %v770 = vpack.c.b16 %v759, %v758
    %v771 = vpack.c.b16 %v761, %v760
    %v772 = vpack.c.b16 %v763, %v762
    %v773 = vpack.c.b16 %v765, %v764
    %782 = vmatprep.subr.bf16.mxu0 0
    %783 = vmatpush1.bf16.msra.mxu0 %v773
    %784 = vmatprep.subr.bf16.mxu0 0
    %785 = vmatpush1.bf16.msra.mxu0 %v772
    %786 = vmatprep.subr.bf16.mxu0 0
    %787 = vmatpush1.bf16.msra.mxu0 %v771
    %788 = vmatprep.subr.bf16.mxu0 0
    %789 = vmatpush1.bf16.msra.mxu0 %v770
    %790 = vmatprep.subr.bf16.mxu0 0
    %791 = vmatpush1.bf16.msra.mxu0 %v769
    %792 = vmatprep.subr.bf16.mxu0 0
    %793 = vmatpush1.bf16.msra.mxu0 %v768
    %794 = vmatprep.subr.bf16.mxu0 0
    %795 = vmatpush1.bf16.msra.mxu0 %v767
    %796 = vmatprep.subr.bf16.mxu0 0
    %797 = vmatpush1.bf16.msra.mxu0 %v766
    %798 = vmatprep.subr.bf16.mxu0 0
    %799 = vmatpush2.bf16.msra.mxu0 0
    %800 = vmatprep.subr.bf16.mxu0 0
    %801 = vmatpush2.bf16.msra.mxu0 0
    %802 = vmatprep.subr.bf16.mxu0 0
    %803 = vmatpush2.bf16.msra.mxu0 0
    %804 = vmatprep.subr.bf16.mxu0 0
    %805 = vmatpush2.bf16.msra.mxu0 0
    %806 = vmatprep.subr.bf16.mxu0 0
    %807 = vmatpush2.bf16.msra.mxu0 0
    %808 = vmatprep.subr.bf16.mxu0 0
    %809 = vmatpush2.bf16.msra.mxu0 0
    %810 = vmatprep.subr.bf16.mxu0 0
    %811 = vmatpush2.bf16.msra.mxu0 0
    %812 = vmatprep.subr.bf16.mxu0 0
    %813 = vmatpush2.bf16.msra.mxu0 0
    %814 = vmatprep.mubr.bf16.mxu0 0
    %815 = vmatmul.mubr.bf16.gmra.mxu0 %v705
    %v816 = vpop.f32.mrf.mxu0
    %v817 = vadd.f32 %v732, %v816
    %v818 = vpop.f32.mrf.mxu0
    %v819 = vpop.f32.mrf.mxu0
    %v820 = vadd.f32 %v732, %v819
    %v821 = vpop.f32.mrf.mxu0
    %822 = vmatprep.mubr.bf16.mxu0 0
    %823 = vmatmul.mubr.bf16.gmra.mxu0 %v706
    %v824 = vpop.f32.mrf.mxu0
    %v825 = vadd.f32 %v732, %v824
    %v826 = vpop.f32.mrf.mxu0
    %v827 = vpop.f32.mrf.mxu0
    %v828 = vadd.f32 %v732, %v827
    %v829 = vpop.f32.mrf.mxu0
    %830 = vmatprep.mubr.bf16.mxu0 0
    %831 = vmatmul.mubr.bf16.gmra.mxu0 %v707
    %v832 = vpop.f32.mrf.mxu0
    %v833 = vadd.f32 %v732, %v832
    %v834 = vpop.f32.mrf.mxu0
    %v835 = vpop.f32.mrf.mxu0
    %v836 = vadd.f32 %v732, %v835
    %v837 = vpop.f32.mrf.mxu0
    %838 = vmatprep.mubr.bf16.mxu0 0
    %839 = vmatmul.mubr.bf16.gmra.mxu0 %v708
    %v840 = vpop.f32.mrf.mxu0
    %v841 = vadd.f32 %v732, %v840
    %v842 = vpop.f32.mrf.mxu0
    %v843 = vpop.f32.mrf.mxu0
    %v844 = vadd.f32 %v732, %v843
    %v845 = vpop.f32.mrf.mxu0
    %846 = vdwg.mxu0
    %v847 = vmax.f32 %v817, 0.0
    %v848 = vmax.f32 %v820, 0.0
    %v849 = vmax.f32 %v825, 0.0
    %v850 = vmax.f32 %v828, 0.0
    %v851 = vmax.f32 %v833, 0.0
    %v852 = vmax.f32 %v836, 0.0
    %v853 = vmax.f32 %v841, 0.0
    %v854 = vmax.f32 %v844, 0.0
    %v855 = vadd.f32 %v675, %v847
    %v856 = vadd.f32 %v678, %v848
    %v857 = vadd.f32 %v683, %v849
    %v858 = vadd.f32 %v686, %v850
    %v859 = vadd.f32 %v691, %v851
    %v860 = vadd.f32 %v694, %v852
    %v861 = vadd.f32 %v699, %v853
    %v862 = vadd.f32 %v702, %v854
    %v863 = vpack.c.bf16 %v856, %v855
    %v864 = vpack.c.bf16 %v858, %v857
    %v865 = vpack.c.bf16 %v860, %v859
    %v866 = vpack.c.bf16 %v862, %v861
    %s867 = scalar_lea.vmem [#allocation2], 192
    %v868 = vld [vmem:[%s867] sm:$0xf]
    %v869 = vld [vmem:[%s867 + $0x4] sm:$0xf]
    %v870 = vld [vmem:[%s867 + $0x8] sm:$0xf]
    %v871 = vld [vmem:[%s867 + $0xc] sm:$0xf]
    %v872 = vld [vmem:[%s867 + $0x10] sm:$0xf]
    %v873 = vld [vmem:[%s867 + $0x14] sm:$0xf]
    %v874 = vld [vmem:[%s867 + $0x18] sm:$0xf]
    %v875 = vld [vmem:[%s867 + $0x1c] sm:$0xf]
    %v876 = vld [vmem:[%s867 + $0x20] sm:$0xf]
    %v877 = vld [vmem:[%s867 + $0x24] sm:$0xf]
    %v878 = vld [vmem:[%s867 + $0x28] sm:$0xf]
    %v879 = vld [vmem:[%s867 + $0x2c] sm:$0xf]
    %v880 = vld [vmem:[%s867 + $0x30] sm:$0xf]
    %v881 = vld [vmem:[%s867 + $0x34] sm:$0xf]
    %v882 = vld [vmem:[%s867 + $0x38] sm:$0xf]
    %v883 = vld [vmem:[%s867 + $0x3c] sm:$0xf]
    %s884 = scalar_lea.vmem %s5, 3
    %v885 = vld [vmem:[%s884] sm:$0x1]
    %v887 = vlaneseq
    %v888 = vshrl.u32 %v887, 7
    %v889 = vsub.s32 0, %v888
    %v890 = vrot.slane %v885, %v889
    %v908 = vunpack.c.l.b16 %v868
    %v909 = vunpack.c.l.b16 %v869
    %v910 = vunpack.c.l.b16 %v870
    %v911 = vunpack.c.l.b16 %v871
    %v912 = vunpack.c.l.b16 %v872
    %v913 = vunpack.c.l.b16 %v873
    %v914 = vunpack.c.l.b16 %v874
    %v915 = vunpack.c.l.b16 %v875
    %v916 = vunpack.c.l.b16 %v876
    %v917 = vunpack.c.l.b16 %v877
    %v918 = vunpack.c.l.b16 %v878
    %v919 = vunpack.c.l.b16 %v879
    %v920 = vunpack.c.l.b16 %v880
    %v921 = vunpack.c.l.b16 %v881
    %v922 = vunpack.c.l.b16 %v882
    %v923 = vunpack.c.l.b16 %v883
    %v924 = vpack.c.b16 %v909, %v908
    %v925 = vpack.c.b16 %v911, %v910
    %v926 = vpack.c.b16 %v913, %v912
    %v927 = vpack.c.b16 %v915, %v914
    %v928 = vpack.c.b16 %v917, %v916
    %v929 = vpack.c.b16 %v919, %v918
    %v930 = vpack.c.b16 %v921, %v920
    %v931 = vpack.c.b16 %v923, %v922
    %940 = vmatprep.subr.bf16.mxu0 0
    %941 = vmatpush1.bf16.msra.mxu0 %v931
    %942 = vmatprep.subr.bf16.mxu0 0
    %943 = vmatpush1.bf16.msra.mxu0 %v930
    %944 = vmatprep.subr.bf16.mxu0 0
    %945 = vmatpush1.bf16.msra.mxu0 %v929
    %946 = vmatprep.subr.bf16.mxu0 0
    %947 = vmatpush1.bf16.msra.mxu0 %v928
    %948 = vmatprep.subr.bf16.mxu0 0
    %949 = vmatpush1.bf16.msra.mxu0 %v927
    %950 = vmatprep.subr.bf16.mxu0 0
    %951 = vmatpush1.bf16.msra.mxu0 %v926
    %952 = vmatprep.subr.bf16.mxu0 0
    %953 = vmatpush1.bf16.msra.mxu0 %v925
    %954 = vmatprep.subr.bf16.mxu0 0
    %955 = vmatpush1.bf16.msra.mxu0 %v924
    %956 = vmatprep.subr.bf16.mxu0 0
    %957 = vmatpush2.bf16.msra.mxu0 0
    %958 = vmatprep.subr.bf16.mxu0 0
    %959 = vmatpush2.bf16.msra.mxu0 0
    %960 = vmatprep.subr.bf16.mxu0 0
    %961 = vmatpush2.bf16.msra.mxu0 0
    %962 = vmatprep.subr.bf16.mxu0 0
    %963 = vmatpush2.bf16.msra.mxu0 0
    %964 = vmatprep.subr.bf16.mxu0 0
    %965 = vmatpush2.bf16.msra.mxu0 0
    %966 = vmatprep.subr.bf16.mxu0 0
    %967 = vmatpush2.bf16.msra.mxu0 0
    %968 = vmatprep.subr.bf16.mxu0 0
    %969 = vmatpush2.bf16.msra.mxu0 0
    %970 = vmatprep.subr.bf16.mxu0 0
    %971 = vmatpush2.bf16.msra.mxu0 0
    %972 = vmatprep.mubr.bf16.mxu0 0
    %973 = vmatmul.mubr.bf16.gmra.mxu0 %v863
    %v974 = vpop.f32.mrf.mxu0
    %v975 = vadd.f32 %v890, %v974
    %v976 = vpop.f32.mrf.mxu0
    %v977 = vpop.f32.mrf.mxu0
    %v978 = vadd.f32 %v890, %v977
    %v979 = vpop.f32.mrf.mxu0
    %980 = vmatprep.mubr.bf16.mxu0 0
    %981 = vmatmul.mubr.bf16.gmra.mxu0 %v864
    %v982 = vpop.f32.mrf.mxu0
    %v983 = vadd.f32 %v890, %v982
    %v984 = vpop.f32.mrf.mxu0
    %v985 = vpop.f32.mrf.mxu0
    %v986 = vadd.f32 %v890, %v985
    %v987 = vpop.f32.mrf.mxu0
    %988 = vmatprep.mubr.bf16.mxu0 0
    %989 = vmatmul.mubr.bf16.gmra.mxu0 %v865
    %v990 = vpop.f32.mrf.mxu0
    %v991 = vadd.f32 %v890, %v990
    %v992 = vpop.f32.mrf.mxu0
    %v993 = vpop.f32.mrf.mxu0
    %v994 = vadd.f32 %v890, %v993
    %v995 = vpop.f32.mrf.mxu0
    %996 = vmatprep.mubr.bf16.mxu0 0
    %997 = vmatmul.mubr.bf16.gmra.mxu0 %v866
    %v998 = vpop.f32.mrf.mxu0
    %v999 = vadd.f32 %v890, %v998
    %v1000 = vpop.f32.mrf.mxu0
    %v1001 = vpop.f32.mrf.mxu0
    %v1002 = vadd.f32 %v890, %v1001
    %v1003 = vpop.f32.mrf.mxu0
    %1004 = vdwg.mxu0
    %v1005 = vmax.f32 %v975, 0.0
    %v1006 = vmax.f32 %v978, 0.0
    %v1007 = vmax.f32 %v983, 0.0
    %v1008 = vmax.f32 %v986, 0.0
    %v1009 = vmax.f32 %v991, 0.0
    %v1010 = vmax.f32 %v994, 0.0
    %v1011 = vmax.f32 %v999, 0.0
    %v1012 = vmax.f32 %v1002, 0.0
    %v1013 = vadd.f32 %v855, %v1005
    %v1014 = vadd.f32 %v856, %v1006
    %v1015 = vadd.f32 %v857, %v1007
    %v1016 = vadd.f32 %v858, %v1008
    %v1017 = vadd.f32 %v859, %v1009
    %v1018 = vadd.f32 %v860, %v1010
    %v1019 = vadd.f32 %v861, %v1011
    %v1020 = vadd.f32 %v862, %v1012
    %v1021 = vpack.c.bf16 %v1014, %v1013
    %v1022 = vpack.c.bf16 %v1016, %v1015
    %v1023 = vpack.c.bf16 %v1018, %v1017
    %v1024 = vpack.c.bf16 %v1020, %v1019
    %s1025 = scalar_lea.vmem %s6, 64
    %v1026 = vld [vmem:[%s1025] sm:$0xf]
    %v1027 = vld [vmem:[%s1025 + $0x4] sm:$0xf]
    %v1028 = vld [vmem:[%s1025 + $0x8] sm:$0xf]
    %v1029 = vld [vmem:[%s1025 + $0xc] sm:$0xf]
    %v1030 = vld [vmem:[%s1025 + $0x10] sm:$0xf]
    %v1031 = vld [vmem:[%s1025 + $0x14] sm:$0xf]
    %v1032 = vld [vmem:[%s1025 + $0x18] sm:$0xf]
    %v1033 = vld [vmem:[%s1025 + $0x1c] sm:$0xf]
    %v1034 = vld [vmem:[%s1025 + $0x20] sm:$0xf]
    %v1035 = vld [vmem:[%s1025 + $0x24] sm:$0xf]
    %v1036 = vld [vmem:[%s1025 + $0x28] sm:$0xf]
    %v1037 = vld [vmem:[%s1025 + $0x2c] sm:$0xf]
    %v1038 = vld [vmem:[%s1025 + $0x30] sm:$0xf]
    %v1039 = vld [vmem:[%s1025 + $0x34] sm:$0xf]
    %v1040 = vld [vmem:[%s1025 + $0x38] sm:$0xf]
    %v1041 = vld [vmem:[%s1025 + $0x3c] sm:$0xf]
    %s1042 = scalar_lea.vmem %s7, 1
    %v1043 = vld [vmem:[%s1042] sm:$0x1]
    %v1045 = vlaneseq
    %v1046 = vshrl.u32 %v1045, 7
    %v1047 = vsub.s32 0, %v1046
    %v1048 = vrot.slane %v1043, %v1047
    %v1066 = vunpack.c.l.b16 %v1026
    %v1067 = vunpack.c.l.b16 %v1027
    %v1068 = vunpack.c.l.b16 %v1028
    %v1069 = vunpack.c.l.b16 %v1029
    %v1070 = vunpack.c.l.b16 %v1030
    %v1071 = vunpack.c.l.b16 %v1031
    %v1072 = vunpack.c.l.b16 %v1032
    %v1073 = vunpack.c.l.b16 %v1033
    %v1074 = vunpack.c.l.b16 %v1034
    %v1075 = vunpack.c.l.b16 %v1035
    %v1076 = vunpack.c.l.b16 %v1036
    %v1077 = vunpack.c.l.b16 %v1037
    %v1078 = vunpack.c.l.b16 %v1038
    %v1079 = vunpack.c.l.b16 %v1039
    %v1080 = vunpack.c.l.b16 %v1040
    %v1081 = vunpack.c.l.b16 %v1041
    %v1082 = vpack.c.b16 %v1067, %v1066
    %v1083 = vpack.c.b16 %v1069, %v1068
    %v1084 = vpack.c.b16 %v1071, %v1070
    %v1085 = vpack.c.b16 %v1073, %v1072
    %v1086 = vpack.c.b16 %v1075, %v1074
    %v1087 = vpack.c.b16 %v1077, %v1076
    %v1088 = vpack.c.b16 %v1079, %v1078
    %v1089 = vpack.c.b16 %v1081, %v1080
    %1098 = vmatprep.subr.bf16.mxu0 0
    %1099 = vmatpush1.bf16.msra.mxu0 %v1089
    %1100 = vmatprep.subr.bf16.mxu0 0
    %1101 = vmatpush1.bf16.msra.mxu0 %v1088
    %1102 = vmatprep.subr.bf16.mxu0 0
    %1103 = vmatpush1.bf16.msra.mxu0 %v1087
    %1104 = vmatprep.subr.bf16.mxu0 0
    %1105 = vmatpush1.bf16.msra.mxu0 %v1086
    %1106 = vmatprep.subr.bf16.mxu0 0
    %1107 = vmatpush1.bf16.msra.mxu0 %v1085
    %1108 = vmatprep.subr.bf16.mxu0 0
    %1109 = vmatpush1.bf16.msra.mxu0 %v1084
    %1110 = vmatprep.subr.bf16.mxu0 0
    %1111 = vmatpush1.bf16.msra.mxu0 %v1083
    %1112 = vmatprep.subr.bf16.mxu0 0
    %1113 = vmatpush1.bf16.msra.mxu0 %v1082
    %1114 = vmatprep.subr.bf16.mxu0 0
    %1115 = vmatpush2.bf16.msra.mxu0 0
    %1116 = vmatprep.subr.bf16.mxu0 0
    %1117 = vmatpush2.bf16.msra.mxu0 0
    %1118 = vmatprep.subr.bf16.mxu0 0
    %1119 = vmatpush2.bf16.msra.mxu0 0
    %1120 = vmatprep.subr.bf16.mxu0 0
    %1121 = vmatpush2.bf16.msra.mxu0 0
    %1122 = vmatprep.subr.bf16.mxu0 0
    %1123 = vmatpush2.bf16.msra.mxu0 0
    %1124 = vmatprep.subr.bf16.mxu0 0
    %1125 = vmatpush2.bf16.msra.mxu0 0
    %1126 = vmatprep.subr.bf16.mxu0 0
    %1127 = vmatpush2.bf16.msra.mxu0 0
    %1128 = vmatprep.subr.bf16.mxu0 0
    %1129 = vmatpush2.bf16.msra.mxu0 0
    %1130 = vmatprep.mubr.bf16.mxu0 0
    %1131 = vmatmul.mubr.bf16.gmra.mxu0 %v1021
    %v1132 = vpop.f32.mrf.mxu0
    %v1133 = vadd.f32 %v1048, %v1132
    %v1134 = vpop.f32.mrf.mxu0
    %v1135 = vpop.f32.mrf.mxu0
    %v1136 = vadd.f32 %v1048, %v1135
    %v1137 = vpop.f32.mrf.mxu0
    %1138 = vmatprep.mubr.bf16.mxu0 0
    %1139 = vmatmul.mubr.bf16.gmra.mxu0 %v1022
    %v1140 = vpop.f32.mrf.mxu0
    %v1141 = vadd.f32 %v1048, %v1140
    %v1142 = vpop.f32.mrf.mxu0
    %v1143 = vpop.f32.mrf.mxu0
    %v1144 = vadd.f32 %v1048, %v1143
    %v1145 = vpop.f32.mrf.mxu0
    %1146 = vmatprep.mubr.bf16.mxu0 0
    %1147 = vmatmul.mubr.bf16.gmra.mxu0 %v1023
    %v1148 = vpop.f32.mrf.mxu0
    %v1149 = vadd.f32 %v1048, %v1148
    %v1150 = vpop.f32.mrf.mxu0
    %v1151 = vpop.f32.mrf.mxu0
    %v1152 = vadd.f32 %v1048, %v1151
    %v1153 = vpop.f32.mrf.mxu0
    %1154 = vmatprep.mubr.bf16.mxu0 0
    %1155 = vmatmul.mubr.bf16.gmra.mxu0 %v1024
    %v1156 = vpop.f32.mrf.mxu0
    %v1157 = vadd.f32 %v1048, %v1156
    %v1158 = vpop.f32.mrf.mxu0
    %v1159 = vpop.f32.mrf.mxu0
    %v1160 = vadd.f32 %v1048, %v1159
    %v1161 = vpop.f32.mrf.mxu0
    %1162 = vdwg.mxu0
    %v1163 = vpack.c.bf16 %v1136, %v1133
    %v1164 = vpack.c.bf16 %v1144, %v1141
    %v1165 = vpack.c.bf16 %v1152, %v1149
    %v1166 = vpack.c.bf16 %v1160, %v1157
    %v1171 = vunpack.c.l.b16 %v619
    %v1172 = vunpack.c.h.b16 %v619
    %v1173 = vunpack.c.l.b16 %v620
    %v1174 = vunpack.c.h.b16 %v620
    %v1175 = vunpack.c.l.b16 %v621
    %v1176 = vunpack.c.h.b16 %v621
    %v1177 = vunpack.c.l.b16 %v622
    %v1178 = vunpack.c.h.b16 %v622
    %v1179 = vpack.c.b16 %v1171, %v1171
    %v1180 = vpack.c.b16 %v1172, %v1172
    %v1181 = vpack.c.b16 %v1173, %v1173
    %v1182 = vpack.c.b16 %v1174, %v1174
    %v1183 = vpack.c.b16 %v1175, %v1175
    %v1184 = vpack.c.b16 %v1176, %v1176
    %v1185 = vpack.c.b16 %v1177, %v1177
    %v1186 = vpack.c.b16 %v1178, %v1178
    %v1191 = vunpack.c.l.b16 %v1163
    %v1192 = vunpack.c.h.b16 %v1163
    %v1193 = vunpack.c.l.b16 %v1164
    %v1194 = vunpack.c.h.b16 %v1164
    %v1195 = vunpack.c.l.b16 %v1165
    %v1196 = vunpack.c.h.b16 %v1165
    %v1197 = vunpack.c.l.b16 %v1166
    %v1198 = vunpack.c.h.b16 %v1166
    %v1199 = vpack.c.b16 %v1191, %v1191
    %v1200 = vpack.c.b16 %v1192, %v1192
    %v1201 = vpack.c.b16 %v1193, %v1193
    %v1202 = vpack.c.b16 %v1194, %v1194
    %v1203 = vpack.c.b16 %v1195, %v1195
    %v1204 = vpack.c.b16 %v1196, %v1196
    %v1205 = vpack.c.b16 %v1197, %v1197
    %v1206 = vpack.c.b16 %v1198, %v1198
    %vm1207 = vcmask 64512
    %v1209 = vsel %vm1207, %v44, 0
    %vm1211 = vcmask 1043456
    %v1213 = vsel %vm1211, %v1179, 0
    %1215 = vmatprep.subr.bf16.mxu0 0
    %1216 = vmatpush1.bf16.msra.mxu0 0
    %1217 = vmatprep.subr.bf16.mxu0 0
    %1218 = vmatpush1.bf16.msra.mxu0 0
    %1219 = vmatprep.subr.bf16.mxu0 0
    %1220 = vmatpush1.bf16.msra.mxu0 0
    %1221 = vmatprep.subr.bf16.mxu0 0
    %1222 = vmatpush1.bf16.msra.mxu0 0
    %1223 = vmatprep.subr.bf16.mxu0 0
    %1224 = vmatpush1.bf16.msra.mxu0 0
    %1225 = vmatprep.subr.bf16.mxu0 0
    %1226 = vmatpush1.bf16.msra.mxu0 0
    %1227 = vmatprep.subr.bf16.mxu0 0
    %1228 = vmatpush1.bf16.msra.mxu0 0
    %1229 = vmatprep.subr.bf16.mxu0 0
    %1230 = vmatpush1.bf16.msra.mxu0 %v1213
    %1231 = vmatprep.subr.bf16.mxu0 0
    %1232 = vmatpush2.bf16.msra.mxu0 0
    %1233 = vmatprep.subr.bf16.mxu0 0
    %1234 = vmatpush2.bf16.msra.mxu0 0
    %1235 = vmatprep.subr.bf16.mxu0 0
    %1236 = vmatpush2.bf16.msra.mxu0 0
    %1237 = vmatprep.subr.bf16.mxu0 0
    %1238 = vmatpush2.bf16.msra.mxu0 0
    %1239 = vmatprep.subr.bf16.mxu0 0
    %1240 = vmatpush2.bf16.msra.mxu0 0
    %1241 = vmatprep.subr.bf16.mxu0 0
    %1242 = vmatpush2.bf16.msra.mxu0 0
    %1243 = vmatprep.subr.bf16.mxu0 0
    %1244 = vmatpush2.bf16.msra.mxu0 0
    %1245 = vmatprep.subr.bf16.mxu0 0
    %1246 = vmatpush2.bf16.msra.mxu0 0
    %1247 = vmatprep.mubr.bf16.mxu0 0
    %1248 = vmatmul.mubr.bf16.gmra.mxu0 %v1209
    %v1249 = vpop.f32.mrf.mxu0
    %v1250 = vadd.f32 0.0, %v1249
    %v1251 = vpop.f32.mrf.mxu0
    %v1252 = vpop.f32.mrf.mxu0
    %v1253 = vpop.f32.mrf.mxu0
    %1254 = vdwg.mxu0
    %v1256 = vsel %vm1207, %v45, 0
    %v1259 = vsel %vm1211, %v1199, 0
    %1261 = vmatprep.subr.bf16.mxu0 0
    %1262 = vmatpush1.bf16.msra.mxu0 0
    %1263 = vmatprep.subr.bf16.mxu0 0
    %1264 = vmatpush1.bf16.msra.mxu0 0
    %1265 = vmatprep.subr.bf16.mxu0 0
    %1266 = vmatpush1.bf16.msra.mxu0 0
    %1267 = vmatprep.subr.bf16.mxu0 0
    %1268 = vmatpush1.bf16.msra.mxu0 0
    %1269 = vmatprep.subr.bf16.mxu0 0
    %1270 = vmatpush1.bf16.msra.mxu0 0
    %1271 = vmatprep.subr.bf16.mxu0 0
    %1272 = vmatpush1.bf16.msra.mxu0 0
    %1273 = vmatprep.subr.bf16.mxu0 0
    %1274 = vmatpush1.bf16.msra.mxu0 0
    %1275 = vmatprep.subr.bf16.mxu0 0
    %1276 = vmatpush1.bf16.msra.mxu0 %v1259
    %1277 = vmatprep.subr.bf16.mxu0 0
    %1278 = vmatpush2.bf16.msra.mxu0 0
    %1279 = vmatprep.subr.bf16.mxu0 0
    %1280 = vmatpush2.bf16.msra.mxu0 0
    %1281 = vmatprep.subr.bf16.mxu0 0
    %1282 = vmatpush2.bf16.msra.mxu0 0
    %1283 = vmatprep.subr.bf16.mxu0 0
    %1284 = vmatpush2.bf16.msra.mxu0 0
    %1285 = vmatprep.subr.bf16.mxu0 0
    %1286 = vmatpush2.bf16.msra.mxu0 0
    %1287 = vmatprep.subr.bf16.mxu0 0
    %1288 = vmatpush2.bf16.msra.mxu0 0
    %1289 = vmatprep.subr.bf16.mxu0 0
    %1290 = vmatpush2.bf16.msra.mxu0 0
    %1291 = vmatprep.subr.bf16.mxu0 0
    %1292 = vmatpush2.bf16.msra.mxu0 0
    %1293 = vmatprep.mubr.bf16.mxu0 0
    %1294 = vmatmul.mubr.bf16.gmra.mxu0 %v1256
    %v1295 = vpop.f32.mrf.mxu0
    %v1296 = vadd.f32 0.0, %v1295
    %v1297 = vpop.f32.mrf.mxu0
    %v1298 = vpop.f32.mrf.mxu0
    %v1299 = vpop.f32.mrf.mxu0
    %1300 = vdwg.mxu0
    %v1302 = vsel %vm1207, %v46, 0
    %v1305 = vsel %vm1211, %v1180, 0
    %1307 = vmatprep.subr.bf16.mxu0 0
    %1308 = vmatpush1.bf16.msra.mxu0 0
    %1309 = vmatprep.subr.bf16.mxu0 0
    %1310 = vmatpush1.bf16.msra.mxu0 0
    %1311 = vmatprep.subr.bf16.mxu0 0
    %1312 = vmatpush1.bf16.msra.mxu0 0
    %1313 = vmatprep.subr.bf16.mxu0 0
    %1314 = vmatpush1.bf16.msra.mxu0 0
    %1315 = vmatprep.subr.bf16.mxu0 0
    %1316 = vmatpush1.bf16.msra.mxu0 0
    %1317 = vmatprep.subr.bf16.mxu0 0
    %1318 = vmatpush1.bf16.msra.mxu0 0
    %1319 = vmatprep.subr.bf16.mxu0 0
    %1320 = vmatpush1.bf16.msra.mxu0 0
    %1321 = vmatprep.subr.bf16.mxu0 0
    %1322 = vmatpush1.bf16.msra.mxu0 %v1305
    %1323 = vmatprep.subr.bf16.mxu0 0
    %1324 = vmatpush2.bf16.msra.mxu0 0
    %1325 = vmatprep.subr.bf16.mxu0 0
    %1326 = vmatpush2.bf16.msra.mxu0 0
    %1327 = vmatprep.subr.bf16.mxu0 0
    %1328 = vmatpush2.bf16.msra.mxu0 0
    %1329 = vmatprep.subr.bf16.mxu0 0
    %1330 = vmatpush2.bf16.msra.mxu0 0
    %1331 = vmatprep.subr.bf16.mxu0 0
    %1332 = vmatpush2.bf16.msra.mxu0 0
    %1333 = vmatprep.subr.bf16.mxu0 0
    %1334 = vmatpush2.bf16.msra.mxu0 0
    %1335 = vmatprep.subr.bf16.mxu0 0
    %1336 = vmatpush2.bf16.msra.mxu0 0
    %1337 = vmatprep.subr.bf16.mxu0 0
    %1338 = vmatpush2.bf16.msra.mxu0 0
    %1339 = vmatprep.mubr.bf16.mxu0 0
    %1340 = vmatmul.mubr.bf16.gmra.mxu0 %v1302
    %v1341 = vpop.f32.mrf.mxu0
    %v1342 = vadd.f32 0.0, %v1341
    %v1343 = vpop.f32.mrf.mxu0
    %v1344 = vpop.f32.mrf.mxu0
    %v1345 = vpop.f32.mrf.mxu0
    %1346 = vdwg.mxu0
    %v1348 = vsel %vm1207, %v47, 0
    %v1351 = vsel %vm1211, %v1200, 0
    %1353 = vmatprep.subr.bf16.mxu0 0
    %1354 = vmatpush1.bf16.msra.mxu0 0
    %1355 = vmatprep.subr.bf16.mxu0 0
    %1356 = vmatpush1.bf16.msra.mxu0 0
    %1357 = vmatprep.subr.bf16.mxu0 0
    %1358 = vmatpush1.bf16.msra.mxu0 0
    %1359 = vmatprep.subr.bf16.mxu0 0
    %1360 = vmatpush1.bf16.msra.mxu0 0
    %1361 = vmatprep.subr.bf16.mxu0 0
    %1362 = vmatpush1.bf16.msra.mxu0 0
    %1363 = vmatprep.subr.bf16.mxu0 0
    %1364 = vmatpush1.bf16.msra.mxu0 0
    %1365 = vmatprep.subr.bf16.mxu0 0
    %1366 = vmatpush1.bf16.msra.mxu0 0
    %1367 = vmatprep.subr.bf16.mxu0 0
    %1368 = vmatpush1.bf16.msra.mxu0 %v1351
    %1369 = vmatprep.subr.bf16.mxu0 0
    %1370 = vmatpush2.bf16.msra.mxu0 0
    %1371 = vmatprep.subr.bf16.mxu0 0
    %1372 = vmatpush2.bf16.msra.mxu0 0
    %1373 = vmatprep.subr.bf16.mxu0 0
    %1374 = vmatpush2.bf16.msra.mxu0 0
    %1375 = vmatprep.subr.bf16.mxu0 0
    %1376 = vmatpush2.bf16.msra.mxu0 0
    %1377 = vmatprep.subr.bf16.mxu0 0
    %1378 = vmatpush2.bf16.msra.mxu0 0
    %1379 = vmatprep.subr.bf16.mxu0 0
    %1380 = vmatpush2.bf16.msra.mxu0 0
    %1381 = vmatprep.subr.bf16.mxu0 0
    %1382 = vmatpush2.bf16.msra.mxu0 0
    %1383 = vmatprep.subr.bf16.mxu0 0
    %1384 = vmatpush2.bf16.msra.mxu0 0
    %1385 = vmatprep.mubr.bf16.mxu0 0
    %1386 = vmatmul.mubr.bf16.gmra.mxu0 %v1348
    %v1387 = vpop.f32.mrf.mxu0
    %v1388 = vadd.f32 0.0, %v1387
    %v1389 = vpop.f32.mrf.mxu0
    %v1390 = vpop.f32.mrf.mxu0
    %v1391 = vpop.f32.mrf.mxu0
    %1392 = vdwg.mxu0
    %v1394 = vsel %vm1207, %v48, 0
    %v1397 = vsel %vm1211, %v1181, 0
    %1399 = vmatprep.subr.bf16.mxu0 0
    %1400 = vmatpush1.bf16.msra.mxu0 0
    %1401 = vmatprep.subr.bf16.mxu0 0
    %1402 = vmatpush1.bf16.msra.mxu0 0
    %1403 = vmatprep.subr.bf16.mxu0 0
    %1404 = vmatpush1.bf16.msra.mxu0 0
    %1405 = vmatprep.subr.bf16.mxu0 0
    %1406 = vmatpush1.bf16.msra.mxu0 0
    %1407 = vmatprep.subr.bf16.mxu0 0
    %1408 = vmatpush1.bf16.msra.mxu0 0
    %1409 = vmatprep.subr.bf16.mxu0 0
    %1410 = vmatpush1.bf16.msra.mxu0 0
    %1411 = vmatprep.subr.bf16.mxu0 0
    %1412 = vmatpush1.bf16.msra.mxu0 0
    %1413 = vmatprep.subr.bf16.mxu0 0
    %1414 = vmatpush1.bf16.msra.mxu0 %v1397
    %1415 = vmatprep.subr.bf16.mxu0 0
    %1416 = vmatpush2.bf16.msra.mxu0 0
    %1417 = vmatprep.subr.bf16.mxu0 0
    %1418 = vmatpush2.bf16.msra.mxu0 0
    %1419 = vmatprep.subr.bf16.mxu0 0
    %1420 = vmatpush2.bf16.msra.mxu0 0
    %1421 = vmatprep.subr.bf16.mxu0 0
    %1422 = vmatpush2.bf16.msra.mxu0 0
    %1423 = vmatprep.subr.bf16.mxu0 0
    %1424 = vmatpush2.bf16.msra.mxu0 0
    %1425 = vmatprep.subr.bf16.mxu0 0
    %1426 = vmatpush2.bf16.msra.mxu0 0
    %1427 = vmatprep.subr.bf16.mxu0 0
    %1428 = vmatpush2.bf16.msra.mxu0 0
    %1429 = vmatprep.subr.bf16.mxu0 0
    %1430 = vmatpush2.bf16.msra.mxu0 0
    %1431 = vmatprep.mubr.bf16.mxu0 0
    %1432 = vmatmul.mubr.bf16.gmra.mxu0 %v1394
    %v1433 = vpop.f32.mrf.mxu0
    %v1434 = vadd.f32 0.0, %v1433
    %v1435 = vpop.f32.mrf.mxu0
    %v1436 = vpop.f32.mrf.mxu0
    %v1437 = vpop.f32.mrf.mxu0
    %1438 = vdwg.mxu0
    %v1440 = vsel %vm1207, %v49, 0
    %v1443 = vsel %vm1211, %v1201, 0
    %1445 = vmatprep.subr.bf16.mxu0 0
    %1446 = vmatpush1.bf16.msra.mxu0 0
    %1447 = vmatprep.subr.bf16.mxu0 0
    %1448 = vmatpush1.bf16.msra.mxu0 0
    %1449 = vmatprep.subr.bf16.mxu0 0
    %1450 = vmatpush1.bf16.msra.mxu0 0
    %1451 = vmatprep.subr.bf16.mxu0 0
    %1452 = vmatpush1.bf16.msra.mxu0 0
    %1453 = vmatprep.subr.bf16.mxu0 0
    %1454 = vmatpush1.bf16.msra.mxu0 0
    %1455 = vmatprep.subr.bf16.mxu0 0
    %1456 = vmatpush1.bf16.msra.mxu0 0
    %1457 = vmatprep.subr.bf16.mxu0 0
    %1458 = vmatpush1.bf16.msra.mxu0 0
    %1459 = vmatprep.subr.bf16.mxu0 0
    %1460 = vmatpush1.bf16.msra.mxu0 %v1443
    %1461 = vmatprep.subr.bf16.mxu0 0
    %1462 = vmatpush2.bf16.msra.mxu0 0
    %1463 = vmatprep.subr.bf16.mxu0 0
    %1464 = vmatpush2.bf16.msra.mxu0 0
    %1465 = vmatprep.subr.bf16.mxu0 0
    %1466 = vmatpush2.bf16.msra.mxu0 0
    %1467 = vmatprep.subr.bf16.mxu0 0
    %1468 = vmatpush2.bf16.msra.mxu0 0
    %1469 = vmatprep.subr.bf16.mxu0 0
    %1470 = vmatpush2.bf16.msra.mxu0 0
    %1471 = vmatprep.subr.bf16.mxu0 0
    %1472 = vmatpush2.bf16.msra.mxu0 0
    %1473 = vmatprep.subr.bf16.mxu0 0
    %1474 = vmatpush2.bf16.msra.mxu0 0
    %1475 = vmatprep.subr.bf16.mxu0 0
    %1476 = vmatpush2.bf16.msra.mxu0 0
    %1477 = vmatprep.mubr.bf16.mxu0 0
    %1478 = vmatmul.mubr.bf16.gmra.mxu0 %v1440
    %v1479 = vpop.f32.mrf.mxu0
    %v1480 = vadd.f32 0.0, %v1479
    %v1481 = vpop.f32.mrf.mxu0
    %v1482 = vpop.f32.mrf.mxu0
    %v1483 = vpop.f32.mrf.mxu0
    %1484 = vdwg.mxu0
    %v1486 = vsel %vm1207, %v50, 0
    %v1489 = vsel %vm1211, %v1182, 0
    %1491 = vmatprep.subr.bf16.mxu0 0
    %1492 = vmatpush1.bf16.msra.mxu0 0
    %1493 = vmatprep.subr.bf16.mxu0 0
    %1494 = vmatpush1.bf16.msra.mxu0 0
    %1495 = vmatprep.subr.bf16.mxu0 0
    %1496 = vmatpush1.bf16.msra.mxu0 0
    %1497 = vmatprep.subr.bf16.mxu0 0
    %1498 = vmatpush1.bf16.msra.mxu0 0
    %1499 = vmatprep.subr.bf16.mxu0 0
    %1500 = vmatpush1.bf16.msra.mxu0 0
    %1501 = vmatprep.subr.bf16.mxu0 0
    %1502 = vmatpush1.bf16.msra.mxu0 0
    %1503 = vmatprep.subr.bf16.mxu0 0
    %1504 = vmatpush1.bf16.msra.mxu0 0
    %1505 = vmatprep.subr.bf16.mxu0 0
    %1506 = vmatpush1.bf16.msra.mxu0 %v1489
    %1507 = vmatprep.subr.bf16.mxu0 0
    %1508 = vmatpush2.bf16.msra.mxu0 0
    %1509 = vmatprep.subr.bf16.mxu0 0
    %1510 = vmatpush2.bf16.msra.mxu0 0
    %1511 = vmatprep.subr.bf16.mxu0 0
    %1512 = vmatpush2.bf16.msra.mxu0 0
    %1513 = vmatprep.subr.bf16.mxu0 0
    %1514 = vmatpush2.bf16.msra.mxu0 0
    %1515 = vmatprep.subr.bf16.mxu0 0
    %1516 = vmatpush2.bf16.msra.mxu0 0
    %1517 = vmatprep.subr.bf16.mxu0 0
    %1518 = vmatpush2.bf16.msra.mxu0 0
    %1519 = vmatprep.subr.bf16.mxu0 0
    %1520 = vmatpush2.bf16.msra.mxu0 0
    %1521 = vmatprep.subr.bf16.mxu0 0
    %1522 = vmatpush2.bf16.msra.mxu0 0
    %1523 = vmatprep.mubr.bf16.mxu0 0
    %1524 = vmatmul.mubr.bf16.gmra.mxu0 %v1486
    %v1525 = vpop.f32.mrf.mxu0
    %v1526 = vadd.f32 0.0, %v1525
    %v1527 = vpop.f32.mrf.mxu0
    %v1528 = vpop.f32.mrf.mxu0
    %v1529 = vpop.f32.mrf.mxu0
    %1530 = vdwg.mxu0
    %v1532 = vsel %vm1207, %v51, 0
    %v1535 = vsel %vm1211, %v1202, 0
    %1537 = vmatprep.subr.bf16.mxu0 0
    %1538 = vmatpush1.bf16.msra.mxu0 0
    %1539 = vmatprep.subr.bf16.mxu0 0
    %1540 = vmatpush1.bf16.msra.mxu0 0
    %1541 = vmatprep.subr.bf16.mxu0 0
    %1542 = vmatpush1.bf16.msra.mxu0 0
    %1543 = vmatprep.subr.bf16.mxu0 0
    %1544 = vmatpush1.bf16.msra.mxu0 0
    %1545 = vmatprep.subr.bf16.mxu0 0
    %1546 = vmatpush1.bf16.msra.mxu0 0
    %1547 = vmatprep.subr.bf16.mxu0 0
    %1548 = vmatpush1.bf16.msra.mxu0 0
    %1549 = vmatprep.subr.bf16.mxu0 0
    %1550 = vmatpush1.bf16.msra.mxu0 0
    %1551 = vmatprep.subr.bf16.mxu0 0
    %1552 = vmatpush1.bf16.msra.mxu0 %v1535
    %1553 = vmatprep.subr.bf16.mxu0 0
    %1554 = vmatpush2.bf16.msra.mxu0 0
    %1555 = vmatprep.subr.bf16.mxu0 0
    %1556 = vmatpush2.bf16.msra.mxu0 0
    %1557 = vmatprep.subr.bf16.mxu0 0
    %1558 = vmatpush2.bf16.msra.mxu0 0
    %1559 = vmatprep.subr.bf16.mxu0 0
    %1560 = vmatpush2.bf16.msra.mxu0 0
    %1561 = vmatprep.subr.bf16.mxu0 0
    %1562 = vmatpush2.bf16.msra.mxu0 0
    %1563 = vmatprep.subr.bf16.mxu0 0
    %1564 = vmatpush2.bf16.msra.mxu0 0
    %1565 = vmatprep.subr.bf16.mxu0 0
    %1566 = vmatpush2.bf16.msra.mxu0 0
    %1567 = vmatprep.subr.bf16.mxu0 0
    %1568 = vmatpush2.bf16.msra.mxu0 0
    %1569 = vmatprep.mubr.bf16.mxu0 0
    %1570 = vmatmul.mubr.bf16.gmra.mxu0 %v1532
    %v1571 = vpop.f32.mrf.mxu0
    %v1572 = vadd.f32 0.0, %v1571
    %v1573 = vpop.f32.mrf.mxu0
    %v1574 = vpop.f32.mrf.mxu0
    %v1575 = vpop.f32.mrf.mxu0
    %1576 = vdwg.mxu0
    %v1578 = vsel %vm1207, %v52, 0
    %v1581 = vsel %vm1211, %v1183, 0
    %1583 = vmatprep.subr.bf16.mxu0 0
    %1584 = vmatpush1.bf16.msra.mxu0 0
    %1585 = vmatprep.subr.bf16.mxu0 0
    %1586 = vmatpush1.bf16.msra.mxu0 0
    %1587 = vmatprep.subr.bf16.mxu0 0
    %1588 = vmatpush1.bf16.msra.mxu0 0
    %1589 = vmatprep.subr.bf16.mxu0 0
    %1590 = vmatpush1.bf16.msra.mxu0 0
    %1591 = vmatprep.subr.bf16.mxu0 0
    %1592 = vmatpush1.bf16.msra.mxu0 0
    %1593 = vmatprep.subr.bf16.mxu0 0
    %1594 = vmatpush1.bf16.msra.mxu0 0
    %1595 = vmatprep.subr.bf16.mxu0 0
    %1596 = vmatpush1.bf16.msra.mxu0 0
    %1597 = vmatprep.subr.bf16.mxu0 0
    %1598 = vmatpush1.bf16.msra.mxu0 %v1581
    %1599 = vmatprep.subr.bf16.mxu0 0
    %1600 = vmatpush2.bf16.msra.mxu0 0
    %1601 = vmatprep.subr.bf16.mxu0 0
    %1602 = vmatpush2.bf16.msra.mxu0 0
    %1603 = vmatprep.subr.bf16.mxu0 0
    %1604 = vmatpush2.bf16.msra.mxu0 0
    %1605 = vmatprep.subr.bf16.mxu0 0
    %1606 = vmatpush2.bf16.msra.mxu0 0
    %1607 = vmatprep.subr.bf16.mxu0 0
    %1608 = vmatpush2.bf16.msra.mxu0 0
    %1609 = vmatprep.subr.bf16.mxu0 0
    %1610 = vmatpush2.bf16.msra.mxu0 0
    %1611 = vmatprep.subr.bf16.mxu0 0
    %1612 = vmatpush2.bf16.msra.mxu0 0
    %1613 = vmatprep.subr.bf16.mxu0 0
    %1614 = vmatpush2.bf16.msra.mxu0 0
    %1615 = vmatprep.mubr.bf16.mxu0 0
    %1616 = vmatmul.mubr.bf16.gmra.mxu0 %v1578
    %v1617 = vpop.f32.mrf.mxu0
    %v1618 = vadd.f32 0.0, %v1617
    %v1619 = vpop.f32.mrf.mxu0
    %v1620 = vpop.f32.mrf.mxu0
    %v1621 = vpop.f32.mrf.mxu0
    %1622 = vdwg.mxu0
    %v1624 = vsel %vm1207, %v53, 0
    %v1627 = vsel %vm1211, %v1203, 0
    %1629 = vmatprep.subr.bf16.mxu0 0
    %1630 = vmatpush1.bf16.msra.mxu0 0
    %1631 = vmatprep.subr.bf16.mxu0 0
    %1632 = vmatpush1.bf16.msra.mxu0 0
    %1633 = vmatprep.subr.bf16.mxu0 0
    %1634 = vmatpush1.bf16.msra.mxu0 0
    %1635 = vmatprep.subr.bf16.mxu0 0
    %1636 = vmatpush1.bf16.msra.mxu0 0
    %1637 = vmatprep.subr.bf16.mxu0 0
    %1638 = vmatpush1.bf16.msra.mxu0 0
    %1639 = vmatprep.subr.bf16.mxu0 0
    %1640 = vmatpush1.bf16.msra.mxu0 0
    %1641 = vmatprep.subr.bf16.mxu0 0
    %1642 = vmatpush1.bf16.msra.mxu0 0
    %1643 = vmatprep.subr.bf16.mxu0 0
    %1644 = vmatpush1.bf16.msra.mxu0 %v1627
    %1645 = vmatprep.subr.bf16.mxu0 0
    %1646 = vmatpush2.bf16.msra.mxu0 0
    %1647 = vmatprep.subr.bf16.mxu0 0
    %1648 = vmatpush2.bf16.msra.mxu0 0
    %1649 = vmatprep.subr.bf16.mxu0 0
    %1650 = vmatpush2.bf16.msra.mxu0 0
    %1651 = vmatprep.subr.bf16.mxu0 0
    %1652 = vmatpush2.bf16.msra.mxu0 0
    %1653 = vmatprep.subr.bf16.mxu0 0
    %1654 = vmatpush2.bf16.msra.mxu0 0
    %1655 = vmatprep.subr.bf16.mxu0 0
    %1656 = vmatpush2.bf16.msra.mxu0 0
    %1657 = vmatprep.subr.bf16.mxu0 0
    %1658 = vmatpush2.bf16.msra.mxu0 0
    %1659 = vmatprep.subr.bf16.mxu0 0
    %1660 = vmatpush2.bf16.msra.mxu0 0
    %1661 = vmatprep.mubr.bf16.mxu0 0
    %1662 = vmatmul.mubr.bf16.gmra.mxu0 %v1624
    %v1663 = vpop.f32.mrf.mxu0
    %v1664 = vadd.f32 0.0, %v1663
    %v1665 = vpop.f32.mrf.mxu0
    %v1666 = vpop.f32.mrf.mxu0
    %v1667 = vpop.f32.mrf.mxu0
    %1668 = vdwg.mxu0
    %v1670 = vsel %vm1207, %v54, 0
    %v1673 = vsel %vm1211, %v1184, 0
    %1675 = vmatprep.subr.bf16.mxu0 0
    %1676 = vmatpush1.bf16.msra.mxu0 0
    %1677 = vmatprep.subr.bf16.mxu0 0
    %1678 = vmatpush1.bf16.msra.mxu0 0
    %1679 = vmatprep.subr.bf16.mxu0 0
    %1680 = vmatpush1.bf16.msra.mxu0 0
    %1681 = vmatprep.subr.bf16.mxu0 0
    %1682 = vmatpush1.bf16.msra.mxu0 0
    %1683 = vmatprep.subr.bf16.mxu0 0
    %1684 = vmatpush1.bf16.msra.mxu0 0
    %1685 = vmatprep.subr.bf16.mxu0 0
    %1686 = vmatpush1.bf16.msra.mxu0 0
    %1687 = vmatprep.subr.bf16.mxu0 0
    %1688 = vmatpush1.bf16.msra.mxu0 0
    %1689 = vmatprep.subr.bf16.mxu0 0
    %1690 = vmatpush1.bf16.msra.mxu0 %v1673
    %1691 = vmatprep.subr.bf16.mxu0 0
    %1692 = vmatpush2.bf16.msra.mxu0 0
    %1693 = vmatprep.subr.bf16.mxu0 0
    %1694 = vmatpush2.bf16.msra.mxu0 0
    %1695 = vmatprep.subr.bf16.mxu0 0
    %1696 = vmatpush2.bf16.msra.mxu0 0
    %1697 = vmatprep.subr.bf16.mxu0 0
    %1698 = vmatpush2.bf16.msra.mxu0 0
    %1699 = vmatprep.subr.bf16.mxu0 0
    %1700 = vmatpush2.bf16.msra.mxu0 0
    %1701 = vmatprep.subr.bf16.mxu0 0
    %1702 = vmatpush2.bf16.msra.mxu0 0
    %1703 = vmatprep.subr.bf16.mxu0 0
    %1704 = vmatpush2.bf16.msra.mxu0 0
    %1705 = vmatprep.subr.bf16.mxu0 0
    %1706 = vmatpush2.bf16.msra.mxu0 0
    %1707 = vmatprep.mubr.bf16.mxu0 0
    %1708 = vmatmul.mubr.bf16.gmra.mxu0 %v1670
    %v1709 = vpop.f32.mrf.mxu0
    %v1710 = vadd.f32 0.0, %v1709
    %v1711 = vpop.f32.mrf.mxu0
    %v1712 = vpop.f32.mrf.mxu0
    %v1713 = vpop.f32.mrf.mxu0
    %1714 = vdwg.mxu0
    %v1716 = vsel %vm1207, %v55, 0
    %v1719 = vsel %vm1211, %v1204, 0
    %1721 = vmatprep.subr.bf16.mxu0 0
    %1722 = vmatpush1.bf16.msra.mxu0 0
    %1723 = vmatprep.subr.bf16.mxu0 0
    %1724 = vmatpush1.bf16.msra.mxu0 0
    %1725 = vmatprep.subr.bf16.mxu0 0
    %1726 = vmatpush1.bf16.msra.mxu0 0
    %1727 = vmatprep.subr.bf16.mxu0 0
    %1728 = vmatpush1.bf16.msra.mxu0 0
    %1729 = vmatprep.subr.bf16.mxu0 0
    %1730 = vmatpush1.bf16.msra.mxu0 0
    %1731 = vmatprep.subr.bf16.mxu0 0
    %1732 = vmatpush1.bf16.msra.mxu0 0
    %1733 = vmatprep.subr.bf16.mxu0 0
    %1734 = vmatpush1.bf16.msra.mxu0 0
    %1735 = vmatprep.subr.bf16.mxu0 0
    %1736 = vmatpush1.bf16.msra.mxu0 %v1719
    %1737 = vmatprep.subr.bf16.mxu0 0
    %1738 = vmatpush2.bf16.msra.mxu0 0
    %1739 = vmatprep.subr.bf16.mxu0 0
    %1740 = vmatpush2.bf16.msra.mxu0 0
    %1741 = vmatprep.subr.bf16.mxu0 0
    %1742 = vmatpush2.bf16.msra.mxu0 0
    %1743 = vmatprep.subr.bf16.mxu0 0
    %1744 = vmatpush2.bf16.msra.mxu0 0
    %1745 = vmatprep.subr.bf16.mxu0 0
    %1746 = vmatpush2.bf16.msra.mxu0 0
    %1747 = vmatprep.subr.bf16.mxu0 0
    %1748 = vmatpush2.bf16.msra.mxu0 0
    %1749 = vmatprep.subr.bf16.mxu0 0
    %1750 = vmatpush2.bf16.msra.mxu0 0
    %1751 = vmatprep.subr.bf16.mxu0 0
    %1752 = vmatpush2.bf16.msra.mxu0 0
    %1753 = vmatprep.mubr.bf16.mxu0 0
    %1754 = vmatmul.mubr.bf16.gmra.mxu0 %v1716
    %v1755 = vpop.f32.mrf.mxu0
    %v1756 = vadd.f32 0.0, %v1755
    %v1757 = vpop.f32.mrf.mxu0
    %v1758 = vpop.f32.mrf.mxu0
    %v1759 = vpop.f32.mrf.mxu0
    %1760 = vdwg.mxu0
    %v1762 = vsel %vm1207, %v56, 0
    %v1765 = vsel %vm1211, %v1185, 0
    %1767 = vmatprep.subr.bf16.mxu0 0
    %1768 = vmatpush1.bf16.msra.mxu0 0
    %1769 = vmatprep.subr.bf16.mxu0 0
    %1770 = vmatpush1.bf16.msra.mxu0 0
    %1771 = vmatprep.subr.bf16.mxu0 0
    %1772 = vmatpush1.bf16.msra.mxu0 0
    %1773 = vmatprep.subr.bf16.mxu0 0
    %1774 = vmatpush1.bf16.msra.mxu0 0
    %1775 = vmatprep.subr.bf16.mxu0 0
    %1776 = vmatpush1.bf16.msra.mxu0 0
    %1777 = vmatprep.subr.bf16.mxu0 0
    %1778 = vmatpush1.bf16.msra.mxu0 0
    %1779 = vmatprep.subr.bf16.mxu0 0
    %1780 = vmatpush1.bf16.msra.mxu0 0
    %1781 = vmatprep.subr.bf16.mxu0 0
    %1782 = vmatpush1.bf16.msra.mxu0 %v1765
    %1783 = vmatprep.subr.bf16.mxu0 0
    %1784 = vmatpush2.bf16.msra.mxu0 0
    %1785 = vmatprep.subr.bf16.mxu0 0
    %1786 = vmatpush2.bf16.msra.mxu0 0
    %1787 = vmatprep.subr.bf16.mxu0 0
    %1788 = vmatpush2.bf16.msra.mxu0 0
    %1789 = vmatprep.subr.bf16.mxu0 0
    %1790 = vmatpush2.bf16.msra.mxu0 0
    %1791 = vmatprep.subr.bf16.mxu0 0
    %1792 = vmatpush2.bf16.msra.mxu0 0
    %1793 = vmatprep.subr.bf16.mxu0 0
    %1794 = vmatpush2.bf16.msra.mxu0 0
    %1795 = vmatprep.subr.bf16.mxu0 0
    %1796 = vmatpush2.bf16.msra.mxu0 0
    %1797 = vmatprep.subr.bf16.mxu0 0
    %1798 = vmatpush2.bf16.msra.mxu0 0
    %1799 = vmatprep.mubr.bf16.mxu0 0
    %1800 = vmatmul.mubr.bf16.gmra.mxu0 %v1762
    %v1801 = vpop.f32.mrf.mxu0
    %v1802 = vadd.f32 0.0, %v1801
    %v1803 = vpop.f32.mrf.mxu0
    %v1804 = vpop.f32.mrf.mxu0
    %v1805 = vpop.f32.mrf.mxu0
    %1806 = vdwg.mxu0
    %v1808 = vsel %vm1207, %v57, 0
    %v1811 = vsel %vm1211, %v1205, 0
    %1813 = vmatprep.subr.bf16.mxu0 0
    %1814 = vmatpush1.bf16.msra.mxu0 0
    %1815 = vmatprep.subr.bf16.mxu0 0
    %1816 = vmatpush1.bf16.msra.mxu0 0
    %1817 = vmatprep.subr.bf16.mxu0 0
    %1818 = vmatpush1.bf16.msra.mxu0 0
    %1819 = vmatprep.subr.bf16.mxu0 0
    %1820 = vmatpush1.bf16.msra.mxu0 0
    %1821 = vmatprep.subr.bf16.mxu0 0
    %1822 = vmatpush1.bf16.msra.mxu0 0
    %1823 = vmatprep.subr.bf16.mxu0 0
    %1824 = vmatpush1.bf16.msra.mxu0 0
    %1825 = vmatprep.subr.bf16.mxu0 0
    %1826 = vmatpush1.bf16.msra.mxu0 0
    %1827 = vmatprep.subr.bf16.mxu0 0
    %1828 = vmatpush1.bf16.msra.mxu0 %v1811
    %1829 = vmatprep.subr.bf16.mxu0 0
    %1830 = vmatpush2.bf16.msra.mxu0 0
    %1831 = vmatprep.subr.bf16.mxu0 0
    %1832 = vmatpush2.bf16.msra.mxu0 0
    %1833 = vmatprep.subr.bf16.mxu0 0
    %1834 = vmatpush2.bf16.msra.mxu0 0
    %1835 = vmatprep.subr.bf16.mxu0 0
    %1836 = vmatpush2.bf16.msra.mxu0 0
    %1837 = vmatprep.subr.bf16.mxu0 0
    %1838 = vmatpush2.bf16.msra.mxu0 0
    %1839 = vmatprep.subr.bf16.mxu0 0
    %1840 = vmatpush2.bf16.msra.mxu0 0
    %1841 = vmatprep.subr.bf16.mxu0 0
    %1842 = vmatpush2.bf16.msra.mxu0 0
    %1843 = vmatprep.subr.bf16.mxu0 0
    %1844 = vmatpush2.bf16.msra.mxu0 0
    %1845 = vmatprep.mubr.bf16.mxu0 0
    %1846 = vmatmul.mubr.bf16.gmra.mxu0 %v1808
    %v1847 = vpop.f32.mrf.mxu0
    %v1848 = vadd.f32 0.0, %v1847
    %v1849 = vpop.f32.mrf.mxu0
    %v1850 = vpop.f32.mrf.mxu0
    %v1851 = vpop.f32.mrf.mxu0
    %1852 = vdwg.mxu0
    %v1854 = vsel %vm1207, %v58, 0
    %v1857 = vsel %vm1211, %v1186, 0
    %1859 = vmatprep.subr.bf16.mxu0 0
    %1860 = vmatpush1.bf16.msra.mxu0 0
    %1861 = vmatprep.subr.bf16.mxu0 0
    %1862 = vmatpush1.bf16.msra.mxu0 0
    %1863 = vmatprep.subr.bf16.mxu0 0
    %1864 = vmatpush1.bf16.msra.mxu0 0
    %1865 = vmatprep.subr.bf16.mxu0 0
    %1866 = vmatpush1.bf16.msra.mxu0 0
    %1867 = vmatprep.subr.bf16.mxu0 0
    %1868 = vmatpush1.bf16.msra.mxu0 0
    %1869 = vmatprep.subr.bf16.mxu0 0
    %1870 = vmatpush1.bf16.msra.mxu0 0
    %1871 = vmatprep.subr.bf16.mxu0 0
    %1872 = vmatpush1.bf16.msra.mxu0 0
    %1873 = vmatprep.subr.bf16.mxu0 0
    %1874 = vmatpush1.bf16.msra.mxu0 %v1857
    %1875 = vmatprep.subr.bf16.mxu0 0
    %1876 = vmatpush2.bf16.msra.mxu0 0
    %1877 = vmatprep.subr.bf16.mxu0 0
    %1878 = vmatpush2.bf16.msra.mxu0 0
    %1879 = vmatprep.subr.bf16.mxu0 0
    %1880 = vmatpush2.bf16.msra.mxu0 0
    %1881 = vmatprep.subr.bf16.mxu0 0
    %1882 = vmatpush2.bf16.msra.mxu0 0
    %1883 = vmatprep.subr.bf16.mxu0 0
    %1884 = vmatpush2.bf16.msra.mxu0 0
    %1885 = vmatprep.subr.bf16.mxu0 0
    %1886 = vmatpush2.bf16.msra.mxu0 0
    %1887 = vmatprep.subr.bf16.mxu0 0
    %1888 = vmatpush2.bf16.msra.mxu0 0
    %1889 = vmatprep.subr.bf16.mxu0 0
    %1890 = vmatpush2.bf16.msra.mxu0 0
    %1891 = vmatprep.mubr.bf16.mxu0 0
    %1892 = vmatmul.mubr.bf16.gmra.mxu0 %v1854
    %v1893 = vpop.f32.mrf.mxu0
    %v1894 = vadd.f32 0.0, %v1893
    %v1895 = vpop.f32.mrf.mxu0
    %v1896 = vpop.f32.mrf.mxu0
    %v1897 = vpop.f32.mrf.mxu0
    %1898 = vdwg.mxu0
    %v1900 = vsel %vm1207, %v59, 0
    %v1903 = vsel %vm1211, %v1206, 0
    %1905 = vmatprep.subr.bf16.mxu0 0
    %1906 = vmatpush1.bf16.msra.mxu0 0
    %1907 = vmatprep.subr.bf16.mxu0 0
    %1908 = vmatpush1.bf16.msra.mxu0 0
    %1909 = vmatprep.subr.bf16.mxu0 0
    %1910 = vmatpush1.bf16.msra.mxu0 0
    %1911 = vmatprep.subr.bf16.mxu0 0
    %1912 = vmatpush1.bf16.msra.mxu0 0
    %1913 = vmatprep.subr.bf16.mxu0 0
    %1914 = vmatpush1.bf16.msra.mxu0 0
    %1915 = vmatprep.subr.bf16.mxu0 0
    %1916 = vmatpush1.bf16.msra.mxu0 0
    %1917 = vmatprep.subr.bf16.mxu0 0
    %1918 = vmatpush1.bf16.msra.mxu0 0
    %1919 = vmatprep.subr.bf16.mxu0 0
    %1920 = vmatpush1.bf16.msra.mxu0 %v1903
    %1921 = vmatprep.subr.bf16.mxu0 0
    %1922 = vmatpush2.bf16.msra.mxu0 0
    %1923 = vmatprep.subr.bf16.mxu0 0
    %1924 = vmatpush2.bf16.msra.mxu0 0
    %1925 = vmatprep.subr.bf16.mxu0 0
    %1926 = vmatpush2.bf16.msra.mxu0 0
    %1927 = vmatprep.subr.bf16.mxu0 0
    %1928 = vmatpush2.bf16.msra.mxu0 0
    %1929 = vmatprep.subr.bf16.mxu0 0
    %1930 = vmatpush2.bf16.msra.mxu0 0
    %1931 = vmatprep.subr.bf16.mxu0 0
    %1932 = vmatpush2.bf16.msra.mxu0 0
    %1933 = vmatprep.subr.bf16.mxu0 0
    %1934 = vmatpush2.bf16.msra.mxu0 0
    %1935 = vmatprep.subr.bf16.mxu0 0
    %1936 = vmatpush2.bf16.msra.mxu0 0
    %1937 = vmatprep.mubr.bf16.mxu0 0
    %1938 = vmatmul.mubr.bf16.gmra.mxu0 %v1900
    %v1939 = vpop.f32.mrf.mxu0
    %v1940 = vadd.f32 0.0, %v1939
    %v1941 = vpop.f32.mrf.mxu0
    %v1942 = vpop.f32.mrf.mxu0
    %v1943 = vpop.f32.mrf.mxu0
    %1944 = vdwg.mxu0
    %v1945 = vmax.f32 %v1250, 0.0
    %v1946 = vmax.f32 %v1296, 0.0
    %v1947 = vmax.f32 %v1342, 0.0
    %v1948 = vmax.f32 %v1388, 0.0
    %v1949 = vmax.f32 %v1434, 0.0
    %v1950 = vmax.f32 %v1480, 0.0
    %v1951 = vmax.f32 %v1526, 0.0
    %v1952 = vmax.f32 %v1572, 0.0
    %v1953 = vmax.f32 %v1618, 0.0
    %v1954 = vmax.f32 %v1664, 0.0
    %v1955 = vmax.f32 %v1710, 0.0
    %v1956 = vmax.f32 %v1756, 0.0
    %v1957 = vmax.f32 %v1802, 0.0
    %v1958 = vmax.f32 %v1848, 0.0
    %v1959 = vmax.f32 %v1894, 0.0
    %v1960 = vmax.f32 %v1940, 0.0
    %v1961 = vsel %vm87, %v1945, 0.0
    %v1962 = vsel %vm87, %v1946, 0.0
    %v1963 = vadd.f32 %v1961, %v1962
    %v1964 = vsel %vm87, %v1947, 0.0
    %v1965 = vsel %vm87, %v1948, 0.0
    %v1966 = vadd.f32 %v1964, %v1965
    %v1967 = vsel %vm87, %v1949, 0.0
    %v1968 = vsel %vm87, %v1950, 0.0
    %v1969 = vadd.f32 %v1967, %v1968
    %v1970 = vsel %vm87, %v1951, 0.0
    %v1971 = vsel %vm87, %v1952, 0.0
    %v1972 = vadd.f32 %v1970, %v1971
    %v1973 = vsel %vm87, %v1953, 0.0
    %v1974 = vsel %vm87, %v1954, 0.0
    %v1975 = vadd.f32 %v1973, %v1974
    %v1976 = vsel %vm87, %v1955, 0.0
    %v1977 = vsel %vm87, %v1956, 0.0
    %v1978 = vadd.f32 %v1976, %v1977
    %v1979 = vsel %vm87, %v1957, 0.0
    %v1980 = vsel %vm87, %v1958, 0.0
    %v1981 = vadd.f32 %v1979, %v1980
    %v1982 = vsel %vm87, %v1959, 0.0
    %v1983 = vsel %vm87, %v1960, 0.0
    %v1984 = vadd.f32 %v1982, %v1983
    %v1985 = vmul.f32 %v1963, 0.5
    %v1986 = vmul.f32 %v1966, 0.5
    %v1987 = vmul.f32 %v1969, 0.5
    %v1988 = vmul.f32 %v1972, 0.5
    %v1989 = vmul.f32 %v1975, 0.5
    %v1990 = vmul.f32 %v1978, 0.5
    %v1991 = vmul.f32 %v1981, 0.5
    %v1992 = vmul.f32 %v1984, 0.5
    %v1993 = vadd.f32 %v1985, %v60
    %v1994 = vadd.f32 %v1986, %v61
    %v1995 = vadd.f32 %v1987, %v62
    %v1996 = vadd.f32 %v1988, %v63
    %v1997 = vadd.f32 %v1989, %v64
    %v1998 = vadd.f32 %v1990, %v65
    %v1999 = vadd.f32 %v1991, %v66
    %v2000 = vadd.f32 %v1992, %v67
    %v2001 = vpack.c.bf16 %v1994, %v1993
    %v2002 = vpack.c.bf16 %v1996, %v1995
    %v2003 = vpack.c.bf16 %v1998, %v1997
    %v2004 = vpack.c.bf16 %v2000, %v1999
    %s2005 = scalar_lea.vmem %s2, 16
    %v2006 = vld [vmem:[%s2005] sm:$0xf]
    %v2007 = vld [vmem:[%s2005 + $0x4] sm:$0xf]
    %s2008 = scalar_lea.vmem %s3, 2
    %v2009 = vld [vmem:[%s2008] sm:$0x1]
    %v2011 = vlaneseq
    %v2012 = vshrl.u32 %v2011, 7
    %v2013 = vsub.s32 0, %v2012
    %v2014 = vrot.slane %v2009, %v2013
    %v2018 = vunpack.c.l.b16 %v2006
    %v2019 = vunpack.c.l.b16 %v2007
    %v2020 = vpack.c.b16 %v2019, %v2018
    %v2023 = vsel %vm87, %v2001, 0
    %v2026 = vsel %vm87, %v2002, 0
    %v2029 = vsel %vm87, %v2003, 0
    %v2032 = vsel %vm87, %v2004, 0
    %2034 = vmatprep.subr.bf16.mxu0 0
    %2035 = vmatpush1.bf16.msra.mxu0 0
    %2036 = vmatprep.subr.bf16.mxu0 0
    %2037 = vmatpush1.bf16.msra.mxu0 0
    %2038 = vmatprep.subr.bf16.mxu0 0
    %2039 = vmatpush1.bf16.msra.mxu0 0
    %2040 = vmatprep.subr.bf16.mxu0 0
    %2041 = vmatpush1.bf16.msra.mxu0 0
    %2042 = vmatprep.subr.bf16.mxu0 0
    %2043 = vmatpush1.bf16.msra.mxu0 0
    %2044 = vmatprep.subr.bf16.mxu0 0
    %2045 = vmatpush1.bf16.msra.mxu0 0
    %2046 = vmatprep.subr.bf16.mxu0 0
    %2047 = vmatpush1.bf16.msra.mxu0 0
    %2048 = vmatprep.subr.bf16.mxu0 0
    %2049 = vmatpush1.bf16.msra.mxu0 %v2020
    %2050 = vmatprep.subr.bf16.mxu0 0
    %2051 = vmatpush2.bf16.msra.mxu0 0
    %2052 = vmatprep.subr.bf16.mxu0 0
    %2053 = vmatpush2.bf16.msra.mxu0 0
    %2054 = vmatprep.subr.bf16.mxu0 0
    %2055 = vmatpush2.bf16.msra.mxu0 0
    %2056 = vmatprep.subr.bf16.mxu0 0
    %2057 = vmatpush2.bf16.msra.mxu0 0
    %2058 = vmatprep.subr.bf16.mxu0 0
    %2059 = vmatpush2.bf16.msra.mxu0 0
    %2060 = vmatprep.subr.bf16.mxu0 0
    %2061 = vmatpush2.bf16.msra.mxu0 0
    %2062 = vmatprep.subr.bf16.mxu0 0
    %2063 = vmatpush2.bf16.msra.mxu0 0
    %2064 = vmatprep.subr.bf16.mxu0 0
    %2065 = vmatpush2.bf16.msra.mxu0 0
    %2066 = vmatprep.mubr.bf16.mxu0 0
    %2067 = vmatmul.mubr.bf16.gmra.mxu0 %v2023
    %v2068 = vpop.f32.mrf.mxu0
    %v2069 = vadd.f32 %v2014, %v2068
    %v2070 = vpop.f32.mrf.mxu0
    %v2071 = vpop.f32.mrf.mxu0
    %v2072 = vadd.f32 %v2014, %v2071
    %v2073 = vpop.f32.mrf.mxu0
    %2074 = vmatprep.mubr.bf16.mxu0 0
    %2075 = vmatmul.mubr.bf16.gmra.mxu0 %v2026
    %v2076 = vpop.f32.mrf.mxu0
    %v2077 = vadd.f32 %v2014, %v2076
    %v2078 = vpop.f32.mrf.mxu0
    %v2079 = vpop.f32.mrf.mxu0
    %v2080 = vadd.f32 %v2014, %v2079
    %v2081 = vpop.f32.mrf.mxu0
    %2082 = vmatprep.mubr.bf16.mxu0 0
    %2083 = vmatmul.mubr.bf16.gmra.mxu0 %v2029
    %v2084 = vpop.f32.mrf.mxu0
    %v2085 = vadd.f32 %v2014, %v2084
    %v2086 = vpop.f32.mrf.mxu0
    %v2087 = vpop.f32.mrf.mxu0
    %v2088 = vadd.f32 %v2014, %v2087
    %v2089 = vpop.f32.mrf.mxu0
    %2090 = vmatprep.mubr.bf16.mxu0 0
    %2091 = vmatmul.mubr.bf16.gmra.mxu0 %v2032
    %v2092 = vpop.f32.mrf.mxu0
    %v2093 = vadd.f32 %v2014, %v2092
    %v2094 = vpop.f32.mrf.mxu0
    %v2095 = vpop.f32.mrf.mxu0
    %v2096 = vadd.f32 %v2014, %v2095
    %v2097 = vpop.f32.mrf.mxu0
    %2098 = vdwg.mxu0
    %v2099 = vpack.c.bf16 %v2072, %v2069
    %v2100 = vpack.c.bf16 %v2080, %v2077
    %v2101 = vpack.c.bf16 %v2088, %v2085
    %v2102 = vpack.c.bf16 %v2096, %v2093
    %s2103 = scalar_lea.vmem [#allocation2], 256
    %v2104 = vld [vmem:[%s2103] sm:$0xf]
    %v2105 = vld [vmem:[%s2103 + $0x4] sm:$0xf]
    %v2106 = vld [vmem:[%s2103 + $0x8] sm:$0xf]
    %v2107 = vld [vmem:[%s2103 + $0xc] sm:$0xf]
    %v2108 = vld [vmem:[%s2103 + $0x10] sm:$0xf]
    %v2109 = vld [vmem:[%s2103 + $0x14] sm:$0xf]
    %v2110 = vld [vmem:[%s2103 + $0x18] sm:$0xf]
    %v2111 = vld [vmem:[%s2103 + $0x1c] sm:$0xf]
    %v2112 = vld [vmem:[%s2103 + $0x20] sm:$0xf]
    %v2113 = vld [vmem:[%s2103 + $0x24] sm:$0xf]
    %v2114 = vld [vmem:[%s2103 + $0x28] sm:$0xf]
    %v2115 = vld [vmem:[%s2103 + $0x2c] sm:$0xf]
    %v2116 = vld [vmem:[%s2103 + $0x30] sm:$0xf]
    %v2117 = vld [vmem:[%s2103 + $0x34] sm:$0xf]
    %v2118 = vld [vmem:[%s2103 + $0x38] sm:$0xf]
    %v2119 = vld [vmem:[%s2103 + $0x3c] sm:$0xf]
    %s2120 = scalar_lea.vmem %s5, 4
    %v2121 = vld [vmem:[%s2120] sm:$0x1]
    %v2123 = vlaneseq
    %v2124 = vshrl.u32 %v2123, 7
    %v2125 = vsub.s32 0, %v2124
    %v2126 = vrot.slane %v2121, %v2125
    %v2144 = vunpack.c.l.b16 %v2104
    %v2145 = vunpack.c.l.b16 %v2105
    %v2146 = vunpack.c.l.b16 %v2106
    %v2147 = vunpack.c.l.b16 %v2107
    %v2148 = vunpack.c.l.b16 %v2108
    %v2149 = vunpack.c.l.b16 %v2109
    %v2150 = vunpack.c.l.b16 %v2110
    %v2151 = vunpack.c.l.b16 %v2111
    %v2152 = vunpack.c.l.b16 %v2112
    %v2153 = vunpack.c.l.b16 %v2113
    %v2154 = vunpack.c.l.b16 %v2114
    %v2155 = vunpack.c.l.b16 %v2115
    %v2156 = vunpack.c.l.b16 %v2116
    %v2157 = vunpack.c.l.b16 %v2117
    %v2158 = vunpack.c.l.b16 %v2118
    %v2159 = vunpack.c.l.b16 %v2119
    %v2160 = vpack.c.b16 %v2145, %v2144
    %v2161 = vpack.c.b16 %v2147, %v2146
    %v2162 = vpack.c.b16 %v2149, %v2148
    %v2163 = vpack.c.b16 %v2151, %v2150
    %v2164 = vpack.c.b16 %v2153, %v2152
    %v2165 = vpack.c.b16 %v2155, %v2154
    %v2166 = vpack.c.b16 %v2157, %v2156
    %v2167 = vpack.c.b16 %v2159, %v2158
    %2176 = vmatprep.subr.bf16.mxu0 0
    %2177 = vmatpush1.bf16.msra.mxu0 %v2167
    %2178 = vmatprep.subr.bf16.mxu0 0
    %2179 = vmatpush1.bf16.msra.mxu0 %v2166
    %2180 = vmatprep.subr.bf16.mxu0 0
    %2181 = vmatpush1.bf16.msra.mxu0 %v2165
    %2182 = vmatprep.subr.bf16.mxu0 0
    %2183 = vmatpush1.bf16.msra.mxu0 %v2164
    %2184 = vmatprep.subr.bf16.mxu0 0
    %2185 = vmatpush1.bf16.msra.mxu0 %v2163
    %2186 = vmatprep.subr.bf16.mxu0 0
    %2187 = vmatpush1.bf16.msra.mxu0 %v2162
    %2188 = vmatprep.subr.bf16.mxu0 0
    %2189 = vmatpush1.bf16.msra.mxu0 %v2161
    %2190 = vmatprep.subr.bf16.mxu0 0
    %2191 = vmatpush1.bf16.msra.mxu0 %v2160
    %2192 = vmatprep.subr.bf16.mxu0 0
    %2193 = vmatpush2.bf16.msra.mxu0 0
    %2194 = vmatprep.subr.bf16.mxu0 0
    %2195 = vmatpush2.bf16.msra.mxu0 0
    %2196 = vmatprep.subr.bf16.mxu0 0
    %2197 = vmatpush2.bf16.msra.mxu0 0
    %2198 = vmatprep.subr.bf16.mxu0 0
    %2199 = vmatpush2.bf16.msra.mxu0 0
    %2200 = vmatprep.subr.bf16.mxu0 0
    %2201 = vmatpush2.bf16.msra.mxu0 0
    %2202 = vmatprep.subr.bf16.mxu0 0
    %2203 = vmatpush2.bf16.msra.mxu0 0
    %2204 = vmatprep.subr.bf16.mxu0 0
    %2205 = vmatpush2.bf16.msra.mxu0 0
    %2206 = vmatprep.subr.bf16.mxu0 0
    %2207 = vmatpush2.bf16.msra.mxu0 0
    %2208 = vmatprep.mubr.bf16.mxu0 0
    %2209 = vmatmul.mubr.bf16.gmra.mxu0 %v2099
    %v2210 = vpop.f32.mrf.mxu0
    %v2211 = vadd.f32 %v2126, %v2210
    %v2212 = vpop.f32.mrf.mxu0
    %v2213 = vpop.f32.mrf.mxu0
    %v2214 = vadd.f32 %v2126, %v2213
    %v2215 = vpop.f32.mrf.mxu0
    %2216 = vmatprep.mubr.bf16.mxu0 0
    %2217 = vmatmul.mubr.bf16.gmra.mxu0 %v2100
    %v2218 = vpop.f32.mrf.mxu0
    %v2219 = vadd.f32 %v2126, %v2218
    %v2220 = vpop.f32.mrf.mxu0
    %v2221 = vpop.f32.mrf.mxu0
    %v2222 = vadd.f32 %v2126, %v2221
    %v2223 = vpop.f32.mrf.mxu0
    %2224 = vmatprep.mubr.bf16.mxu0 0
    %2225 = vmatmul.mubr.bf16.gmra.mxu0 %v2101
    %v2226 = vpop.f32.mrf.mxu0
    %v2227 = vadd.f32 %v2126, %v2226
    %v2228 = vpop.f32.mrf.mxu0
    %v2229 = vpop.f32.mrf.mxu0
    %v2230 = vadd.f32 %v2126, %v2229
    %v2231 = vpop.f32.mrf.mxu0
    %2232 = vmatprep.mubr.bf16.mxu0 0
    %2233 = vmatmul.mubr.bf16.gmra.mxu0 %v2102
    %v2234 = vpop.f32.mrf.mxu0
    %v2235 = vadd.f32 %v2126, %v2234
    %v2236 = vpop.f32.mrf.mxu0
    %v2237 = vpop.f32.mrf.mxu0
    %v2238 = vadd.f32 %v2126, %v2237
    %v2239 = vpop.f32.mrf.mxu0
    %2240 = vdwg.mxu0
    %v2241 = vmax.f32 %v2211, 0.0
    %v2242 = vmax.f32 %v2214, 0.0
    %v2243 = vmax.f32 %v2219, 0.0
    %v2244 = vmax.f32 %v2222, 0.0
    %v2245 = vmax.f32 %v2227, 0.0
    %v2246 = vmax.f32 %v2230, 0.0
    %v2247 = vmax.f32 %v2235, 0.0
    %v2248 = vmax.f32 %v2238, 0.0
    %v2249 = vadd.f32 %v2069, %v2241
    %v2250 = vadd.f32 %v2072, %v2242
    %v2251 = vadd.f32 %v2077, %v2243
    %v2252 = vadd.f32 %v2080, %v2244
    %v2253 = vadd.f32 %v2085, %v2245
    %v2254 = vadd.f32 %v2088, %v2246
    %v2255 = vadd.f32 %v2093, %v2247
    %v2256 = vadd.f32 %v2096, %v2248
    %v2257 = vpack.c.bf16 %v2250, %v2249
    %v2258 = vpack.c.bf16 %v2252, %v2251
    %v2259 = vpack.c.bf16 %v2254, %v2253
    %v2260 = vpack.c.bf16 %v2256, %v2255
    %s2261 = scalar_lea.vmem [#allocation2], 320
    %v2262 = vld [vmem:[%s2261] sm:$0xf]
    %v2263 = vld [vmem:[%s2261 + $0x4] sm:$0xf]
    %v2264 = vld [vmem:[%s2261 + $0x8] sm:$0xf]
    %v2265 = vld [vmem:[%s2261 + $0xc] sm:$0xf]
    %v2266 = vld [vmem:[%s2261 + $0x10] sm:$0xf]
    %v2267 = vld [vmem:[%s2261 + $0x14] sm:$0xf]
    %v2268 = vld [vmem:[%s2261 + $0x18] sm:$0xf]
    %v2269 = vld [vmem:[%s2261 + $0x1c] sm:$0xf]
    %v2270 = vld [vmem:[%s2261 + $0x20] sm:$0xf]
    %v2271 = vld [vmem:[%s2261 + $0x24] sm:$0xf]
    %v2272 = vld [vmem:[%s2261 + $0x28] sm:$0xf]
    %v2273 = vld [vmem:[%s2261 + $0x2c] sm:$0xf]
    %v2274 = vld [vmem:[%s2261 + $0x30] sm:$0xf]
    %v2275 = vld [vmem:[%s2261 + $0x34] sm:$0xf]
    %v2276 = vld [vmem:[%s2261 + $0x38] sm:$0xf]
    %v2277 = vld [vmem:[%s2261 + $0x3c] sm:$0xf]
    %s2278 = scalar_lea.vmem %s5, 5
    %v2279 = vld [vmem:[%s2278] sm:$0x1]
    %v2281 = vlaneseq
    %v2282 = vshrl.u32 %v2281, 7
    %v2283 = vsub.s32 0, %v2282
    %v2284 = vrot.slane %v2279, %v2283
    %v2302 = vunpack.c.l.b16 %v2262
    %v2303 = vunpack.c.l.b16 %v2263
    %v2304 = vunpack.c.l.b16 %v2264
    %v2305 = vunpack.c.l.b16 %v2265
    %v2306 = vunpack.c.l.b16 %v2266
    %v2307 = vunpack.c.l.b16 %v2267
    %v2308 = vunpack.c.l.b16 %v2268
    %v2309 = vunpack.c.l.b16 %v2269
    %v2310 = vunpack.c.l.b16 %v2270
    %v2311 = vunpack.c.l.b16 %v2271
    %v2312 = vunpack.c.l.b16 %v2272
    %v2313 = vunpack.c.l.b16 %v2273
    %v2314 = vunpack.c.l.b16 %v2274
    %v2315 = vunpack.c.l.b16 %v2275
    %v2316 = vunpack.c.l.b16 %v2276
    %v2317 = vunpack.c.l.b16 %v2277
    %v2318 = vpack.c.b16 %v2303, %v2302
    %v2319 = vpack.c.b16 %v2305, %v2304
    %v2320 = vpack.c.b16 %v2307, %v2306
    %v2321 = vpack.c.b16 %v2309, %v2308
    %v2322 = vpack.c.b16 %v2311, %v2310
    %v2323 = vpack.c.b16 %v2313, %v2312
    %v2324 = vpack.c.b16 %v2315, %v2314
    %v2325 = vpack.c.b16 %v2317, %v2316
    %2334 = vmatprep.subr.bf16.mxu0 0
    %2335 = vmatpush1.bf16.msra.mxu0 %v2325
    %2336 = vmatprep.subr.bf16.mxu0 0
    %2337 = vmatpush1.bf16.msra.mxu0 %v2324
    %2338 = vmatprep.subr.bf16.mxu0 0
    %2339 = vmatpush1.bf16.msra.mxu0 %v2323
    %2340 = vmatprep.subr.bf16.mxu0 0
    %2341 = vmatpush1.bf16.msra.mxu0 %v2322
    %2342 = vmatprep.subr.bf16.mxu0 0
    %2343 = vmatpush1.bf16.msra.mxu0 %v2321
    %2344 = vmatprep.subr.bf16.mxu0 0
    %2345 = vmatpush1.bf16.msra.mxu0 %v2320
    %2346 = vmatprep.subr.bf16.mxu0 0
    %2347 = vmatpush1.bf16.msra.mxu0 %v2319
    %2348 = vmatprep.subr.bf16.mxu0 0
    %2349 = vmatpush1.bf16.msra.mxu0 %v2318
    %2350 = vmatprep.subr.bf16.mxu0 0
    %2351 = vmatpush2.bf16.msra.mxu0 0
    %2352 = vmatprep.subr.bf16.mxu0 0
    %2353 = vmatpush2.bf16.msra.mxu0 0
    %2354 = vmatprep.subr.bf16.mxu0 0
    %2355 = vmatpush2.bf16.msra.mxu0 0
    %2356 = vmatprep.subr.bf16.mxu0 0
    %2357 = vmatpush2.bf16.msra.mxu0 0
    %2358 = vmatprep.subr.bf16.mxu0 0
    %2359 = vmatpush2.bf16.msra.mxu0 0
    %2360 = vmatprep.subr.bf16.mxu0 0
    %2361 = vmatpush2.bf16.msra.mxu0 0
    %2362 = vmatprep.subr.bf16.mxu0 0
    %2363 = vmatpush2.bf16.msra.mxu0 0
    %2364 = vmatprep.subr.bf16.mxu0 0
    %2365 = vmatpush2.bf16.msra.mxu0 0
    %2366 = vmatprep.mubr.bf16.mxu0 0
    %2367 = vmatmul.mubr.bf16.gmra.mxu0 %v2257
    %v2368 = vpop.f32.mrf.mxu0
    %v2369 = vadd.f32 %v2284, %v2368
    %v2370 = vpop.f32.mrf.mxu0
    %v2371 = vpop.f32.mrf.mxu0
    %v2372 = vadd.f32 %v2284, %v2371
    %v2373 = vpop.f32.mrf.mxu0
    %2374 = vmatprep.mubr.bf16.mxu0 0
    %2375 = vmatmul.mubr.bf16.gmra.mxu0 %v2258
    %v2376 = vpop.f32.mrf.mxu0
    %v2377 = vadd.f32 %v2284, %v2376
    %v2378 = vpop.f32.mrf.mxu0
    %v2379 = vpop.f32.mrf.mxu0
    %v2380 = vadd.f32 %v2284, %v2379
    %v2381 = vpop.f32.mrf.mxu0
    %2382 = vmatprep.mubr.bf16.mxu0 0
    %2383 = vmatmul.mubr.bf16.gmra.mxu0 %v2259
    %v2384 = vpop.f32.mrf.mxu0
    %v2385 = vadd.f32 %v2284, %v2384
    %v2386 = vpop.f32.mrf.mxu0
    %v2387 = vpop.f32.mrf.mxu0
    %v2388 = vadd.f32 %v2284, %v2387
    %v2389 = vpop.f32.mrf.mxu0
    %2390 = vmatprep.mubr.bf16.mxu0 0
    %2391 = vmatmul.mubr.bf16.gmra.mxu0 %v2260
    %v2392 = vpop.f32.mrf.mxu0
    %v2393 = vadd.f32 %v2284, %v2392
    %v2394 = vpop.f32.mrf.mxu0
    %v2395 = vpop.f32.mrf.mxu0
    %v2396 = vadd.f32 %v2284, %v2395
    %v2397 = vpop.f32.mrf.mxu0
    %2398 = vdwg.mxu0
    %v2399 = vmax.f32 %v2369, 0.0
    %v2400 = vmax.f32 %v2372, 0.0
    %v2401 = vmax.f32 %v2377, 0.0
    %v2402 = vmax.f32 %v2380, 0.0
    %v2403 = vmax.f32 %v2385, 0.0
    %v2404 = vmax.f32 %v2388, 0.0
    %v2405 = vmax.f32 %v2393, 0.0
    %v2406 = vmax.f32 %v2396, 0.0
    %v2407 = vadd.f32 %v2249, %v2399
    %v2408 = vadd.f32 %v2250, %v2400
    %v2409 = vadd.f32 %v2251, %v2401
    %v2410 = vadd.f32 %v2252, %v2402
    %v2411 = vadd.f32 %v2253, %v2403
    %v2412 = vadd.f32 %v2254, %v2404
    %v2413 = vadd.f32 %v2255, %v2405
    %v2414 = vadd.f32 %v2256, %v2406
    %v2415 = vpack.c.bf16 %v2408, %v2407
    %v2416 = vpack.c.bf16 %v2410, %v2409
    %v2417 = vpack.c.bf16 %v2412, %v2411
    %v2418 = vpack.c.bf16 %v2414, %v2413
    %s2419 = scalar_lea.vmem %s6, 128
    %v2420 = vld [vmem:[%s2419] sm:$0xf]
    %v2421 = vld [vmem:[%s2419 + $0x4] sm:$0xf]
    %v2422 = vld [vmem:[%s2419 + $0x8] sm:$0xf]
    %v2423 = vld [vmem:[%s2419 + $0xc] sm:$0xf]
    %v2424 = vld [vmem:[%s2419 + $0x10] sm:$0xf]
    %v2425 = vld [vmem:[%s2419 + $0x14] sm:$0xf]
    %v2426 = vld [vmem:[%s2419 + $0x18] sm:$0xf]
    %v2427 = vld [vmem:[%s2419 + $0x1c] sm:$0xf]
    %v2428 = vld [vmem:[%s2419 + $0x20] sm:$0xf]
    %v2429 = vld [vmem:[%s2419 + $0x24] sm:$0xf]
    %v2430 = vld [vmem:[%s2419 + $0x28] sm:$0xf]
    %v2431 = vld [vmem:[%s2419 + $0x2c] sm:$0xf]
    %v2432 = vld [vmem:[%s2419 + $0x30] sm:$0xf]
    %v2433 = vld [vmem:[%s2419 + $0x34] sm:$0xf]
    %v2434 = vld [vmem:[%s2419 + $0x38] sm:$0xf]
    %v2435 = vld [vmem:[%s2419 + $0x3c] sm:$0xf]
    %s2436 = scalar_lea.vmem %s7, 2
    %v2437 = vld [vmem:[%s2436] sm:$0x1]
    %v2439 = vlaneseq
    %v2440 = vshrl.u32 %v2439, 7
    %v2441 = vsub.s32 0, %v2440
    %v2442 = vrot.slane %v2437, %v2441
    %v2460 = vunpack.c.l.b16 %v2420
    %v2461 = vunpack.c.l.b16 %v2421
    %v2462 = vunpack.c.l.b16 %v2422
    %v2463 = vunpack.c.l.b16 %v2423
    %v2464 = vunpack.c.l.b16 %v2424
    %v2465 = vunpack.c.l.b16 %v2425
    %v2466 = vunpack.c.l.b16 %v2426
    %v2467 = vunpack.c.l.b16 %v2427
    %v2468 = vunpack.c.l.b16 %v2428
    %v2469 = vunpack.c.l.b16 %v2429
    %v2470 = vunpack.c.l.b16 %v2430
    %v2471 = vunpack.c.l.b16 %v2431
    %v2472 = vunpack.c.l.b16 %v2432
    %v2473 = vunpack.c.l.b16 %v2433
    %v2474 = vunpack.c.l.b16 %v2434
    %v2475 = vunpack.c.l.b16 %v2435
    %v2476 = vpack.c.b16 %v2461, %v2460
    %v2477 = vpack.c.b16 %v2463, %v2462
    %v2478 = vpack.c.b16 %v2465, %v2464
    %v2479 = vpack.c.b16 %v2467, %v2466
    %v2480 = vpack.c.b16 %v2469, %v2468
    %v2481 = vpack.c.b16 %v2471, %v2470
    %v2482 = vpack.c.b16 %v2473, %v2472
    %v2483 = vpack.c.b16 %v2475, %v2474
    %2492 = vmatprep.subr.bf16.mxu0 0
    %2493 = vmatpush1.bf16.msra.mxu0 %v2483
    %2494 = vmatprep.subr.bf16.mxu0 0
    %2495 = vmatpush1.bf16.msra.mxu0 %v2482
    %2496 = vmatprep.subr.bf16.mxu0 0
    %2497 = vmatpush1.bf16.msra.mxu0 %v2481
    %2498 = vmatprep.subr.bf16.mxu0 0
    %2499 = vmatpush1.bf16.msra.mxu0 %v2480
    %2500 = vmatprep.subr.bf16.mxu0 0
    %2501 = vmatpush1.bf16.msra.mxu0 %v2479
    %2502 = vmatprep.subr.bf16.mxu0 0
    %2503 = vmatpush1.bf16.msra.mxu0 %v2478
    %2504 = vmatprep.subr.bf16.mxu0 0
    %2505 = vmatpush1.bf16.msra.mxu0 %v2477
    %2506 = vmatprep.subr.bf16.mxu0 0
    %2507 = vmatpush1.bf16.msra.mxu0 %v2476
    %2508 = vmatprep.subr.bf16.mxu0 0
    %2509 = vmatpush2.bf16.msra.mxu0 0
    %2510 = vmatprep.subr.bf16.mxu0 0
    %2511 = vmatpush2.bf16.msra.mxu0 0
    %2512 = vmatprep.subr.bf16.mxu0 0
    %2513 = vmatpush2.bf16.msra.mxu0 0
    %2514 = vmatprep.subr.bf16.mxu0 0
    %2515 = vmatpush2.bf16.msra.mxu0 0
    %2516 = vmatprep.subr.bf16.mxu0 0
    %2517 = vmatpush2.bf16.msra.mxu0 0
    %2518 = vmatprep.subr.bf16.mxu0 0
    %2519 = vmatpush2.bf16.msra.mxu0 0
    %2520 = vmatprep.subr.bf16.mxu0 0
    %2521 = vmatpush2.bf16.msra.mxu0 0
    %2522 = vmatprep.subr.bf16.mxu0 0
    %2523 = vmatpush2.bf16.msra.mxu0 0
    %2524 = vmatprep.mubr.bf16.mxu0 0
    %2525 = vmatmul.mubr.bf16.gmra.mxu0 %v2415
    %v2526 = vpop.f32.mrf.mxu0
    %v2527 = vadd.f32 %v2442, %v2526
    %v2528 = vpop.f32.mrf.mxu0
    %v2529 = vpop.f32.mrf.mxu0
    %v2530 = vadd.f32 %v2442, %v2529
    %v2531 = vpop.f32.mrf.mxu0
    %2532 = vmatprep.mubr.bf16.mxu0 0
    %2533 = vmatmul.mubr.bf16.gmra.mxu0 %v2416
    %v2534 = vpop.f32.mrf.mxu0
    %v2535 = vadd.f32 %v2442, %v2534
    %v2536 = vpop.f32.mrf.mxu0
    %v2537 = vpop.f32.mrf.mxu0
    %v2538 = vadd.f32 %v2442, %v2537
    %v2539 = vpop.f32.mrf.mxu0
    %2540 = vmatprep.mubr.bf16.mxu0 0
    %2541 = vmatmul.mubr.bf16.gmra.mxu0 %v2417
    %v2542 = vpop.f32.mrf.mxu0
    %v2543 = vadd.f32 %v2442, %v2542
    %v2544 = vpop.f32.mrf.mxu0
    %v2545 = vpop.f32.mrf.mxu0
    %v2546 = vadd.f32 %v2442, %v2545
    %v2547 = vpop.f32.mrf.mxu0
    %2548 = vmatprep.mubr.bf16.mxu0 0
    %2549 = vmatmul.mubr.bf16.gmra.mxu0 %v2418
    %v2550 = vpop.f32.mrf.mxu0
    %v2551 = vadd.f32 %v2442, %v2550
    %v2552 = vpop.f32.mrf.mxu0
    %v2553 = vpop.f32.mrf.mxu0
    %v2554 = vadd.f32 %v2442, %v2553
    %v2555 = vpop.f32.mrf.mxu0
    %2556 = vdwg.mxu0
    %v2557 = vpack.c.bf16 %v2530, %v2527
    %v2558 = vpack.c.bf16 %v2538, %v2535
    %v2559 = vpack.c.bf16 %v2546, %v2543
    %v2560 = vpack.c.bf16 %v2554, %v2551
    %s2561 = scalar_lea.vmem %s2, 24
    %v2562 = vld [vmem:[%s2561] sm:$0xf]
    %v2563 = vld [vmem:[%s2561 + $0x4] sm:$0xf]
    %s2564 = scalar_lea.vmem %s3, 3
    %v2565 = vld [vmem:[%s2564] sm:$0x1]
    %v2567 = vlaneseq
    %v2568 = vshrl.u32 %v2567, 7
    %v2569 = vsub.s32 0, %v2568
    %v2570 = vrot.slane %v2565, %v2569
    %v2574 = vunpack.c.l.b16 %v2562
    %v2575 = vunpack.c.l.b16 %v2563
    %v2576 = vpack.c.b16 %v2575, %v2574
    %2578 = vmatprep.subr.bf16.mxu0 0
    %2579 = vmatpush1.bf16.msra.mxu0 0
    %2580 = vmatprep.subr.bf16.mxu0 0
    %2581 = vmatpush1.bf16.msra.mxu0 0
    %2582 = vmatprep.subr.bf16.mxu0 0
    %2583 = vmatpush1.bf16.msra.mxu0 0
    %2584 = vmatprep.subr.bf16.mxu0 0
    %2585 = vmatpush1.bf16.msra.mxu0 0
    %2586 = vmatprep.subr.bf16.mxu0 0
    %2587 = vmatpush1.bf16.msra.mxu0 0
    %2588 = vmatprep.subr.bf16.mxu0 0
    %2589 = vmatpush1.bf16.msra.mxu0 0
    %2590 = vmatprep.subr.bf16.mxu0 0
    %2591 = vmatpush1.bf16.msra.mxu0 0
    %2592 = vmatprep.subr.bf16.mxu0 0
    %2593 = vmatpush1.bf16.msra.mxu0 %v2576
    %2594 = vmatprep.subr.bf16.mxu0 0
    %2595 = vmatpush2.bf16.msra.mxu0 0
    %2596 = vmatprep.subr.bf16.mxu0 0
    %2597 = vmatpush2.bf16.msra.mxu0 0
    %2598 = vmatprep.subr.bf16.mxu0 0
    %2599 = vmatpush2.bf16.msra.mxu0 0
    %2600 = vmatprep.subr.bf16.mxu0 0
    %2601 = vmatpush2.bf16.msra.mxu0 0
    %2602 = vmatprep.subr.bf16.mxu0 0
    %2603 = vmatpush2.bf16.msra.mxu0 0
    %2604 = vmatprep.subr.bf16.mxu0 0
    %2605 = vmatpush2.bf16.msra.mxu0 0
    %2606 = vmatprep.subr.bf16.mxu0 0
    %2607 = vmatpush2.bf16.msra.mxu0 0
    %2608 = vmatprep.subr.bf16.mxu0 0
    %2609 = vmatpush2.bf16.msra.mxu0 0
    %2610 = vmatprep.mubr.bf16.mxu0 0
    %2611 = vmatmul.mubr.bf16.gmra.mxu0 %v2023
    %v2612 = vpop.f32.mrf.mxu0
    %v2613 = vadd.f32 %v2570, %v2612
    %v2614 = vpop.f32.mrf.mxu0
    %v2615 = vpop.f32.mrf.mxu0
    %v2616 = vadd.f32 %v2570, %v2615
    %v2617 = vpop.f32.mrf.mxu0
    %2618 = vmatprep.mubr.bf16.mxu0 0
    %2619 = vmatmul.mubr.bf16.gmra.mxu0 %v2026
    %v2620 = vpop.f32.mrf.mxu0
    %v2621 = vadd.f32 %v2570, %v2620
    %v2622 = vpop.f32.mrf.mxu0
    %v2623 = vpop.f32.mrf.mxu0
    %v2624 = vadd.f32 %v2570, %v2623
    %v2625 = vpop.f32.mrf.mxu0
    %2626 = vmatprep.mubr.bf16.mxu0 0
    %2627 = vmatmul.mubr.bf16.gmra.mxu0 %v2029
    %v2628 = vpop.f32.mrf.mxu0
    %v2629 = vadd.f32 %v2570, %v2628
    %v2630 = vpop.f32.mrf.mxu0
    %v2631 = vpop.f32.mrf.mxu0
    %v2632 = vadd.f32 %v2570, %v2631
    %v2633 = vpop.f32.mrf.mxu0
    %2634 = vmatprep.mubr.bf16.mxu0 0
    %2635 = vmatmul.mubr.bf16.gmra.mxu0 %v2032
    %v2636 = vpop.f32.mrf.mxu0
    %v2637 = vadd.f32 %v2570, %v2636
    %v2638 = vpop.f32.mrf.mxu0
    %v2639 = vpop.f32.mrf.mxu0
    %v2640 = vadd.f32 %v2570, %v2639
    %v2641 = vpop.f32.mrf.mxu0
    %2642 = vdwg.mxu0
    %v2643 = vpack.c.bf16 %v2616, %v2613
    %v2644 = vpack.c.bf16 %v2624, %v2621
    %v2645 = vpack.c.bf16 %v2632, %v2629
    %v2646 = vpack.c.bf16 %v2640, %v2637
    %s2647 = scalar_lea.vmem [#allocation2], 384
    %v2648 = vld [vmem:[%s2647] sm:$0xf]
    %v2649 = vld [vmem:[%s2647 + $0x4] sm:$0xf]
    %v2650 = vld [vmem:[%s2647 + $0x8] sm:$0xf]
    %v2651 = vld [vmem:[%s2647 + $0xc] sm:$0xf]
    %v2652 = vld [vmem:[%s2647 + $0x10] sm:$0xf]
    %v2653 = vld [vmem:[%s2647 + $0x14] sm:$0xf]
    %v2654 = vld [vmem:[%s2647 + $0x18] sm:$0xf]
    %v2655 = vld [vmem:[%s2647 + $0x1c] sm:$0xf]
    %v2656 = vld [vmem:[%s2647 + $0x20] sm:$0xf]
    %v2657 = vld [vmem:[%s2647 + $0x24] sm:$0xf]
    %v2658 = vld [vmem:[%s2647 + $0x28] sm:$0xf]
    %v2659 = vld [vmem:[%s2647 + $0x2c] sm:$0xf]
    %v2660 = vld [vmem:[%s2647 + $0x30] sm:$0xf]
    %v2661 = vld [vmem:[%s2647 + $0x34] sm:$0xf]
    %v2662 = vld [vmem:[%s2647 + $0x38] sm:$0xf]
    %v2663 = vld [vmem:[%s2647 + $0x3c] sm:$0xf]
    %s2664 = scalar_lea.vmem %s5, 6
    %v2665 = vld [vmem:[%s2664] sm:$0x1]
    %v2667 = vlaneseq
    %v2668 = vshrl.u32 %v2667, 7
    %v2669 = vsub.s32 0, %v2668
    %v2670 = vrot.slane %v2665, %v2669
    %v2688 = vunpack.c.l.b16 %v2648
    %v2689 = vunpack.c.l.b16 %v2649
    %v2690 = vunpack.c.l.b16 %v2650
    %v2691 = vunpack.c.l.b16 %v2651
    %v2692 = vunpack.c.l.b16 %v2652
    %v2693 = vunpack.c.l.b16 %v2653
    %v2694 = vunpack.c.l.b16 %v2654
    %v2695 = vunpack.c.l.b16 %v2655
    %v2696 = vunpack.c.l.b16 %v2656
    %v2697 = vunpack.c.l.b16 %v2657
    %v2698 = vunpack.c.l.b16 %v2658
    %v2699 = vunpack.c.l.b16 %v2659
    %v2700 = vunpack.c.l.b16 %v2660
    %v2701 = vunpack.c.l.b16 %v2661
    %v2702 = vunpack.c.l.b16 %v2662
    %v2703 = vunpack.c.l.b16 %v2663
    %v2704 = vpack.c.b16 %v2689, %v2688
    %v2705 = vpack.c.b16 %v2691, %v2690
    %v2706 = vpack.c.b16 %v2693, %v2692
    %v2707 = vpack.c.b16 %v2695, %v2694
    %v2708 = vpack.c.b16 %v2697, %v2696
    %v2709 = vpack.c.b16 %v2699, %v2698
    %v2710 = vpack.c.b16 %v2701, %v2700
    %v2711 = vpack.c.b16 %v2703, %v2702
    %2720 = vmatprep.subr.bf16.mxu0 0
    %2721 = vmatpush1.bf16.msra.mxu0 %v2711
    %2722 = vmatprep.subr.bf16.mxu0 0
    %2723 = vmatpush1.bf16.msra.mxu0 %v2710
    %2724 = vmatprep.subr.bf16.mxu0 0
    %2725 = vmatpush1.bf16.msra.mxu0 %v2709
    %2726 = vmatprep.subr.bf16.mxu0 0
    %2727 = vmatpush1.bf16.msra.mxu0 %v2708
    %2728 = vmatprep.subr.bf16.mxu0 0
    %2729 = vmatpush1.bf16.msra.mxu0 %v2707
    %2730 = vmatprep.subr.bf16.mxu0 0
    %2731 = vmatpush1.bf16.msra.mxu0 %v2706
    %2732 = vmatprep.subr.bf16.mxu0 0
    %2733 = vmatpush1.bf16.msra.mxu0 %v2705
    %2734 = vmatprep.subr.bf16.mxu0 0
    %2735 = vmatpush1.bf16.msra.mxu0 %v2704
    %2736 = vmatprep.subr.bf16.mxu0 0
    %2737 = vmatpush2.bf16.msra.mxu0 0
    %2738 = vmatprep.subr.bf16.mxu0 0
    %2739 = vmatpush2.bf16.msra.mxu0 0
    %2740 = vmatprep.subr.bf16.mxu0 0
    %2741 = vmatpush2.bf16.msra.mxu0 0
    %2742 = vmatprep.subr.bf16.mxu0 0
    %2743 = vmatpush2.bf16.msra.mxu0 0
    %2744 = vmatprep.subr.bf16.mxu0 0
    %2745 = vmatpush2.bf16.msra.mxu0 0
    %2746 = vmatprep.subr.bf16.mxu0 0
    %2747 = vmatpush2.bf16.msra.mxu0 0
    %2748 = vmatprep.subr.bf16.mxu0 0
    %2749 = vmatpush2.bf16.msra.mxu0 0
    %2750 = vmatprep.subr.bf16.mxu0 0
    %2751 = vmatpush2.bf16.msra.mxu0 0
    %2752 = vmatprep.mubr.bf16.mxu0 0
    %2753 = vmatmul.mubr.bf16.gmra.mxu0 %v2643
    %v2754 = vpop.f32.mrf.mxu0
    %v2755 = vadd.f32 %v2670, %v2754
    %v2756 = vpop.f32.mrf.mxu0
    %v2757 = vpop.f32.mrf.mxu0
    %v2758 = vadd.f32 %v2670, %v2757
    %v2759 = vpop.f32.mrf.mxu0
    %2760 = vmatprep.mubr.bf16.mxu0 0
    %2761 = vmatmul.mubr.bf16.gmra.mxu0 %v2644
    %v2762 = vpop.f32.mrf.mxu0
    %v2763 = vadd.f32 %v2670, %v2762
    %v2764 = vpop.f32.mrf.mxu0
    %v2765 = vpop.f32.mrf.mxu0
    %v2766 = vadd.f32 %v2670, %v2765
    %v2767 = vpop.f32.mrf.mxu0
    %2768 = vmatprep.mubr.bf16.mxu0 0
    %2769 = vmatmul.mubr.bf16.gmra.mxu0 %v2645
    %v2770 = vpop.f32.mrf.mxu0
    %v2771 = vadd.f32 %v2670, %v2770
    %v2772 = vpop.f32.mrf.mxu0
    %v2773 = vpop.f32.mrf.mxu0
    %v2774 = vadd.f32 %v2670, %v2773
    %v2775 = vpop.f32.mrf.mxu0
    %2776 = vmatprep.mubr.bf16.mxu0 0
    %2777 = vmatmul.mubr.bf16.gmra.mxu0 %v2646
    %v2778 = vpop.f32.mrf.mxu0
    %v2779 = vadd.f32 %v2670, %v2778
    %v2780 = vpop.f32.mrf.mxu0
    %v2781 = vpop.f32.mrf.mxu0
    %v2782 = vadd.f32 %v2670, %v2781
    %v2783 = vpop.f32.mrf.mxu0
    %2784 = vdwg.mxu0
    %v2785 = vmax.f32 %v2755, 0.0
    %v2786 = vmax.f32 %v2758, 0.0
    %v2787 = vmax.f32 %v2763, 0.0
    %v2788 = vmax.f32 %v2766, 0.0
    %v2789 = vmax.f32 %v2771, 0.0
    %v2790 = vmax.f32 %v2774, 0.0
    %v2791 = vmax.f32 %v2779, 0.0
    %v2792 = vmax.f32 %v2782, 0.0
    %v2793 = vadd.f32 %v2613, %v2785
    %v2794 = vadd.f32 %v2616, %v2786
    %v2795 = vadd.f32 %v2621, %v2787
    %v2796 = vadd.f32 %v2624, %v2788
    %v2797 = vadd.f32 %v2629, %v2789
    %v2798 = vadd.f32 %v2632, %v2790
    %v2799 = vadd.f32 %v2637, %v2791
    %v2800 = vadd.f32 %v2640, %v2792
    %v2801 = vpack.c.bf16 %v2794, %v2793
    %v2802 = vpack.c.bf16 %v2796, %v2795
    %v2803 = vpack.c.bf16 %v2798, %v2797
    %v2804 = vpack.c.bf16 %v2800, %v2799
    %s2805 = scalar_lea.vmem [#allocation2], 448
    %v2806 = vld [vmem:[%s2805] sm:$0xf]
    %v2807 = vld [vmem:[%s2805 + $0x4] sm:$0xf]
    %v2808 = vld [vmem:[%s2805 + $0x8] sm:$0xf]
    %v2809 = vld [vmem:[%s2805 + $0xc] sm:$0xf]
    %v2810 = vld [vmem:[%s2805 + $0x10] sm:$0xf]
    %v2811 = vld [vmem:[%s2805 + $0x14] sm:$0xf]
    %v2812 = vld [vmem:[%s2805 + $0x18] sm:$0xf]
    %v2813 = vld [vmem:[%s2805 + $0x1c] sm:$0xf]
    %v2814 = vld [vmem:[%s2805 + $0x20] sm:$0xf]
    %v2815 = vld [vmem:[%s2805 + $0x24] sm:$0xf]
    %v2816 = vld [vmem:[%s2805 + $0x28] sm:$0xf]
    %v2817 = vld [vmem:[%s2805 + $0x2c] sm:$0xf]
    %v2818 = vld [vmem:[%s2805 + $0x30] sm:$0xf]
    %v2819 = vld [vmem:[%s2805 + $0x34] sm:$0xf]
    %v2820 = vld [vmem:[%s2805 + $0x38] sm:$0xf]
    %v2821 = vld [vmem:[%s2805 + $0x3c] sm:$0xf]
    %s2822 = scalar_lea.vmem %s5, 7
    %v2823 = vld [vmem:[%s2822] sm:$0x1]
    %v2825 = vlaneseq
    %v2826 = vshrl.u32 %v2825, 7
    %v2827 = vsub.s32 0, %v2826
    %v2828 = vrot.slane %v2823, %v2827
    %v2846 = vunpack.c.l.b16 %v2806
    %v2847 = vunpack.c.l.b16 %v2807
    %v2848 = vunpack.c.l.b16 %v2808
    %v2849 = vunpack.c.l.b16 %v2809
    %v2850 = vunpack.c.l.b16 %v2810
    %v2851 = vunpack.c.l.b16 %v2811
    %v2852 = vunpack.c.l.b16 %v2812
    %v2853 = vunpack.c.l.b16 %v2813
    %v2854 = vunpack.c.l.b16 %v2814
    %v2855 = vunpack.c.l.b16 %v2815
    %v2856 = vunpack.c.l.b16 %v2816
    %v2857 = vunpack.c.l.b16 %v2817
    %v2858 = vunpack.c.l.b16 %v2818
    %v2859 = vunpack.c.l.b16 %v2819
    %v2860 = vunpack.c.l.b16 %v2820
    %v2861 = vunpack.c.l.b16 %v2821
    %v2862 = vpack.c.b16 %v2847, %v2846
    %v2863 = vpack.c.b16 %v2849, %v2848
    %v2864 = vpack.c.b16 %v2851, %v2850
    %v2865 = vpack.c.b16 %v2853, %v2852
    %v2866 = vpack.c.b16 %v2855, %v2854
    %v2867 = vpack.c.b16 %v2857, %v2856
    %v2868 = vpack.c.b16 %v2859, %v2858
    %v2869 = vpack.c.b16 %v2861, %v2860
    %2878 = vmatprep.subr.bf16.mxu0 0
    %2879 = vmatpush1.bf16.msra.mxu0 %v2869
    %2880 = vmatprep.subr.bf16.mxu0 0
    %2881 = vmatpush1.bf16.msra.mxu0 %v2868
    %2882 = vmatprep.subr.bf16.mxu0 0
    %2883 = vmatpush1.bf16.msra.mxu0 %v2867
    %2884 = vmatprep.subr.bf16.mxu0 0
    %2885 = vmatpush1.bf16.msra.mxu0 %v2866
    %2886 = vmatprep.subr.bf16.mxu0 0
    %2887 = vmatpush1.bf16.msra.mxu0 %v2865
    %2888 = vmatprep.subr.bf16.mxu0 0
    %2889 = vmatpush1.bf16.msra.mxu0 %v2864
    %2890 = vmatprep.subr.bf16.mxu0 0
    %2891 = vmatpush1.bf16.msra.mxu0 %v2863
    %2892 = vmatprep.subr.bf16.mxu0 0
    %2893 = vmatpush1.bf16.msra.mxu0 %v2862
    %2894 = vmatprep.subr.bf16.mxu0 0
    %2895 = vmatpush2.bf16.msra.mxu0 0
    %2896 = vmatprep.subr.bf16.mxu0 0
    %2897 = vmatpush2.bf16.msra.mxu0 0
    %2898 = vmatprep.subr.bf16.mxu0 0
    %2899 = vmatpush2.bf16.msra.mxu0 0
    %2900 = vmatprep.subr.bf16.mxu0 0
    %2901 = vmatpush2.bf16.msra.mxu0 0
    %2902 = vmatprep.subr.bf16.mxu0 0
    %2903 = vmatpush2.bf16.msra.mxu0 0
    %2904 = vmatprep.subr.bf16.mxu0 0
    %2905 = vmatpush2.bf16.msra.mxu0 0
    %2906 = vmatprep.subr.bf16.mxu0 0
    %2907 = vmatpush2.bf16.msra.mxu0 0
    %2908 = vmatprep.subr.bf16.mxu0 0
    %2909 = vmatpush2.bf16.msra.mxu0 0
    %2910 = vmatprep.mubr.bf16.mxu0 0
    %2911 = vmatmul.mubr.bf16.gmra.mxu0 %v2801
    %v2912 = vpop.f32.mrf.mxu0
    %v2913 = vadd.f32 %v2828, %v2912
    %v2914 = vpop.f32.mrf.mxu0
    %v2915 = vpop.f32.mrf.mxu0
    %v2916 = vadd.f32 %v2828, %v2915
    %v2917 = vpop.f32.mrf.mxu0
    %2918 = vmatprep.mubr.bf16.mxu0 0
    %2919 = vmatmul.mubr.bf16.gmra.mxu0 %v2802
    %v2920 = vpop.f32.mrf.mxu0
    %v2921 = vadd.f32 %v2828, %v2920
    %v2922 = vpop.f32.mrf.mxu0
    %v2923 = vpop.f32.mrf.mxu0
    %v2924 = vadd.f32 %v2828, %v2923
    %v2925 = vpop.f32.mrf.mxu0
    %2926 = vmatprep.mubr.bf16.mxu0 0
    %2927 = vmatmul.mubr.bf16.gmra.mxu0 %v2803
    %v2928 = vpop.f32.mrf.mxu0
    %v2929 = vadd.f32 %v2828, %v2928
    %v2930 = vpop.f32.mrf.mxu0
    %v2931 = vpop.f32.mrf.mxu0
    %v2932 = vadd.f32 %v2828, %v2931
    %v2933 = vpop.f32.mrf.mxu0
    %2934 = vmatprep.mubr.bf16.mxu0 0
    %2935 = vmatmul.mubr.bf16.gmra.mxu0 %v2804
    %v2936 = vpop.f32.mrf.mxu0
    %v2937 = vadd.f32 %v2828, %v2936
    %v2938 = vpop.f32.mrf.mxu0
    %v2939 = vpop.f32.mrf.mxu0
    %v2940 = vadd.f32 %v2828, %v2939
    %v2941 = vpop.f32.mrf.mxu0
    %2942 = vdwg.mxu0
    %v2943 = vmax.f32 %v2913, 0.0
    %v2944 = vmax.f32 %v2916, 0.0
    %v2945 = vmax.f32 %v2921, 0.0
    %v2946 = vmax.f32 %v2924, 0.0
    %v2947 = vmax.f32 %v2929, 0.0
    %v2948 = vmax.f32 %v2932, 0.0
    %v2949 = vmax.f32 %v2937, 0.0
    %v2950 = vmax.f32 %v2940, 0.0
    %v2951 = vadd.f32 %v2793, %v2943
    %v2952 = vadd.f32 %v2794, %v2944
    %v2953 = vadd.f32 %v2795, %v2945
    %v2954 = vadd.f32 %v2796, %v2946
    %v2955 = vadd.f32 %v2797, %v2947
    %v2956 = vadd.f32 %v2798, %v2948
    %v2957 = vadd.f32 %v2799, %v2949
    %v2958 = vadd.f32 %v2800, %v2950
    %v2959 = vpack.c.bf16 %v2952, %v2951
    %v2960 = vpack.c.bf16 %v2954, %v2953
    %v2961 = vpack.c.bf16 %v2956, %v2955
    %v2962 = vpack.c.bf16 %v2958, %v2957
    %s2963 = scalar_lea.vmem %s6, 192
    %v2964 = vld [vmem:[%s2963] sm:$0xf]
    %v2965 = vld [vmem:[%s2963 + $0x4] sm:$0xf]
    %v2966 = vld [vmem:[%s2963 + $0x8] sm:$0xf]
    %v2967 = vld [vmem:[%s2963 + $0xc] sm:$0xf]
    %v2968 = vld [vmem:[%s2963 + $0x10] sm:$0xf]
    %v2969 = vld [vmem:[%s2963 + $0x14] sm:$0xf]
    %v2970 = vld [vmem:[%s2963 + $0x18] sm:$0xf]
    %v2971 = vld [vmem:[%s2963 + $0x1c] sm:$0xf]
    %v2972 = vld [vmem:[%s2963 + $0x20] sm:$0xf]
    %v2973 = vld [vmem:[%s2963 + $0x24] sm:$0xf]
    %v2974 = vld [vmem:[%s2963 + $0x28] sm:$0xf]
    %v2975 = vld [vmem:[%s2963 + $0x2c] sm:$0xf]
    %v2976 = vld [vmem:[%s2963 + $0x30] sm:$0xf]
    %v2977 = vld [vmem:[%s2963 + $0x34] sm:$0xf]
    %v2978 = vld [vmem:[%s2963 + $0x38] sm:$0xf]
    %v2979 = vld [vmem:[%s2963 + $0x3c] sm:$0xf]
    %s2980 = scalar_lea.vmem %s7, 3
    %v2981 = vld [vmem:[%s2980] sm:$0x1]
    %v2983 = vlaneseq
    %v2984 = vshrl.u32 %v2983, 7
    %v2985 = vsub.s32 0, %v2984
    %v2986 = vrot.slane %v2981, %v2985
    %v3004 = vunpack.c.l.b16 %v2964
    %v3005 = vunpack.c.l.b16 %v2965
    %v3006 = vunpack.c.l.b16 %v2966
    %v3007 = vunpack.c.l.b16 %v2967
    %v3008 = vunpack.c.l.b16 %v2968
    %v3009 = vunpack.c.l.b16 %v2969
    %v3010 = vunpack.c.l.b16 %v2970
    %v3011 = vunpack.c.l.b16 %v2971
    %v3012 = vunpack.c.l.b16 %v2972
    %v3013 = vunpack.c.l.b16 %v2973
    %v3014 = vunpack.c.l.b16 %v2974
    %v3015 = vunpack.c.l.b16 %v2975
    %v3016 = vunpack.c.l.b16 %v2976
    %v3017 = vunpack.c.l.b16 %v2977
    %v3018 = vunpack.c.l.b16 %v2978
    %v3019 = vunpack.c.l.b16 %v2979
    %v3020 = vpack.c.b16 %v3005, %v3004
    %v3021 = vpack.c.b16 %v3007, %v3006
    %v3022 = vpack.c.b16 %v3009, %v3008
    %v3023 = vpack.c.b16 %v3011, %v3010
    %v3024 = vpack.c.b16 %v3013, %v3012
    %v3025 = vpack.c.b16 %v3015, %v3014
    %v3026 = vpack.c.b16 %v3017, %v3016
    %v3027 = vpack.c.b16 %v3019, %v3018
    %3036 = vmatprep.subr.bf16.mxu0 0
    %3037 = vmatpush1.bf16.msra.mxu0 %v3027
    %3038 = vmatprep.subr.bf16.mxu0 0
    %3039 = vmatpush1.bf16.msra.mxu0 %v3026
    %3040 = vmatprep.subr.bf16.mxu0 0
    %3041 = vmatpush1.bf16.msra.mxu0 %v3025
    %3042 = vmatprep.subr.bf16.mxu0 0
    %3043 = vmatpush1.bf16.msra.mxu0 %v3024
    %3044 = vmatprep.subr.bf16.mxu0 0
    %3045 = vmatpush1.bf16.msra.mxu0 %v3023
    %3046 = vmatprep.subr.bf16.mxu0 0
    %3047 = vmatpush1.bf16.msra.mxu0 %v3022
    %3048 = vmatprep.subr.bf16.mxu0 0
    %3049 = vmatpush1.bf16.msra.mxu0 %v3021
    %3050 = vmatprep.subr.bf16.mxu0 0
    %3051 = vmatpush1.bf16.msra.mxu0 %v3020
    %3052 = vmatprep.subr.bf16.mxu0 0
    %3053 = vmatpush2.bf16.msra.mxu0 0
    %3054 = vmatprep.subr.bf16.mxu0 0
    %3055 = vmatpush2.bf16.msra.mxu0 0
    %3056 = vmatprep.subr.bf16.mxu0 0
    %3057 = vmatpush2.bf16.msra.mxu0 0
    %3058 = vmatprep.subr.bf16.mxu0 0
    %3059 = vmatpush2.bf16.msra.mxu0 0
    %3060 = vmatprep.subr.bf16.mxu0 0
    %3061 = vmatpush2.bf16.msra.mxu0 0
    %3062 = vmatprep.subr.bf16.mxu0 0
    %3063 = vmatpush2.bf16.msra.mxu0 0
    %3064 = vmatprep.subr.bf16.mxu0 0
    %3065 = vmatpush2.bf16.msra.mxu0 0
    %3066 = vmatprep.subr.bf16.mxu0 0
    %3067 = vmatpush2.bf16.msra.mxu0 0
    %3068 = vmatprep.mubr.bf16.mxu0 0
    %3069 = vmatmul.mubr.bf16.gmra.mxu0 %v2959
    %v3070 = vpop.f32.mrf.mxu0
    %v3071 = vadd.f32 %v2986, %v3070
    %v3072 = vpop.f32.mrf.mxu0
    %v3073 = vpop.f32.mrf.mxu0
    %v3074 = vadd.f32 %v2986, %v3073
    %v3075 = vpop.f32.mrf.mxu0
    %3076 = vmatprep.mubr.bf16.mxu0 0
    %3077 = vmatmul.mubr.bf16.gmra.mxu0 %v2960
    %v3078 = vpop.f32.mrf.mxu0
    %v3079 = vadd.f32 %v2986, %v3078
    %v3080 = vpop.f32.mrf.mxu0
    %v3081 = vpop.f32.mrf.mxu0
    %v3082 = vadd.f32 %v2986, %v3081
    %v3083 = vpop.f32.mrf.mxu0
    %3084 = vmatprep.mubr.bf16.mxu0 0
    %3085 = vmatmul.mubr.bf16.gmra.mxu0 %v2961
    %v3086 = vpop.f32.mrf.mxu0
    %v3087 = vadd.f32 %v2986, %v3086
    %v3088 = vpop.f32.mrf.mxu0
    %v3089 = vpop.f32.mrf.mxu0
    %v3090 = vadd.f32 %v2986, %v3089
    %v3091 = vpop.f32.mrf.mxu0
    %3092 = vmatprep.mubr.bf16.mxu0 0
    %3093 = vmatmul.mubr.bf16.gmra.mxu0 %v2962
    %v3094 = vpop.f32.mrf.mxu0
    %v3095 = vadd.f32 %v2986, %v3094
    %v3096 = vpop.f32.mrf.mxu0
    %v3097 = vpop.f32.mrf.mxu0
    %v3098 = vadd.f32 %v2986, %v3097
    %v3099 = vpop.f32.mrf.mxu0
    %3100 = vdwg.mxu0
    %v3101 = vpack.c.bf16 %v3074, %v3071
    %v3102 = vpack.c.bf16 %v3082, %v3079
    %v3103 = vpack.c.bf16 %v3090, %v3087
    %v3104 = vpack.c.bf16 %v3098, %v3095
    %v3109 = vunpack.c.l.b16 %v2557
    %v3110 = vunpack.c.h.b16 %v2557
    %v3111 = vunpack.c.l.b16 %v2558
    %v3112 = vunpack.c.h.b16 %v2558
    %v3113 = vunpack.c.l.b16 %v2559
    %v3114 = vunpack.c.h.b16 %v2559
    %v3115 = vunpack.c.l.b16 %v2560
    %v3116 = vunpack.c.h.b16 %v2560
    %v3117 = vpack.c.b16 %v3109, %v3109
    %v3118 = vpack.c.b16 %v3110, %v3110
    %v3119 = vpack.c.b16 %v3111, %v3111
    %v3120 = vpack.c.b16 %v3112, %v3112
    %v3121 = vpack.c.b16 %v3113, %v3113
    %v3122 = vpack.c.b16 %v3114, %v3114
    %v3123 = vpack.c.b16 %v3115, %v3115
    %v3124 = vpack.c.b16 %v3116, %v3116
    %v3129 = vunpack.c.l.b16 %v3101
    %v3130 = vunpack.c.h.b16 %v3101
    %v3131 = vunpack.c.l.b16 %v3102
    %v3132 = vunpack.c.h.b16 %v3102
    %v3133 = vunpack.c.l.b16 %v3103
    %v3134 = vunpack.c.h.b16 %v3103
    %v3135 = vunpack.c.l.b16 %v3104
    %v3136 = vunpack.c.h.b16 %v3104
    %v3137 = vpack.c.b16 %v3129, %v3129
    %v3138 = vpack.c.b16 %v3130, %v3130
    %v3139 = vpack.c.b16 %v3131, %v3131
    %v3140 = vpack.c.b16 %v3132, %v3132
    %v3141 = vpack.c.b16 %v3133, %v3133
    %v3142 = vpack.c.b16 %v3134, %v3134
    %v3143 = vpack.c.b16 %v3135, %v3135
    %v3144 = vpack.c.b16 %v3136, %v3136
    %v3146 = vsel %vm1211, %v3117, 0
    %3148 = vmatprep.subr.bf16.mxu0 0
    %3149 = vmatpush1.bf16.msra.mxu0 0
    %3150 = vmatprep.subr.bf16.mxu0 0
    %3151 = vmatpush1.bf16.msra.mxu0 0
    %3152 = vmatprep.subr.bf16.mxu0 0
    %3153 = vmatpush1.bf16.msra.mxu0 0
    %3154 = vmatprep.subr.bf16.mxu0 0
    %3155 = vmatpush1.bf16.msra.mxu0 0
    %3156 = vmatprep.subr.bf16.mxu0 0
    %3157 = vmatpush1.bf16.msra.mxu0 0
    %3158 = vmatprep.subr.bf16.mxu0 0
    %3159 = vmatpush1.bf16.msra.mxu0 0
    %3160 = vmatprep.subr.bf16.mxu0 0
    %3161 = vmatpush1.bf16.msra.mxu0 0
    %3162 = vmatprep.subr.bf16.mxu0 0
    %3163 = vmatpush1.bf16.msra.mxu0 %v3146
    %3164 = vmatprep.subr.bf16.mxu0 0
    %3165 = vmatpush2.bf16.msra.mxu0 0
    %3166 = vmatprep.subr.bf16.mxu0 0
    %3167 = vmatpush2.bf16.msra.mxu0 0
    %3168 = vmatprep.subr.bf16.mxu0 0
    %3169 = vmatpush2.bf16.msra.mxu0 0
    %3170 = vmatprep.subr.bf16.mxu0 0
    %3171 = vmatpush2.bf16.msra.mxu0 0
    %3172 = vmatprep.subr.bf16.mxu0 0
    %3173 = vmatpush2.bf16.msra.mxu0 0
    %3174 = vmatprep.subr.bf16.mxu0 0
    %3175 = vmatpush2.bf16.msra.mxu0 0
    %3176 = vmatprep.subr.bf16.mxu0 0
    %3177 = vmatpush2.bf16.msra.mxu0 0
    %3178 = vmatprep.subr.bf16.mxu0 0
    %3179 = vmatpush2.bf16.msra.mxu0 0
    %3180 = vmatprep.mubr.bf16.mxu0 0
    %3181 = vmatmul.mubr.bf16.gmra.mxu0 %v1209
    %v3182 = vpop.f32.mrf.mxu0
    %v3183 = vadd.f32 0.0, %v3182
    %v3184 = vpop.f32.mrf.mxu0
    %v3185 = vpop.f32.mrf.mxu0
    %v3186 = vpop.f32.mrf.mxu0
    %3187 = vdwg.mxu0
    %v3189 = vsel %vm1211, %v3137, 0
    %3191 = vmatprep.subr.bf16.mxu0 0
    %3192 = vmatpush1.bf16.msra.mxu0 0
    %3193 = vmatprep.subr.bf16.mxu0 0
    %3194 = vmatpush1.bf16.msra.mxu0 0
    %3195 = vmatprep.subr.bf16.mxu0 0
    %3196 = vmatpush1.bf16.msra.mxu0 0
    %3197 = vmatprep.subr.bf16.mxu0 0
    %3198 = vmatpush1.bf16.msra.mxu0 0
    %3199 = vmatprep.subr.bf16.mxu0 0
    %3200 = vmatpush1.bf16.msra.mxu0 0
    %3201 = vmatprep.subr.bf16.mxu0 0
    %3202 = vmatpush1.bf16.msra.mxu0 0
    %3203 = vmatprep.subr.bf16.mxu0 0
    %3204 = vmatpush1.bf16.msra.mxu0 0
    %3205 = vmatprep.subr.bf16.mxu0 0
    %3206 = vmatpush1.bf16.msra.mxu0 %v3189
    %3207 = vmatprep.subr.bf16.mxu0 0
    %3208 = vmatpush2.bf16.msra.mxu0 0
    %3209 = vmatprep.subr.bf16.mxu0 0
    %3210 = vmatpush2.bf16.msra.mxu0 0
    %3211 = vmatprep.subr.bf16.mxu0 0
    %3212 = vmatpush2.bf16.msra.mxu0 0
    %3213 = vmatprep.subr.bf16.mxu0 0
    %3214 = vmatpush2.bf16.msra.mxu0 0
    %3215 = vmatprep.subr.bf16.mxu0 0
    %3216 = vmatpush2.bf16.msra.mxu0 0
    %3217 = vmatprep.subr.bf16.mxu0 0
    %3218 = vmatpush2.bf16.msra.mxu0 0
    %3219 = vmatprep.subr.bf16.mxu0 0
    %3220 = vmatpush2.bf16.msra.mxu0 0
    %3221 = vmatprep.subr.bf16.mxu0 0
    %3222 = vmatpush2.bf16.msra.mxu0 0
    %3223 = vmatprep.mubr.bf16.mxu0 0
    %3224 = vmatmul.mubr.bf16.gmra.mxu0 %v1256
    %v3225 = vpop.f32.mrf.mxu0
    %v3226 = vadd.f32 0.0, %v3225
    %v3227 = vpop.f32.mrf.mxu0
    %v3228 = vpop.f32.mrf.mxu0
    %v3229 = vpop.f32.mrf.mxu0
    %3230 = vdwg.mxu0
    %v3232 = vsel %vm1211, %v3118, 0
    %3234 = vmatprep.subr.bf16.mxu0 0
    %3235 = vmatpush1.bf16.msra.mxu0 0
    %3236 = vmatprep.subr.bf16.mxu0 0
    %3237 = vmatpush1.bf16.msra.mxu0 0
    %3238 = vmatprep.subr.bf16.mxu0 0
    %3239 = vmatpush1.bf16.msra.mxu0 0
    %3240 = vmatprep.subr.bf16.mxu0 0
    %3241 = vmatpush1.bf16.msra.mxu0 0
    %3242 = vmatprep.subr.bf16.mxu0 0
    %3243 = vmatpush1.bf16.msra.mxu0 0
    %3244 = vmatprep.subr.bf16.mxu0 0
    %3245 = vmatpush1.bf16.msra.mxu0 0
    %3246 = vmatprep.subr.bf16.mxu0 0
    %3247 = vmatpush1.bf16.msra.mxu0 0
    %3248 = vmatprep.subr.bf16.mxu0 0
    %3249 = vmatpush1.bf16.msra.mxu0 %v3232
    %3250 = vmatprep.subr.bf16.mxu0 0
    %3251 = vmatpush2.bf16.msra.mxu0 0
    %3252 = vmatprep.subr.bf16.mxu0 0
    %3253 = vmatpush2.bf16.msra.mxu0 0
    %3254 = vmatprep.subr.bf16.mxu0 0
    %3255 = vmatpush2.bf16.msra.mxu0 0
    %3256 = vmatprep.subr.bf16.mxu0 0
    %3257 = vmatpush2.bf16.msra.mxu0 0
    %3258 = vmatprep.subr.bf16.mxu0 0
    %3259 = vmatpush2.bf16.msra.mxu0 0
    %3260 = vmatprep.subr.bf16.mxu0 0
    %3261 = vmatpush2.bf16.msra.mxu0 0
    %3262 = vmatprep.subr.bf16.mxu0 0
    %3263 = vmatpush2.bf16.msra.mxu0 0
    %3264 = vmatprep.subr.bf16.mxu0 0
    %3265 = vmatpush2.bf16.msra.mxu0 0
    %3266 = vmatprep.mubr.bf16.mxu0 0
    %3267 = vmatmul.mubr.bf16.gmra.mxu0 %v1302
    %v3268 = vpop.f32.mrf.mxu0
    %v3269 = vadd.f32 0.0, %v3268
    %v3270 = vpop.f32.mrf.mxu0
    %v3271 = vpop.f32.mrf.mxu0
    %v3272 = vpop.f32.mrf.mxu0
    %3273 = vdwg.mxu0
    %v3275 = vsel %vm1211, %v3138, 0
    %3277 = vmatprep.subr.bf16.mxu0 0
    %3278 = vmatpush1.bf16.msra.mxu0 0
    %3279 = vmatprep.subr.bf16.mxu0 0
    %3280 = vmatpush1.bf16.msra.mxu0 0
    %3281 = vmatprep.subr.bf16.mxu0 0
    %3282 = vmatpush1.bf16.msra.mxu0 0
    %3283 = vmatprep.subr.bf16.mxu0 0
    %3284 = vmatpush1.bf16.msra.mxu0 0
    %3285 = vmatprep.subr.bf16.mxu0 0
    %3286 = vmatpush1.bf16.msra.mxu0 0
    %3287 = vmatprep.subr.bf16.mxu0 0
    %3288 = vmatpush1.bf16.msra.mxu0 0
    %3289 = vmatprep.subr.bf16.mxu0 0
    %3290 = vmatpush1.bf16.msra.mxu0 0
    %3291 = vmatprep.subr.bf16.mxu0 0
    %3292 = vmatpush1.bf16.msra.mxu0 %v3275
    %3293 = vmatprep.subr.bf16.mxu0 0
    %3294 = vmatpush2.bf16.msra.mxu0 0
    %3295 = vmatprep.subr.bf16.mxu0 0
    %3296 = vmatpush2.bf16.msra.mxu0 0
    %3297 = vmatprep.subr.bf16.mxu0 0
    %3298 = vmatpush2.bf16.msra.mxu0 0
    %3299 = vmatprep.subr.bf16.mxu0 0
    %3300 = vmatpush2.bf16.msra.mxu0 0
    %3301 = vmatprep.subr.bf16.mxu0 0
    %3302 = vmatpush2.bf16.msra.mxu0 0
    %3303 = vmatprep.subr.bf16.mxu0 0
    %3304 = vmatpush2.bf16.msra.mxu0 0
    %3305 = vmatprep.subr.bf16.mxu0 0
    %3306 = vmatpush2.bf16.msra.mxu0 0
    %3307 = vmatprep.subr.bf16.mxu0 0
    %3308 = vmatpush2.bf16.msra.mxu0 0
    %3309 = vmatprep.mubr.bf16.mxu0 0
    %3310 = vmatmul.mubr.bf16.gmra.mxu0 %v1348
    %v3311 = vpop.f32.mrf.mxu0
    %v3312 = vadd.f32 0.0, %v3311
    %v3313 = vpop.f32.mrf.mxu0
    %v3314 = vpop.f32.mrf.mxu0
    %v3315 = vpop.f32.mrf.mxu0
    %3316 = vdwg.mxu0
    %v3318 = vsel %vm1211, %v3119, 0
    %3320 = vmatprep.subr.bf16.mxu0 0
    %3321 = vmatpush1.bf16.msra.mxu0 0
    %3322 = vmatprep.subr.bf16.mxu0 0
    %3323 = vmatpush1.bf16.msra.mxu0 0
    %3324 = vmatprep.subr.bf16.mxu0 0
    %3325 = vmatpush1.bf16.msra.mxu0 0
    %3326 = vmatprep.subr.bf16.mxu0 0
    %3327 = vmatpush1.bf16.msra.mxu0 0
    %3328 = vmatprep.subr.bf16.mxu0 0
    %3329 = vmatpush1.bf16.msra.mxu0 0
    %3330 = vmatprep.subr.bf16.mxu0 0
    %3331 = vmatpush1.bf16.msra.mxu0 0
    %3332 = vmatprep.subr.bf16.mxu0 0
    %3333 = vmatpush1.bf16.msra.mxu0 0
    %3334 = vmatprep.subr.bf16.mxu0 0
    %3335 = vmatpush1.bf16.msra.mxu0 %v3318
    %3336 = vmatprep.subr.bf16.mxu0 0
    %3337 = vmatpush2.bf16.msra.mxu0 0
    %3338 = vmatprep.subr.bf16.mxu0 0
    %3339 = vmatpush2.bf16.msra.mxu0 0
    %3340 = vmatprep.subr.bf16.mxu0 0
    %3341 = vmatpush2.bf16.msra.mxu0 0
    %3342 = vmatprep.subr.bf16.mxu0 0
    %3343 = vmatpush2.bf16.msra.mxu0 0
    %3344 = vmatprep.subr.bf16.mxu0 0
    %3345 = vmatpush2.bf16.msra.mxu0 0
    %3346 = vmatprep.subr.bf16.mxu0 0
    %3347 = vmatpush2.bf16.msra.mxu0 0
    %3348 = vmatprep.subr.bf16.mxu0 0
    %3349 = vmatpush2.bf16.msra.mxu0 0
    %3350 = vmatprep.subr.bf16.mxu0 0
    %3351 = vmatpush2.bf16.msra.mxu0 0
    %3352 = vmatprep.mubr.bf16.mxu0 0
    %3353 = vmatmul.mubr.bf16.gmra.mxu0 %v1394
    %v3354 = vpop.f32.mrf.mxu0
    %v3355 = vadd.f32 0.0, %v3354
    %v3356 = vpop.f32.mrf.mxu0
    %v3357 = vpop.f32.mrf.mxu0
    %v3358 = vpop.f32.mrf.mxu0
    %3359 = vdwg.mxu0
    %v3361 = vsel %vm1211, %v3139, 0
    %3363 = vmatprep.subr.bf16.mxu0 0
    %3364 = vmatpush1.bf16.msra.mxu0 0
    %3365 = vmatprep.subr.bf16.mxu0 0
    %3366 = vmatpush1.bf16.msra.mxu0 0
    %3367 = vmatprep.subr.bf16.mxu0 0
    %3368 = vmatpush1.bf16.msra.mxu0 0
    %3369 = vmatprep.subr.bf16.mxu0 0
    %3370 = vmatpush1.bf16.msra.mxu0 0
    %3371 = vmatprep.subr.bf16.mxu0 0
    %3372 = vmatpush1.bf16.msra.mxu0 0
    %3373 = vmatprep.subr.bf16.mxu0 0
    %3374 = vmatpush1.bf16.msra.mxu0 0
    %3375 = vmatprep.subr.bf16.mxu0 0
    %3376 = vmatpush1.bf16.msra.mxu0 0
    %3377 = vmatprep.subr.bf16.mxu0 0
    %3378 = vmatpush1.bf16.msra.mxu0 %v3361
    %3379 = vmatprep.subr.bf16.mxu0 0
    %3380 = vmatpush2.bf16.msra.mxu0 0
    %3381 = vmatprep.subr.bf16.mxu0 0
    %3382 = vmatpush2.bf16.msra.mxu0 0
    %3383 = vmatprep.subr.bf16.mxu0 0
    %3384 = vmatpush2.bf16.msra.mxu0 0
    %3385 = vmatprep.subr.bf16.mxu0 0
    %3386 = vmatpush2.bf16.msra.mxu0 0
    %3387 = vmatprep.subr.bf16.mxu0 0
    %3388 = vmatpush2.bf16.msra.mxu0 0
    %3389 = vmatprep.subr.bf16.mxu0 0
    %3390 = vmatpush2.bf16.msra.mxu0 0
    %3391 = vmatprep.subr.bf16.mxu0 0
    %3392 = vmatpush2.bf16.msra.mxu0 0
    %3393 = vmatprep.subr.bf16.mxu0 0
    %3394 = vmatpush2.bf16.msra.mxu0 0
    %3395 = vmatprep.mubr.bf16.mxu0 0
    %3396 = vmatmul.mubr.bf16.gmra.mxu0 %v1440
    %v3397 = vpop.f32.mrf.mxu0
    %v3398 = vadd.f32 0.0, %v3397
    %v3399 = vpop.f32.mrf.mxu0
    %v3400 = vpop.f32.mrf.mxu0
    %v3401 = vpop.f32.mrf.mxu0
    %3402 = vdwg.mxu0
    %v3404 = vsel %vm1211, %v3120, 0
    %3406 = vmatprep.subr.bf16.mxu0 0
    %3407 = vmatpush1.bf16.msra.mxu0 0
    %3408 = vmatprep.subr.bf16.mxu0 0
    %3409 = vmatpush1.bf16.msra.mxu0 0
    %3410 = vmatprep.subr.bf16.mxu0 0
    %3411 = vmatpush1.bf16.msra.mxu0 0
    %3412 = vmatprep.subr.bf16.mxu0 0
    %3413 = vmatpush1.bf16.msra.mxu0 0
    %3414 = vmatprep.subr.bf16.mxu0 0
    %3415 = vmatpush1.bf16.msra.mxu0 0
    %3416 = vmatprep.subr.bf16.mxu0 0
    %3417 = vmatpush1.bf16.msra.mxu0 0
    %3418 = vmatprep.subr.bf16.mxu0 0
    %3419 = vmatpush1.bf16.msra.mxu0 0
    %3420 = vmatprep.subr.bf16.mxu0 0
    %3421 = vmatpush1.bf16.msra.mxu0 %v3404
    %3422 = vmatprep.subr.bf16.mxu0 0
    %3423 = vmatpush2.bf16.msra.mxu0 0
    %3424 = vmatprep.subr.bf16.mxu0 0
    %3425 = vmatpush2.bf16.msra.mxu0 0
    %3426 = vmatprep.subr.bf16.mxu0 0
    %3427 = vmatpush2.bf16.msra.mxu0 0
    %3428 = vmatprep.subr.bf16.mxu0 0
    %3429 = vmatpush2.bf16.msra.mxu0 0
    %3430 = vmatprep.subr.bf16.mxu0 0
    %3431 = vmatpush2.bf16.msra.mxu0 0
    %3432 = vmatprep.subr.bf16.mxu0 0
    %3433 = vmatpush2.bf16.msra.mxu0 0
    %3434 = vmatprep.subr.bf16.mxu0 0
    %3435 = vmatpush2.bf16.msra.mxu0 0
    %3436 = vmatprep.subr.bf16.mxu0 0
    %3437 = vmatpush2.bf16.msra.mxu0 0
    %3438 = vmatprep.mubr.bf16.mxu0 0
    %3439 = vmatmul.mubr.bf16.gmra.mxu0 %v1486
    %v3440 = vpop.f32.mrf.mxu0
    %v3441 = vadd.f32 0.0, %v3440
    %v3442 = vpop.f32.mrf.mxu0
    %v3443 = vpop.f32.mrf.mxu0
    %v3444 = vpop.f32.mrf.mxu0
    %3445 = vdwg.mxu0
    %v3447 = vsel %vm1211, %v3140, 0
    %3449 = vmatprep.subr.bf16.mxu0 0
    %3450 = vmatpush1.bf16.msra.mxu0 0
    %3451 = vmatprep.subr.bf16.mxu0 0
    %3452 = vmatpush1.bf16.msra.mxu0 0
    %3453 = vmatprep.subr.bf16.mxu0 0
    %3454 = vmatpush1.bf16.msra.mxu0 0
    %3455 = vmatprep.subr.bf16.mxu0 0
    %3456 = vmatpush1.bf16.msra.mxu0 0
    %3457 = vmatprep.subr.bf16.mxu0 0
    %3458 = vmatpush1.bf16.msra.mxu0 0
    %3459 = vmatprep.subr.bf16.mxu0 0
    %3460 = vmatpush1.bf16.msra.mxu0 0
    %3461 = vmatprep.subr.bf16.mxu0 0
    %3462 = vmatpush1.bf16.msra.mxu0 0
    %3463 = vmatprep.subr.bf16.mxu0 0
    %3464 = vmatpush1.bf16.msra.mxu0 %v3447
    %3465 = vmatprep.subr.bf16.mxu0 0
    %3466 = vmatpush2.bf16.msra.mxu0 0
    %3467 = vmatprep.subr.bf16.mxu0 0
    %3468 = vmatpush2.bf16.msra.mxu0 0
    %3469 = vmatprep.subr.bf16.mxu0 0
    %3470 = vmatpush2.bf16.msra.mxu0 0
    %3471 = vmatprep.subr.bf16.mxu0 0
    %3472 = vmatpush2.bf16.msra.mxu0 0
    %3473 = vmatprep.subr.bf16.mxu0 0
    %3474 = vmatpush2.bf16.msra.mxu0 0
    %3475 = vmatprep.subr.bf16.mxu0 0
    %3476 = vmatpush2.bf16.msra.mxu0 0
    %3477 = vmatprep.subr.bf16.mxu0 0
    %3478 = vmatpush2.bf16.msra.mxu0 0
    %3479 = vmatprep.subr.bf16.mxu0 0
    %3480 = vmatpush2.bf16.msra.mxu0 0
    %3481 = vmatprep.mubr.bf16.mxu0 0
    %3482 = vmatmul.mubr.bf16.gmra.mxu0 %v1532
    %v3483 = vpop.f32.mrf.mxu0
    %v3484 = vadd.f32 0.0, %v3483
    %v3485 = vpop.f32.mrf.mxu0
    %v3486 = vpop.f32.mrf.mxu0
    %v3487 = vpop.f32.mrf.mxu0
    %3488 = vdwg.mxu0
    %v3490 = vsel %vm1211, %v3121, 0
    %3492 = vmatprep.subr.bf16.mxu0 0
    %3493 = vmatpush1.bf16.msra.mxu0 0
    %3494 = vmatprep.subr.bf16.mxu0 0
    %3495 = vmatpush1.bf16.msra.mxu0 0
    %3496 = vmatprep.subr.bf16.mxu0 0
    %3497 = vmatpush1.bf16.msra.mxu0 0
    %3498 = vmatprep.subr.bf16.mxu0 0
    %3499 = vmatpush1.bf16.msra.mxu0 0
    %3500 = vmatprep.subr.bf16.mxu0 0
    %3501 = vmatpush1.bf16.msra.mxu0 0
    %3502 = vmatprep.subr.bf16.mxu0 0
    %3503 = vmatpush1.bf16.msra.mxu0 0
    %3504 = vmatprep.subr.bf16.mxu0 0
    %3505 = vmatpush1.bf16.msra.mxu0 0
    %3506 = vmatprep.subr.bf16.mxu0 0
    %3507 = vmatpush1.bf16.msra.mxu0 %v3490
    %3508 = vmatprep.subr.bf16.mxu0 0
    %3509 = vmatpush2.bf16.msra.mxu0 0
    %3510 = vmatprep.subr.bf16.mxu0 0
    %3511 = vmatpush2.bf16.msra.mxu0 0
    %3512 = vmatprep.subr.bf16.mxu0 0
    %3513 = vmatpush2.bf16.msra.mxu0 0
    %3514 = vmatprep.subr.bf16.mxu0 0
    %3515 = vmatpush2.bf16.msra.mxu0 0
    %3516 = vmatprep.subr.bf16.mxu0 0
    %3517 = vmatpush2.bf16.msra.mxu0 0
    %3518 = vmatprep.subr.bf16.mxu0 0
    %3519 = vmatpush2.bf16.msra.mxu0 0
    %3520 = vmatprep.subr.bf16.mxu0 0
    %3521 = vmatpush2.bf16.msra.mxu0 0
    %3522 = vmatprep.subr.bf16.mxu0 0
    %3523 = vmatpush2.bf16.msra.mxu0 0
    %3524 = vmatprep.mubr.bf16.mxu0 0
    %3525 = vmatmul.mubr.bf16.gmra.mxu0 %v1578
    %v3526 = vpop.f32.mrf.mxu0
    %v3527 = vadd.f32 0.0, %v3526
    %v3528 = vpop.f32.mrf.mxu0
    %v3529 = vpop.f32.mrf.mxu0
    %v3530 = vpop.f32.mrf.mxu0
    %3531 = vdwg.mxu0
    %v3533 = vsel %vm1211, %v3141, 0
    %3535 = vmatprep.subr.bf16.mxu0 0
    %3536 = vmatpush1.bf16.msra.mxu0 0
    %3537 = vmatprep.subr.bf16.mxu0 0
    %3538 = vmatpush1.bf16.msra.mxu0 0
    %3539 = vmatprep.subr.bf16.mxu0 0
    %3540 = vmatpush1.bf16.msra.mxu0 0
    %3541 = vmatprep.subr.bf16.mxu0 0
    %3542 = vmatpush1.bf16.msra.mxu0 0
    %3543 = vmatprep.subr.bf16.mxu0 0
    %3544 = vmatpush1.bf16.msra.mxu0 0
    %3545 = vmatprep.subr.bf16.mxu0 0
    %3546 = vmatpush1.bf16.msra.mxu0 0
    %3547 = vmatprep.subr.bf16.mxu0 0
    %3548 = vmatpush1.bf16.msra.mxu0 0
    %3549 = vmatprep.subr.bf16.mxu0 0
    %3550 = vmatpush1.bf16.msra.mxu0 %v3533
    %3551 = vmatprep.subr.bf16.mxu0 0
    %3552 = vmatpush2.bf16.msra.mxu0 0
    %3553 = vmatprep.subr.bf16.mxu0 0
    %3554 = vmatpush2.bf16.msra.mxu0 0
    %3555 = vmatprep.subr.bf16.mxu0 0
    %3556 = vmatpush2.bf16.msra.mxu0 0
    %3557 = vmatprep.subr.bf16.mxu0 0
    %3558 = vmatpush2.bf16.msra.mxu0 0
    %3559 = vmatprep.subr.bf16.mxu0 0
    %3560 = vmatpush2.bf16.msra.mxu0 0
    %3561 = vmatprep.subr.bf16.mxu0 0
    %3562 = vmatpush2.bf16.msra.mxu0 0
    %3563 = vmatprep.subr.bf16.mxu0 0
    %3564 = vmatpush2.bf16.msra.mxu0 0
    %3565 = vmatprep.subr.bf16.mxu0 0
    %3566 = vmatpush2.bf16.msra.mxu0 0
    %3567 = vmatprep.mubr.bf16.mxu0 0
    %3568 = vmatmul.mubr.bf16.gmra.mxu0 %v1624
    %v3569 = vpop.f32.mrf.mxu0
    %v3570 = vadd.f32 0.0, %v3569
    %v3571 = vpop.f32.mrf.mxu0
    %v3572 = vpop.f32.mrf.mxu0
    %v3573 = vpop.f32.mrf.mxu0
    %3574 = vdwg.mxu0
    %v3576 = vsel %vm1211, %v3122, 0
    %3578 = vmatprep.subr.bf16.mxu0 0
    %3579 = vmatpush1.bf16.msra.mxu0 0
    %3580 = vmatprep.subr.bf16.mxu0 0
    %3581 = vmatpush1.bf16.msra.mxu0 0
    %3582 = vmatprep.subr.bf16.mxu0 0
    %3583 = vmatpush1.bf16.msra.mxu0 0
    %3584 = vmatprep.subr.bf16.mxu0 0
    %3585 = vmatpush1.bf16.msra.mxu0 0
    %3586 = vmatprep.subr.bf16.mxu0 0
    %3587 = vmatpush1.bf16.msra.mxu0 0
    %3588 = vmatprep.subr.bf16.mxu0 0
    %3589 = vmatpush1.bf16.msra.mxu0 0
    %3590 = vmatprep.subr.bf16.mxu0 0
    %3591 = vmatpush1.bf16.msra.mxu0 0
    %3592 = vmatprep.subr.bf16.mxu0 0
    %3593 = vmatpush1.bf16.msra.mxu0 %v3576
    %3594 = vmatprep.subr.bf16.mxu0 0
    %3595 = vmatpush2.bf16.msra.mxu0 0
    %3596 = vmatprep.subr.bf16.mxu0 0
    %3597 = vmatpush2.bf16.msra.mxu0 0
    %3598 = vmatprep.subr.bf16.mxu0 0
    %3599 = vmatpush2.bf16.msra.mxu0 0
    %3600 = vmatprep.subr.bf16.mxu0 0
    %3601 = vmatpush2.bf16.msra.mxu0 0
    %3602 = vmatprep.subr.bf16.mxu0 0
    %3603 = vmatpush2.bf16.msra.mxu0 0
    %3604 = vmatprep.subr.bf16.mxu0 0
    %3605 = vmatpush2.bf16.msra.mxu0 0
    %3606 = vmatprep.subr.bf16.mxu0 0
    %3607 = vmatpush2.bf16.msra.mxu0 0
    %3608 = vmatprep.subr.bf16.mxu0 0
    %3609 = vmatpush2.bf16.msra.mxu0 0
    %3610 = vmatprep.mubr.bf16.mxu0 0
    %3611 = vmatmul.mubr.bf16.gmra.mxu0 %v1670
    %v3612 = vpop.f32.mrf.mxu0
    %v3613 = vadd.f32 0.0, %v3612
    %v3614 = vpop.f32.mrf.mxu0
    %v3615 = vpop.f32.mrf.mxu0
    %v3616 = vpop.f32.mrf.mxu0
    %3617 = vdwg.mxu0
    %v3619 = vsel %vm1211, %v3142, 0
    %3621 = vmatprep.subr.bf16.mxu0 0
    %3622 = vmatpush1.bf16.msra.mxu0 0
    %3623 = vmatprep.subr.bf16.mxu0 0
    %3624 = vmatpush1.bf16.msra.mxu0 0
    %3625 = vmatprep.subr.bf16.mxu0 0
    %3626 = vmatpush1.bf16.msra.mxu0 0
    %3627 = vmatprep.subr.bf16.mxu0 0
    %3628 = vmatpush1.bf16.msra.mxu0 0
    %3629 = vmatprep.subr.bf16.mxu0 0
    %3630 = vmatpush1.bf16.msra.mxu0 0
    %3631 = vmatprep.subr.bf16.mxu0 0
    %3632 = vmatpush1.bf16.msra.mxu0 0
    %3633 = vmatprep.subr.bf16.mxu0 0
    %3634 = vmatpush1.bf16.msra.mxu0 0
    %3635 = vmatprep.subr.bf16.mxu0 0
    %3636 = vmatpush1.bf16.msra.mxu0 %v3619
    %3637 = vmatprep.subr.bf16.mxu0 0
    %3638 = vmatpush2.bf16.msra.mxu0 0
    %3639 = vmatprep.subr.bf16.mxu0 0
    %3640 = vmatpush2.bf16.msra.mxu0 0
    %3641 = vmatprep.subr.bf16.mxu0 0
    %3642 = vmatpush2.bf16.msra.mxu0 0
    %3643 = vmatprep.subr.bf16.mxu0 0
    %3644 = vmatpush2.bf16.msra.mxu0 0
    %3645 = vmatprep.subr.bf16.mxu0 0
    %3646 = vmatpush2.bf16.msra.mxu0 0
    %3647 = vmatprep.subr.bf16.mxu0 0
    %3648 = vmatpush2.bf16.msra.mxu0 0
    %3649 = vmatprep.subr.bf16.mxu0 0
    %3650 = vmatpush2.bf16.msra.mxu0 0
    %3651 = vmatprep.subr.bf16.mxu0 0
    %3652 = vmatpush2.bf16.msra.mxu0 0
    %3653 = vmatprep.mubr.bf16.mxu0 0
    %3654 = vmatmul.mubr.bf16.gmra.mxu0 %v1716
    %v3655 = vpop.f32.mrf.mxu0
    %v3656 = vadd.f32 0.0, %v3655
    %v3657 = vpop.f32.mrf.mxu0
    %v3658 = vpop.f32.mrf.mxu0
    %v3659 = vpop.f32.mrf.mxu0
    %3660 = vdwg.mxu0
    %v3662 = vsel %vm1211, %v3123, 0
    %3664 = vmatprep.subr.bf16.mxu0 0
    %3665 = vmatpush1.bf16.msra.mxu0 0
    %3666 = vmatprep.subr.bf16.mxu0 0
    %3667 = vmatpush1.bf16.msra.mxu0 0
    %3668 = vmatprep.subr.bf16.mxu0 0
    %3669 = vmatpush1.bf16.msra.mxu0 0
    %3670 = vmatprep.subr.bf16.mxu0 0
    %3671 = vmatpush1.bf16.msra.mxu0 0
    %3672 = vmatprep.subr.bf16.mxu0 0
    %3673 = vmatpush1.bf16.msra.mxu0 0
    %3674 = vmatprep.subr.bf16.mxu0 0
    %3675 = vmatpush1.bf16.msra.mxu0 0
    %3676 = vmatprep.subr.bf16.mxu0 0
    %3677 = vmatpush1.bf16.msra.mxu0 0
    %3678 = vmatprep.subr.bf16.mxu0 0
    %3679 = vmatpush1.bf16.msra.mxu0 %v3662
    %3680 = vmatprep.subr.bf16.mxu0 0
    %3681 = vmatpush2.bf16.msra.mxu0 0
    %3682 = vmatprep.subr.bf16.mxu0 0
    %3683 = vmatpush2.bf16.msra.mxu0 0
    %3684 = vmatprep.subr.bf16.mxu0 0
    %3685 = vmatpush2.bf16.msra.mxu0 0
    %3686 = vmatprep.subr.bf16.mxu0 0
    %3687 = vmatpush2.bf16.msra.mxu0 0
    %3688 = vmatprep.subr.bf16.mxu0 0
    %3689 = vmatpush2.bf16.msra.mxu0 0
    %3690 = vmatprep.subr.bf16.mxu0 0
    %3691 = vmatpush2.bf16.msra.mxu0 0
    %3692 = vmatprep.subr.bf16.mxu0 0
    %3693 = vmatpush2.bf16.msra.mxu0 0
    %3694 = vmatprep.subr.bf16.mxu0 0
    %3695 = vmatpush2.bf16.msra.mxu0 0
    %3696 = vmatprep.mubr.bf16.mxu0 0
    %3697 = vmatmul.mubr.bf16.gmra.mxu0 %v1762
    %v3698 = vpop.f32.mrf.mxu0
    %v3699 = vadd.f32 0.0, %v3698
    %v3700 = vpop.f32.mrf.mxu0
    %v3701 = vpop.f32.mrf.mxu0
    %v3702 = vpop.f32.mrf.mxu0
    %3703 = vdwg.mxu0
    %v3705 = vsel %vm1211, %v3143, 0
    %3707 = vmatprep.subr.bf16.mxu0 0
    %3708 = vmatpush1.bf16.msra.mxu0 0
    %3709 = vmatprep.subr.bf16.mxu0 0
    %3710 = vmatpush1.bf16.msra.mxu0 0
    %3711 = vmatprep.subr.bf16.mxu0 0
    %3712 = vmatpush1.bf16.msra.mxu0 0
    %3713 = vmatprep.subr.bf16.mxu0 0
    %3714 = vmatpush1.bf16.msra.mxu0 0
    %3715 = vmatprep.subr.bf16.mxu0 0
    %3716 = vmatpush1.bf16.msra.mxu0 0
    %3717 = vmatprep.subr.bf16.mxu0 0
    %3718 = vmatpush1.bf16.msra.mxu0 0
    %3719 = vmatprep.subr.bf16.mxu0 0
    %3720 = vmatpush1.bf16.msra.mxu0 0
    %3721 = vmatprep.subr.bf16.mxu0 0
    %3722 = vmatpush1.bf16.msra.mxu0 %v3705
    %3723 = vmatprep.subr.bf16.mxu0 0
    %3724 = vmatpush2.bf16.msra.mxu0 0
    %3725 = vmatprep.subr.bf16.mxu0 0
    %3726 = vmatpush2.bf16.msra.mxu0 0
    %3727 = vmatprep.subr.bf16.mxu0 0
    %3728 = vmatpush2.bf16.msra.mxu0 0
    %3729 = vmatprep.subr.bf16.mxu0 0
    %3730 = vmatpush2.bf16.msra.mxu0 0
    %3731 = vmatprep.subr.bf16.mxu0 0
    %3732 = vmatpush2.bf16.msra.mxu0 0
    %3733 = vmatprep.subr.bf16.mxu0 0
    %3734 = vmatpush2.bf16.msra.mxu0 0
    %3735 = vmatprep.subr.bf16.mxu0 0
    %3736 = vmatpush2.bf16.msra.mxu0 0
    %3737 = vmatprep.subr.bf16.mxu0 0
    %3738 = vmatpush2.bf16.msra.mxu0 0
    %3739 = vmatprep.mubr.bf16.mxu0 0
    %3740 = vmatmul.mubr.bf16.gmra.mxu0 %v1808
    %v3741 = vpop.f32.mrf.mxu0
    %v3742 = vadd.f32 0.0, %v3741
    %v3743 = vpop.f32.mrf.mxu0
    %v3744 = vpop.f32.mrf.mxu0
    %v3745 = vpop.f32.mrf.mxu0
    %3746 = vdwg.mxu0
    %v3748 = vsel %vm1211, %v3124, 0
    %3750 = vmatprep.subr.bf16.mxu0 0
    %3751 = vmatpush1.bf16.msra.mxu0 0
    %3752 = vmatprep.subr.bf16.mxu0 0
    %3753 = vmatpush1.bf16.msra.mxu0 0
    %3754 = vmatprep.subr.bf16.mxu0 0
    %3755 = vmatpush1.bf16.msra.mxu0 0
    %3756 = vmatprep.subr.bf16.mxu0 0
    %3757 = vmatpush1.bf16.msra.mxu0 0
    %3758 = vmatprep.subr.bf16.mxu0 0
    %3759 = vmatpush1.bf16.msra.mxu0 0
    %3760 = vmatprep.subr.bf16.mxu0 0
    %3761 = vmatpush1.bf16.msra.mxu0 0
    %3762 = vmatprep.subr.bf16.mxu0 0
    %3763 = vmatpush1.bf16.msra.mxu0 0
    %3764 = vmatprep.subr.bf16.mxu0 0
    %3765 = vmatpush1.bf16.msra.mxu0 %v3748
    %3766 = vmatprep.subr.bf16.mxu0 0
    %3767 = vmatpush2.bf16.msra.mxu0 0
    %3768 = vmatprep.subr.bf16.mxu0 0
    %3769 = vmatpush2.bf16.msra.mxu0 0
    %3770 = vmatprep.subr.bf16.mxu0 0
    %3771 = vmatpush2.bf16.msra.mxu0 0
    %3772 = vmatprep.subr.bf16.mxu0 0
    %3773 = vmatpush2.bf16.msra.mxu0 0
    %3774 = vmatprep.subr.bf16.mxu0 0
    %3775 = vmatpush2.bf16.msra.mxu0 0
    %3776 = vmatprep.subr.bf16.mxu0 0
    %3777 = vmatpush2.bf16.msra.mxu0 0
    %3778 = vmatprep.subr.bf16.mxu0 0
    %3779 = vmatpush2.bf16.msra.mxu0 0
    %3780 = vmatprep.subr.bf16.mxu0 0
    %3781 = vmatpush2.bf16.msra.mxu0 0
    %3782 = vmatprep.mubr.bf16.mxu0 0
    %3783 = vmatmul.mubr.bf16.gmra.mxu0 %v1854
    %v3784 = vpop.f32.mrf.mxu0
    %v3785 = vadd.f32 0.0, %v3784
    %v3786 = vpop.f32.mrf.mxu0
    %v3787 = vpop.f32.mrf.mxu0
    %v3788 = vpop.f32.mrf.mxu0
    %3789 = vdwg.mxu0
    %v3791 = vsel %vm1211, %v3144, 0
    %3793 = vmatprep.subr.bf16.mxu0 0
    %3794 = vmatpush1.bf16.msra.mxu0 0
    %3795 = vmatprep.subr.bf16.mxu0 0
    %3796 = vmatpush1.bf16.msra.mxu0 0
    %3797 = vmatprep.subr.bf16.mxu0 0
    %3798 = vmatpush1.bf16.msra.mxu0 0
    %3799 = vmatprep.subr.bf16.mxu0 0
    %3800 = vmatpush1.bf16.msra.mxu0 0
    %3801 = vmatprep.subr.bf16.mxu0 0
    %3802 = vmatpush1.bf16.msra.mxu0 0
    %3803 = vmatprep.subr.bf16.mxu0 0
    %3804 = vmatpush1.bf16.msra.mxu0 0
    %3805 = vmatprep.subr.bf16.mxu0 0
    %3806 = vmatpush1.bf16.msra.mxu0 0
    %3807 = vmatprep.subr.bf16.mxu0 0
    %3808 = vmatpush1.bf16.msra.mxu0 %v3791
    %3809 = vmatprep.subr.bf16.mxu0 0
    %3810 = vmatpush2.bf16.msra.mxu0 0
    %3811 = vmatprep.subr.bf16.mxu0 0
    %3812 = vmatpush2.bf16.msra.mxu0 0
    %3813 = vmatprep.subr.bf16.mxu0 0
    %3814 = vmatpush2.bf16.msra.mxu0 0
    %3815 = vmatprep.subr.bf16.mxu0 0
    %3816 = vmatpush2.bf16.msra.mxu0 0
    %3817 = vmatprep.subr.bf16.mxu0 0
    %3818 = vmatpush2.bf16.msra.mxu0 0
    %3819 = vmatprep.subr.bf16.mxu0 0
    %3820 = vmatpush2.bf16.msra.mxu0 0
    %3821 = vmatprep.subr.bf16.mxu0 0
    %3822 = vmatpush2.bf16.msra.mxu0 0
    %3823 = vmatprep.subr.bf16.mxu0 0
    %3824 = vmatpush2.bf16.msra.mxu0 0
    %3825 = vmatprep.mubr.bf16.mxu0 0
    %3826 = vmatmul.mubr.bf16.gmra.mxu0 %v1900
    %v3827 = vpop.f32.mrf.mxu0
    %v3828 = vadd.f32 0.0, %v3827
    %v3829 = vpop.f32.mrf.mxu0
    %v3830 = vpop.f32.mrf.mxu0
    %v3831 = vpop.f32.mrf.mxu0
    %3832 = vdwg.mxu0
    %v3833 = vmax.f32 %v3183, 0.0
    %v3834 = vmax.f32 %v3226, 0.0
    %v3835 = vmax.f32 %v3269, 0.0
    %v3836 = vmax.f32 %v3312, 0.0
    %v3837 = vmax.f32 %v3355, 0.0
    %v3838 = vmax.f32 %v3398, 0.0
    %v3839 = vmax.f32 %v3441, 0.0
    %v3840 = vmax.f32 %v3484, 0.0
    %v3841 = vmax.f32 %v3527, 0.0
    %v3842 = vmax.f32 %v3570, 0.0
    %v3843 = vmax.f32 %v3613, 0.0
    %v3844 = vmax.f32 %v3656, 0.0
    %v3845 = vmax.f32 %v3699, 0.0
    %v3846 = vmax.f32 %v3742, 0.0
    %v3847 = vmax.f32 %v3785, 0.0
    %v3848 = vmax.f32 %v3828, 0.0
    %v3849 = vsel %vm87, %v3833, 0.0
    %v3850 = vsel %vm87, %v3834, 0.0
    %v3851 = vadd.f32 %v3849, %v3850
    %v3852 = vsel %vm87, %v3835, 0.0
    %v3853 = vsel %vm87, %v3836, 0.0
    %v3854 = vadd.f32 %v3852, %v3853
    %v3855 = vsel %vm87, %v3837, 0.0
    %v3856 = vsel %vm87, %v3838, 0.0
    %v3857 = vadd.f32 %v3855, %v3856
    %v3858 = vsel %vm87, %v3839, 0.0
    %v3859 = vsel %vm87, %v3840, 0.0
    %v3860 = vadd.f32 %v3858, %v3859
    %v3861 = vsel %vm87, %v3841, 0.0
    %v3862 = vsel %vm87, %v3842, 0.0
    %v3863 = vadd.f32 %v3861, %v3862
    %v3864 = vsel %vm87, %v3843, 0.0
    %v3865 = vsel %vm87, %v3844, 0.0
    %v3866 = vadd.f32 %v3864, %v3865
    %v3867 = vsel %vm87, %v3845, 0.0
    %v3868 = vsel %vm87, %v3846, 0.0
    %v3869 = vadd.f32 %v3867, %v3868
    %v3870 = vsel %vm87, %v3847, 0.0
    %v3871 = vsel %vm87, %v3848, 0.0
    %v3872 = vadd.f32 %v3870, %v3871
    %v3873 = vmul.f32 %v3851, 0.5
    %v3874 = vmul.f32 %v3854, 0.5
    %v3875 = vmul.f32 %v3857, 0.5
    %v3876 = vmul.f32 %v3860, 0.5
    %v3877 = vmul.f32 %v3863, 0.5
    %v3878 = vmul.f32 %v3866, 0.5
    %v3879 = vmul.f32 %v3869, 0.5
    %v3880 = vmul.f32 %v3872, 0.5
    %v3881 = vadd.f32 %v3873, %v1993
    %v3882 = vadd.f32 %v3874, %v1994
    %v3883 = vadd.f32 %v3875, %v1995
    %v3884 = vadd.f32 %v3876, %v1996
    %v3885 = vadd.f32 %v3877, %v1997
    %v3886 = vadd.f32 %v3878, %v1998
    %v3887 = vadd.f32 %v3879, %v1999
    %v3888 = vadd.f32 %v3880, %v2000
    %3889 = vst.msk [vmem:[%s8] sm:$0xff] %vm87, %v3881
    %3890 = vst.msk [vmem:[%s8 + $0x8] sm:$0xff] %vm87, %v3882
    %3891 = vst.msk [vmem:[%s8 + $0x10] sm:$0xff] %vm87, %v3883
    %3892 = vst.msk [vmem:[%s8 + $0x18] sm:$0xff] %vm87, %v3884
    %3893 = vst.msk [vmem:[%s8 + $0x20] sm:$0xff] %vm87, %v3885
    %3894 = vst.msk [vmem:[%s8 + $0x28] sm:$0xff] %vm87, %v3886
    %3895 = vst.msk [vmem:[%s8 + $0x30] sm:$0xff] %vm87, %v3887
    %3896 = vst.msk [vmem:[%s8 + $0x38] sm:$0xff] %vm87, %v3888
    // Predicated region
    $region38: #{tpu_custom_call.1} parent=1 // pred_check
      _
    $region39: #{tpu_custom_call.1} parent=1 // pred_check_branch
      %3898 = sbr.rel (0) target = $region41
    $region40: #{tpu_custom_call.1} parent=1 // pred_region
      _
    $region41: #{tpu_custom_call.1} parent=1 // pred_fallthru
      _
    // Predicated region
    $region42: #{tpu_custom_call.1} parent=1 // pred_check
      _
    $region43: #{tpu_custom_call.1} parent=1 // pred_check_branch
      %3900 = sbr.rel (0) target = $region45
    $region44: #{tpu_custom_call.1} parent=1 // pred_region
      _
    $region45: #{tpu_custom_call.1} parent=1 // pred_fallthru
      _
    %3901 = vsyncpa [#allocation3], 1

// kernel: tpu_custom_call.1
$region0: #{tpu_custom_call.1}
  #allocation0 [shape = 'u32[]', space=smem, size = 0x4, offset = 0x4, fixed_abs, tag = 'smem constant byte address 0x4 - core index']
  #allocation1 [shape = 'u32[144,128]{1,0:T(1,128)}', space=vmem, size = 0x12000, scoped, tag = 'internal scratch']
  %s0 = inlined_call_operand.vmem [shape: f32[64,16], index: 0, kind: input, shape index: {}]
  %s1 = inlined_call_operand.vmem [shape: bf16[8,2,8,8], index: 1, kind: input, shape index: {}]
  %s2 = inlined_call_operand.vmem [shape: bf16[4,16,128], index: 2, kind: input, shape index: {}]
  %s3 = inlined_call_operand.vmem [shape: f32[4,1,128], index: 3, kind: input, shape index: {}]
  %s4 = inlined_call_operand.hbm [shape: bf16[4,2,128,128], index: 4, kind: input, shape index: {}]
  %s5 = inlined_call_operand.vmem [shape: f32[4,2,1,128], index: 5, kind: input, shape index: {}]
  %s6 = inlined_call_operand.vmem [shape: bf16[4,128,16], index: 6, kind: input, shape index: {}]
  %s7 = inlined_call_operand.vmem [shape: f32[4,1,16], index: 7, kind: input, shape index: {}]
  %s8 = inlined_call_operand.vmem [shape: f32[64,16], index: 8, kind: output, shape index: {}]
  %s9 = sld [smem:[#allocation0]]
  $region46: #{tpu_custom_call.1} parent=0
    _
  %s11 = ssub.s32 1, %s9
  %s12 = scalar_select 0, %s11, %s9
  $region1: #{tpu_custom_call.1} parent=0
    #allocation2 [shape = 'u8[262144]{0}', space=vmem, size = 0x40000, scoped, tag = 'input window, operand 4, single buffered']
    #allocation3 [shape = 's32[1]{0}', space=sflag, size = 0x4, scoped, tag = 'scoped memory for tpu_custom_call.1']
    %13 = vsyncpa [#allocation3], 0
    // Predicated region
    $region2: #{tpu_custom_call.1} parent=1 // pred_check
      _
    $region3: #{tpu_custom_call.1} parent=1 // pred_check_branch
      %15 = sbr.rel (0) target = $region5
    $region4: #{tpu_custom_call.1} parent=1 // pred_region
      _
    $region5: #{tpu_custom_call.1} parent=1 // pred_fallthru
      _
    // Predicated region
    $region6: #{tpu_custom_call.1} parent=1 // pred_check
      _
    $region7: #{tpu_custom_call.1} parent=1 // pred_check_branch
      %17 = sbr.rel (0) target = $region9
    $region8: #{tpu_custom_call.1} parent=1 // pred_region
      _
    $region9: #{tpu_custom_call.1} parent=1 // pred_fallthru
      _
    // Predicated region
    $region10: #{tpu_custom_call.1} parent=1 // pred_check
      _
    $region11: #{tpu_custom_call.1} parent=1 // pred_check_branch
      %19 = sbr.rel (0) target = $region13
    $region12: #{tpu_custom_call.1} parent=1 // pred_region
      _
    $region13: #{tpu_custom_call.1} parent=1 // pred_fallthru
      _
    // Predicated region
    $region14: #{tpu_custom_call.1} parent=1 // pred_check
      _
    $region15: #{tpu_custom_call.1} parent=1 // pred_check_branch
      %21 = sbr.rel (0) target = $region17
    $region16: #{tpu_custom_call.1} parent=1 // pred_region
      _
    $region17: #{tpu_custom_call.1} parent=1 // pred_fallthru
      _
    // Predicated region
    $region18: #{tpu_custom_call.1} parent=1 // pred_check
      _
    $region19: #{tpu_custom_call.1} parent=1 // pred_check_branch
      %23 = sbr.rel (0) target = $region21
    $region20: #{tpu_custom_call.1} parent=1 // pred_region
      %s25 = ssub.s32 8192, 8192
      %26 = vsyncadd [#allocation3], %s25
      %s27 = sshll.u32 [#allocation2], 4
      %s28 = int_to_ptr.vmem [resolvable:$true] %s27
      %33 = dma.hbm_to_vmem [thread:$0]  %s4, 8192, %s28, [#allocation3], 64, 64, 4
    $region21: #{tpu_custom_call.1} parent=1 // pred_fallthru
      _
    // Predicated region
    $region22: #{tpu_custom_call.1} parent=1 // pred_check
      _
    $region23: #{tpu_custom_call.1} parent=1 // pred_check_branch
      %35 = sbr.rel (0) target = $region25
    $region24: #{tpu_custom_call.1} parent=1 // pred_region
      _
    $region25: #{tpu_custom_call.1} parent=1 // pred_fallthru
      _
    // Predicated region
    $region26: #{tpu_custom_call.1} parent=1 // pred_check
      _
    $region27: #{tpu_custom_call.1} parent=1 // pred_check_branch
      %37 = sbr.rel (0) target = $region29
    $region28: #{tpu_custom_call.1} parent=1 // pred_region
      _
    $region29: #{tpu_custom_call.1} parent=1 // pred_fallthru
      _
    // Predicated region
    $region30: #{tpu_custom_call.1} parent=1 // pred_check
      _
    $region31: #{tpu_custom_call.1} parent=1 // pred_check_branch
      %39 = sbr.rel (0) target = $region33
    $region32: #{tpu_custom_call.1} parent=1 // pred_region
      _
    $region33: #{tpu_custom_call.1} parent=1 // pred_fallthru
      _
    // Predicated region
    $region34: #{tpu_custom_call.1} parent=1 // pred_check
      _
    $region35: #{tpu_custom_call.1} parent=1 // pred_check_branch
      %41 = sbr.rel (0) target = $region37
    $region36: #{tpu_custom_call.1} parent=1 // pred_region
      %42 = dma.done [#allocation3], 8192
    $region37: #{tpu_custom_call.1} parent=1 // pred_fallthru
      _
    %v44 = vld [vmem:[%s1] sm:$0xf]
    %v45 = vld [vmem:[%s1 + $0x4] sm:$0xf]
    %v46 = vld [vmem:[%s1 + $0x8] sm:$0xf]
    %v47 = vld [vmem:[%s1 + $0xc] sm:$0xf]
    %v48 = vld [vmem:[%s1 + $0x10] sm:$0xf]
    %v49 = vld [vmem:[%s1 + $0x14] sm:$0xf]
    %v50 = vld [vmem:[%s1 + $0x18] sm:$0xf]
    %v51 = vld [vmem:[%s1 + $0x1c] sm:$0xf]
    %v52 = vld [vmem:[%s1 + $0x20] sm:$0xf]
    %v53 = vld [vmem:[%s1 + $0x24] sm:$0xf]
    %v54 = vld [vmem:[%s1 + $0x28] sm:$0xf]
    %v55 = vld [vmem:[%s1 + $0x2c] sm:$0xf]
    %v56 = vld [vmem:[%s1 + $0x30] sm:$0xf]
    %v57 = vld [vmem:[%s1 + $0x34] sm:$0xf]
    %v58 = vld [vmem:[%s1 + $0x38] sm:$0xf]
    %v59 = vld [vmem:[%s1 + $0x3c] sm:$0xf]
    %v60 = vld [vmem:[%s0] sm:$0xff]
    %v61 = vld [vmem:[%s0 + $0x8] sm:$0xff]
    %v62 = vld [vmem:[%s0 + $0x10] sm:$0xff]
    %v63 = vld [vmem:[%s0 + $0x18] sm:$0xff]
    %v64 = vld [vmem:[%s0 + $0x20] sm:$0xff]
    %v65 = vld [vmem:[%s0 + $0x28] sm:$0xff]
    %v66 = vld [vmem:[%s0 + $0x30] sm:$0xff]
    %v67 = vld [vmem:[%s0 + $0x38] sm:$0xff]
    %v68 = vpack.c.bf16 %v61, %v60
    %v69 = vpack.c.bf16 %v63, %v62
    %v70 = vpack.c.bf16 %v65, %v64
    %v71 = vpack.c.bf16 %v67, %v66
    %v72 = vld [vmem:[%s2] sm:$0xf]
    %v73 = vld [vmem:[%s2 + $0x4] sm:$0xf]
    %v74 = vld [vmem:[%s3] sm:$0x1]
    %v76 = vlaneseq
    %v77 = vshrl.u32 %v76, 7
    %v78 = vsub.s32 0, %v77
    %v79 = vrot.slane %v74, %v78
    %v83 = vunpack.c.l.b16 %v72
    %v84 = vunpack.c.l.b16 %v73
    %v85 = vpack.c.b16 %v84, %v83
    %vm87 = vcmask 130048
    %v89 = vsel %vm87, %v68, 0
    %v92 = vsel %vm87, %v69, 0
    %v95 = vsel %vm87, %v70, 0
    %v98 = vsel %vm87, %v71, 0
    %100 = vmatprep.subr.bf16.mxu0 0
    %101 = vmatpush1.bf16.msra.mxu0 0
    %102 = vmatprep.subr.bf16.mxu0 0
    %103 = vmatpush1.bf16.msra.mxu0 0
    %104 = vmatprep.subr.bf16.mxu0 0
    %105 = vmatpush1.bf16.msra.mxu0 0
    %106 = vmatprep.subr.bf16.mxu0 0
    %107 = vmatpush1.bf16.msra.mxu0 0
    %108 = vmatprep.subr.bf16.mxu0 0
    %109 = vmatpush1.bf16.msra.mxu0 0
    %110 = vmatprep.subr.bf16.mxu0 0
    %111 = vmatpush1.bf16.msra.mxu0 0
    %112 = vmatprep.subr.bf16.mxu0 0
    %113 = vmatpush1.bf16.msra.mxu0 0
    %114 = vmatprep.subr.bf16.mxu0 0
    %115 = vmatpush1.bf16.msra.mxu0 %v85
    %116 = vmatprep.subr.bf16.mxu0 0
    %117 = vmatpush2.bf16.msra.mxu0 0
    %118 = vmatprep.subr.bf16.mxu0 0
    %119 = vmatpush2.bf16.msra.mxu0 0
    %120 = vmatprep.subr.bf16.mxu0 0
    %121 = vmatpush2.bf16.msra.mxu0 0
    %122 = vmatprep.subr.bf16.mxu0 0
    %123 = vmatpush2.bf16.msra.mxu0 0
    %124 = vmatprep.subr.bf16.mxu0 0
    %125 = vmatpush2.bf16.msra.mxu0 0
    %126 = vmatprep.subr.bf16.mxu0 0
    %127 = vmatpush2.bf16.msra.mxu0 0
    %128 = vmatprep.subr.bf16.mxu0 0
    %129 = vmatpush2.bf16.msra.mxu0 0
    %130 = vmatprep.subr.bf16.mxu0 0
    %131 = vmatpush2.bf16.msra.mxu0 0
    %132 = vmatprep.mubr.bf16.mxu0 0
    %133 = vmatmul.mubr.bf16.gmra.mxu0 %v89
    %v134 = vpop.f32.mrf.mxu0
    %v135 = vadd.f32 %v79, %v134
    %v136 = vpop.f32.mrf.mxu0
    %v137 = vpop.f32.mrf.mxu0
    %v138 = vadd.f32 %v79, %v137
    %v139 = vpop.f32.mrf.mxu0
    %140 = vmatprep.mubr.bf16.mxu0 0
    %141 = vmatmul.mubr.bf16.gmra.mxu0 %v92
    %v142 = vpop.f32.mrf.mxu0
    %v143 = vadd.f32 %v79, %v142
    %v144 = vpop.f32.mrf.mxu0
    %v145 = vpop.f32.mrf.mxu0
    %v146 = vadd.f32 %v79, %v145
    %v147 = vpop.f32.mrf.mxu0
    %148 = vmatprep.mubr.bf16.mxu0 0
    %149 = vmatmul.mubr.bf16.gmra.mxu0 %v95
    %v150 = vpop.f32.mrf.mxu0
    %v151 = vadd.f32 %v79, %v150
    %v152 = vpop.f32.mrf.mxu0
    %v153 = vpop.f32.mrf.mxu0
    %v154 = vadd.f32 %v79, %v153
    %v155 = vpop.f32.mrf.mxu0
    %156 = vmatprep.mubr.bf16.mxu0 0
    %157 = vmatmul.mubr.bf16.gmra.mxu0 %v98
    %v158 = vpop.f32.mrf.mxu0
    %v159 = vadd.f32 %v79, %v158
    %v160 = vpop.f32.mrf.mxu0
    %v161 = vpop.f32.mrf.mxu0
    %v162 = vadd.f32 %v79, %v161
    %v163 = vpop.f32.mrf.mxu0
    %164 = vdwg.mxu0
    %v165 = vpack.c.bf16 %v138, %v135
    %v166 = vpack.c.bf16 %v146, %v143
    %v167 = vpack.c.bf16 %v154, %v151
    %v168 = vpack.c.bf16 %v162, %v159
    %v169 = vld [vmem:[#allocation2] sm:$0xf]
    %v170 = vld [vmem:[#allocation2 + $0x4] sm:$0xf]
    %v171 = vld [vmem:[#allocation2 + $0x8] sm:$0xf]
    %v172 = vld [vmem:[#allocation2 + $0xc] sm:$0xf]
    %v173 = vld [vmem:[#allocation2 + $0x10] sm:$0xf]
    %v174 = vld [vmem:[#allocation2 + $0x14] sm:$0xf]
    %v175 = vld [vmem:[#allocation2 + $0x18] sm:$0xf]
    %v176 = vld [vmem:[#allocation2 + $0x1c] sm:$0xf]
    %v177 = vld [vmem:[#allocation2 + $0x20] sm:$0xf]
    %v178 = vld [vmem:[#allocation2 + $0x24] sm:$0xf]
    %v179 = vld [vmem:[#allocation2 + $0x28] sm:$0xf]
    %v180 = vld [vmem:[#allocation2 + $0x2c] sm:$0xf]
    %v181 = vld [vmem:[#allocation2 + $0x30] sm:$0xf]
    %v182 = vld [vmem:[#allocation2 + $0x34] sm:$0xf]
    %v183 = vld [vmem:[#allocation2 + $0x38] sm:$0xf]
    %v184 = vld [vmem:[#allocation2 + $0x3c] sm:$0xf]
    %v185 = vld [vmem:[%s5] sm:$0x1]
    %v187 = vlaneseq
    %v188 = vshrl.u32 %v187, 7
    %v189 = vsub.s32 0, %v188
    %v190 = vrot.slane %v185, %v189
    %v208 = vunpack.c.l.b16 %v169
    %v209 = vunpack.c.l.b16 %v170
    %v210 = vunpack.c.l.b16 %v171
    %v211 = vunpack.c.l.b16 %v172
    %v212 = vunpack.c.l.b16 %v173
    %v213 = vunpack.c.l.b16 %v174
    %v214 = vunpack.c.l.b16 %v175
    %v215 = vunpack.c.l.b16 %v176
    %v216 = vunpack.c.l.b16 %v177
    %v217 = vunpack.c.l.b16 %v178
    %v218 = vunpack.c.l.b16 %v179
    %v219 = vunpack.c.l.b16 %v180
    %v220 = vunpack.c.l.b16 %v181
    %v221 = vunpack.c.l.b16 %v182
    %v222 = vunpack.c.l.b16 %v183
    %v223 = vunpack.c.l.b16 %v184
    %v224 = vpack.c.b16 %v209, %v208
    %v225 = vpack.c.b16 %v211, %v210
    %v226 = vpack.c.b16 %v213, %v212
    %v227 = vpack.c.b16 %v215, %v214
    %v228 = vpack.c.b16 %v217, %v216
    %v229 = vpack.c.b16 %v219, %v218
    %v230 = vpack.c.b16 %v221, %v220
    %v231 = vpack.c.b16 %v223, %v222
    %240 = vmatprep.subr.bf16.mxu0 0
    %241 = vmatpush1.bf16.msra.mxu0 %v231
    %242 = vmatprep.subr.bf16.mxu0 0
    %243 = vmatpush1.bf16.msra.mxu0 %v230
    %244 = vmatprep.subr.bf16.mxu0 0
    %245 = vmatpush1.bf16.msra.mxu0 %v229
    %246 = vmatprep.subr.bf16.mxu0 0
    %247 = vmatpush1.bf16.msra.mxu0 %v228
    %248 = vmatprep.subr.bf16.mxu0 0
    %249 = vmatpush1.bf16.msra.mxu0 %v227
    %250 = vmatprep.subr.bf16.mxu0 0
    %251 = vmatpush1.bf16.msra.mxu0 %v226
    %252 = vmatprep.subr.bf16.mxu0 0
    %253 = vmatpush1.bf16.msra.mxu0 %v225
    %254 = vmatprep.subr.bf16.mxu0 0
    %255 = vmatpush1.bf16.msra.mxu0 %v224
    %256 = vmatprep.subr.bf16.mxu0 0
    %257 = vmatpush2.bf16.msra.mxu0 0
    %258 = vmatprep.subr.bf16.mxu0 0
    %259 = vmatpush2.bf16.msra.mxu0 0
    %260 = vmatprep.subr.bf16.mxu0 0
    %261 = vmatpush2.bf16.msra.mxu0 0
    %262 = vmatprep.subr.bf16.mxu0 0
    %263 = vmatpush2.bf16.msra.mxu0 0
    %264 = vmatprep.subr.bf16.mxu0 0
    %265 = vmatpush2.bf16.msra.mxu0 0
    %266 = vmatprep.subr.bf16.mxu0 0
    %267 = vmatpush2.bf16.msra.mxu0 0
    %268 = vmatprep.subr.bf16.mxu0 0
    %269 = vmatpush2.bf16.msra.mxu0 0
    %270 = vmatprep.subr.bf16.mxu0 0
    %271 = vmatpush2.bf16.msra.mxu0 0
    %272 = vmatprep.mubr.bf16.mxu0 0
    %273 = vmatmul.mubr.bf16.gmra.mxu0 %v165
    %v274 = vpop.f32.mrf.mxu0
    %v275 = vadd.f32 %v190, %v274
    %v276 = vpop.f32.mrf.mxu0
    %v277 = vpop.f32.mrf.mxu0
    %v278 = vadd.f32 %v190, %v277
    %v279 = vpop.f32.mrf.mxu0
    %280 = vmatprep.mubr.bf16.mxu0 0
    %281 = vmatmul.mubr.bf16.gmra.mxu0 %v166
    %v282 = vpop.f32.mrf.mxu0
    %v283 = vadd.f32 %v190, %v282
    %v284 = vpop.f32.mrf.mxu0
    %v285 = vpop.f32.mrf.mxu0
    %v286 = vadd.f32 %v190, %v285
    %v287 = vpop.f32.mrf.mxu0
    %288 = vmatprep.mubr.bf16.mxu0 0
    %289 = vmatmul.mubr.bf16.gmra.mxu0 %v167
    %v290 = vpop.f32.mrf.mxu0
    %v291 = vadd.f32 %v190, %v290
    %v292 = vpop.f32.mrf.mxu0
    %v293 = vpop.f32.mrf.mxu0
    %v294 = vadd.f32 %v190, %v293
    %v295 = vpop.f32.mrf.mxu0
    %296 = vmatprep.mubr.bf16.mxu0 0
    %297 = vmatmul.mubr.bf16.gmra.mxu0 %v168
    %v298 = vpop.f32.mrf.mxu0
    %v299 = vadd.f32 %v190, %v298
    %v300 = vpop.f32.mrf.mxu0
    %v301 = vpop.f32.mrf.mxu0
    %v302 = vadd.f32 %v190, %v301
    %v303 = vpop.f32.mrf.mxu0
    %304 = vdwg.mxu0
    %v305 = vmax.f32 %v275, 0.0
    %v306 = vmax.f32 %v278, 0.0
    %v307 = vmax.f32 %v283, 0.0
    %v308 = vmax.f32 %v286, 0.0
    %v309 = vmax.f32 %v291, 0.0
    %v310 = vmax.f32 %v294, 0.0
    %v311 = vmax.f32 %v299, 0.0
    %v312 = vmax.f32 %v302, 0.0
    %v313 = vadd.f32 %v135, %v305
    %v314 = vadd.f32 %v138, %v306
    %v315 = vadd.f32 %v143, %v307
    %v316 = vadd.f32 %v146, %v308
    %v317 = vadd.f32 %v151, %v309
    %v318 = vadd.f32 %v154, %v310
    %v319 = vadd.f32 %v159, %v311
    %v320 = vadd.f32 %v162, %v312
    %v321 = vpack.c.bf16 %v314, %v313
    %v322 = vpack.c.bf16 %v316, %v315
    %v323 = vpack.c.bf16 %v318, %v317
    %v324 = vpack.c.bf16 %v320, %v319
    %s325 = scalar_lea.vmem [#allocation2], 64
    %v326 = vld [vmem:[%s325] sm:$0xf]
    %v327 = vld [vmem:[%s325 + $0x4] sm:$0xf]
    %v328 = vld [vmem:[%s325 + $0x8] sm:$0xf]
    %v329 = vld [vmem:[%s325 + $0xc] sm:$0xf]
    %v330 = vld [vmem:[%s325 + $0x10] sm:$0xf]
    %v331 = vld [vmem:[%s325 + $0x14] sm:$0xf]
    %v332 = vld [vmem:[%s325 + $0x18] sm:$0xf]
    %v333 = vld [vmem:[%s325 + $0x1c] sm:$0xf]
    %v334 = vld [vmem:[%s325 + $0x20] sm:$0xf]
    %v335 = vld [vmem:[%s325 + $0x24] sm:$0xf]
    %v336 = vld [vmem:[%s325 + $0x28] sm:$0xf]
    %v337 = vld [vmem:[%s325 + $0x2c] sm:$0xf]
    %v338 = vld [vmem:[%s325 + $0x30] sm:$0xf]
    %v339 = vld [vmem:[%s325 + $0x34] sm:$0xf]
    %v340 = vld [vmem:[%s325 + $0x38] sm:$0xf]
    %v341 = vld [vmem:[%s325 + $0x3c] sm:$0xf]
    %s342 = scalar_lea.vmem %s5, 1
    %v343 = vld [vmem:[%s342] sm:$0x1]
    %v345 = vlaneseq
    %v346 = vshrl.u32 %v345, 7
    %v347 = vsub.s32 0, %v346
    %v348 = vrot.slane %v343, %v347
    %v366 = vunpack.c.l.b16 %v326
    %v367 = vunpack.c.l.b16 %v327
    %v368 = vunpack.c.l.b16 %v328
    %v369 = vunpack.c.l.b16 %v329
    %v370 = vunpack.c.l.b16 %v330
    %v371 = vunpack.c.l.b16 %v331
    %v372 = vunpack.c.l.b16 %v332
    %v373 = vunpack.c.l.b16 %v333
    %v374 = vunpack.c.l.b16 %v334
    %v375 = vunpack.c.l.b16 %v335
    %v376 = vunpack.c.l.b16 %v336
    %v377 = vunpack.c.l.b16 %v337
    %v378 = vunpack.c.l.b16 %v338
    %v379 = vunpack.c.l.b16 %v339
    %v380 = vunpack.c.l.b16 %v340
    %v381 = vunpack.c.l.b16 %v341
    %v382 = vpack.c.b16 %v367, %v366
    %v383 = vpack.c.b16 %v369, %v368
    %v384 = vpack.c.b16 %v371, %v370
    %v385 = vpack.c.b16 %v373, %v372
    %v386 = vpack.c.b16 %v375, %v374
    %v387 = vpack.c.b16 %v377, %v376
    %v388 = vpack.c.b16 %v379, %v378
    %v389 = vpack.c.b16 %v381, %v380
    %398 = vmatprep.subr.bf16.mxu0 0
    %399 = vmatpush1.bf16.msra.mxu0 %v389
    %400 = vmatprep.subr.bf16.mxu0 0
    %401 = vmatpush1.bf16.msra.mxu0 %v388
    %402 = vmatprep.subr.bf16.mxu0 0
    %403 = vmatpush1.bf16.msra.mxu0 %v387
    %404 = vmatprep.subr.bf16.mxu0 0
    %405 = vmatpush1.bf16.msra.mxu0 %v386
    %406 = vmatprep.subr.bf16.mxu0 0
    %407 = vmatpush1.bf16.msra.mxu0 %v385
    %408 = vmatprep.subr.bf16.mxu0 0
    %409 = vmatpush1.bf16.msra.mxu0 %v384
    %410 = vmatprep.subr.bf16.mxu0 0
    %411 = vmatpush1.bf16.msra.mxu0 %v383
    %412 = vmatprep.subr.bf16.mxu0 0
    %413 = vmatpush1.bf16.msra.mxu0 %v382
    %414 = vmatprep.subr.bf16.mxu0 0
    %415 = vmatpush2.bf16.msra.mxu0 0
    %416 = vmatprep.subr.bf16.mxu0 0
    %417 = vmatpush2.bf16.msra.mxu0 0
    %418 = vmatprep.subr.bf16.mxu0 0
    %419 = vmatpush2.bf16.msra.mxu0 0
    %420 = vmatprep.subr.bf16.mxu0 0
    %421 = vmatpush2.bf16.msra.mxu0 0
    %422 = vmatprep.subr.bf16.mxu0 0
    %423 = vmatpush2.bf16.msra.mxu0 0
    %424 = vmatprep.subr.bf16.mxu0 0
    %425 = vmatpush2.bf16.msra.mxu0 0
    %426 = vmatprep.subr.bf16.mxu0 0
    %427 = vmatpush2.bf16.msra.mxu0 0
    %428 = vmatprep.subr.bf16.mxu0 0
    %429 = vmatpush2.bf16.msra.mxu0 0
    %430 = vmatprep.mubr.bf16.mxu0 0
    %431 = vmatmul.mubr.bf16.gmra.mxu0 %v321
    %v432 = vpop.f32.mrf.mxu0
    %v433 = vadd.f32 %v348, %v432
    %v434 = vpop.f32.mrf.mxu0
    %v435 = vpop.f32.mrf.mxu0
    %v436 = vadd.f32 %v348, %v435
    %v437 = vpop.f32.mrf.mxu0
    %438 = vmatprep.mubr.bf16.mxu0 0
    %439 = vmatmul.mubr.bf16.gmra.mxu0 %v322
    %v440 = vpop.f32.mrf.mxu0
    %v441 = vadd.f32 %v348, %v440
    %v442 = vpop.f32.mrf.mxu0
    %v443 = vpop.f32.mrf.mxu0
    %v444 = vadd.f32 %v348, %v443
    %v445 = vpop.f32.mrf.mxu0
    %446 = vmatprep.mubr.bf16.mxu0 0
    %447 = vmatmul.mubr.bf16.gmra.mxu0 %v323
    %v448 = vpop.f32.mrf.mxu0
    %v449 = vadd.f32 %v348, %v448
    %v450 = vpop.f32.mrf.mxu0
    %v451 = vpop.f32.mrf.mxu0
    %v452 = vadd.f32 %v348, %v451
    %v453 = vpop.f32.mrf.mxu0
    %454 = vmatprep.mubr.bf16.mxu0 0
    %455 = vmatmul.mubr.bf16.gmra.mxu0 %v324
    %v456 = vpop.f32.mrf.mxu0
    %v457 = vadd.f32 %v348, %v456
    %v458 = vpop.f32.mrf.mxu0
    %v459 = vpop.f32.mrf.mxu0
    %v460 = vadd.f32 %v348, %v459
    %v461 = vpop.f32.mrf.mxu0
    %462 = vdwg.mxu0
    %v463 = vmax.f32 %v433, 0.0
    %v464 = vmax.f32 %v436, 0.0
    %v465 = vmax.f32 %v441, 0.0
    %v466 = vmax.f32 %v444, 0.0
    %v467 = vmax.f32 %v449, 0.0
    %v468 = vmax.f32 %v452, 0.0
    %v469 = vmax.f32 %v457, 0.0
    %v470 = vmax.f32 %v460, 0.0
    %v471 = vadd.f32 %v313, %v463
    %v472 = vadd.f32 %v314, %v464
    %v473 = vadd.f32 %v315, %v465
    %v474 = vadd.f32 %v316, %v466
    %v475 = vadd.f32 %v317, %v467
    %v476 = vadd.f32 %v318, %v468
    %v477 = vadd.f32 %v319, %v469
    %v478 = vadd.f32 %v320, %v470
    %v479 = vpack.c.bf16 %v472, %v471
    %v480 = vpack.c.bf16 %v474, %v473
    %v481 = vpack.c.bf16 %v476, %v475
    %v482 = vpack.c.bf16 %v478, %v477
    %v483 = vld [vmem:[%s6] sm:$0xf]
    %v484 = vld [vmem:[%s6 + $0x4] sm:$0xf]
    %v485 = vld [vmem:[%s6 + $0x8] sm:$0xf]
    %v486 = vld [vmem:[%s6 + $0xc] sm:$0xf]
    %v487 = vld [vmem:[%s6 + $0x10] sm:$0xf]
    %v488 = vld [vmem:[%s6 + $0x14] sm:$0xf]
    %v489 = vld [vmem:[%s6 + $0x18] sm:$0xf]
    %v490 = vld [vmem:[%s6 + $0x1c] sm:$0xf]
    %v491 = vld [vmem:[%s6 + $0x20] sm:$0xf]
    %v492 = vld [vmem:[%s6 + $0x24] sm:$0xf]
    %v493 = vld [vmem:[%s6 + $0x28] sm:$0xf]
    %v494 = vld [vmem:[%s6 + $0x2c] sm:$0xf]
    %v495 = vld [vmem:[%s6 + $0x30] sm:$0xf]
    %v496 = vld [vmem:[%s6 + $0x34] sm:$0xf]
    %v497 = vld [vmem:[%s6 + $0x38] sm:$0xf]
    %v498 = vld [vmem:[%s6 + $0x3c] sm:$0xf]
    %v499 = vld [vmem:[%s7] sm:$0x1]
    %v501 = vlaneseq
    %v502 = vshrl.u32 %v501, 7
    %v503 = vsub.s32 0, %v502
    %v504 = vrot.slane %v499, %v503
    %v522 = vunpack.c.l.b16 %v483
    %v523 = vunpack.c.l.b16 %v484
    %v524 = vunpack.c.l.b16 %v485
    %v525 = vunpack.c.l.b16 %v486
    %v526 = vunpack.c.l.b16 %v487
    %v527 = vunpack.c.l.b16 %v488
    %v528 = vunpack.c.l.b16 %v489
    %v529 = vunpack.c.l.b16 %v490
    %v530 = vunpack.c.l.b16 %v491
    %v531 = vunpack.c.l.b16 %v492
    %v532 = vunpack.c.l.b16 %v493
    %v533 = vunpack.c.l.b16 %v494
    %v534 = vunpack.c.l.b16 %v495
    %v535 = vunpack.c.l.b16 %v496
    %v536 = vunpack.c.l.b16 %v497
    %v537 = vunpack.c.l.b16 %v498
    %v538 = vpack.c.b16 %v523, %v522
    %v539 = vpack.c.b16 %v525, %v524
    %v540 = vpack.c.b16 %v527, %v526
    %v541 = vpack.c.b16 %v529, %v528
    %v542 = vpack.c.b16 %v531, %v530
    %v543 = vpack.c.b16 %v533, %v532
    %v544 = vpack.c.b16 %v535, %v534
    %v545 = vpack.c.b16 %v537, %v536
    %554 = vmatprep.subr.bf16.mxu0 0
    %555 = vmatpush1.bf16.msra.mxu0 %v545
    %556 = vmatprep.subr.bf16.mxu0 0
    %557 = vmatpush1.bf16.msra.mxu0 %v544
    %558 = vmatprep.subr.bf16.mxu0 0
    %559 = vmatpush1.bf16.msra.mxu0 %v543
    %560 = vmatprep.subr.bf16.mxu0 0
    %561 = vmatpush1.bf16.msra.mxu0 %v542
    %562 = vmatprep.subr.bf16.mxu0 0
    %563 = vmatpush1.bf16.msra.mxu0 %v541
    %564 = vmatprep.subr.bf16.mxu0 0
    %565 = vmatpush1.bf16.msra.mxu0 %v540
    %566 = vmatprep.subr.bf16.mxu0 0
    %567 = vmatpush1.bf16.msra.mxu0 %v539
    %568 = vmatprep.subr.bf16.mxu0 0
    %569 = vmatpush1.bf16.msra.mxu0 %v538
    %570 = vmatprep.subr.bf16.mxu0 0
    %571 = vmatpush2.bf16.msra.mxu0 0
    %572 = vmatprep.subr.bf16.mxu0 0
    %573 = vmatpush2.bf16.msra.mxu0 0
    %574 = vmatprep.subr.bf16.mxu0 0
    %575 = vmatpush2.bf16.msra.mxu0 0
    %576 = vmatprep.subr.bf16.mxu0 0
    %577 = vmatpush2.bf16.msra.mxu0 0
    %578 = vmatprep.subr.bf16.mxu0 0
    %579 = vmatpush2.bf16.msra.mxu0 0
    %580 = vmatprep.subr.bf16.mxu0 0
    %581 = vmatpush2.bf16.msra.mxu0 0
    %582 = vmatprep.subr.bf16.mxu0 0
    %583 = vmatpush2.bf16.msra.mxu0 0
    %584 = vmatprep.subr.bf16.mxu0 0
    %585 = vmatpush2.bf16.msra.mxu0 0
    %586 = vmatprep.mubr.bf16.mxu0 0
    %587 = vmatmul.mubr.bf16.gmra.mxu0 %v479
    %v588 = vpop.f32.mrf.mxu0
    %v589 = vadd.f32 %v504, %v588
    %v590 = vpop.f32.mrf.mxu0
    %v591 = vpop.f32.mrf.mxu0
    %v592 = vadd.f32 %v504, %v591
    %v593 = vpop.f32.mrf.mxu0
    %594 = vmatprep.mubr.bf16.mxu0 0
    %595 = vmatmul.mubr.bf16.gmra.mxu0 %v480
    %v596 = vpop.f32.mrf.mxu0
    %v597 = vadd.f32 %v504, %v596
    %v598 = vpop.f32.mrf.mxu0
    %v599 = vpop.f32.mrf.mxu0
    %v600 = vadd.f32 %v504, %v599
    %v601 = vpop.f32.mrf.mxu0
    %602 = vmatprep.mubr.bf16.mxu0 0
    %603 = vmatmul.mubr.bf16.gmra.mxu0 %v481
    %v604 = vpop.f32.mrf.mxu0
    %v605 = vadd.f32 %v504, %v604
    %v606 = vpop.f32.mrf.mxu0
    %v607 = vpop.f32.mrf.mxu0
    %v608 = vadd.f32 %v504, %v607
    %v609 = vpop.f32.mrf.mxu0
    %610 = vmatprep.mubr.bf16.mxu0 0
    %611 = vmatmul.mubr.bf16.gmra.mxu0 %v482
    %v612 = vpop.f32.mrf.mxu0
    %v613 = vadd.f32 %v504, %v612
    %v614 = vpop.f32.mrf.mxu0
    %v615 = vpop.f32.mrf.mxu0
    %v616 = vadd.f32 %v504, %v615
    %v617 = vpop.f32.mrf.mxu0
    %618 = vdwg.mxu0
    %v619 = vpack.c.bf16 %v592, %v589
    %v620 = vpack.c.bf16 %v600, %v597
    %v621 = vpack.c.bf16 %v608, %v605
    %v622 = vpack.c.bf16 %v616, %v613
    %s623 = scalar_lea.vmem %s2, 8
    %v624 = vld [vmem:[%s623] sm:$0xf]
    %v625 = vld [vmem:[%s623 + $0x4] sm:$0xf]
    %s626 = scalar_lea.vmem %s3, 1
    %v627 = vld [vmem:[%s626] sm:$0x1]
    %v629 = vlaneseq
    %v630 = vshrl.u32 %v629, 7
    %v631 = vsub.s32 0, %v630
    %v632 = vrot.slane %v627, %v631
    %v636 = vunpack.c.l.b16 %v624
    %v637 = vunpack.c.l.b16 %v625
    %v638 = vpack.c.b16 %v637, %v636
    %640 = vmatprep.subr.bf16.mxu0 0
    %641 = vmatpush1.bf16.msra.mxu0 0
    %642 = vmatprep.subr.bf16.mxu0 0
    %643 = vmatpush1.bf16.msra.mxu0 0
    %644 = vmatprep.subr.bf16.mxu0 0
    %645 = vmatpush1.bf16.msra.mxu0 0
    %646 = vmatprep.subr.bf16.mxu0 0
    %647 = vmatpush1.bf16.msra.mxu0 0
    %648 = vmatprep.subr.bf16.mxu0 0
    %649 = vmatpush1.bf16.msra.mxu0 0
    %650 = vmatprep.subr.bf16.mxu0 0
    %651 = vmatpush1.bf16.msra.mxu0 0
    %652 = vmatprep.subr.bf16.mxu0 0
    %653 = vmatpush1.bf16.msra.mxu0 0
    %654 = vmatprep.subr.bf16.mxu0 0
    %655 = vmatpush1.bf16.msra.mxu0 %v638
    %656 = vmatprep.subr.bf16.mxu0 0
    %657 = vmatpush2.bf16.msra.mxu0 0
    %658 = vmatprep.subr.bf16.mxu0 0
    %659 = vmatpush2.bf16.msra.mxu0 0
    %660 = vmatprep.subr.bf16.mxu0 0
    %661 = vmatpush2.bf16.msra.mxu0 0
    %662 = vmatprep.subr.bf16.mxu0 0
    %663 = vmatpush2.bf16.msra.mxu0 0
    %664 = vmatprep.subr.bf16.mxu0 0
    %665 = vmatpush2.bf16.msra.mxu0 0
    %666 = vmatprep.subr.bf16.mxu0 0
    %667 = vmatpush2.bf16.msra.mxu0 0
    %668 = vmatprep.subr.bf16.mxu0 0
    %669 = vmatpush2.bf16.msra.mxu0 0
    %670 = vmatprep.subr.bf16.mxu0 0
    %671 = vmatpush2.bf16.msra.mxu0 0
    %672 = vmatprep.mubr.bf16.mxu0 0
    %673 = vmatmul.mubr.bf16.gmra.mxu0 %v89
    %v674 = vpop.f32.mrf.mxu0
    %v675 = vadd.f32 %v632, %v674
    %v676 = vpop.f32.mrf.mxu0
    %v677 = vpop.f32.mrf.mxu0
    %v678 = vadd.f32 %v632, %v677
    %v679 = vpop.f32.mrf.mxu0
    %680 = vmatprep.mubr.bf16.mxu0 0
    %681 = vmatmul.mubr.bf16.gmra.mxu0 %v92
    %v682 = vpop.f32.mrf.mxu0
    %v683 = vadd.f32 %v632, %v682
    %v684 = vpop.f32.mrf.mxu0
    %v685 = vpop.f32.mrf.mxu0
    %v686 = vadd.f32 %v632, %v685
    %v687 = vpop.f32.mrf.mxu0
    %688 = vmatprep.mubr.bf16.mxu0 0
    %689 = vmatmul.mubr.bf16.gmra.mxu0 %v95
    %v690 = vpop.f32.mrf.mxu0
    %v691 = vadd.f32 %v632, %v690
    %v692 = vpop.f32.mrf.mxu0
    %v693 = vpop.f32.mrf.mxu0
    %v694 = vadd.f32 %v632, %v693
    %v695 = vpop.f32.mrf.mxu0
    %696 = vmatprep.mubr.bf16.mxu0 0
    %697 = vmatmul.mubr.bf16.gmra.mxu0 %v98
    %v698 = vpop.f32.mrf.mxu0
    %v699 = vadd.f32 %v632, %v698
    %v700 = vpop.f32.mrf.mxu0
    %v701 = vpop.f32.mrf.mxu0
    %v702 = vadd.f32 %v632, %v701
    %v703 = vpop.f32.mrf.mxu0
    %704 = vdwg.mxu0
    %v705 = vpack.c.bf16 %v678, %v675
    %v706 = vpack.c.bf16 %v686, %v683
    %v707 = vpack.c.bf16 %v694, %v691
    %v708 = vpack.c.bf16 %v702, %v699
    %s709 = scalar_lea.vmem [#allocation2], 128
    %v710 = vld [vmem:[%s709] sm:$0xf]
    %v711 = vld [vmem:[%s709 + $0x4] sm:$0xf]
    %v712 = vld [vmem:[%s709 + $0x8] sm:$0xf]
    %v713 = vld [vmem:[%s709 + $0xc] sm:$0xf]
    %v714 = vld [vmem:[%s709 + $0x10] sm:$0xf]
    %v715 = vld [vmem:[%s709 + $0x14] sm:$0xf]
    %v716 = vld [vmem:[%s709 + $0x18] sm:$0xf]
    %v717 = vld [vmem:[%s709 + $0x1c] sm:$0xf]
    %v718 = vld [vmem:[%s709 + $0x20] sm:$0xf]
    %v719 = vld [vmem:[%s709 + $0x24] sm:$0xf]
    %v720 = vld [vmem:[%s709 + $0x28] sm:$0xf]
    %v721 = vld [vmem:[%s709 + $0x2c] sm:$0xf]
    %v722 = vld [vmem:[%s709 + $0x30] sm:$0xf]
    %v723 = vld [vmem:[%s709 + $0x34] sm:$0xf]
    %v724 = vld [vmem:[%s709 + $0x38] sm:$0xf]
    %v725 = vld [vmem:[%s709 + $0x3c] sm:$0xf]
    %s726 = scalar_lea.vmem %s5, 2
    %v727 = vld [vmem:[%s726] sm:$0x1]
    %v729 = vlaneseq
    %v730 = vshrl.u32 %v729, 7
    %v731 = vsub.s32 0, %v730
    %v732 = vrot.slane %v727, %v731
    %v750 = vunpack.c.l.b16 %v710
    %v751 = vunpack.c.l.b16 %v711
    %v752 = vunpack.c.l.b16 %v712
    %v753 = vunpack.c.l.b16 %v713
    %v754 = vunpack.c.l.b16 %v714
    %v755 = vunpack.c.l.b16 %v715
    %v756 = vunpack.c.l.b16 %v716
    %v757 = vunpack.c.l.b16 %v717
    %v758 = vunpack.c.l.b16 %v718
    %v759 = vunpack.c.l.b16 %v719
    %v760 = vunpack.c.l.b16 %v720
    %v761 = vunpack.c.l.b16 %v721
    %v762 = vunpack.c.l.b16 %v722
    %v763 = vunpack.c.l.b16 %v723
    %v764 = vunpack.c.l.b16 %v724
    %v765 = vunpack.c.l.b16 %v725
    %v766 = vpack.c.b16 %v751, %v750
    %v767 = vpack.c.b16 %v753, %v752
    %v768 = vpack.c.b16 %v755, %v754
    %v769 = vpack.c.b16 %v757, %v756
    %v770 = vpack.c.b16 %v759, %v758
    %v771 = vpack.c.b16 %v761, %v760
    %v772 = vpack.c.b16 %v763, %v762
    %v773 = vpack.c.b16 %v765, %v764
    %782 = vmatprep.subr.bf16.mxu0 0
    %783 = vmatpush1.bf16.msra.mxu0 %v773
    %784 = vmatprep.subr.bf16.mxu0 0
    %785 = vmatpush1.bf16.msra.mxu0 %v772
    %786 = vmatprep.subr.bf16.mxu0 0
    %787 = vmatpush1.bf16.msra.mxu0 %v771
    %788 = vmatprep.subr.bf16.mxu0 0
    %789 = vmatpush1.bf16.msra.mxu0 %v770
    %790 = vmatprep.subr.bf16.mxu0 0
    %791 = vmatpush1.bf16.msra.mxu0 %v769
    %792 = vmatprep.subr.bf16.mxu0 0
    %793 = vmatpush1.bf16.msra.mxu0 %v768
    %794 = vmatprep.subr.bf16.mxu0 0
    %795 = vmatpush1.bf16.msra.mxu0 %v767
    %796 = vmatprep.subr.bf16.mxu0 0
    %797 = vmatpush1.bf16.msra.mxu0 %v766
    %798 = vmatprep.subr.bf16.mxu0 0
    %799 = vmatpush2.bf16.msra.mxu0 0
    %800 = vmatprep.subr.bf16.mxu0 0
    %801 = vmatpush2.bf16.msra.mxu0 0
    %802 = vmatprep.subr.bf16.mxu0 0
    %803 = vmatpush2.bf16.msra.mxu0 0
    %804 = vmatprep.subr.bf16.mxu0 0
    %805 = vmatpush2.bf16.msra.mxu0 0
    %806 = vmatprep.subr.bf16.mxu0 0
    %807 = vmatpush2.bf16.msra.mxu0 0
    %808 = vmatprep.subr.bf16.mxu0 0
    %809 = vmatpush2.bf16.msra.mxu0 0
    %810 = vmatprep.subr.bf16.mxu0 0
    %811 = vmatpush2.bf16.msra.mxu0 0
    %812 = vmatprep.subr.bf16.mxu0 0
    %813 = vmatpush2.bf16.msra.mxu0 0
    %814 = vmatprep.mubr.bf16.mxu0 0
    %815 = vmatmul.mubr.bf16.gmra.mxu0 %v705
    %v816 = vpop.f32.mrf.mxu0
    %v817 = vadd.f32 %v732, %v816
    %v818 = vpop.f32.mrf.mxu0
    %v819 = vpop.f32.mrf.mxu0
    %v820 = vadd.f32 %v732, %v819
    %v821 = vpop.f32.mrf.mxu0
    %822 = vmatprep.mubr.bf16.mxu0 0
    %823 = vmatmul.mubr.bf16.gmra.mxu0 %v706
    %v824 = vpop.f32.mrf.mxu0
    %v825 = vadd.f32 %v732, %v824
    %v826 = vpop.f32.mrf.mxu0
    %v827 = vpop.f32.mrf.mxu0
    %v828 = vadd.f32 %v732, %v827
    %v829 = vpop.f32.mrf.mxu0
    %830 = vmatprep.mubr.bf16.mxu0 0
    %831 = vmatmul.mubr.bf16.gmra.mxu0 %v707
    %v832 = vpop.f32.mrf.mxu0
    %v833 = vadd.f32 %v732, %v832
    %v834 = vpop.f32.mrf.mxu0
    %v835 = vpop.f32.mrf.mxu0
    %v836 = vadd.f32 %v732, %v835
    %v837 = vpop.f32.mrf.mxu0
    %838 = vmatprep.mubr.bf16.mxu0 0
    %839 = vmatmul.mubr.bf16.gmra.mxu0 %v708
    %v840 = vpop.f32.mrf.mxu0
    %v841 = vadd.f32 %v732, %v840
    %v842 = vpop.f32.mrf.mxu0
    %v843 = vpop.f32.mrf.mxu0
    %v844 = vadd.f32 %v732, %v843
    %v845 = vpop.f32.mrf.mxu0
    %846 = vdwg.mxu0
    %v847 = vmax.f32 %v817, 0.0
    %v848 = vmax.f32 %v820, 0.0
    %v849 = vmax.f32 %v825, 0.0
    %v850 = vmax.f32 %v828, 0.0
    %v851 = vmax.f32 %v833, 0.0
    %v852 = vmax.f32 %v836, 0.0
    %v853 = vmax.f32 %v841, 0.0
    %v854 = vmax.f32 %v844, 0.0
    %v855 = vadd.f32 %v675, %v847
    %v856 = vadd.f32 %v678, %v848
    %v857 = vadd.f32 %v683, %v849
    %v858 = vadd.f32 %v686, %v850
    %v859 = vadd.f32 %v691, %v851
    %v860 = vadd.f32 %v694, %v852
    %v861 = vadd.f32 %v699, %v853
    %v862 = vadd.f32 %v702, %v854
    %v863 = vpack.c.bf16 %v856, %v855
    %v864 = vpack.c.bf16 %v858, %v857
    %v865 = vpack.c.bf16 %v860, %v859
    %v866 = vpack.c.bf16 %v862, %v861
    %s867 = scalar_lea.vmem [#allocation2], 192
    %v868 = vld [vmem:[%s867] sm:$0xf]
    %v869 = vld [vmem:[%s867 + $0x4] sm:$0xf]
    %v870 = vld [vmem:[%s867 + $0x8] sm:$0xf]
    %v871 = vld [vmem:[%s867 + $0xc] sm:$0xf]
    %v872 = vld [vmem:[%s867 + $0x10] sm:$0xf]
    %v873 = vld [vmem:[%s867 + $0x14] sm:$0xf]
    %v874 = vld [vmem:[%s867 + $0x18] sm:$0xf]
    %v875 = vld [vmem:[%s867 + $0x1c] sm:$0xf]
    %v876 = vld [vmem:[%s867 + $0x20] sm:$0xf]
    %v877 = vld [vmem:[%s867 + $0x24] sm:$0xf]
    %v878 = vld [vmem:[%s867 + $0x28] sm:$0xf]
    %v879 = vld [vmem:[%s867 + $0x2c] sm:$0xf]
    %v880 = vld [vmem:[%s867 + $0x30] sm:$0xf]
    %v881 = vld [vmem:[%s867 + $0x34] sm:$0xf]
    %v882 = vld [vmem:[%s867 + $0x38] sm:$0xf]
    %v883 = vld [vmem:[%s867 + $0x3c] sm:$0xf]
    %s884 = scalar_lea.vmem %s5, 3
    %v885 = vld [vmem:[%s884] sm:$0x1]
    %v887 = vlaneseq
    %v888 = vshrl.u32 %v887, 7
    %v889 = vsub.s32 0, %v888
    %v890 = vrot.slane %v885, %v889
    %v908 = vunpack.c.l.b16 %v868
    %v909 = vunpack.c.l.b16 %v869
    %v910 = vunpack.c.l.b16 %v870
    %v911 = vunpack.c.l.b16 %v871
    %v912 = vunpack.c.l.b16 %v872
    %v913 = vunpack.c.l.b16 %v873
    %v914 = vunpack.c.l.b16 %v874
    %v915 = vunpack.c.l.b16 %v875
    %v916 = vunpack.c.l.b16 %v876
    %v917 = vunpack.c.l.b16 %v877
    %v918 = vunpack.c.l.b16 %v878
    %v919 = vunpack.c.l.b16 %v879
    %v920 = vunpack.c.l.b16 %v880
    %v921 = vunpack.c.l.b16 %v881
    %v922 = vunpack.c.l.b16 %v882
    %v923 = vunpack.c.l.b16 %v883
    %v924 = vpack.c.b16 %v909, %v908
    %v925 = vpack.c.b16 %v911, %v910
    %v926 = vpack.c.b16 %v913, %v912
    %v927 = vpack.c.b16 %v915, %v914
    %v928 = vpack.c.b16 %v917, %v916
    %v929 = vpack.c.b16 %v919, %v918
    %v930 = vpack.c.b16 %v921, %v920
    %v931 = vpack.c.b16 %v923, %v922
    %940 = vmatprep.subr.bf16.mxu0 0
    %941 = vmatpush1.bf16.msra.mxu0 %v931
    %942 = vmatprep.subr.bf16.mxu0 0
    %943 = vmatpush1.bf16.msra.mxu0 %v930
    %944 = vmatprep.subr.bf16.mxu0 0
    %945 = vmatpush1.bf16.msra.mxu0 %v929
    %946 = vmatprep.subr.bf16.mxu0 0
    %947 = vmatpush1.bf16.msra.mxu0 %v928
    %948 = vmatprep.subr.bf16.mxu0 0
    %949 = vmatpush1.bf16.msra.mxu0 %v927
    %950 = vmatprep.subr.bf16.mxu0 0
    %951 = vmatpush1.bf16.msra.mxu0 %v926
    %952 = vmatprep.subr.bf16.mxu0 0
    %953 = vmatpush1.bf16.msra.mxu0 %v925
    %954 = vmatprep.subr.bf16.mxu0 0
    %955 = vmatpush1.bf16.msra.mxu0 %v924
    %956 = vmatprep.subr.bf16.mxu0 0
    %957 = vmatpush2.bf16.msra.mxu0 0
    %958 = vmatprep.subr.bf16.mxu0 0
    %959 = vmatpush2.bf16.msra.mxu0 0
    %960 = vmatprep.subr.bf16.mxu0 0
    %961 = vmatpush2.bf16.msra.mxu0 0
    %962 = vmatprep.subr.bf16.mxu0 0
    %963 = vmatpush2.bf16.msra.mxu0 0
    %964 = vmatprep.subr.bf16.mxu0 0
    %965 = vmatpush2.bf16.msra.mxu0 0
    %966 = vmatprep.subr.bf16.mxu0 0
    %967 = vmatpush2.bf16.msra.mxu0 0
    %968 = vmatprep.subr.bf16.mxu0 0
    %969 = vmatpush2.bf16.msra.mxu0 0
    %970 = vmatprep.subr.bf16.mxu0 0
    %971 = vmatpush2.bf16.msra.mxu0 0
    %972 = vmatprep.mubr.bf16.mxu0 0
    %973 = vmatmul.mubr.bf16.gmra.mxu0 %v863
    %v974 = vpop.f32.mrf.mxu0
    %v975 = vadd.f32 %v890, %v974
    %v976 = vpop.f32.mrf.mxu0
    %v977 = vpop.f32.mrf.mxu0
    %v978 = vadd.f32 %v890, %v977
    %v979 = vpop.f32.mrf.mxu0
    %980 = vmatprep.mubr.bf16.mxu0 0
    %981 = vmatmul.mubr.bf16.gmra.mxu0 %v864
    %v982 = vpop.f32.mrf.mxu0
    %v983 = vadd.f32 %v890, %v982
    %v984 = vpop.f32.mrf.mxu0
    %v985 = vpop.f32.mrf.mxu0
    %v986 = vadd.f32 %v890, %v985
    %v987 = vpop.f32.mrf.mxu0
    %988 = vmatprep.mubr.bf16.mxu0 0
    %989 = vmatmul.mubr.bf16.gmra.mxu0 %v865
    %v990 = vpop.f32.mrf.mxu0
    %v991 = vadd.f32 %v890, %v990
    %v992 = vpop.f32.mrf.mxu0
    %v993 = vpop.f32.mrf.mxu0
    %v994 = vadd.f32 %v890, %v993
    %v995 = vpop.f32.mrf.mxu0
    %996 = vmatprep.mubr.bf16.mxu0 0
    %997 = vmatmul.mubr.bf16.gmra.mxu0 %v866
    %v998 = vpop.f32.mrf.mxu0
    %v999 = vadd.f32 %v890, %v998
    %v1000 = vpop.f32.mrf.mxu0
    %v1001 = vpop.f32.mrf.mxu0
    %v1002 = vadd.f32 %v890, %v1001
    %v1003 = vpop.f32.mrf.mxu0
    %1004 = vdwg.mxu0
    %v1005 = vmax.f32 %v975, 0.0
    %v1006 = vmax.f32 %v978, 0.0
    %v1007 = vmax.f32 %v983, 0.0
    %v1008 = vmax.f32 %v986, 0.0
    %v1009 = vmax.f32 %v991, 0.0
    %v1010 = vmax.f32 %v994, 0.0
    %v1011 = vmax.f32 %v999, 0.0
    %v1012 = vmax.f32 %v1002, 0.0
    %v1013 = vadd.f32 %v855, %v1005
    %v1014 = vadd.f32 %v856, %v1006
    %v1015 = vadd.f32 %v857, %v1007
    %v1016 = vadd.f32 %v858, %v1008
    %v1017 = vadd.f32 %v859, %v1009
    %v1018 = vadd.f32 %v860, %v1010
    %v1019 = vadd.f32 %v861, %v1011
    %v1020 = vadd.f32 %v862, %v1012
    %v1021 = vpack.c.bf16 %v1014, %v1013
    %v1022 = vpack.c.bf16 %v1016, %v1015
    %v1023 = vpack.c.bf16 %v1018, %v1017
    %v1024 = vpack.c.bf16 %v1020, %v1019
    %s1025 = scalar_lea.vmem %s6, 64
    %v1026 = vld [vmem:[%s1025] sm:$0xf]
    %v1027 = vld [vmem:[%s1025 + $0x4] sm:$0xf]
    %v1028 = vld [vmem:[%s1025 + $0x8] sm:$0xf]
    %v1029 = vld [vmem:[%s1025 + $0xc] sm:$0xf]
    %v1030 = vld [vmem:[%s1025 + $0x10] sm:$0xf]
    %v1031 = vld [vmem:[%s1025 + $0x14] sm:$0xf]
    %v1032 = vld [vmem:[%s1025 + $0x18] sm:$0xf]
    %v1033 = vld [vmem:[%s1025 + $0x1c] sm:$0xf]
    %v1034 = vld [vmem:[%s1025 + $0x20] sm:$0xf]
    %v1035 = vld [vmem:[%s1025 + $0x24] sm:$0xf]
    %v1036 = vld [vmem:[%s1025 + $0x28] sm:$0xf]
    %v1037 = vld [vmem:[%s1025 + $0x2c] sm:$0xf]
    %v1038 = vld [vmem:[%s1025 + $0x30] sm:$0xf]
    %v1039 = vld [vmem:[%s1025 + $0x34] sm:$0xf]
    %v1040 = vld [vmem:[%s1025 + $0x38] sm:$0xf]
    %v1041 = vld [vmem:[%s1025 + $0x3c] sm:$0xf]
    %s1042 = scalar_lea.vmem %s7, 1
    %v1043 = vld [vmem:[%s1042] sm:$0x1]
    %v1045 = vlaneseq
    %v1046 = vshrl.u32 %v1045, 7
    %v1047 = vsub.s32 0, %v1046
    %v1048 = vrot.slane %v1043, %v1047
    %v1066 = vunpack.c.l.b16 %v1026
    %v1067 = vunpack.c.l.b16 %v1027
    %v1068 = vunpack.c.l.b16 %v1028
    %v1069 = vunpack.c.l.b16 %v1029
    %v1070 = vunpack.c.l.b16 %v1030
    %v1071 = vunpack.c.l.b16 %v1031
    %v1072 = vunpack.c.l.b16 %v1032
    %v1073 = vunpack.c.l.b16 %v1033
    %v1074 = vunpack.c.l.b16 %v1034
    %v1075 = vunpack.c.l.b16 %v1035
    %v1076 = vunpack.c.l.b16 %v1036
    %v1077 = vunpack.c.l.b16 %v1037
    %v1078 = vunpack.c.l.b16 %v1038
    %v1079 = vunpack.c.l.b16 %v1039
    %v1080 = vunpack.c.l.b16 %v1040
    %v1081 = vunpack.c.l.b16 %v1041
    %v1082 = vpack.c.b16 %v1067, %v1066
    %v1083 = vpack.c.b16 %v1069, %v1068
    %v1084 = vpack.c.b16 %v1071, %v1070
    %v1085 = vpack.c.b16 %v1073, %v1072
    %v1086 = vpack.c.b16 %v1075, %v1074
    %v1087 = vpack.c.b16 %v1077, %v1076
    %v1088 = vpack.c.b16 %v1079, %v1078
    %v1089 = vpack.c.b16 %v1081, %v1080
    %1098 = vmatprep.subr.bf16.mxu0 0
    %1099 = vmatpush1.bf16.msra.mxu0 %v1089
    %1100 = vmatprep.subr.bf16.mxu0 0
    %1101 = vmatpush1.bf16.msra.mxu0 %v1088
    %1102 = vmatprep.subr.bf16.mxu0 0
    %1103 = vmatpush1.bf16.msra.mxu0 %v1087
    %1104 = vmatprep.subr.bf16.mxu0 0
    %1105 = vmatpush1.bf16.msra.mxu0 %v1086
    %1106 = vmatprep.subr.bf16.mxu0 0
    %1107 = vmatpush1.bf16.msra.mxu0 %v1085
    %1108 = vmatprep.subr.bf16.mxu0 0
    %1109 = vmatpush1.bf16.msra.mxu0 %v1084
    %1110 = vmatprep.subr.bf16.mxu0 0
    %1111 = vmatpush1.bf16.msra.mxu0 %v1083
    %1112 = vmatprep.subr.bf16.mxu0 0
    %1113 = vmatpush1.bf16.msra.mxu0 %v1082
    %1114 = vmatprep.subr.bf16.mxu0 0
    %1115 = vmatpush2.bf16.msra.mxu0 0
    %1116 = vmatprep.subr.bf16.mxu0 0
    %1117 = vmatpush2.bf16.msra.mxu0 0
    %1118 = vmatprep.subr.bf16.mxu0 0
    %1119 = vmatpush2.bf16.msra.mxu0 0
    %1120 = vmatprep.subr.bf16.mxu0 0
    %1121 = vmatpush2.bf16.msra.mxu0 0
    %1122 = vmatprep.subr.bf16.mxu0 0
    %1123 = vmatpush2.bf16.msra.mxu0 0
    %1124 = vmatprep.subr.bf16.mxu0 0
    %1125 = vmatpush2.bf16.msra.mxu0 0
    %1126 = vmatprep.subr.bf16.mxu0 0
    %1127 = vmatpush2.bf16.msra.mxu0 0
    %1128 = vmatprep.subr.bf16.mxu0 0
    %1129 = vmatpush2.bf16.msra.mxu0 0
    %1130 = vmatprep.mubr.bf16.mxu0 0
    %1131 = vmatmul.mubr.bf16.gmra.mxu0 %v1021
    %v1132 = vpop.f32.mrf.mxu0
    %v1133 = vadd.f32 %v1048, %v1132
    %v1134 = vpop.f32.mrf.mxu0
    %v1135 = vpop.f32.mrf.mxu0
    %v1136 = vadd.f32 %v1048, %v1135
    %v1137 = vpop.f32.mrf.mxu0
    %1138 = vmatprep.mubr.bf16.mxu0 0
    %1139 = vmatmul.mubr.bf16.gmra.mxu0 %v1022
    %v1140 = vpop.f32.mrf.mxu0
    %v1141 = vadd.f32 %v1048, %v1140
    %v1142 = vpop.f32.mrf.mxu0
    %v1143 = vpop.f32.mrf.mxu0
    %v1144 = vadd.f32 %v1048, %v1143
    %v1145 = vpop.f32.mrf.mxu0
    %1146 = vmatprep.mubr.bf16.mxu0 0
    %1147 = vmatmul.mubr.bf16.gmra.mxu0 %v1023
    %v1148 = vpop.f32.mrf.mxu0
    %v1149 = vadd.f32 %v1048, %v1148
    %v1150 = vpop.f32.mrf.mxu0
    %v1151 = vpop.f32.mrf.mxu0
    %v1152 = vadd.f32 %v1048, %v1151
    %v1153 = vpop.f32.mrf.mxu0
    %1154 = vmatprep.mubr.bf16.mxu0 0
    %1155 = vmatmul.mubr.bf16.gmra.mxu0 %v1024
    %v1156 = vpop.f32.mrf.mxu0
    %v1157 = vadd.f32 %v1048, %v1156
    %v1158 = vpop.f32.mrf.mxu0
    %v1159 = vpop.f32.mrf.mxu0
    %v1160 = vadd.f32 %v1048, %v1159
    %v1161 = vpop.f32.mrf.mxu0
    %1162 = vdwg.mxu0
    %v1163 = vpack.c.bf16 %v1136, %v1133
    %v1164 = vpack.c.bf16 %v1144, %v1141
    %v1165 = vpack.c.bf16 %v1152, %v1149
    %v1166 = vpack.c.bf16 %v1160, %v1157
    %v1171 = vunpack.c.l.b16 %v619
    %v1172 = vunpack.c.h.b16 %v619
    %v1173 = vunpack.c.l.b16 %v620
    %v1174 = vunpack.c.h.b16 %v620
    %v1175 = vunpack.c.l.b16 %v621
    %v1176 = vunpack.c.h.b16 %v621
    %v1177 = vunpack.c.l.b16 %v622
    %v1178 = vunpack.c.h.b16 %v622
    %v1179 = vpack.c.b16 %v1171, %v1171
    %v1180 = vpack.c.b16 %v1172, %v1172
    %v1181 = vpack.c.b16 %v1173, %v1173
    %v1182 = vpack.c.b16 %v1174, %v1174
    %v1183 = vpack.c.b16 %v1175, %v1175
    %v1184 = vpack.c.b16 %v1176, %v1176
    %v1185 = vpack.c.b16 %v1177, %v1177
    %v1186 = vpack.c.b16 %v1178, %v1178
    %v1191 = vunpack.c.l.b16 %v1163
    %v1192 = vunpack.c.h.b16 %v1163
    %v1193 = vunpack.c.l.b16 %v1164
    %v1194 = vunpack.c.h.b16 %v1164
    %v1195 = vunpack.c.l.b16 %v1165
    %v1196 = vunpack.c.h.b16 %v1165
    %v1197 = vunpack.c.l.b16 %v1166
    %v1198 = vunpack.c.h.b16 %v1166
    %v1199 = vpack.c.b16 %v1191, %v1191
    %v1200 = vpack.c.b16 %v1192, %v1192
    %v1201 = vpack.c.b16 %v1193, %v1193
    %v1202 = vpack.c.b16 %v1194, %v1194
    %v1203 = vpack.c.b16 %v1195, %v1195
    %v1204 = vpack.c.b16 %v1196, %v1196
    %v1205 = vpack.c.b16 %v1197, %v1197
    %v1206 = vpack.c.b16 %v1198, %v1198
    %vm1207 = vcmask 64512
    %v1209 = vsel %vm1207, %v44, 0
    %vm1211 = vcmask 1043456
    %v1213 = vsel %vm1211, %v1179, 0
    %1215 = vmatprep.subr.bf16.mxu0 0
    %1216 = vmatpush1.bf16.msra.mxu0 0
    %1217 = vmatprep.subr.bf16.mxu0 0
    %1218 = vmatpush1.bf16.msra.mxu0 0
    %1219 = vmatprep.subr.bf16.mxu0 0
    %1220 = vmatpush1.bf16.msra.mxu0 0
    %1221 = vmatprep.subr.bf16.mxu0 0
    %1222 = vmatpush1.bf16.msra.mxu0 0
    %1223 = vmatprep.subr.bf16.mxu0 0
    %1224 = vmatpush1.bf16.msra.mxu0 0
    %1225 = vmatprep.subr.bf16.mxu0 0
    %1226 = vmatpush1.bf16.msra.mxu0 0
    %1227 = vmatprep.subr.bf16.mxu0 0
    %1228 = vmatpush1.bf16.msra.mxu0 0
    %1229 = vmatprep.subr.bf16.mxu0 0
    %1230 = vmatpush1.bf16.msra.mxu0 %v1213
    %1231 = vmatprep.subr.bf16.mxu0 0
    %1232 = vmatpush2.bf16.msra.mxu0 0
    %1233 = vmatprep.subr.bf16.mxu0 0
    %1234 = vmatpush2.bf16.msra.mxu0 0
    %1235 = vmatprep.subr.bf16.mxu0 0
    %1236 = vmatpush2.bf16.msra.mxu0 0
    %1237 = vmatprep.subr.bf16.mxu0 0
    %1238 = vmatpush2.bf16.msra.mxu0 0
    %1239 = vmatprep.subr.bf16.mxu0 0
    %1240 = vmatpush2.bf16.msra.mxu0 0
    %1241 = vmatprep.subr.bf16.mxu0 0
    %1242 = vmatpush2.bf16.msra.mxu0 0
    %1243 = vmatprep.subr.bf16.mxu0 0
    %1244 = vmatpush2.bf16.msra.mxu0 0
    %1245 = vmatprep.subr.bf16.mxu0 0
    %1246 = vmatpush2.bf16.msra.mxu0 0
    %1247 = vmatprep.mubr.bf16.mxu0 0
    %1248 = vmatmul.mubr.bf16.gmra.mxu0 %v1209
    %v1249 = vpop.f32.mrf.mxu0
    %v1250 = vadd.f32 0.0, %v1249
    %v1251 = vpop.f32.mrf.mxu0
    %v1252 = vpop.f32.mrf.mxu0
    %v1253 = vpop.f32.mrf.mxu0
    %1254 = vdwg.mxu0
    %v1256 = vsel %vm1207, %v45, 0
    %v1259 = vsel %vm1211, %v1199, 0
    %1261 = vmatprep.subr.bf16.mxu0 0
    %1262 = vmatpush1.bf16.msra.mxu0 0
    %1263 = vmatprep.subr.bf16.mxu0 0
    %1264 = vmatpush1.bf16.msra.mxu0 0
    %1265 = vmatprep.subr.bf16.mxu0 0
    %1266 = vmatpush1.bf16.msra.mxu0 0
    %1267 = vmatprep.subr.bf16.mxu0 0
    %1268 = vmatpush1.bf16.msra.mxu0 0
    %1269 = vmatprep.subr.bf16.mxu0 0
    %1270 = vmatpush1.bf16.msra.mxu0 0
    %1271 = vmatprep.subr.bf16.mxu0 0
    %1272 = vmatpush1.bf16.msra.mxu0 0
    %1273 = vmatprep.subr.bf16.mxu0 0
    %1274 = vmatpush1.bf16.msra.mxu0 0
    %1275 = vmatprep.subr.bf16.mxu0 0
    %1276 = vmatpush1.bf16.msra.mxu0 %v1259
    %1277 = vmatprep.subr.bf16.mxu0 0
    %1278 = vmatpush2.bf16.msra.mxu0 0
    %1279 = vmatprep.subr.bf16.mxu0 0
    %1280 = vmatpush2.bf16.msra.mxu0 0
    %1281 = vmatprep.subr.bf16.mxu0 0
    %1282 = vmatpush2.bf16.msra.mxu0 0
    %1283 = vmatprep.subr.bf16.mxu0 0
    %1284 = vmatpush2.bf16.msra.mxu0 0
    %1285 = vmatprep.subr.bf16.mxu0 0
    %1286 = vmatpush2.bf16.msra.mxu0 0
    %1287 = vmatprep.subr.bf16.mxu0 0
    %1288 = vmatpush2.bf16.msra.mxu0 0
    %1289 = vmatprep.subr.bf16.mxu0 0
    %1290 = vmatpush2.bf16.msra.mxu0 0
    %1291 = vmatprep.subr.bf16.mxu0 0
    %1292 = vmatpush2.bf16.msra.mxu0 0
    %1293 = vmatprep.mubr.bf16.mxu0 0
    %1294 = vmatmul.mubr.bf16.gmra.mxu0 %v1256
    %v1295 = vpop.f32.mrf.mxu0
    %v1296 = vadd.f32 0.0, %v1295
    %v1297 = vpop.f32.mrf.mxu0
    %v1298 = vpop.f32.mrf.mxu0
    %v1299 = vpop.f32.mrf.mxu0
    %1300 = vdwg.mxu0
    %v1302 = vsel %vm1207, %v46, 0
    %v1305 = vsel %vm1211, %v1180, 0
    %1307 = vmatprep.subr.bf16.mxu0 0
    %1308 = vmatpush1.bf16.msra.mxu0 0
    %1309 = vmatprep.subr.bf16.mxu0 0
    %1310 = vmatpush1.bf16.msra.mxu0 0
    %1311 = vmatprep.subr.bf16.mxu0 0
    %1312 = vmatpush1.bf16.msra.mxu0 0
    %1313 = vmatprep.subr.bf16.mxu0 0
    %1314 = vmatpush1.bf16.msra.mxu0 0
    %1315 = vmatprep.subr.bf16.mxu0 0
    %1316 = vmatpush1.bf16.msra.mxu0 0
    %1317 = vmatprep.subr.bf16.mxu0 0
    %1318 = vmatpush1.bf16.msra.mxu0 0
    %1319 = vmatprep.subr.bf16.mxu0 0
    %1320 = vmatpush1.bf16.msra.mxu0 0
    %1321 = vmatprep.subr.bf16.mxu0 0
    %1322 = vmatpush1.bf16.msra.mxu0 %v1305
    %1323 = vmatprep.subr.bf16.mxu0 0
    %1324 = vmatpush2.bf16.msra.mxu0 0
    %1325 = vmatprep.subr.bf16.mxu0 0
    %1326 = vmatpush2.bf16.msra.mxu0 0
    %1327 = vmatprep.subr.bf16.mxu0 0
    %1328 = vmatpush2.bf16.msra.mxu0 0
    %1329 = vmatprep.subr.bf16.mxu0 0
    %1330 = vmatpush2.bf16.msra.mxu0 0
    %1331 = vmatprep.subr.bf16.mxu0 0
    %1332 = vmatpush2.bf16.msra.mxu0 0
    %1333 = vmatprep.subr.bf16.mxu0 0
    %1334 = vmatpush2.bf16.msra.mxu0 0
    %1335 = vmatprep.subr.bf16.mxu0 0
    %1336 = vmatpush2.bf16.msra.mxu0 0
    %1337 = vmatprep.subr.bf16.mxu0 0
    %1338 = vmatpush2.bf16.msra.mxu0 0
    %1339 = vmatprep.mubr.bf16.mxu0 0
    %1340 = vmatmul.mubr.bf16.gmra.mxu0 %v1302
    %v1341 = vpop.f32.mrf.mxu0
    %v1342 = vadd.f32 0.0, %v1341
    %v1343 = vpop.f32.mrf.mxu0
    %v1344 = vpop.f32.mrf.mxu0
    %v1345 = vpop.f32.mrf.mxu0
    %1346 = vdwg.mxu0
    %v1348 = vsel %vm1207, %v47, 0
    %v1351 = vsel %vm1211, %v1200, 0
    %1353 = vmatprep.subr.bf16.mxu0 0
    %1354 = vmatpush1.bf16.msra.mxu0 0
    %1355 = vmatprep.subr.bf16.mxu0 0
    %1356 = vmatpush1.bf16.msra.mxu0 0
    %1357 = vmatprep.subr.bf16.mxu0 0
    %1358 = vmatpush1.bf16.msra.mxu0 0
    %1359 = vmatprep.subr.bf16.mxu0 0
    %1360 = vmatpush1.bf16.msra.mxu0 0
    %1361 = vmatprep.subr.bf16.mxu0 0
    %1362 = vmatpush1.bf16.msra.mxu0 0
    %1363 = vmatprep.subr.bf16.mxu0 0
    %1364 = vmatpush1.bf16.msra.mxu0 0
    %1365 = vmatprep.subr.bf16.mxu0 0
    %1366 = vmatpush1.bf16.msra.mxu0 0
    %1367 = vmatprep.subr.bf16.mxu0 0
    %1368 = vmatpush1.bf16.msra.mxu0 %v1351
    %1369 = vmatprep.subr.bf16.mxu0 0
    %1370 = vmatpush2.bf16.msra.mxu0 0
    %1371 = vmatprep.subr.bf16.mxu0 0
    %1372 = vmatpush2.bf16.msra.mxu0 0
    %1373 = vmatprep.subr.bf16.mxu0 0
    %1374 = vmatpush2.bf16.msra.mxu0 0
    %1375 = vmatprep.subr.bf16.mxu0 0
    %1376 = vmatpush2.bf16.msra.mxu0 0
    %1377 = vmatprep.subr.bf16.mxu0 0
    %1378 = vmatpush2.bf16.msra.mxu0 0
    %1379 = vmatprep.subr.bf16.mxu0 0
    %1380 = vmatpush2.bf16.msra.mxu0 0
    %1381 = vmatprep.subr.bf16.mxu0 0
    %1382 = vmatpush2.bf16.msra.mxu0 0
    %1383 = vmatprep.subr.bf16.mxu0 0
    %1384 = vmatpush2.bf16.msra.mxu0 0
    %1385 = vmatprep.mubr.bf16.mxu0 0
    %1386 = vmatmul.mubr.bf16.gmra.mxu0 %v1348
    %v1387 = vpop.f32.mrf.mxu0
    %v1388 = vadd.f32 0.0, %v1387
    %v1389 = vpop.f32.mrf.mxu0
    %v1390 = vpop.f32.mrf.mxu0
    %v1391 = vpop.f32.mrf.mxu0
    %1392 = vdwg.mxu0
    %v1394 = vsel %vm1207, %v48, 0
    %v1397 = vsel %vm1211, %v1181, 0
    %1399 = vmatprep.subr.bf16.mxu0 0
    %1400 = vmatpush1.bf16.msra.mxu0 0
    %1401 = vmatprep.subr.bf16.mxu0 0
    %1402 = vmatpush1.bf16.msra.mxu0 0
    %1403 = vmatprep.subr.bf16.mxu0 0
    %1404 = vmatpush1.bf16.msra.mxu0 0
    %1405 = vmatprep.subr.bf16.mxu0 0
    %1406 = vmatpush1.bf16.msra.mxu0 0
    %1407 = vmatprep.subr.bf16.mxu0 0
    %1408 = vmatpush1.bf16.msra.mxu0 0
    %1409 = vmatprep.subr.bf16.mxu0 0
    %1410 = vmatpush1.bf16.msra.mxu0 0
    %1411 = vmatprep.subr.bf16.mxu0 0
    %1412 = vmatpush1.bf16.msra.mxu0 0
    %1413 = vmatprep.subr.bf16.mxu0 0
    %1414 = vmatpush1.bf16.msra.mxu0 %v1397
    %1415 = vmatprep.subr.bf16.mxu0 0
    %1416 = vmatpush2.bf16.msra.mxu0 0
    %1417 = vmatprep.subr.bf16.mxu0 0
    %1418 = vmatpush2.bf16.msra.mxu0 0
    %1419 = vmatprep.subr.bf16.mxu0 0
    %1420 = vmatpush2.bf16.msra.mxu0 0
    %1421 = vmatprep.subr.bf16.mxu0 0
    %1422 = vmatpush2.bf16.msra.mxu0 0
    %1423 = vmatprep.subr.bf16.mxu0 0
    %1424 = vmatpush2.bf16.msra.mxu0 0
    %1425 = vmatprep.subr.bf16.mxu0 0
    %1426 = vmatpush2.bf16.msra.mxu0 0
    %1427 = vmatprep.subr.bf16.mxu0 0
    %1428 = vmatpush2.bf16.msra.mxu0 0
    %1429 = vmatprep.subr.bf16.mxu0 0
    %1430 = vmatpush2.bf16.msra.mxu0 0
    %1431 = vmatprep.mubr.bf16.mxu0 0
    %1432 = vmatmul.mubr.bf16.gmra.mxu0 %v1394
    %v1433 = vpop.f32.mrf.mxu0
    %v1434 = vadd.f32 0.0, %v1433
    %v1435 = vpop.f32.mrf.mxu0
    %v1436 = vpop.f32.mrf.mxu0
    %v1437 = vpop.f32.mrf.mxu0
    %1438 = vdwg.mxu0
    %v1440 = vsel %vm1207, %v49, 0
    %v1443 = vsel %vm1211, %v1201, 0
    %1445 = vmatprep.subr.bf16.mxu0 0
    %1446 = vmatpush1.bf16.msra.mxu0 0
    %1447 = vmatprep.subr.bf16.mxu0 0
    %1448 = vmatpush1.bf16.msra.mxu0 0
    %1449 = vmatprep.subr.bf16.mxu0 0
    %1450 = vmatpush1.bf16.msra.mxu0 0
    %1451 = vmatprep.subr.bf16.mxu0 0
    %1452 = vmatpush1.bf16.msra.mxu0 0
    %1453 = vmatprep.subr.bf16.mxu0 0
    %1454 = vmatpush1.bf16.msra.mxu0 0
    %1455 = vmatprep.subr.bf16.mxu0 0
    %1456 = vmatpush1.bf16.msra.mxu0 0
    %1457 = vmatprep.subr.bf16.mxu0 0
    %1458 = vmatpush1.bf16.msra.mxu0 0
    %1459 = vmatprep.subr.bf16.mxu0 0
    %1460 = vmatpush1.bf16.msra.mxu0 %v1443
    %1461 = vmatprep.subr.bf16.mxu0 0
    %1462 = vmatpush2.bf16.msra.mxu0 0
    %1463 = vmatprep.subr.bf16.mxu0 0
    %1464 = vmatpush2.bf16.msra.mxu0 0
    %1465 = vmatprep.subr.bf16.mxu0 0
    %1466 = vmatpush2.bf16.msra.mxu0 0
    %1467 = vmatprep.subr.bf16.mxu0 0
    %1468 = vmatpush2.bf16.msra.mxu0 0
    %1469 = vmatprep.subr.bf16.mxu0 0
    %1470 = vmatpush2.bf16.msra.mxu0 0
    %1471 = vmatprep.subr.bf16.mxu0 0
    %1472 = vmatpush2.bf16.msra.mxu0 0
    %1473 = vmatprep.subr.bf16.mxu0 0
    %1474 = vmatpush2.bf16.msra.mxu0 0
    %1475 = vmatprep.subr.bf16.mxu0 0
    %1476 = vmatpush2.bf16.msra.mxu0 0
    %1477 = vmatprep.mubr.bf16.mxu0 0
    %1478 = vmatmul.mubr.bf16.gmra.mxu0 %v1440
    %v1479 = vpop.f32.mrf.mxu0
    %v1480 = vadd.f32 0.0, %v1479
    %v1481 = vpop.f32.mrf.mxu0
    %v1482 = vpop.f32.mrf.mxu0
    %v1483 = vpop.f32.mrf.mxu0
    %1484 = vdwg.mxu0
    %v1486 = vsel %vm1207, %v50, 0
    %v1489 = vsel %vm1211, %v1182, 0
    %1491 = vmatprep.subr.bf16.mxu0 0
    %1492 = vmatpush1.bf16.msra.mxu0 0
    %1493 = vmatprep.subr.bf16.mxu0 0
    %1494 = vmatpush1.bf16.msra.mxu0 0
    %1495 = vmatprep.subr.bf16.mxu0 0
    %1496 = vmatpush1.bf16.msra.mxu0 0
    %1497 = vmatprep.subr.bf16.mxu0 0
    %1498 = vmatpush1.bf16.msra.mxu0 0
    %1499 = vmatprep.subr.bf16.mxu0 0
    %1500 = vmatpush1.bf16.msra.mxu0 0
    %1501 = vmatprep.subr.bf16.mxu0 0
    %1502 = vmatpush1.bf16.msra.mxu0 0
    %1503 = vmatprep.subr.bf16.mxu0 0
    %1504 = vmatpush1.bf16.msra.mxu0 0
    %1505 = vmatprep.subr.bf16.mxu0 0
    %1506 = vmatpush1.bf16.msra.mxu0 %v1489
    %1507 = vmatprep.subr.bf16.mxu0 0
    %1508 = vmatpush2.bf16.msra.mxu0 0
    %1509 = vmatprep.subr.bf16.mxu0 0
    %1510 = vmatpush2.bf16.msra.mxu0 0
    %1511 = vmatprep.subr.bf16.mxu0 0
    %1512 = vmatpush2.bf16.msra.mxu0 0
    %1513 = vmatprep.subr.bf16.mxu0 0
    %1514 = vmatpush2.bf16.msra.mxu0 0
    %1515 = vmatprep.subr.bf16.mxu0 0
    %1516 = vmatpush2.bf16.msra.mxu0 0
    %1517 = vmatprep.subr.bf16.mxu0 0
    %1518 = vmatpush2.bf16.msra.mxu0 0
    %1519 = vmatprep.subr.bf16.mxu0 0
    %1520 = vmatpush2.bf16.msra.mxu0 0
    %1521 = vmatprep.subr.bf16.mxu0 0
    %1522 = vmatpush2.bf16.msra.mxu0 0
    %1523 = vmatprep.mubr.bf16.mxu0 0
    %1524 = vmatmul.mubr.bf16.gmra.mxu0 %v1486
    %v1525 = vpop.f32.mrf.mxu0
    %v1526 = vadd.f32 0.0, %v1525
    %v1527 = vpop.f32.mrf.mxu0
    %v1528 = vpop.f32.mrf.mxu0
    %v1529 = vpop.f32.mrf.mxu0
    %1530 = vdwg.mxu0
    %v1532 = vsel %vm1207, %v51, 0
    %v1535 = vsel %vm1211, %v1202, 0
    %1537 = vmatprep.subr.bf16.mxu0 0
    %1538 = vmatpush1.bf16.msra.mxu0 0
    %1539 = vmatprep.subr.bf16.mxu0 0
    %1540 = vmatpush1.bf16.msra.mxu0 0
    %1541 = vmatprep.subr.bf16.mxu0 0
    %1542 = vmatpush1.bf16.msra.mxu0 0
    %1543 = vmatprep.subr.bf16.mxu0 0
    %1544 = vmatpush1.bf16.msra.mxu0 0
    %1545 = vmatprep.subr.bf16.mxu0 0
    %1546 = vmatpush1.bf16.msra.mxu0 0
    %1547 = vmatprep.subr.bf16.mxu0 0
    %1548 = vmatpush1.bf16.msra.mxu0 0
    %1549 = vmatprep.subr.bf16.mxu0 0
    %1550 = vmatpush1.bf16.msra.mxu0 0
    %1551 = vmatprep.subr.bf16.mxu0 0
    %1552 = vmatpush1.bf16.msra.mxu0 %v1535
    %1553 = vmatprep.subr.bf16.mxu0 0
    %1554 = vmatpush2.bf16.msra.mxu0 0
    %1555 = vmatprep.subr.bf16.mxu0 0
    %1556 = vmatpush2.bf16.msra.mxu0 0
    %1557 = vmatprep.subr.bf16.mxu0 0
    %1558 = vmatpush2.bf16.msra.mxu0 0
    %1559 = vmatprep.subr.bf16.mxu0 0
    %1560 = vmatpush2.bf16.msra.mxu0 0
    %1561 = vmatprep.subr.bf16.mxu0 0
    %1562 = vmatpush2.bf16.msra.mxu0 0
    %1563 = vmatprep.subr.bf16.mxu0 0
    %1564 = vmatpush2.bf16.msra.mxu0 0
    %1565 = vmatprep.subr.bf16.mxu0 0
    %1566 = vmatpush2.bf16.msra.mxu0 0
    %1567 = vmatprep.subr.bf16.mxu0 0
    %1568 = vmatpush2.bf16.msra.mxu0 0
    %1569 = vmatprep.mubr.bf16.mxu0 0
    %1570 = vmatmul.mubr.bf16.gmra.mxu0 %v1532
    %v1571 = vpop.f32.mrf.mxu0
    %v1572 = vadd.f32 0.0, %v1571
    %v1573 = vpop.f32.mrf.mxu0
    %v1574 = vpop.f32.mrf.mxu0
    %v1575 = vpop.f32.mrf.mxu0
    %1576 = vdwg.mxu0
    %v1578 = vsel %vm1207, %v52, 0
    %v1581 = vsel %vm1211, %v1183, 0
    %1583 = vmatprep.subr.bf16.mxu0 0
    %1584 = vmatpush1.bf16.msra.mxu0 0
    %1585 = vmatprep.subr.bf16.mxu0 0
    %1586 = vmatpush1.bf16.msra.mxu0 0
    %1587 = vmatprep.subr.bf16.mxu0 0
    %1588 = vmatpush1.bf16.msra.mxu0 0
    %1589 = vmatprep.subr.bf16.mxu0 0
    %1590 = vmatpush1.bf16.msra.mxu0 0
    %1591 = vmatprep.subr.bf16.mxu0 0
    %1592 = vmatpush1.bf16.msra.mxu0 0
    %1593 = vmatprep.subr.bf16.mxu0 0
    %1594 = vmatpush1.bf16.msra.mxu0 0
    %1595 = vmatprep.subr.bf16.mxu0 0
    %1596 = vmatpush1.bf16.msra.mxu0 0
    %1597 = vmatprep.subr.bf16.mxu0 0
    %1598 = vmatpush1.bf16.msra.mxu0 %v1581
    %1599 = vmatprep.subr.bf16.mxu0 0
    %1600 = vmatpush2.bf16.msra.mxu0 0
    %1601 = vmatprep.subr.bf16.mxu0 0
    %1602 = vmatpush2.bf16.msra.mxu0 0
    %1603 = vmatprep.subr.bf16.mxu0 0
    %1604 = vmatpush2.bf16.msra.mxu0 0
    %1605 = vmatprep.subr.bf16.mxu0 0
    %1606 = vmatpush2.bf16.msra.mxu0 0
    %1607 = vmatprep.subr.bf16.mxu0 0
    %1608 = vmatpush2.bf16.msra.mxu0 0
    %1609 = vmatprep.subr.bf16.mxu0 0
    %1610 = vmatpush2.bf16.msra.mxu0 0
    %1611 = vmatprep.subr.bf16.mxu0 0
    %1612 = vmatpush2.bf16.msra.mxu0 0
    %1613 = vmatprep.subr.bf16.mxu0 0
    %1614 = vmatpush2.bf16.msra.mxu0 0
    %1615 = vmatprep.mubr.bf16.mxu0 0
    %1616 = vmatmul.mubr.bf16.gmra.mxu0 %v1578
    %v1617 = vpop.f32.mrf.mxu0
    %v1618 = vadd.f32 0.0, %v1617
    %v1619 = vpop.f32.mrf.mxu0
    %v1620 = vpop.f32.mrf.mxu0
    %v1621 = vpop.f32.mrf.mxu0
    %1622 = vdwg.mxu0
    %v1624 = vsel %vm1207, %v53, 0
    %v1627 = vsel %vm1211, %v1203, 0
    %1629 = vmatprep.subr.bf16.mxu0 0
    %1630 = vmatpush1.bf16.msra.mxu0 0
    %1631 = vmatprep.subr.bf16.mxu0 0
    %1632 = vmatpush1.bf16.msra.mxu0 0
    %1633 = vmatprep.subr.bf16.mxu0 0
    %1634 = vmatpush1.bf16.msra.mxu0 0
    %1635 = vmatprep.subr.bf16.mxu0 0
    %1636 = vmatpush1.bf16.msra.mxu0 0
    %1637 = vmatprep.subr.bf16.mxu0 0
    %1638 = vmatpush1.bf16.msra.mxu0 0
    %1639 = vmatprep.subr.bf16.mxu0 0
    %1640 = vmatpush1.bf16.msra.mxu0 0
    %1641 = vmatprep.subr.bf16.mxu0 0
    %1642 = vmatpush1.bf16.msra.mxu0 0
    %1643 = vmatprep.subr.bf16.mxu0 0
    %1644 = vmatpush1.bf16.msra.mxu0 %v1627
    %1645 = vmatprep.subr.bf16.mxu0 0
    %1646 = vmatpush2.bf16.msra.mxu0 0
    %1647 = vmatprep.subr.bf16.mxu0 0
    %1648 = vmatpush2.bf16.msra.mxu0 0
    %1649 = vmatprep.subr.bf16.mxu0 0
    %1650 = vmatpush2.bf16.msra.mxu0 0
    %1651 = vmatprep.subr.bf16.mxu0 0
    %1652 = vmatpush2.bf16.msra.mxu0 0
    %1653 = vmatprep.subr.bf16.mxu0 0
    %1654 = vmatpush2.bf16.msra.mxu0 0
    %1655 = vmatprep.subr.bf16.mxu0 0
    %1656 = vmatpush2.bf16.msra.mxu0 0
    %1657 = vmatprep.subr.bf16.mxu0 0
    %1658 = vmatpush2.bf16.msra.mxu0 0
    %1659 = vmatprep.subr.bf16.mxu0 0
    %1660 = vmatpush2.bf16.msra.mxu0 0
    %1661 = vmatprep.mubr.bf16.mxu0 0
    %1662 = vmatmul.mubr.bf16.gmra.mxu0 %v1624
    %v1663 = vpop.f32.mrf.mxu0
    %v1664 = vadd.f32 0.0, %v1663
    %v1665 = vpop.f32.mrf.mxu0
    %v1666 = vpop.f32.mrf.mxu0
    %v1667 = vpop.f32.mrf.mxu0
    %1668 = vdwg.mxu0
    %v1670 = vsel %vm1207, %v54, 0
    %v1673 = vsel %vm1211, %v1184, 0
    %1675 = vmatprep.subr.bf16.mxu0 0
    %1676 = vmatpush1.bf16.msra.mxu0 0
    %1677 = vmatprep.subr.bf16.mxu0 0
    %1678 = vmatpush1.bf16.msra.mxu0 0
    %1679 = vmatprep.subr.bf16.mxu0 0
    %1680 = vmatpush1.bf16.msra.mxu0 0
    %1681 = vmatprep.subr.bf16.mxu0 0
    %1682 = vmatpush1.bf16.msra.mxu0 0
    %1683 = vmatprep.subr.bf16.mxu0 0
    %1684 = vmatpush1.bf16.msra.mxu0 0
    %1685 = vmatprep.subr.bf16.mxu0 0
    %1686 = vmatpush1.bf16.msra.mxu0 0
    %1687 = vmatprep.subr.bf16.mxu0 0
    %1688 = vmatpush1.bf16.msra.mxu0 0
    %1689 = vmatprep.subr.bf16.mxu0 0
    %1690 = vmatpush1.bf16.msra.mxu0 %v1673
    %1691 = vmatprep.subr.bf16.mxu0 0
    %1692 = vmatpush2.bf16.msra.mxu0 0
    %1693 = vmatprep.subr.bf16.mxu0 0
    %1694 = vmatpush2.bf16.msra.mxu0 0
    %1695 = vmatprep.subr.bf16.mxu0 0
    %1696 = vmatpush2.bf16.msra.mxu0 0
    %1697 = vmatprep.subr.bf16.mxu0 0
    %1698 = vmatpush2.bf16.msra.mxu0 0
    %1699 = vmatprep.subr.bf16.mxu0 0
    %1700 = vmatpush2.bf16.msra.mxu0 0
    %1701 = vmatprep.subr.bf16.mxu0 0
    %1702 = vmatpush2.bf16.msra.mxu0 0
    %1703 = vmatprep.subr.bf16.mxu0 0
    %1704 = vmatpush2.bf16.msra.mxu0 0
    %1705 = vmatprep.subr.bf16.mxu0 0
    %1706 = vmatpush2.bf16.msra.mxu0 0
    %1707 = vmatprep.mubr.bf16.mxu0 0
    %1708 = vmatmul.mubr.bf16.gmra.mxu0 %v1670
    %v1709 = vpop.f32.mrf.mxu0
    %v1710 = vadd.f32 0.0, %v1709
    %v1711 = vpop.f32.mrf.mxu0
    %v1712 = vpop.f32.mrf.mxu0
    %v1713 = vpop.f32.mrf.mxu0
    %1714 = vdwg.mxu0
    %v1716 = vsel %vm1207, %v55, 0
    %v1719 = vsel %vm1211, %v1204, 0
    %1721 = vmatprep.subr.bf16.mxu0 0
    %1722 = vmatpush1.bf16.msra.mxu0 0
    %1723 = vmatprep.subr.bf16.mxu0 0
    %1724 = vmatpush1.bf16.msra.mxu0 0
    %1725 = vmatprep.subr.bf16.mxu0 0
    %1726 = vmatpush1.bf16.msra.mxu0 0
    %1727 = vmatprep.subr.bf16.mxu0 0
    %1728 = vmatpush1.bf16.msra.mxu0 0
    %1729 = vmatprep.subr.bf16.mxu0 0
    %1730 = vmatpush1.bf16.msra.mxu0 0
    %1731 = vmatprep.subr.bf16.mxu0 0
    %1732 = vmatpush1.bf16.msra.mxu0 0
    %1733 = vmatprep.subr.bf16.mxu0 0
    %1734 = vmatpush1.bf16.msra.mxu0 0
    %1735 = vmatprep.subr.bf16.mxu0 0
    %1736 = vmatpush1.bf16.msra.mxu0 %v1719
    %1737 = vmatprep.subr.bf16.mxu0 0
    %1738 = vmatpush2.bf16.msra.mxu0 0
    %1739 = vmatprep.subr.bf16.mxu0 0
    %1740 = vmatpush2.bf16.msra.mxu0 0
    %1741 = vmatprep.subr.bf16.mxu0 0
    %1742 = vmatpush2.bf16.msra.mxu0 0
    %1743 = vmatprep.subr.bf16.mxu0 0
    %1744 = vmatpush2.bf16.msra.mxu0 0
    %1745 = vmatprep.subr.bf16.mxu0 0
    %1746 = vmatpush2.bf16.msra.mxu0 0
    %1747 = vmatprep.subr.bf16.mxu0 0
    %1748 = vmatpush2.bf16.msra.mxu0 0
    %1749 = vmatprep.subr.bf16.mxu0 0
    %1750 = vmatpush2.bf16.msra.mxu0 0
    %1751 = vmatprep.subr.bf16.mxu0 0
    %1752 = vmatpush2.bf16.msra.mxu0 0
    %1753 = vmatprep.mubr.bf16.mxu0 0
    %1754 = vmatmul.mubr.bf16.gmra.mxu0 %v1716
    %v1755 = vpop.f32.mrf.mxu0
    %v1756 = vadd.f32 0.0, %v1755
    %v1757 = vpop.f32.mrf.mxu0
    %v1758 = vpop.f32.mrf.mxu0
    %v1759 = vpop.f32.mrf.mxu0
    %1760 = vdwg.mxu0
    %v1762 = vsel %vm1207, %v56, 0
    %v1765 = vsel %vm1211, %v1185, 0
    %1767 = vmatprep.subr.bf16.mxu0 0
    %1768 = vmatpush1.bf16.msra.mxu0 0
    %1769 = vmatprep.subr.bf16.mxu0 0
    %1770 = vmatpush1.bf16.msra.mxu0 0
    %1771 = vmatprep.subr.bf16.mxu0 0
    %1772 = vmatpush1.bf16.msra.mxu0 0
    %1773 = vmatprep.subr.bf16.mxu0 0
    %1774 = vmatpush1.bf16.msra.mxu0 0
    %1775 = vmatprep.subr.bf16.mxu0 0
    %1776 = vmatpush1.bf16.msra.mxu0 0
    %1777 = vmatprep.subr.bf16.mxu0 0
    %1778 = vmatpush1.bf16.msra.mxu0 0
    %1779 = vmatprep.subr.bf16.mxu0 0
    %1780 = vmatpush1.bf16.msra.mxu0 0
    %1781 = vmatprep.subr.bf16.mxu0 0
    %1782 = vmatpush1.bf16.msra.mxu0 %v1765
    %1783 = vmatprep.subr.bf16.mxu0 0
    %1784 = vmatpush2.bf16.msra.mxu0 0
    %1785 = vmatprep.subr.bf16.mxu0 0
    %1786 = vmatpush2.bf16.msra.mxu0 0
    %1787 = vmatprep.subr.bf16.mxu0 0
    %1788 = vmatpush2.bf16.msra.mxu0 0
    %1789 = vmatprep.subr.bf16.mxu0 0
    %1790 = vmatpush2.bf16.msra.mxu0 0
    %1791 = vmatprep.subr.bf16.mxu0 0
    %1792 = vmatpush2.bf16.msra.mxu0 0
    %1793 = vmatprep.subr.bf16.mxu0 0
    %1794 = vmatpush2.bf16.msra.mxu0 0
    %1795 = vmatprep.subr.bf16.mxu0 0
    %1796 = vmatpush2.bf16.msra.mxu0 0
    %1797 = vmatprep.subr.bf16.mxu0 0
    %1798 = vmatpush2.bf16.msra.mxu0 0
    %1799 = vmatprep.mubr.bf16.mxu0 0
    %1800 = vmatmul.mubr.bf16.gmra.mxu0 %v1762
    %v1801 = vpop.f32.mrf.mxu0
    %v1802 = vadd.f32 0.0, %v1801
    %v1803 = vpop.f32.mrf.mxu0
    %v1804 = vpop.f32.mrf.mxu0
    %v1805 = vpop.f32.mrf.mxu0
    %1806 = vdwg.mxu0
    %v1808 = vsel %vm1207, %v57, 0
    %v1811 = vsel %vm1211, %v1205, 0
    %1813 = vmatprep.subr.bf16.mxu0 0
    %1814 = vmatpush1.bf16.msra.mxu0 0
    %1815 = vmatprep.subr.bf16.mxu0 0
    %1816 = vmatpush1.bf16.msra.mxu0 0
    %1817 = vmatprep.subr.bf16.mxu0 0
    %1818 = vmatpush1.bf16.msra.mxu0 0
    %1819 = vmatprep.subr.bf16.mxu0 0
    %1820 = vmatpush1.bf16.msra.mxu0 0
    %1821 = vmatprep.subr.bf16.mxu0 0
    %1822 = vmatpush1.bf16.msra.mxu0 0
    %1823 = vmatprep.subr.bf16.mxu0 0
    %1824 = vmatpush1.bf16.msra.mxu0 0
    %1825 = vmatprep.subr.bf16.mxu0 0
    %1826 = vmatpush1.bf16.msra.mxu0 0
    %1827 = vmatprep.subr.bf16.mxu0 0
    %1828 = vmatpush1.bf16.msra.mxu0 %v1811
    %1829 = vmatprep.subr.bf16.mxu0 0
    %1830 = vmatpush2.bf16.msra.mxu0 0
    %1831 = vmatprep.subr.bf16.mxu0 0
    %1832 = vmatpush2.bf16.msra.mxu0 0
    %1833 = vmatprep.subr.bf16.mxu0 0
    %1834 = vmatpush2.bf16.msra.mxu0 0
    %1835 = vmatprep.subr.bf16.mxu0 0
    %1836 = vmatpush2.bf16.msra.mxu0 0
    %1837 = vmatprep.subr.bf16.mxu0 0
    %1838 = vmatpush2.bf16.msra.mxu0 0
    %1839 = vmatprep.subr.bf16.mxu0 0
    %1840 = vmatpush2.bf16.msra.mxu0 0
    %1841 = vmatprep.subr.bf16.mxu0 0
    %1842 = vmatpush2.bf16.msra.mxu0 0
    %1843 = vmatprep.subr.bf16.mxu0 0
    %1844 = vmatpush2.bf16.msra.mxu0 0
    %1845 = vmatprep.mubr.bf16.mxu0 0
    %1846 = vmatmul.mubr.bf16.gmra.mxu0 %v1808
    %v1847 = vpop.f32.mrf.mxu0
    %v1848 = vadd.f32 0.0, %v1847
    %v1849 = vpop.f32.mrf.mxu0
    %v1850 = vpop.f32.mrf.mxu0
    %v1851 = vpop.f32.mrf.mxu0
    %1852 = vdwg.mxu0
    %v1854 = vsel %vm1207, %v58, 0
    %v1857 = vsel %vm1211, %v1186, 0
    %1859 = vmatprep.subr.bf16.mxu0 0
    %1860 = vmatpush1.bf16.msra.mxu0 0
    %1861 = vmatprep.subr.bf16.mxu0 0
    %1862 = vmatpush1.bf16.msra.mxu0 0
    %1863 = vmatprep.subr.bf16.mxu0 0
    %1864 = vmatpush1.bf16.msra.mxu0 0
    %1865 = vmatprep.subr.bf16.mxu0 0
    %1866 = vmatpush1.bf16.msra.mxu0 0
    %1867 = vmatprep.subr.bf16.mxu0 0
    %1868 = vmatpush1.bf16.msra.mxu0 0
    %1869 = vmatprep.subr.bf16.mxu0 0
    %1870 = vmatpush1.bf16.msra.mxu0 0
    %1871 = vmatprep.subr.bf16.mxu0 0
    %1872 = vmatpush1.bf16.msra.mxu0 0
    %1873 = vmatprep.subr.bf16.mxu0 0
    %1874 = vmatpush1.bf16.msra.mxu0 %v1857
    %1875 = vmatprep.subr.bf16.mxu0 0
    %1876 = vmatpush2.bf16.msra.mxu0 0
    %1877 = vmatprep.subr.bf16.mxu0 0
    %1878 = vmatpush2.bf16.msra.mxu0 0
    %1879 = vmatprep.subr.bf16.mxu0 0
    %1880 = vmatpush2.bf16.msra.mxu0 0
    %1881 = vmatprep.subr.bf16.mxu0 0
    %1882 = vmatpush2.bf16.msra.mxu0 0
    %1883 = vmatprep.subr.bf16.mxu0 0
    %1884 = vmatpush2.bf16.msra.mxu0 0
    %1885 = vmatprep.subr.bf16.mxu0 0
    %1886 = vmatpush2.bf16.msra.mxu0 0
    %1887 = vmatprep.subr.bf16.mxu0 0
    %1888 = vmatpush2.bf16.msra.mxu0 0
    %1889 = vmatprep.subr.bf16.mxu0 0
    %1890 = vmatpush2.bf16.msra.mxu0 0
    %1891 = vmatprep.mubr.bf16.mxu0 0
    %1892 = vmatmul.mubr.bf16.gmra.mxu0 %v1854
    %v1893 = vpop.f32.mrf.mxu0
    %v1894 = vadd.f32 0.0, %v1893
    %v1895 = vpop.f32.mrf.mxu0
    %v1896 = vpop.f32.mrf.mxu0
    %v1897 = vpop.f32.mrf.mxu0
    %1898 = vdwg.mxu0
    %v1900 = vsel %vm1207, %v59, 0
    %v1903 = vsel %vm1211, %v1206, 0
    %1905 = vmatprep.subr.bf16.mxu0 0
    %1906 = vmatpush1.bf16.msra.mxu0 0
    %1907 = vmatprep.subr.bf16.mxu0 0
    %1908 = vmatpush1.bf16.msra.mxu0 0
    %1909 = vmatprep.subr.bf16.mxu0 0
    %1910 = vmatpush1.bf16.msra.mxu0 0
    %1911 = vmatprep.subr.bf16.mxu0 0
    %1912 = vmatpush1.bf16.msra.mxu0 0
    %1913 = vmatprep.subr.bf16.mxu0 0
    %1914 = vmatpush1.bf16.msra.mxu0 0
    %1915 = vmatprep.subr.bf16.mxu0 0
    %1916 = vmatpush1.bf16.msra.mxu0 0
    %1917 = vmatprep.subr.bf16.mxu0 0
    %1918 = vmatpush1.bf16.msra.mxu0 0
    %1919 = vmatprep.subr.bf16.mxu0 0
    %1920 = vmatpush1.bf16.msra.mxu0 %v1903
    %1921 = vmatprep.subr.bf16.mxu0 0
    %1922 = vmatpush2.bf16.msra.mxu0 0
    %1923 = vmatprep.subr.bf16.mxu0 0
    %1924 = vmatpush2.bf16.msra.mxu0 0
    %1925 = vmatprep.subr.bf16.mxu0 0
    %1926 = vmatpush2.bf16.msra.mxu0 0
    %1927 = vmatprep.subr.bf16.mxu0 0
    %1928 = vmatpush2.bf16.msra.mxu0 0
    %1929 = vmatprep.subr.bf16.mxu0 0
    %1930 = vmatpush2.bf16.msra.mxu0 0
    %1931 = vmatprep.subr.bf16.mxu0 0
    %1932 = vmatpush2.bf16.msra.mxu0 0
    %1933 = vmatprep.subr.bf16.mxu0 0
    %1934 = vmatpush2.bf16.msra.mxu0 0
    %1935 = vmatprep.subr.bf16.mxu0 0
    %1936 = vmatpush2.bf16.msra.mxu0 0
    %1937 = vmatprep.mubr.bf16.mxu0 0
    %1938 = vmatmul.mubr.bf16.gmra.mxu0 %v1900
    %v1939 = vpop.f32.mrf.mxu0
    %v1940 = vadd.f32 0.0, %v1939
    %v1941 = vpop.f32.mrf.mxu0
    %v1942 = vpop.f32.mrf.mxu0
    %v1943 = vpop.f32.mrf.mxu0
    %1944 = vdwg.mxu0
    %v1945 = vmax.f32 %v1250, 0.0
    %v1946 = vmax.f32 %v1296, 0.0
    %v1947 = vmax.f32 %v1342, 0.0
    %v1948 = vmax.f32 %v1388, 0.0
    %v1949 = vmax.f32 %v1434, 0.0
    %v1950 = vmax.f32 %v1480, 0.0
    %v1951 = vmax.f32 %v1526, 0.0
    %v1952 = vmax.f32 %v1572, 0.0
    %v1953 = vmax.f32 %v1618, 0.0
    %v1954 = vmax.f32 %v1664, 0.0
    %v1955 = vmax.f32 %v1710, 0.0
    %v1956 = vmax.f32 %v1756, 0.0
    %v1957 = vmax.f32 %v1802, 0.0
    %v1958 = vmax.f32 %v1848, 0.0
    %v1959 = vmax.f32 %v1894, 0.0
    %v1960 = vmax.f32 %v1940, 0.0
    %v1961 = vsel %vm87, %v1945, 0.0
    %v1962 = vsel %vm87, %v1946, 0.0
    %v1963 = vadd.f32 %v1961, %v1962
    %v1964 = vsel %vm87, %v1947, 0.0
    %v1965 = vsel %vm87, %v1948, 0.0
    %v1966 = vadd.f32 %v1964, %v1965
    %v1967 = vsel %vm87, %v1949, 0.0
    %v1968 = vsel %vm87, %v1950, 0.0
    %v1969 = vadd.f32 %v1967, %v1968
    %v1970 = vsel %vm87, %v1951, 0.0
    %v1971 = vsel %vm87, %v1952, 0.0
    %v1972 = vadd.f32 %v1970, %v1971
    %v1973 = vsel %vm87, %v1953, 0.0
    %v1974 = vsel %vm87, %v1954, 0.0
    %v1975 = vadd.f32 %v1973, %v1974
    %v1976 = vsel %vm87, %v1955, 0.0
    %v1977 = vsel %vm87, %v1956, 0.0
    %v1978 = vadd.f32 %v1976, %v1977
    %v1979 = vsel %vm87, %v1957, 0.0
    %v1980 = vsel %vm87, %v1958, 0.0
    %v1981 = vadd.f32 %v1979, %v1980
    %v1982 = vsel %vm87, %v1959, 0.0
    %v1983 = vsel %vm87, %v1960, 0.0
    %v1984 = vadd.f32 %v1982, %v1983
    %v1985 = vmul.f32 %v1963, 0.5
    %v1986 = vmul.f32 %v1966, 0.5
    %v1987 = vmul.f32 %v1969, 0.5
    %v1988 = vmul.f32 %v1972, 0.5
    %v1989 = vmul.f32 %v1975, 0.5
    %v1990 = vmul.f32 %v1978, 0.5
    %v1991 = vmul.f32 %v1981, 0.5
    %v1992 = vmul.f32 %v1984, 0.5
    %v1993 = vadd.f32 %v1985, %v60
    %v1994 = vadd.f32 %v1986, %v61
    %v1995 = vadd.f32 %v1987, %v62
    %v1996 = vadd.f32 %v1988, %v63
    %v1997 = vadd.f32 %v1989, %v64
    %v1998 = vadd.f32 %v1990, %v65
    %v1999 = vadd.f32 %v1991, %v66
    %v2000 = vadd.f32 %v1992, %v67
    %v2001 = vpack.c.bf16 %v1994, %v1993
    %v2002 = vpack.c.bf16 %v1996, %v1995
    %v2003 = vpack.c.bf16 %v1998, %v1997
    %v2004 = vpack.c.bf16 %v2000, %v1999
    %s2005 = scalar_lea.vmem %s2, 16
    %v2006 = vld [vmem:[%s2005] sm:$0xf]
    %v2007 = vld [vmem:[%s2005 + $0x4] sm:$0xf]
    %s2008 = scalar_lea.vmem %s3, 2
    %v2009 = vld [vmem:[%s2008] sm:$0x1]
    %v2011 = vlaneseq
    %v2012 = vshrl.u32 %v2011, 7
    %v2013 = vsub.s32 0, %v2012
    %v2014 = vrot.slane %v2009, %v2013
    %v2018 = vunpack.c.l.b16 %v2006
    %v2019 = vunpack.c.l.b16 %v2007
    %v2020 = vpack.c.b16 %v2019, %v2018
    %v2023 = vsel %vm87, %v2001, 0
    %v2026 = vsel %vm87, %v2002, 0
    %v2029 = vsel %vm87, %v2003, 0
    %v2032 = vsel %vm87, %v2004, 0
    %2034 = vmatprep.subr.bf16.mxu0 0
    %2035 = vmatpush1.bf16.msra.mxu0 0
    %2036 = vmatprep.subr.bf16.mxu0 0
    %2037 = vmatpush1.bf16.msra.mxu0 0
    %2038 = vmatprep.subr.bf16.mxu0 0
    %2039 = vmatpush1.bf16.msra.mxu0 0
    %2040 = vmatprep.subr.bf16.mxu0 0
    %2041 = vmatpush1.bf16.msra.mxu0 0
    %2042 = vmatprep.subr.bf16.mxu0 0
    %2043 = vmatpush1.bf16.msra.mxu0 0
    %2044 = vmatprep.subr.bf16.mxu0 0
    %2045 = vmatpush1.bf16.msra.mxu0 0
    %2046 = vmatprep.subr.bf16.mxu0 0
    %2047 = vmatpush1.bf16.msra.mxu0 0
    %2048 = vmatprep.subr.bf16.mxu0 0
    %2049 = vmatpush1.bf16.msra.mxu0 %v2020
    %2050 = vmatprep.subr.bf16.mxu0 0
    %2051 = vmatpush2.bf16.msra.mxu0 0
    %2052 = vmatprep.subr.bf16.mxu0 0
    %2053 = vmatpush2.bf16.msra.mxu0 0
    %2054 = vmatprep.subr.bf16.mxu0 0
    %2055 = vmatpush2.bf16.msra.mxu0 0
    %2056 = vmatprep.subr.bf16.mxu0 0
    %2057 = vmatpush2.bf16.msra.mxu0 0
    %2058 = vmatprep.subr.bf16.mxu0 0
    %2059 = vmatpush2.bf16.msra.mxu0 0
    %2060 = vmatprep.subr.bf16.mxu0 0
    %2061 = vmatpush2.bf16.msra.mxu0 0
    %2062 = vmatprep.subr.bf16.mxu0 0
    %2063 = vmatpush2.bf16.msra.mxu0 0
    %2064 = vmatprep.subr.bf16.mxu0 0
    %2065 = vmatpush2.bf16.msra.mxu0 0
    %2066 = vmatprep.mubr.bf16.mxu0 0
    %2067 = vmatmul.mubr.bf16.gmra.mxu0 %v2023
    %v2068 = vpop.f32.mrf.mxu0
    %v2069 = vadd.f32 %v2014, %v2068
    %v2070 = vpop.f32.mrf.mxu0
    %v2071 = vpop.f32.mrf.mxu0
    %v2072 = vadd.f32 %v2014, %v2071
    %v2073 = vpop.f32.mrf.mxu0
    %2074 = vmatprep.mubr.bf16.mxu0 0
    %2075 = vmatmul.mubr.bf16.gmra.mxu0 %v2026
    %v2076 = vpop.f32.mrf.mxu0
    %v2077 = vadd.f32 %v2014, %v2076
    %v2078 = vpop.f32.mrf.mxu0
    %v2079 = vpop.f32.mrf.mxu0
    %v2080 = vadd.f32 %v2014, %v2079
    %v2081 = vpop.f32.mrf.mxu0
    %2082 = vmatprep.mubr.bf16.mxu0 0
    %2083 = vmatmul.mubr.bf16.gmra.mxu0 %v2029
    %v2084 = vpop.f32.mrf.mxu0
    %v2085 = vadd.f32 %v2014, %v2084
    %v2086 = vpop.f32.mrf.mxu0
    %v2087 = vpop.f32.mrf.mxu0
    %v2088 = vadd.f32 %v2014, %v2087
    %v2089 = vpop.f32.mrf.mxu0
    %2090 = vmatprep.mubr.bf16.mxu0 0
    %2091 = vmatmul.mubr.bf16.gmra.mxu0 %v2032
    %v2092 = vpop.f32.mrf.mxu0
    %v2093 = vadd.f32 %v2014, %v2092
    %v2094 = vpop.f32.mrf.mxu0
    %v2095 = vpop.f32.mrf.mxu0
    %v2096 = vadd.f32 %v2014, %v2095
    %v2097 = vpop.f32.mrf.mxu0
    %2098 = vdwg.mxu0
    %v2099 = vpack.c.bf16 %v2072, %v2069
    %v2100 = vpack.c.bf16 %v2080, %v2077
    %v2101 = vpack.c.bf16 %v2088, %v2085
    %v2102 = vpack.c.bf16 %v2096, %v2093
    %s2103 = scalar_lea.vmem [#allocation2], 256
    %v2104 = vld [vmem:[%s2103] sm:$0xf]
    %v2105 = vld [vmem:[%s2103 + $0x4] sm:$0xf]
    %v2106 = vld [vmem:[%s2103 + $0x8] sm:$0xf]
    %v2107 = vld [vmem:[%s2103 + $0xc] sm:$0xf]
    %v2108 = vld [vmem:[%s2103 + $0x10] sm:$0xf]
    %v2109 = vld [vmem:[%s2103 + $0x14] sm:$0xf]
    %v2110 = vld [vmem:[%s2103 + $0x18] sm:$0xf]
    %v2111 = vld [vmem:[%s2103 + $0x1c] sm:$0xf]
    %v2112 = vld [vmem:[%s2103 + $0x20] sm:$0xf]
    %v2113 = vld [vmem:[%s2103 + $0x24] sm:$0xf]
    %v2114 = vld [vmem:[%s2103 + $0x28] sm:$0xf]
    %v2115 = vld [vmem:[%s2103 + $0x2c] sm:$0xf]
    %v2116 = vld [vmem:[%s2103 + $0x30] sm:$0xf]
    %v2117 = vld [vmem:[%s2103 + $0x34] sm:$0xf]
    %v2118 = vld [vmem:[%s2103 + $0x38] sm:$0xf]
    %v2119 = vld [vmem:[%s2103 + $0x3c] sm:$0xf]
    %s2120 = scalar_lea.vmem %s5, 4
    %v2121 = vld [vmem:[%s2120] sm:$0x1]
    %v2123 = vlaneseq
    %v2124 = vshrl.u32 %v2123, 7
    %v2125 = vsub.s32 0, %v2124
    %v2126 = vrot.slane %v2121, %v2125
    %v2144 = vunpack.c.l.b16 %v2104
    %v2145 = vunpack.c.l.b16 %v2105
    %v2146 = vunpack.c.l.b16 %v2106
    %v2147 = vunpack.c.l.b16 %v2107
    %v2148 = vunpack.c.l.b16 %v2108
    %v2149 = vunpack.c.l.b16 %v2109
    %v2150 = vunpack.c.l.b16 %v2110
    %v2151 = vunpack.c.l.b16 %v2111
    %v2152 = vunpack.c.l.b16 %v2112
    %v2153 = vunpack.c.l.b16 %v2113
    %v2154 = vunpack.c.l.b16 %v2114
    %v2155 = vunpack.c.l.b16 %v2115
    %v2156 = vunpack.c.l.b16 %v2116
    %v2157 = vunpack.c.l.b16 %v2117
    %v2158 = vunpack.c.l.b16 %v2118
    %v2159 = vunpack.c.l.b16 %v2119
    %v2160 = vpack.c.b16 %v2145, %v2144
    %v2161 = vpack.c.b16 %v2147, %v2146
    %v2162 = vpack.c.b16 %v2149, %v2148
    %v2163 = vpack.c.b16 %v2151, %v2150
    %v2164 = vpack.c.b16 %v2153, %v2152
    %v2165 = vpack.c.b16 %v2155, %v2154
    %v2166 = vpack.c.b16 %v2157, %v2156
    %v2167 = vpack.c.b16 %v2159, %v2158
    %2176 = vmatprep.subr.bf16.mxu0 0
    %2177 = vmatpush1.bf16.msra.mxu0 %v2167
    %2178 = vmatprep.subr.bf16.mxu0 0
    %2179 = vmatpush1.bf16.msra.mxu0 %v2166
    %2180 = vmatprep.subr.bf16.mxu0 0
    %2181 = vmatpush1.bf16.msra.mxu0 %v2165
    %2182 = vmatprep.subr.bf16.mxu0 0
    %2183 = vmatpush1.bf16.msra.mxu0 %v2164
    %2184 = vmatprep.subr.bf16.mxu0 0
    %2185 = vmatpush1.bf16.msra.mxu0 %v2163
    %2186 = vmatprep.subr.bf16.mxu0 0
    %2187 = vmatpush1.bf16.msra.mxu0 %v2162
    %2188 = vmatprep.subr.bf16.mxu0 0
    %2189 = vmatpush1.bf16.msra.mxu0 %v2161
    %2190 = vmatprep.subr.bf16.mxu0 0
    %2191 = vmatpush1.bf16.msra.mxu0 %v2160
    %2192 = vmatprep.subr.bf16.mxu0 0
    %2193 = vmatpush2.bf16.msra.mxu0 0
    %2194 = vmatprep.subr.bf16.mxu0 0
    %2195 = vmatpush2.bf16.msra.mxu0 0
    %2196 = vmatprep.subr.bf16.mxu0 0
    %2197 = vmatpush2.bf16.msra.mxu0 0
    %2198 = vmatprep.subr.bf16.mxu0 0
    %2199 = vmatpush2.bf16.msra.mxu0 0
    %2200 = vmatprep.subr.bf16.mxu0 0
    %2201 = vmatpush2.bf16.msra.mxu0 0
    %2202 = vmatprep.subr.bf16.mxu0 0
    %2203 = vmatpush2.bf16.msra.mxu0 0
    %2204 = vmatprep.subr.bf16.mxu0 0
    %2205 = vmatpush2.bf16.msra.mxu0 0
    %2206 = vmatprep.subr.bf16.mxu0 0
    %2207 = vmatpush2.bf16.msra.mxu0 0
    %2208 = vmatprep.mubr.bf16.mxu0 0
    %2209 = vmatmul.mubr.bf16.gmra.mxu0 %v2099
    %v2210 = vpop.f32.mrf.mxu0
    %v2211 = vadd.f32 %v2126, %v2210
    %v2212 = vpop.f32.mrf.mxu0
    %v2213 = vpop.f32.mrf.mxu0
    %v2214 = vadd.f32 %v2126, %v2213
    %v2215 = vpop.f32.mrf.mxu0
    %2216 = vmatprep.mubr.bf16.mxu0 0
    %2217 = vmatmul.mubr.bf16.gmra.mxu0 %v2100
    %v2218 = vpop.f32.mrf.mxu0
    %v2219 = vadd.f32 %v2126, %v2218
    %v2220 = vpop.f32.mrf.mxu0
    %v2221 = vpop.f32.mrf.mxu0
    %v2222 = vadd.f32 %v2126, %v2221
    %v2223 = vpop.f32.mrf.mxu0
    %2224 = vmatprep.mubr.bf16.mxu0 0
    %2225 = vmatmul.mubr.bf16.gmra.mxu0 %v2101
    %v2226 = vpop.f32.mrf.mxu0
    %v2227 = vadd.f32 %v2126, %v2226
    %v2228 = vpop.f32.mrf.mxu0
    %v2229 = vpop.f32.mrf.mxu0
    %v2230 = vadd.f32 %v2126, %v2229
    %v2231 = vpop.f32.mrf.mxu0
    %2232 = vmatprep.mubr.bf16.mxu0 0
    %2233 = vmatmul.mubr.bf16.gmra.mxu0 %v2102
    %v2234 = vpop.f32.mrf.mxu0
    %v2235 = vadd.f32 %v2126, %v2234
    %v2236 = vpop.f32.mrf.mxu0
    %v2237 = vpop.f32.mrf.mxu0
    %v2238 = vadd.f32 %v2126, %v2237
    %v2239 = vpop.f32.mrf.mxu0
    %2240 = vdwg.mxu0
    %v2241 = vmax.f32 %v2211, 0.0
    %v2242 = vmax.f32 %v2214, 0.0
    %v2243 = vmax.f32 %v2219, 0.0
    %v2244 = vmax.f32 %v2222, 0.0
    %v2245 = vmax.f32 %v2227, 0.0
    %v2246 = vmax.f32 %v2230, 0.0
    %v2247 = vmax.f32 %v2235, 0.0
    %v2248 = vmax.f32 %v2238, 0.0
    %v2249 = vadd.f32 %v2069, %v2241
    %v2250 = vadd.f32 %v2072, %v2242
    %v2251 = vadd.f32 %v2077, %v2243
    %v2252 = vadd.f32 %v2080, %v2244
    %v2253 = vadd.f32 %v2085, %v2245
    %v2254 = vadd.f32 %v2088, %v2246
    %v2255 = vadd.f32 %v2093, %v2247
    %v2256 = vadd.f32 %v2096, %v2248
    %v2257 = vpack.c.bf16 %v2250, %v2249
    %v2258 = vpack.c.bf16 %v2252, %v2251
    %v2259 = vpack.c.bf16 %v2254, %v2253
    %v2260 = vpack.c.bf16 %v2256, %v2255
    %s2261 = scalar_lea.vmem [#allocation2], 320
    %v2262 = vld [vmem:[%s2261] sm:$0xf]
    %v2263 = vld [vmem:[%s2261 + $0x4] sm:$0xf]
    %v2264 = vld [vmem:[%s2261 + $0x8] sm:$0xf]
    %v2265 = vld [vmem:[%s2261 + $0xc] sm:$0xf]
    %v2266 = vld [vmem:[%s2261 + $0x10] sm:$0xf]
    %v2267 = vld [vmem:[%s2261 + $0x14] sm:$0xf]
    %v2268 = vld [vmem:[%s2261 + $0x18] sm:$0xf]
    %v2269 = vld [vmem:[%s2261 + $0x1c] sm:$0xf]
    %v2270 = vld [vmem:[%s2261 + $0x20] sm:$0xf]
    %v2271 = vld [vmem:[%s2261 + $0x24] sm:$0xf]
    %v2272 = vld [vmem:[%s2261 + $0x28] sm:$0xf]
    %v2273 = vld [vmem:[%s2261 + $0x2c] sm:$0xf]
    %v2274 = vld [vmem:[%s2261 + $0x30] sm:$0xf]
    %v2275 = vld [vmem:[%s2261 + $0x34] sm:$0xf]
    %v2276 = vld [vmem:[%s2261 + $0x38] sm:$0xf]
    %v2277 = vld [vmem:[%s2261 + $0x3c] sm:$0xf]
    %s2278 = scalar_lea.vmem %s5, 5
    %v2279 = vld [vmem:[%s2278] sm:$0x1]
    %v2281 = vlaneseq
    %v2282 = vshrl.u32 %v2281, 7
    %v2283 = vsub.s32 0, %v2282
    %v2284 = vrot.slane %v2279, %v2283
    %v2302 = vunpack.c.l.b16 %v2262
    %v2303 = vunpack.c.l.b16 %v2263
    %v2304 = vunpack.c.l.b16 %v2264
    %v2305 = vunpack.c.l.b16 %v2265
    %v2306 = vunpack.c.l.b16 %v2266
    %v2307 = vunpack.c.l.b16 %v2267
    %v2308 = vunpack.c.l.b16 %v2268
    %v2309 = vunpack.c.l.b16 %v2269
    %v2310 = vunpack.c.l.b16 %v2270
    %v2311 = vunpack.c.l.b16 %v2271
    %v2312 = vunpack.c.l.b16 %v2272
    %v2313 = vunpack.c.l.b16 %v2273
    %v2314 = vunpack.c.l.b16 %v2274
    %v2315 = vunpack.c.l.b16 %v2275
    %v2316 = vunpack.c.l.b16 %v2276
    %v2317 = vunpack.c.l.b16 %v2277
    %v2318 = vpack.c.b16 %v2303, %v2302
    %v2319 = vpack.c.b16 %v2305, %v2304
    %v2320 = vpack.c.b16 %v2307, %v2306
    %v2321 = vpack.c.b16 %v2309, %v2308
    %v2322 = vpack.c.b16 %v2311, %v2310
    %v2323 = vpack.c.b16 %v2313, %v2312
    %v2324 = vpack.c.b16 %v2315, %v2314
    %v2325 = vpack.c.b16 %v2317, %v2316
    %2334 = vmatprep.subr.bf16.mxu0 0
    %2335 = vmatpush1.bf16.msra.mxu0 %v2325
    %2336 = vmatprep.subr.bf16.mxu0 0
    %2337 = vmatpush1.bf16.msra.mxu0 %v2324
    %2338 = vmatprep.subr.bf16.mxu0 0
    %2339 = vmatpush1.bf16.msra.mxu0 %v2323
    %2340 = vmatprep.subr.bf16.mxu0 0
    %2341 = vmatpush1.bf16.msra.mxu0 %v2322
    %2342 = vmatprep.subr.bf16.mxu0 0
    %2343 = vmatpush1.bf16.msra.mxu0 %v2321
    %2344 = vmatprep.subr.bf16.mxu0 0
    %2345 = vmatpush1.bf16.msra.mxu0 %v2320
    %2346 = vmatprep.subr.bf16.mxu0 0
    %2347 = vmatpush1.bf16.msra.mxu0 %v2319
    %2348 = vmatprep.subr.bf16.mxu0 0
    %2349 = vmatpush1.bf16.msra.mxu0 %v2318
    %2350 = vmatprep.subr.bf16.mxu0 0
    %2351 = vmatpush2.bf16.msra.mxu0 0
    %2352 = vmatprep.subr.bf16.mxu0 0
    %2353 = vmatpush2.bf16.msra.mxu0 0
    %2354 = vmatprep.subr.bf16.mxu0 0
    %2355 = vmatpush2.bf16.msra.mxu0 0
    %2356 = vmatprep.subr.bf16.mxu0 0
    %2357 = vmatpush2.bf16.msra.mxu0 0
    %2358 = vmatprep.subr.bf16.mxu0 0
    %2359 = vmatpush2.bf16.msra.mxu0 0
    %2360 = vmatprep.subr.bf16.mxu0 0
    %2361 = vmatpush2.bf16.msra.mxu0 0
    %2362 = vmatprep.subr.bf16.mxu0 0
    %2363 = vmatpush2.bf16.msra.mxu0 0
    %2364 = vmatprep.subr.bf16.mxu0 0
    %2365 = vmatpush2.bf16.msra.mxu0 0
    %2366 = vmatprep.mubr.bf16.mxu0 0
    %2367 = vmatmul.mubr.bf16.gmra.mxu0 %v2257
    %v2368 = vpop.f32.mrf.mxu0
    %v2369 = vadd.f32 %v2284, %v2368
    %v2370 = vpop.f32.mrf.mxu0
    %v2371 = vpop.f32.mrf.mxu0
    %v2372 = vadd.f32 %v2284, %v2371
    %v2373 = vpop.f32.mrf.mxu0
    %2374 = vmatprep.mubr.bf16.mxu0 0
    %2375 = vmatmul.mubr.bf16.gmra.mxu0 %v2258
    %v2376 = vpop.f32.mrf.mxu0
    %v2377 = vadd.f32 %v2284, %v2376
    %v2378 = vpop.f32.mrf.mxu0
    %v2379 = vpop.f32.mrf.mxu0
    %v2380 = vadd.f32 %v2284, %v2379
    %v2381 = vpop.f32.mrf.mxu0
    %2382 = vmatprep.mubr.bf16.mxu0 0
    %2383 = vmatmul.mubr.bf16.gmra.mxu0 %v2259
    %v2384 = vpop.f32.mrf.mxu0
    %v2385 = vadd.f32 %v2284, %v2384
    %v2386 = vpop.f32.mrf.mxu0
    %v2387 = vpop.f32.mrf.mxu0
    %v2388 = vadd.f32 %v2284, %v2387
    %v2389 = vpop.f32.mrf.mxu0
    %2390 = vmatprep.mubr.bf16.mxu0 0
    %2391 = vmatmul.mubr.bf16.gmra.mxu0 %v2260
    %v2392 = vpop.f32.mrf.mxu0
    %v2393 = vadd.f32 %v2284, %v2392
    %v2394 = vpop.f32.mrf.mxu0
    %v2395 = vpop.f32.mrf.mxu0
    %v2396 = vadd.f32 %v2284, %v2395
    %v2397 = vpop.f32.mrf.mxu0
    %2398 = vdwg.mxu0
    %v2399 = vmax.f32 %v2369, 0.0
    %v2400 = vmax.f32 %v2372, 0.0
    %v2401 = vmax.f32 %v2377, 0.0
    %v2402 = vmax.f32 %v2380, 0.0
    %v2403 = vmax.f32 %v2385, 0.0
    %v2404 = vmax.f32 %v2388, 0.0
    %v2405 = vmax.f32 %v2393, 0.0
    %v2406 = vmax.f32 %v2396, 0.0
    %v2407 = vadd.f32 %v2249, %v2399
    %v2408 = vadd.f32 %v2250, %v2400
    %v2409 = vadd.f32 %v2251, %v2401
    %v2410 = vadd.f32 %v2252, %v2402
    %v2411 = vadd.f32 %v2253, %v2403
    %v2412 = vadd.f32 %v2254, %v2404
    %v2413 = vadd.f32 %v2255, %v2405
    %v2414 = vadd.f32 %v2256, %v2406
    %v2415 = vpack.c.bf16 %v2408, %v2407
    %v2416 = vpack.c.bf16 %v2410, %v2409
    %v2417 = vpack.c.bf16 %v2412, %v2411
    %v2418 = vpack.c.bf16 %v2414, %v2413
    %s2419 = scalar_lea.vmem %s6, 128
    %v2420 = vld [vmem:[%s2419] sm:$0xf]
    %v2421 = vld [vmem:[%s2419 + $0x4] sm:$0xf]
    %v2422 = vld [vmem:[%s2419 + $0x8] sm:$0xf]
    %v2423 = vld [vmem:[%s2419 + $0xc] sm:$0xf]
    %v2424 = vld [vmem:[%s2419 + $0x10] sm:$0xf]
    %v2425 = vld [vmem:[%s2419 + $0x14] sm:$0xf]
    %v2426 = vld [vmem:[%s2419 + $0x18] sm:$0xf]
    %v2427 = vld [vmem:[%s2419 + $0x1c] sm:$0xf]
    %v2428 = vld [vmem:[%s2419 + $0x20] sm:$0xf]
    %v2429 = vld [vmem:[%s2419 + $0x24] sm:$0xf]
    %v2430 = vld [vmem:[%s2419 + $0x28] sm:$0xf]
    %v2431 = vld [vmem:[%s2419 + $0x2c] sm:$0xf]
    %v2432 = vld [vmem:[%s2419 + $0x30] sm:$0xf]
    %v2433 = vld [vmem:[%s2419 + $0x34] sm:$0xf]
    %v2434 = vld [vmem:[%s2419 + $0x38] sm:$0xf]
    %v2435 = vld [vmem:[%s2419 + $0x3c] sm:$0xf]
    %s2436 = scalar_lea.vmem %s7, 2
    %v2437 = vld [vmem:[%s2436] sm:$0x1]
    %v2439 = vlaneseq
    %v2440 = vshrl.u32 %v2439, 7
    %v2441 = vsub.s32 0, %v2440
    %v2442 = vrot.slane %v2437, %v2441
    %v2460 = vunpack.c.l.b16 %v2420
    %v2461 = vunpack.c.l.b16 %v2421
    %v2462 = vunpack.c.l.b16 %v2422
    %v2463 = vunpack.c.l.b16 %v2423
    %v2464 = vunpack.c.l.b16 %v2424
    %v2465 = vunpack.c.l.b16 %v2425
    %v2466 = vunpack.c.l.b16 %v2426
    %v2467 = vunpack.c.l.b16 %v2427
    %v2468 = vunpack.c.l.b16 %v2428
    %v2469 = vunpack.c.l.b16 %v2429
    %v2470 = vunpack.c.l.b16 %v2430
    %v2471 = vunpack.c.l.b16 %v2431
    %v2472 = vunpack.c.l.b16 %v2432
    %v2473 = vunpack.c.l.b16 %v2433
    %v2474 = vunpack.c.l.b16 %v2434
    %v2475 = vunpack.c.l.b16 %v2435
    %v2476 = vpack.c.b16 %v2461, %v2460
    %v2477 = vpack.c.b16 %v2463, %v2462
    %v2478 = vpack.c.b16 %v2465, %v2464
    %v2479 = vpack.c.b16 %v2467, %v2466
    %v2480 = vpack.c.b16 %v2469, %v2468
    %v2481 = vpack.c.b16 %v2471, %v2470
    %v2482 = vpack.c.b16 %v2473, %v2472
    %v2483 = vpack.c.b16 %v2475, %v2474
    %2492 = vmatprep.subr.bf16.mxu0 0
    %2493 = vmatpush1.bf16.msra.mxu0 %v2483
    %2494 = vmatprep.subr.bf16.mxu0 0
    %2495 = vmatpush1.bf16.msra.mxu0 %v2482
    %2496 = vmatprep.subr.bf16.mxu0 0
    %2497 = vmatpush1.bf16.msra.mxu0 %v2481
    %2498 = vmatprep.subr.bf16.mxu0 0
    %2499 = vmatpush1.bf16.msra.mxu0 %v2480
    %2500 = vmatprep.subr.bf16.mxu0 0
    %2501 = vmatpush1.bf16.msra.mxu0 %v2479
    %2502 = vmatprep.subr.bf16.mxu0 0
    %2503 = vmatpush1.bf16.msra.mxu0 %v2478
    %2504 = vmatprep.subr.bf16.mxu0 0
    %2505 = vmatpush1.bf16.msra.mxu0 %v2477
    %2506 = vmatprep.subr.bf16.mxu0 0
    %2507 = vmatpush1.bf16.msra.mxu0 %v2476
    %2508 = vmatprep.subr.bf16.mxu0 0
    %2509 = vmatpush2.bf16.msra.mxu0 0
    %2510 = vmatprep.subr.bf16.mxu0 0
    %2511 = vmatpush2.bf16.msra.mxu0 0
    %2512 = vmatprep.subr.bf16.mxu0 0
    %2513 = vmatpush2.bf16.msra.mxu0 0
    %2514 = vmatprep.subr.bf16.mxu0 0
    %2515 = vmatpush2.bf16.msra.mxu0 0
    %2516 = vmatprep.subr.bf16.mxu0 0
    %2517 = vmatpush2.bf16.msra.mxu0 0
    %2518 = vmatprep.subr.bf16.mxu0 0
    %2519 = vmatpush2.bf16.msra.mxu0 0
    %2520 = vmatprep.subr.bf16.mxu0 0
    %2521 = vmatpush2.bf16.msra.mxu0 0
    %2522 = vmatprep.subr.bf16.mxu0 0
    %2523 = vmatpush2.bf16.msra.mxu0 0
    %2524 = vmatprep.mubr.bf16.mxu0 0
    %2525 = vmatmul.mubr.bf16.gmra.mxu0 %v2415
    %v2526 = vpop.f32.mrf.mxu0
    %v2527 = vadd.f32 %v2442, %v2526
    %v2528 = vpop.f32.mrf.mxu0
    %v2529 = vpop.f32.mrf.mxu0
    %v2530 = vadd.f32 %v2442, %v2529
    %v2531 = vpop.f32.mrf.mxu0
    %2532 = vmatprep.mubr.bf16.mxu0 0
    %2533 = vmatmul.mubr.bf16.gmra.mxu0 %v2416
    %v2534 = vpop.f32.mrf.mxu0
    %v2535 = vadd.f32 %v2442, %v2534
    %v2536 = vpop.f32.mrf.mxu0
    %v2537 = vpop.f32.mrf.mxu0
    %v2538 = vadd.f32 %v2442, %v2537
    %v2539 = vpop.f32.mrf.mxu0
    %2540 = vmatprep.mubr.bf16.mxu0 0
    %2541 = vmatmul.mubr.bf16.gmra.mxu0 %v2417
    %v2542 = vpop.f32.mrf.mxu0
    %v2543 = vadd.f32 %v2442, %v2542
    %v2544 = vpop.f32.mrf.mxu0
    %v2545 = vpop.f32.mrf.mxu0
    %v2546 = vadd.f32 %v2442, %v2545
    %v2547 = vpop.f32.mrf.mxu0
    %2548 = vmatprep.mubr.bf16.mxu0 0
    %2549 = vmatmul.mubr.bf16.gmra.mxu0 %v2418
    %v2550 = vpop.f32.mrf.mxu0
    %v2551 = vadd.f32 %v2442, %v2550
    %v2552 = vpop.f32.mrf.mxu0
    %v2553 = vpop.f32.mrf.mxu0
    %v2554 = vadd.f32 %v2442, %v2553
    %v2555 = vpop.f32.mrf.mxu0
    %2556 = vdwg.mxu0
    %v2557 = vpack.c.bf16 %v2530, %v2527
    %v2558 = vpack.c.bf16 %v2538, %v2535
    %v2559 = vpack.c.bf16 %v2546, %v2543
    %v2560 = vpack.c.bf16 %v2554, %v2551
    %s2561 = scalar_lea.vmem %s2, 24
    %v2562 = vld [vmem:[%s2561] sm:$0xf]
    %v2563 = vld [vmem:[%s2561 + $0x4] sm:$0xf]
    %s2564 = scalar_lea.vmem %s3, 3
    %v2565 = vld [vmem:[%s2564] sm:$0x1]
    %v2567 = vlaneseq
    %v2568 = vshrl.u32 %v2567, 7
    %v2569 = vsub.s32 0, %v2568
    %v2570 = vrot.slane %v2565, %v2569
    %v2574 = vunpack.c.l.b16 %v2562
    %v2575 = vunpack.c.l.b16 %v2563
    %v2576 = vpack.c.b16 %v2575, %v2574
    %2578 = vmatprep.subr.bf16.mxu0 0
    %2579 = vmatpush1.bf16.msra.mxu0 0
    %2580 = vmatprep.subr.bf16.mxu0 0
    %2581 = vmatpush1.bf16.msra.mxu0 0
    %2582 = vmatprep.subr.bf16.mxu0 0
    %2583 = vmatpush1.bf16.msra.mxu0 0
    %2584 = vmatprep.subr.bf16.mxu0 0
    %2585 = vmatpush1.bf16.msra.mxu0 0
    %2586 = vmatprep.subr.bf16.mxu0 0
    %2587 = vmatpush1.bf16.msra.mxu0 0
    %2588 = vmatprep.subr.bf16.mxu0 0
    %2589 = vmatpush1.bf16.msra.mxu0 0
    %2590 = vmatprep.subr.bf16.mxu0 0
    %2591 = vmatpush1.bf16.msra.mxu0 0
    %2592 = vmatprep.subr.bf16.mxu0 0
    %2593 = vmatpush1.bf16.msra.mxu0 %v2576
    %2594 = vmatprep.subr.bf16.mxu0 0
    %2595 = vmatpush2.bf16.msra.mxu0 0
    %2596 = vmatprep.subr.bf16.mxu0 0
    %2597 = vmatpush2.bf16.msra.mxu0 0
    %2598 = vmatprep.subr.bf16.mxu0 0
    %2599 = vmatpush2.bf16.msra.mxu0 0
    %2600 = vmatprep.subr.bf16.mxu0 0
    %2601 = vmatpush2.bf16.msra.mxu0 0
    %2602 = vmatprep.subr.bf16.mxu0 0
    %2603 = vmatpush2.bf16.msra.mxu0 0
    %2604 = vmatprep.subr.bf16.mxu0 0
    %2605 = vmatpush2.bf16.msra.mxu0 0
    %2606 = vmatprep.subr.bf16.mxu0 0
    %2607 = vmatpush2.bf16.msra.mxu0 0
    %2608 = vmatprep.subr.bf16.mxu0 0
    %2609 = vmatpush2.bf16.msra.mxu0 0
    %2610 = vmatprep.mubr.bf16.mxu0 0
    %2611 = vmatmul.mubr.bf16.gmra.mxu0 %v2023
    %v2612 = vpop.f32.mrf.mxu0
    %v2613 = vadd.f32 %v2570, %v2612
    %v2614 = vpop.f32.mrf.mxu0
    %v2615 = vpop.f32.mrf.mxu0
    %v2616 = vadd.f32 %v2570, %v2615
    %v2617 = vpop.f32.mrf.mxu0
    %2618 = vmatprep.mubr.bf16.mxu0 0
    %2619 = vmatmul.mubr.bf16.gmra.mxu0 %v2026
    %v2620 = vpop.f32.mrf.mxu0
    %v2621 = vadd.f32 %v2570, %v2620
    %v2622 = vpop.f32.mrf.mxu0
    %v2623 = vpop.f32.mrf.mxu0
    %v2624 = vadd.f32 %v2570, %v2623
    %v2625 = vpop.f32.mrf.mxu0
    %2626 = vmatprep.mubr.bf16.mxu0 0
    %2627 = vmatmul.mubr.bf16.gmra.mxu0 %v2029
    %v2628 = vpop.f32.mrf.mxu0
    %v2629 = vadd.f32 %v2570, %v2628
    %v2630 = vpop.f32.mrf.mxu0
    %v2631 = vpop.f32.mrf.mxu0
    %v2632 = vadd.f32 %v2570, %v2631
    %v2633 = vpop.f32.mrf.mxu0
    %2634 = vmatprep.mubr.bf16.mxu0 0
    %2635 = vmatmul.mubr.bf16.gmra.mxu0 %v2032
    %v2636 = vpop.f32.mrf.mxu0
    %v2637 = vadd.f32 %v2570, %v2636
    %v2638 = vpop.f32.mrf.mxu0
    %v2639 = vpop.f32.mrf.mxu0
    %v2640 = vadd.f32 %v2570, %v2639
    %v2641 = vpop.f32.mrf.mxu0
    %2642 = vdwg.mxu0
    %v2643 = vpack.c.bf16 %v2616, %v2613
    %v2644 = vpack.c.bf16 %v2624, %v2621
    %v2645 = vpack.c.bf16 %v2632, %v2629
    %v2646 = vpack.c.bf16 %v2640, %v2637
    %s2647 = scalar_lea.vmem [#allocation2], 384
    %v2648 = vld [vmem:[%s2647] sm:$0xf]
    %v2649 = vld [vmem:[%s2647 + $0x4] sm:$0xf]
    %v2650 = vld [vmem:[%s2647 + $0x8] sm:$0xf]
    %v2651 = vld [vmem:[%s2647 + $0xc] sm:$0xf]
    %v2652 = vld [vmem:[%s2647 + $0x10] sm:$0xf]
    %v2653 = vld [vmem:[%s2647 + $0x14] sm:$0xf]
    %v2654 = vld [vmem:[%s2647 + $0x18] sm:$0xf]
    %v2655 = vld [vmem:[%s2647 + $0x1c] sm:$0xf]
    %v2656 = vld [vmem:[%s2647 + $0x20] sm:$0xf]
    %v2657 = vld [vmem:[%s2647 + $0x24] sm:$0xf]
    %v2658 = vld [vmem:[%s2647 + $0x28] sm:$0xf]
    %v2659 = vld [vmem:[%s2647 + $0x2c] sm:$0xf]
    %v2660 = vld [vmem:[%s2647 + $0x30] sm:$0xf]
    %v2661 = vld [vmem:[%s2647 + $0x34] sm:$0xf]
    %v2662 = vld [vmem:[%s2647 + $0x38] sm:$0xf]
    %v2663 = vld [vmem:[%s2647 + $0x3c] sm:$0xf]
    %s2664 = scalar_lea.vmem %s5, 6
    %v2665 = vld [vmem:[%s2664] sm:$0x1]
    %v2667 = vlaneseq
    %v2668 = vshrl.u32 %v2667, 7
    %v2669 = vsub.s32 0, %v2668
    %v2670 = vrot.slane %v2665, %v2669
    %v2688 = vunpack.c.l.b16 %v2648
    %v2689 = vunpack.c.l.b16 %v2649
    %v2690 = vunpack.c.l.b16 %v2650
    %v2691 = vunpack.c.l.b16 %v2651
    %v2692 = vunpack.c.l.b16 %v2652
    %v2693 = vunpack.c.l.b16 %v2653
    %v2694 = vunpack.c.l.b16 %v2654
    %v2695 = vunpack.c.l.b16 %v2655
    %v2696 = vunpack.c.l.b16 %v2656
    %v2697 = vunpack.c.l.b16 %v2657
    %v2698 = vunpack.c.l.b16 %v2658
    %v2699 = vunpack.c.l.b16 %v2659
    %v2700 = vunpack.c.l.b16 %v2660
    %v2701 = vunpack.c.l.b16 %v2661
    %v2702 = vunpack.c.l.b16 %v2662
    %v2703 = vunpack.c.l.b16 %v2663
    %v2704 = vpack.c.b16 %v2689, %v2688
    %v2705 = vpack.c.b16 %v2691, %v2690
    %v2706 = vpack.c.b16 %v2693, %v2692
    %v2707 = vpack.c.b16 %v2695, %v2694
    %v2708 = vpack.c.b16 %v2697, %v2696
    %v2709 = vpack.c.b16 %v2699, %v2698
    %v2710 = vpack.c.b16 %v2701, %v2700
    %v2711 = vpack.c.b16 %v2703, %v2702
    %2720 = vmatprep.subr.bf16.mxu0 0
    %2721 = vmatpush1.bf16.msra.mxu0 %v2711
    %2722 = vmatprep.subr.bf16.mxu0 0
    %2723 = vmatpush1.bf16.msra.mxu0 %v2710
    %2724 = vmatprep.subr.bf16.mxu0 0
    %2725 = vmatpush1.bf16.msra.mxu0 %v2709
    %2726 = vmatprep.subr.bf16.mxu0 0
    %2727 = vmatpush1.bf16.msra.mxu0 %v2708
    %2728 = vmatprep.subr.bf16.mxu0 0
    %2729 = vmatpush1.bf16.msra.mxu0 %v2707
    %2730 = vmatprep.subr.bf16.mxu0 0
    %2731 = vmatpush1.bf16.msra.mxu0 %v2706
    %2732 = vmatprep.subr.bf16.mxu0 0
    %2733 = vmatpush1.bf16.msra.mxu0 %v2705
    %2734 = vmatprep.subr.bf16.mxu0 0
    %2735 = vmatpush1.bf16.msra.mxu0 %v2704
    %2736 = vmatprep.subr.bf16.mxu0 0
    %2737 = vmatpush2.bf16.msra.mxu0 0
    %2738 = vmatprep.subr.bf16.mxu0 0
    %2739 = vmatpush2.bf16.msra.mxu0 0
    %2740 = vmatprep.subr.bf16.mxu0 0
    %2741 = vmatpush2.bf16.msra.mxu0 0
    %2742 = vmatprep.subr.bf16.mxu0 0
    %2743 = vmatpush2.bf16.msra.mxu0 0
    %2744 = vmatprep.subr.bf16.mxu0 0
    %2745 = vmatpush2.bf16.msra.mxu0 0
    %2746 = vmatprep.subr.bf16.mxu0 0
    %2747 = vmatpush2.bf16.msra.mxu0 0
    %2748 = vmatprep.subr.bf16.mxu0 0
    %2749 = vmatpush2.bf16.msra.mxu0 0
    %2750 = vmatprep.subr.bf16.mxu0 0
    %2751 = vmatpush2.bf16.msra.mxu0 0
    %2752 = vmatprep.mubr.bf16.mxu0 0
    %2753 = vmatmul.mubr.bf16.gmra.mxu0 %v2643
    %v2754 = vpop.f32.mrf.mxu0
    %v2755 = vadd.f32 %v2670, %v2754
    %v2756 = vpop.f32.mrf.mxu0
    %v2757 = vpop.f32.mrf.mxu0
    %v2758 = vadd.f32 %v2670, %v2757
    %v2759 = vpop.f32.mrf.mxu0
    %2760 = vmatprep.mubr.bf16.mxu0 0
    %2761 = vmatmul.mubr.bf16.gmra.mxu0 %v2644
    %v2762 = vpop.f32.mrf.mxu0
    %v2763 = vadd.f32 %v2670, %v2762
    %v2764 = vpop.f32.mrf.mxu0
    %v2765 = vpop.f32.mrf.mxu0
    %v2766 = vadd.f32 %v2670, %v2765
    %v2767 = vpop.f32.mrf.mxu0
    %2768 = vmatprep.mubr.bf16.mxu0 0
    %2769 = vmatmul.mubr.bf16.gmra.mxu0 %v2645
    %v2770 = vpop.f32.mrf.mxu0
    %v2771 = vadd.f32 %v2670, %v2770
    %v2772 = vpop.f32.mrf.mxu0
    %v2773 = vpop.f32.mrf.mxu0
    %v2774 = vadd.f32 %v2670, %v2773
    %v2775 = vpop.f32.mrf.mxu0
    %2776 = vmatprep.mubr.bf16.mxu0 0
    %2777 = vmatmul.mubr.bf16.gmra.mxu0 %v2646
    %v2778 = vpop.f32.mrf.mxu0
    %v2779 = vadd.f32 %v2670, %v2778
    %v2780 = vpop.f32.mrf.mxu0
    %v2781 = vpop.f32.mrf.mxu0
    %v2782 = vadd.f32 %v2670, %v2781
    %v2783 = vpop.f32.mrf.mxu0
    %2784 = vdwg.mxu0
    %v2785 = vmax.f32 %v2755, 0.0
    %v2786 = vmax.f32 %v2758, 0.0
    %v2787 = vmax.f32 %v2763, 0.0
    %v2788 = vmax.f32 %v2766, 0.0
    %v2789 = vmax.f32 %v2771, 0.0
    %v2790 = vmax.f32 %v2774, 0.0
    %v2791 = vmax.f32 %v2779, 0.0
    %v2792 = vmax.f32 %v2782, 0.0
    %v2793 = vadd.f32 %v2613, %v2785
    %v2794 = vadd.f32 %v2616, %v2786
    %v2795 = vadd.f32 %v2621, %v2787
    %v2796 = vadd.f32 %v2624, %v2788
    %v2797 = vadd.f32 %v2629, %v2789
    %v2798 = vadd.f32 %v2632, %v2790
    %v2799 = vadd.f32 %v2637, %v2791
    %v2800 = vadd.f32 %v2640, %v2792
    %v2801 = vpack.c.bf16 %v2794, %v2793
    %v2802 = vpack.c.bf16 %v2796, %v2795
    %v2803 = vpack.c.bf16 %v2798, %v2797
    %v2804 = vpack.c.bf16 %v2800, %v2799
    %s2805 = scalar_lea.vmem [#allocation2], 448
    %v2806 = vld [vmem:[%s2805] sm:$0xf]
    %v2807 = vld [vmem:[%s2805 + $0x4] sm:$0xf]
    %v2808 = vld [vmem:[%s2805 + $0x8] sm:$0xf]
    %v2809 = vld [vmem:[%s2805 + $0xc] sm:$0xf]
    %v2810 = vld [vmem:[%s2805 + $0x10] sm:$0xf]
    %v2811 = vld [vmem:[%s2805 + $0x14] sm:$0xf]
    %v2812 = vld [vmem:[%s2805 + $0x18] sm:$0xf]
    %v2813 = vld [vmem:[%s2805 + $0x1c] sm:$0xf]
    %v2814 = vld [vmem:[%s2805 + $0x20] sm:$0xf]
    %v2815 = vld [vmem:[%s2805 + $0x24] sm:$0xf]
    %v2816 = vld [vmem:[%s2805 + $0x28] sm:$0xf]
    %v2817 = vld [vmem:[%s2805 + $0x2c] sm:$0xf]
    %v2818 = vld [vmem:[%s2805 + $0x30] sm:$0xf]
    %v2819 = vld [vmem:[%s2805 + $0x34] sm:$0xf]
    %v2820 = vld [vmem:[%s2805 + $0x38] sm:$0xf]
    %v2821 = vld [vmem:[%s2805 + $0x3c] sm:$0xf]
    %s2822 = scalar_lea.vmem %s5, 7
    %v2823 = vld [vmem:[%s2822] sm:$0x1]
    %v2825 = vlaneseq
    %v2826 = vshrl.u32 %v2825, 7
    %v2827 = vsub.s32 0, %v2826
    %v2828 = vrot.slane %v2823, %v2827
    %v2846 = vunpack.c.l.b16 %v2806
    %v2847 = vunpack.c.l.b16 %v2807
    %v2848 = vunpack.c.l.b16 %v2808
    %v2849 = vunpack.c.l.b16 %v2809
    %v2850 = vunpack.c.l.b16 %v2810
    %v2851 = vunpack.c.l.b16 %v2811
    %v2852 = vunpack.c.l.b16 %v2812
    %v2853 = vunpack.c.l.b16 %v2813
    %v2854 = vunpack.c.l.b16 %v2814
    %v2855 = vunpack.c.l.b16 %v2815
    %v2856 = vunpack.c.l.b16 %v2816
    %v2857 = vunpack.c.l.b16 %v2817
    %v2858 = vunpack.c.l.b16 %v2818
    %v2859 = vunpack.c.l.b16 %v2819
    %v2860 = vunpack.c.l.b16 %v2820
    %v2861 = vunpack.c.l.b16 %v2821
    %v2862 = vpack.c.b16 %v2847, %v2846
    %v2863 = vpack.c.b16 %v2849, %v2848
    %v2864 = vpack.c.b16 %v2851, %v2850
    %v2865 = vpack.c.b16 %v2853, %v2852
    %v2866 = vpack.c.b16 %v2855, %v2854
    %v2867 = vpack.c.b16 %v2857, %v2856
    %v2868 = vpack.c.b16 %v2859, %v2858
    %v2869 = vpack.c.b16 %v2861, %v2860
    %2878 = vmatprep.subr.bf16.mxu0 0
    %2879 = vmatpush1.bf16.msra.mxu0 %v2869
    %2880 = vmatprep.subr.bf16.mxu0 0
    %2881 = vmatpush1.bf16.msra.mxu0 %v2868
    %2882 = vmatprep.subr.bf16.mxu0 0
    %2883 = vmatpush1.bf16.msra.mxu0 %v2867
    %2884 = vmatprep.subr.bf16.mxu0 0
    %2885 = vmatpush1.bf16.msra.mxu0 %v2866
    %2886 = vmatprep.subr.bf16.mxu0 0
    %2887 = vmatpush1.bf16.msra.mxu0 %v2865
    %2888 = vmatprep.subr.bf16.mxu0 0
    %2889 = vmatpush1.bf16.msra.mxu0 %v2864
    %2890 = vmatprep.subr.bf16.mxu0 0
    %2891 = vmatpush1.bf16.msra.mxu0 %v2863
    %2892 = vmatprep.subr.bf16.mxu0 0
    %2893 = vmatpush1.bf16.msra.mxu0 %v2862
    %2894 = vmatprep.subr.bf16.mxu0 0
    %2895 = vmatpush2.bf16.msra.mxu0 0
    %2896 = vmatprep.subr.bf16.mxu0 0
    %2897 = vmatpush2.bf16.msra.mxu0 0
    %2898 = vmatprep.subr.bf16.mxu0 0
    %2899 = vmatpush2.bf16.msra.mxu0 0
    %2900 = vmatprep.subr.bf16.mxu0 0
    %2901 = vmatpush2.bf16.msra.mxu0 0
    %2902 = vmatprep.subr.bf16.mxu0 0
    %2903 = vmatpush2.bf16.msra.mxu0 0
    %2904 = vmatprep.subr.bf16.mxu0 0
    %2905 = vmatpush2.bf16.msra.mxu0 0
    %2906 = vmatprep.subr.bf16.mxu0 0
    %2907 = vmatpush2.bf16.msra.mxu0 0
    %2908 = vmatprep.subr.bf16.mxu0 0
    %2909 = vmatpush2.bf16.msra.mxu0 0
    %2910 = vmatprep.mubr.bf16.mxu0 0
    %2911 = vmatmul.mubr.bf16.gmra.mxu0 %v2801
    %v2912 = vpop.f32.mrf.mxu0
    %v2913 = vadd.f32 %v2828, %v2912
    %v2914 = vpop.f32.mrf.mxu0
    %v2915 = vpop.f32.mrf.mxu0
    %v2916 = vadd.f32 %v2828, %v2915
    %v2917 = vpop.f32.mrf.mxu0
    %2918 = vmatprep.mubr.bf16.mxu0 0
    %2919 = vmatmul.mubr.bf16.gmra.mxu0 %v2802
    %v2920 = vpop.f32.mrf.mxu0
    %v2921 = vadd.f32 %v2828, %v2920
    %v2922 = vpop.f32.mrf.mxu0
    %v2923 = vpop.f32.mrf.mxu0
    %v2924 = vadd.f32 %v2828, %v2923
    %v2925 = vpop.f32.mrf.mxu0
    %2926 = vmatprep.mubr.bf16.mxu0 0
    %2927 = vmatmul.mubr.bf16.gmra.mxu0 %v2803
    %v2928 = vpop.f32.mrf.mxu0
    %v2929 = vadd.f32 %v2828, %v2928
    %v2930 = vpop.f32.mrf.mxu0
    %v2931 = vpop.f32.mrf.mxu0
    %v2932 = vadd.f32 %v2828, %v2931
    %v2933 = vpop.f32.mrf.mxu0
    %2934 = vmatprep.mubr.bf16.mxu0 0
    %2935 = vmatmul.mubr.bf16.gmra.mxu0 %v2804
    %v2936 = vpop.f32.mrf.mxu0
    %v2937 = vadd.f32 %v2828, %v2936
    %v2938 = vpop.f32.mrf.mxu0
    %v2939 = vpop.f32.mrf.mxu0
    %v2940 = vadd.f32 %v2828, %v2939
    %v2941 = vpop.f32.mrf.mxu0
    %2942 = vdwg.mxu0
    %v2943 = vmax.f32 %v2913, 0.0
    %v2944 = vmax.f32 %v2916, 0.0
    %v2945 = vmax.f32 %v2921, 0.0
    %v2946 = vmax.f32 %v2924, 0.0
    %v2947 = vmax.f32 %v2929, 0.0
    %v2948 = vmax.f32 %v2932, 0.0
    %v2949 = vmax.f32 %v2937, 0.0
    %v2950 = vmax.f32 %v2940, 0.0
    %v2951 = vadd.f32 %v2793, %v2943
    %v2952 = vadd.f32 %v2794, %v2944
    %v2953 = vadd.f32 %v2795, %v2945
    %v2954 = vadd.f32 %v2796, %v2946
    %v2955 = vadd.f32 %v2797, %v2947
    %v2956 = vadd.f32 %v2798, %v2948
    %v2957 = vadd.f32 %v2799, %v2949
    %v2958 = vadd.f32 %v2800, %v2950
    %v2959 = vpack.c.bf16 %v2952, %v2951
    %v2960 = vpack.c.bf16 %v2954, %v2953
    %v2961 = vpack.c.bf16 %v2956, %v2955
    %v2962 = vpack.c.bf16 %v2958, %v2957
    %s2963 = scalar_lea.vmem %s6, 192
    %v2964 = vld [vmem:[%s2963] sm:$0xf]
    %v2965 = vld [vmem:[%s2963 + $0x4] sm:$0xf]
    %v2966 = vld [vmem:[%s2963 + $0x8] sm:$0xf]
    %v2967 = vld [vmem:[%s2963 + $0xc] sm:$0xf]
    %v2968 = vld [vmem:[%s2963 + $0x10] sm:$0xf]
    %v2969 = vld [vmem:[%s2963 + $0x14] sm:$0xf]
    %v2970 = vld [vmem:[%s2963 + $0x18] sm:$0xf]
    %v2971 = vld [vmem:[%s2963 + $0x1c] sm:$0xf]
    %v2972 = vld [vmem:[%s2963 + $0x20] sm:$0xf]
    %v2973 = vld [vmem:[%s2963 + $0x24] sm:$0xf]
    %v2974 = vld [vmem:[%s2963 + $0x28] sm:$0xf]
    %v2975 = vld [vmem:[%s2963 + $0x2c] sm:$0xf]
    %v2976 = vld [vmem:[%s2963 + $0x30] sm:$0xf]
    %v2977 = vld [vmem:[%s2963 + $0x34] sm:$0xf]
    %v2978 = vld [vmem:[%s2963 + $0x38] sm:$0xf]
    %v2979 = vld [vmem:[%s2963 + $0x3c] sm:$0xf]
    %s2980 = scalar_lea.vmem %s7, 3
    %v2981 = vld [vmem:[%s2980] sm:$0x1]
    %v2983 = vlaneseq
    %v2984 = vshrl.u32 %v2983, 7
    %v2985 = vsub.s32 0, %v2984
    %v2986 = vrot.slane %v2981, %v2985
    %v3004 = vunpack.c.l.b16 %v2964
    %v3005 = vunpack.c.l.b16 %v2965
    %v3006 = vunpack.c.l.b16 %v2966
    %v3007 = vunpack.c.l.b16 %v2967
    %v3008 = vunpack.c.l.b16 %v2968
    %v3009 = vunpack.c.l.b16 %v2969
    %v3010 = vunpack.c.l.b16 %v2970
    %v3011 = vunpack.c.l.b16 %v2971
    %v3012 = vunpack.c.l.b16 %v2972
    %v3013 = vunpack.c.l.b16 %v2973
    %v3014 = vunpack.c.l.b16 %v2974
    %v3015 = vunpack.c.l.b16 %v2975
    %v3016 = vunpack.c.l.b16 %v2976
    %v3017 = vunpack.c.l.b16 %v2977
    %v3018 = vunpack.c.l.b16 %v2978
    %v3019 = vunpack.c.l.b16 %v2979
    %v3020 = vpack.c.b16 %v3005, %v3004
    %v3021 = vpack.c.b16 %v3007, %v3006
    %v3022 = vpack.c.b16 %v3009, %v3008
    %v3023 = vpack.c.b16 %v3011, %v3010
    %v3024 = vpack.c.b16 %v3013, %v3012
    %v3025 = vpack.c.b16 %v3015, %v3014
    %v3026 = vpack.c.b16 %v3017, %v3016
    %v3027 = vpack.c.b16 %v3019, %v3018
    %3036 = vmatprep.subr.bf16.mxu0 0
    %3037 = vmatpush1.bf16.msra.mxu0 %v3027
    %3038 = vmatprep.subr.bf16.mxu0 0
    %3039 = vmatpush1.bf16.msra.mxu0 %v3026
    %3040 = vmatprep.subr.bf16.mxu0 0
    %3041 = vmatpush1.bf16.msra.mxu0 %v3025
    %3042 = vmatprep.subr.bf16.mxu0 0
    %3043 = vmatpush1.bf16.msra.mxu0 %v3024
    %3044 = vmatprep.subr.bf16.mxu0 0
    %3045 = vmatpush1.bf16.msra.mxu0 %v3023
    %3046 = vmatprep.subr.bf16.mxu0 0
    %3047 = vmatpush1.bf16.msra.mxu0 %v3022
    %3048 = vmatprep.subr.bf16.mxu0 0
    %3049 = vmatpush1.bf16.msra.mxu0 %v3021
    %3050 = vmatprep.subr.bf16.mxu0 0
    %3051 = vmatpush1.bf16.msra.mxu0 %v3020
    %3052 = vmatprep.subr.bf16.mxu0 0
    %3053 = vmatpush2.bf16.msra.mxu0 0
    %3054 = vmatprep.subr.bf16.mxu0 0
    %3055 = vmatpush2.bf16.msra.mxu0 0
    %3056 = vmatprep.subr.bf16.mxu0 0
    %3057 = vmatpush2.bf16.msra.mxu0 0
    %3058 = vmatprep.subr.bf16.mxu0 0
    %3059 = vmatpush2.bf16.msra.mxu0 0
    %3060 = vmatprep.subr.bf16.mxu0 0
    %3061 = vmatpush2.bf16.msra.mxu0 0
    %3062 = vmatprep.subr.bf16.mxu0 0
    %3063 = vmatpush2.bf16.msra.mxu0 0
    %3064 = vmatprep.subr.bf16.mxu0 0
    %3065 = vmatpush2.bf16.msra.mxu0 0
    %3066 = vmatprep.subr.bf16.mxu0 0
    %3067 = vmatpush2.bf16.msra.mxu0 0
    %3068 = vmatprep.mubr.bf16.mxu0 0
    %3069 = vmatmul.mubr.bf16.gmra.mxu0 %v2959
    %v3070 = vpop.f32.mrf.mxu0
    %v3071 = vadd.f32 %v2986, %v3070
    %v3072 = vpop.f32.mrf.mxu0
    %v3073 = vpop.f32.mrf.mxu0
    %v3074 = vadd.f32 %v2986, %v3073
    %v3075 = vpop.f32.mrf.mxu0
    %3076 = vmatprep.mubr.bf16.mxu0 0
    %3077 = vmatmul.mubr.bf16.gmra.mxu0 %v2960
    %v3078 = vpop.f32.mrf.mxu0
    %v3079 = vadd.f32 %v2986, %v3078
    %v3080 = vpop.f32.mrf.mxu0
    %v3081 = vpop.f32.mrf.mxu0
    %v3082 = vadd.f32 %v2986, %v3081
    %v3083 = vpop.f32.mrf.mxu0
    %3084 = vmatprep.mubr.bf16.mxu0 0
    %3085 = vmatmul.mubr.bf16.gmra.mxu0 %v2961
    %v3086 = vpop.f32.mrf.mxu0
    %v3087 = vadd.f32 %v2986, %v3086
    %v3088 = vpop.f32.mrf.mxu0
    %v3089 = vpop.f32.mrf.mxu0
    %v3090 = vadd.f32 %v2986, %v3089
    %v3091 = vpop.f32.mrf.mxu0
    %3092 = vmatprep.mubr.bf16.mxu0 0
    %3093 = vmatmul.mubr.bf16.gmra.mxu0 %v2962
    %v3094 = vpop.f32.mrf.mxu0
    %v3095 = vadd.f32 %v2986, %v3094
    %v3096 = vpop.f32.mrf.mxu0
    %v3097 = vpop.f32.mrf.mxu0
    %v3098 = vadd.f32 %v2986, %v3097
    %v3099 = vpop.f32.mrf.mxu0
    %3100 = vdwg.mxu0
    %v3101 = vpack.c.bf16 %v3074, %v3071
    %v3102 = vpack.c.bf16 %v3082, %v3079
    %v3103 = vpack.c.bf16 %v3090, %v3087
    %v3104 = vpack.c.bf16 %v3098, %v3095
    %v3109 = vunpack.c.l.b16 %v2557
    %v3110 = vunpack.c.h.b16 %v2557
    %v3111 = vunpack.c.l.b16 %v2558
    %v3112 = vunpack.c.h.b16 %v2558
    %v3113 = vunpack.c.l.b16 %v2559
    %v3114 = vunpack.c.h.b16 %v2559
    %v3115 = vunpack.c.l.b16 %v2560
    %v3116 = vunpack.c.h.b16 %v2560
    %v3117 = vpack.c.b16 %v3109, %v3109
    %v3118 = vpack.c.b16 %v3110, %v3110
    %v3119 = vpack.c.b16 %v3111, %v3111
    %v3120 = vpack.c.b16 %v3112, %v3112
    %v3121 = vpack.c.b16 %v3113, %v3113
    %v3122 = vpack.c.b16 %v3114, %v3114
    %v3123 = vpack.c.b16 %v3115, %v3115
    %v3124 = vpack.c.b16 %v3116, %v3116
    %v3129 = vunpack.c.l.b16 %v3101
    %v3130 = vunpack.c.h.b16 %v3101
    %v3131 = vunpack.c.l.b16 %v3102
    %v3132 = vunpack.c.h.b16 %v3102
    %v3133 = vunpack.c.l.b16 %v3103
    %v3134 = vunpack.c.h.b16 %v3103
    %v3135 = vunpack.c.l.b16 %v3104
    %v3136 = vunpack.c.h.b16 %v3104
    %v3137 = vpack.c.b16 %v3129, %v3129
    %v3138 = vpack.c.b16 %v3130, %v3130
    %v3139 = vpack.c.b16 %v3131, %v3131
    %v3140 = vpack.c.b16 %v3132, %v3132
    %v3141 = vpack.c.b16 %v3133, %v3133
    %v3142 = vpack.c.b16 %v3134, %v3134
    %v3143 = vpack.c.b16 %v3135, %v3135
    %v3144 = vpack.c.b16 %v3136, %v3136
    %v3146 = vsel %vm1211, %v3117, 0
    %3148 = vmatprep.subr.bf16.mxu0 0
    %3149 = vmatpush1.bf16.msra.mxu0 0
    %3150 = vmatprep.subr.bf16.mxu0 0
    %3151 = vmatpush1.bf16.msra.mxu0 0
    %3152 = vmatprep.subr.bf16.mxu0 0
    %3153 = vmatpush1.bf16.msra.mxu0 0
    %3154 = vmatprep.subr.bf16.mxu0 0
    %3155 = vmatpush1.bf16.msra.mxu0 0
    %3156 = vmatprep.subr.bf16.mxu0 0
    %3157 = vmatpush1.bf16.msra.mxu0 0
    %3158 = vmatprep.subr.bf16.mxu0 0
    %3159 = vmatpush1.bf16.msra.mxu0 0
    %3160 = vmatprep.subr.bf16.mxu0 0
    %3161 = vmatpush1.bf16.msra.mxu0 0
    %3162 = vmatprep.subr.bf16.mxu0 0
    %3163 = vmatpush1.bf16.msra.mxu0 %v3146
    %3164 = vmatprep.subr.bf16.mxu0 0
    %3165 = vmatpush2.bf16.msra.mxu0 0
    %3166 = vmatprep.subr.bf16.mxu0 0
    %3167 = vmatpush2.bf16.msra.mxu0 0
    %3168 = vmatprep.subr.bf16.mxu0 0
    %3169 = vmatpush2.bf16.msra.mxu0 0
    %3170 = vmatprep.subr.bf16.mxu0 0
    %3171 = vmatpush2.bf16.msra.mxu0 0
    %3172 = vmatprep.subr.bf16.mxu0 0
    %3173 = vmatpush2.bf16.msra.mxu0 0
    %3174 = vmatprep.subr.bf16.mxu0 0
    %3175 = vmatpush2.bf16.msra.mxu0 0
    %3176 = vmatprep.subr.bf16.mxu0 0
    %3177 = vmatpush2.bf16.msra.mxu0 0
    %3178 = vmatprep.subr.bf16.mxu0 0
    %3179 = vmatpush2.bf16.msra.mxu0 0
    %3180 = vmatprep.mubr.bf16.mxu0 0
    %3181 = vmatmul.mubr.bf16.gmra.mxu0 %v1209
    %v3182 = vpop.f32.mrf.mxu0
    %v3183 = vadd.f32 0.0, %v3182
    %v3184 = vpop.f32.mrf.mxu0
    %v3185 = vpop.f32.mrf.mxu0
    %v3186 = vpop.f32.mrf.mxu0
    %3187 = vdwg.mxu0
    %v3189 = vsel %vm1211, %v3137, 0
    %3191 = vmatprep.subr.bf16.mxu0 0
    %3192 = vmatpush1.bf16.msra.mxu0 0
    %3193 = vmatprep.subr.bf16.mxu0 0
    %3194 = vmatpush1.bf16.msra.mxu0 0
    %3195 = vmatprep.subr.bf16.mxu0 0
    %3196 = vmatpush1.bf16.msra.mxu0 0
    %3197 = vmatprep.subr.bf16.mxu0 0
    %3198 = vmatpush1.bf16.msra.mxu0 0
    %3199 = vmatprep.subr.bf16.mxu0 0
    %3200 = vmatpush1.bf16.msra.mxu0 0
    %3201 = vmatprep.subr.bf16.mxu0 0
    %3202 = vmatpush1.bf16.msra.mxu0 0
    %3203 = vmatprep.subr.bf16.mxu0 0
    %3204 = vmatpush1.bf16.msra.mxu0 0
    %3205 = vmatprep.subr.bf16.mxu0 0
    %3206 = vmatpush1.bf16.msra.mxu0 %v3189
    %3207 = vmatprep.subr.bf16.mxu0 0
    %3208 = vmatpush2.bf16.msra.mxu0 0
    %3209 = vmatprep.subr.bf16.mxu0 0
    %3210 = vmatpush2.bf16.msra.mxu0 0
    %3211 = vmatprep.subr.bf16.mxu0 0
    %3212 = vmatpush2.bf16.msra.mxu0 0
    %3213 = vmatprep.subr.bf16.mxu0 0
    %3214 = vmatpush2.bf16.msra.mxu0 0
    %3215 = vmatprep.subr.bf16.mxu0 0
    %3216 = vmatpush2.bf16.msra.mxu0 0
    %3217 = vmatprep.subr.bf16.mxu0 0
    %3218 = vmatpush2.bf16.msra.mxu0 0
    %3219 = vmatprep.subr.bf16.mxu0 0
    %3220 = vmatpush2.bf16.msra.mxu0 0
    %3221 = vmatprep.subr.bf16.mxu0 0
    %3222 = vmatpush2.bf16.msra.mxu0 0
    %3223 = vmatprep.mubr.bf16.mxu0 0
    %3224 = vmatmul.mubr.bf16.gmra.mxu0 %v1256
    %v3225 = vpop.f32.mrf.mxu0
    %v3226 = vadd.f32 0.0, %v3225
    %v3227 = vpop.f32.mrf.mxu0
    %v3228 = vpop.f32.mrf.mxu0
    %v3229 = vpop.f32.mrf.mxu0
    %3230 = vdwg.mxu0
    %v3232 = vsel %vm1211, %v3118, 0
    %3234 = vmatprep.subr.bf16.mxu0 0
    %3235 = vmatpush1.bf16.msra.mxu0 0
    %3236 = vmatprep.subr.bf16.mxu0 0
    %3237 = vmatpush1.bf16.msra.mxu0 0
    %3238 = vmatprep.subr.bf16.mxu0 0
    %3239 = vmatpush1.bf16.msra.mxu0 0
    %3240 = vmatprep.subr.bf16.mxu0 0
    %3241 = vmatpush1.bf16.msra.mxu0 0
    %3242 = vmatprep.subr.bf16.mxu0 0
    %3243 = vmatpush1.bf16.msra.mxu0 0
    %3244 = vmatprep.subr.bf16.mxu0 0
    %3245 = vmatpush1.bf16.msra.mxu0 0
    %3246 = vmatprep.subr.bf16.mxu0 0
    %3247 = vmatpush1.bf16.msra.mxu0 0
    %3248 = vmatprep.subr.bf16.mxu0 0
    %3249 = vmatpush1.bf16.msra.mxu0 %v3232
    %3250 = vmatprep.subr.bf16.mxu0 0
    %3251 = vmatpush2.bf16.msra.mxu0 0
    %3252 = vmatprep.subr.bf16.mxu0 0
    %3253 = vmatpush2.bf16.msra.mxu0 0
    %3254 = vmatprep.subr.bf16.mxu0 0
    %3255 = vmatpush2.bf16.msra.mxu0 0
    %3256 = vmatprep.subr.bf16.mxu0 0
    %3257 = vmatpush2.bf16.msra.mxu0 0
    %3258 = vmatprep.subr.bf16.mxu0 0
    %3259 = vmatpush2.bf16.msra.mxu0 0
    %3260 = vmatprep.subr.bf16.mxu0 0
    %3261 = vmatpush2.bf16.msra.mxu0 0
    %3262 = vmatprep.subr.bf16.mxu0 0
    %3263 = vmatpush2.bf16.msra.mxu0 0
    %3264 = vmatprep.subr.bf16.mxu0 0
    %3265 = vmatpush2.bf16.msra.mxu0 0
    %3266 = vmatprep.mubr.bf16.mxu0 0
    %3267 = vmatmul.mubr.bf16.gmra.mxu0 %v1302
    %v3268 = vpop.f32.mrf.mxu0
    %v3269 = vadd.f32 0.0, %v3268
    %v3270 = vpop.f32.mrf.mxu0
    %v3271 = vpop.f32.mrf.mxu0
    %v3272 = vpop.f32.mrf.mxu0
    %3273 = vdwg.mxu0
    %v3275 = vsel %vm1211, %v3138, 0
    %3277 = vmatprep.subr.bf16.mxu0 0
    %3278 = vmatpush1.bf16.msra.mxu0 0
    %3279 = vmatprep.subr.bf16.mxu0 0
    %3280 = vmatpush1.bf16.msra.mxu0 0
    %3281 = vmatprep.subr.bf16.mxu0 0
    %3282 = vmatpush1.bf16.msra.mxu0 0
    %3283 = vmatprep.subr.bf16.mxu0 0
    %3284 = vmatpush1.bf16.msra.mxu0 0
    %3285 = vmatprep.subr.bf16.mxu0 0
    %3286 = vmatpush1.bf16.msra.mxu0 0
    %3287 = vmatprep.subr.bf16.mxu0 0
    %3288 = vmatpush1.bf16.msra.mxu0 0
    %3289 = vmatprep.subr.bf16.mxu0 0
    %3290 = vmatpush1.bf16.msra.mxu0 0
    %3291 = vmatprep.subr.bf16.mxu0 0
    %3292 = vmatpush1.bf16.msra.mxu0 %v3275
    %3293 = vmatprep.subr.bf16.mxu0 0
    %3294 = vmatpush2.bf16.msra.mxu0 0
    %3295 = vmatprep.subr.bf16.mxu0 0
    %3296 = vmatpush2.bf16.msra.mxu0 0
    %3297 = vmatprep.subr.bf16.mxu0 0
    %3298 = vmatpush2.bf16.msra.mxu0 0
    %3299 = vmatprep.subr.bf16.mxu0 0
    %3300 = vmatpush2.bf16.msra.mxu0 0
    %3301 = vmatprep.subr.bf16.mxu0 0
    %3302 = vmatpush2.bf16.msra.mxu0 0
    %3303 = vmatprep.subr.bf16.mxu0 0
    %3304 = vmatpush2.bf16.msra.mxu0 0
    %3305 = vmatprep.subr.bf16.mxu0 0
    %3306 = vmatpush2.bf16.msra.mxu0 0
    %3307 = vmatprep.subr.bf16.mxu0 0
    %3308 = vmatpush2.bf16.msra.mxu0 0
    %3309 = vmatprep.mubr.bf16.mxu0 0
    %3310 = vmatmul.mubr.bf16.gmra.mxu0 %v1348
    %v3311 = vpop.f32.mrf.mxu0
    %v3312 = vadd.f32 0.0, %v3311
    %v3313 = vpop.f32.mrf.mxu0
    %v3314 = vpop.f32.mrf.mxu0
    %v3315 = vpop.f32.mrf.mxu0
    %3316 = vdwg.mxu0
    %v3318 = vsel %vm1211, %v3119, 0
    %3320 = vmatprep.subr.bf16.mxu0 0
    %3321 = vmatpush1.bf16.msra.mxu0 0
    %3322 = vmatprep.subr.bf16.mxu0 0
    %3323 = vmatpush1.bf16.msra.mxu0 0
    %3324 = vmatprep.subr.bf16.mxu0 0
    %3325 = vmatpush1.bf16.msra.mxu0 0
    %3326 = vmatprep.subr.bf16.mxu0 0
    %3327 = vmatpush1.bf16.msra.mxu0 0
    %3328 = vmatprep.subr.bf16.mxu0 0
    %3329 = vmatpush1.bf16.msra.mxu0 0
    %3330 = vmatprep.subr.bf16.mxu0 0
    %3331 = vmatpush1.bf16.msra.mxu0 0
    %3332 = vmatprep.subr.bf16.mxu0 0
    %3333 = vmatpush1.bf16.msra.mxu0 0
    %3334 = vmatprep.subr.bf16.mxu0 0
    %3335 = vmatpush1.bf16.msra.mxu0 %v3318
    %3336 = vmatprep.subr.bf16.mxu0 0
    %3337 = vmatpush2.bf16.msra.mxu0 0
    %3338 = vmatprep.subr.bf16.mxu0 0
    %3339 = vmatpush2.bf16.msra.mxu0 0
    %3340 = vmatprep.subr.bf16.mxu0 0
    %3341 = vmatpush2.bf16.msra.mxu0 0
    %3342 = vmatprep.subr.bf16.mxu0 0
    %3343 = vmatpush2.bf16.msra.mxu0 0
    %3344 = vmatprep.subr.bf16.mxu0 0
    %3345 = vmatpush2.bf16.msra.mxu0 0
    %3346 = vmatprep.subr.bf16.mxu0 0
    %3347 = vmatpush2.bf16.msra.mxu0 0
    %3348 = vmatprep.subr.bf16.mxu0 0
    %3349 = vmatpush2.bf16.msra.mxu0 0
    %3350 = vmatprep.subr.bf16.mxu0 0
    %3351 = vmatpush2.bf16.msra.mxu0 0
    %3352 = vmatprep.mubr.bf16.mxu0 0
    %3353 = vmatmul.mubr.bf16.gmra.mxu0 %v1394
    %v3354 = vpop.f32.mrf.mxu0
    %v3355 = vadd.f32 0.0, %v3354
    %v3356 = vpop.f32.mrf.mxu0
    %v3357 = vpop.f32.mrf.mxu0
    %v3358 = vpop.f32.mrf.mxu0
    %3359 = vdwg.mxu0
    %v3361 = vsel %vm1211, %v3139, 0
    %3363 = vmatprep.subr.bf16.mxu0 0
    %3364 = vmatpush1.bf16.msra.mxu0 0
    %3365 = vmatprep.subr.bf16.mxu0 0
    %3366 = vmatpush1.bf16.msra.mxu0 0
    %3367 = vmatprep.subr.bf16.mxu0 0
    %3368 = vmatpush1.bf16.msra.mxu0 0
    %3369 = vmatprep.subr.bf16.mxu0 0
    %3370 = vmatpush1.bf16.msra.mxu0 0
    %3371 = vmatprep.subr.bf16.mxu0 0
    %3372 = vmatpush1.bf16.msra.mxu0 0
    %3373 = vmatprep.subr.bf16.mxu0 0
    %3374 = vmatpush1.bf16.msra.mxu0 0
    %3375 = vmatprep.subr.bf16.mxu0 0
    %3376 = vmatpush1.bf16.msra.mxu0 0
    %3377 = vmatprep.subr.bf16.mxu0 0
    %3378 = vmatpush1.bf16.msra.mxu0 %v3361
    %3379 = vmatprep.subr.bf16.mxu0 0
    %3380 = vmatpush2.bf16.msra.mxu0 0
    %3381 = vmatprep.subr.bf16.mxu0 0
    %3382 = vmatpush2.bf16.msra.mxu0 0
    %3383 = vmatprep.subr.bf16.mxu0 0
    %3384 = vmatpush2.bf16.msra.mxu0 0
    %3385 = vmatprep.subr.bf16.mxu0 0
    %3386 = vmatpush2.bf16.msra.mxu0 0
    %3387 = vmatprep.subr.bf16.mxu0 0
    %3388 = vmatpush2.bf16.msra.mxu0 0
    %3389 = vmatprep.subr.bf16.mxu0 0
    %3390 = vmatpush2.bf16.msra.mxu0 0
    %3391 = vmatprep.subr.bf16.mxu0 0
    %3392 = vmatpush2.bf16.msra.mxu0 0
    %3393 = vmatprep.subr.bf16.mxu0 0
    %3394 = vmatpush2.bf16.msra.mxu0 0
    %3395 = vmatprep.mubr.bf16.mxu0 0
    %3396 = vmatmul.mubr.bf16.gmra.mxu0 %v1440
    %v3397 = vpop.f32.mrf.mxu0
    %v3398 = vadd.f32 0.0, %v3397
    %v3399 = vpop.f32.mrf.mxu0
    %v3400 = vpop.f32.mrf.mxu0
    %v3401 = vpop.f32.mrf.mxu0
    %3402 = vdwg.mxu0
    %v3404 = vsel %vm1211, %v3120, 0
    %3406 = vmatprep.subr.bf16.mxu0 0
    %3407 = vmatpush1.bf16.msra.mxu0 0
    %3408 = vmatprep.subr.bf16.mxu0 0
    %3409 = vmatpush1.bf16.msra.mxu0 0
    %3410 = vmatprep.subr.bf16.mxu0 0
    %3411 = vmatpush1.bf16.msra.mxu0 0
    %3412 = vmatprep.subr.bf16.mxu0 0
    %3413 = vmatpush1.bf16.msra.mxu0 0
    %3414 = vmatprep.subr.bf16.mxu0 0
    %3415 = vmatpush1.bf16.msra.mxu0 0
    %3416 = vmatprep.subr.bf16.mxu0 0
    %3417 = vmatpush1.bf16.msra.mxu0 0
    %3418 = vmatprep.subr.bf16.mxu0 0
    %3419 = vmatpush1.bf16.msra.mxu0 0
    %3420 = vmatprep.subr.bf16.mxu0 0
    %3421 = vmatpush1.bf16.msra.mxu0 %v3404
    %3422 = vmatprep.subr.bf16.mxu0 0
    %3423 = vmatpush2.bf16.msra.mxu0 0
    %3424 = vmatprep.subr.bf16.mxu0 0
    %3425 = vmatpush2.bf16.msra.mxu0 0
    %3426 = vmatprep.subr.bf16.mxu0 0
    %3427 = vmatpush2.bf16.msra.mxu0 0
    %3428 = vmatprep.subr.bf16.mxu0 0
    %3429 = vmatpush2.bf16.msra.mxu0 0
    %3430 = vmatprep.subr.bf16.mxu0 0
    %3431 = vmatpush2.bf16.msra.mxu0 0
    %3432 = vmatprep.subr.bf16.mxu0 0
    %3433 = vmatpush2.bf16.msra.mxu0 0
    %3434 = vmatprep.subr.bf16.mxu0 0
    %3435 = vmatpush2.bf16.msra.mxu0 0
    %3436 = vmatprep.subr.bf16.mxu0 0
    %3437 = vmatpush2.bf16.msra.mxu0 0
    %3438 = vmatprep.mubr.bf16.mxu0 0
    %3439 = vmatmul.mubr.bf16.gmra.mxu0 %v1486
    %v3440 = vpop.f32.mrf.mxu0
    %v3441 = vadd.f32 0.0, %v3440
    %v3442 = vpop.f32.mrf.mxu0
    %v3443 = vpop.f32.mrf.mxu0
    %v3444 = vpop.f32.mrf.mxu0
    %3445 = vdwg.mxu0
    %v3447 = vsel %vm1211, %v3140, 0
    %3449 = vmatprep.subr.bf16.mxu0 0
    %3450 = vmatpush1.bf16.msra.mxu0 0
    %3451 = vmatprep.subr.bf16.mxu0 0
    %3452 = vmatpush1.bf16.msra.mxu0 0
    %3453 = vmatprep.subr.bf16.mxu0 0
    %3454 = vmatpush1.bf16.msra.mxu0 0
    %3455 = vmatprep.subr.bf16.mxu0 0
    %3456 = vmatpush1.bf16.msra.mxu0 0
    %3457 = vmatprep.subr.bf16.mxu0 0
    %3458 = vmatpush1.bf16.msra.mxu0 0
    %3459 = vmatprep.subr.bf16.mxu0 0
    %3460 = vmatpush1.bf16.msra.mxu0 0
    %3461 = vmatprep.subr.bf16.mxu0 0
    %3462 = vmatpush1.bf16.msra.mxu0 0
    %3463 = vmatprep.subr.bf16.mxu0 0
    %3464 = vmatpush1.bf16.msra.mxu0 %v3447
    %3465 = vmatprep.subr.bf16.mxu0 0
    %3466 = vmatpush2.bf16.msra.mxu0 0
    %3467 = vmatprep.subr.bf16.mxu0 0
    %3468 = vmatpush2.bf16.msra.mxu0 0
    %3469 = vmatprep.subr.bf16.mxu0 0
    %3470 = vmatpush2.bf16.msra.mxu0 0
    %3471 = vmatprep.subr.bf16.mxu0 0
    %3472 = vmatpush2.bf16.msra.mxu0 0
    %3473 = vmatprep.subr.bf16.mxu0 0
    %3474 = vmatpush2.bf16.msra.mxu0 0
    %3475 = vmatprep.subr.bf16.mxu0 0
    %3476 = vmatpush2.bf16.msra.mxu0 0
    %3477 = vmatprep.subr.bf16.mxu0 0
    %3478 = vmatpush2.bf16.msra.mxu0 0
    %3479 = vmatprep.subr.bf16.mxu0 0
    %3480 = vmatpush2.bf16.msra.mxu0 0
    %3481 = vmatprep.mubr.bf16.mxu0 0
    %3482 = vmatmul.mubr.bf16.gmra.mxu0 %v1532
    %v3483 = vpop.f32.mrf.mxu0
    %v3484 = vadd.f32 0.0, %v3483
    %v3485 = vpop.f32.mrf.mxu0
    %v3486 = vpop.f32.mrf.mxu0
    %v3487 = vpop.f32.mrf.mxu0
    %3488 = vdwg.mxu0
    %v3490 = vsel %vm1211, %v3121, 0
    %3492 = vmatprep.subr.bf16.mxu0 0
    %3493 = vmatpush1.bf16.msra.mxu0 0
    %3494 = vmatprep.subr.bf16.mxu0 0
    %3495 = vmatpush1.bf16.msra.mxu0 0
    %3496 = vmatprep.subr.bf16.mxu0 0
    %3497 = vmatpush1.bf16.msra.mxu0 0
    %3498 = vmatprep.subr.bf16.mxu0 0
    %3499 = vmatpush1.bf16.msra.mxu0 0
    %3500 = vmatprep.subr.bf16.mxu0 0
    %3501 = vmatpush1.bf16.msra.mxu0 0
    %3502 = vmatprep.subr.bf16.mxu0 0
    %3503 = vmatpush1.bf16.msra.mxu0 0
    %3504 = vmatprep.subr.bf16.mxu0 0
    %3505 = vmatpush1.bf16.msra.mxu0 0
    %3506 = vmatprep.subr.bf16.mxu0 0
    %3507 = vmatpush1.bf16.msra.mxu0 %v3490
    %3508 = vmatprep.subr.bf16.mxu0 0
    %3509 = vmatpush2.bf16.msra.mxu0 0
    %3510 = vmatprep.subr.bf16.mxu0 0
    %3511 = vmatpush2.bf16.msra.mxu0 0
    %3512 = vmatprep.subr.bf16.mxu0 0
    %3513 = vmatpush2.bf16.msra.mxu0 0
    %3514 = vmatprep.subr.bf16.mxu0 0
    %3515 = vmatpush2.bf16.msra.mxu0 0
    %3516 = vmatprep.subr.bf16.mxu0 0
    %3517 = vmatpush2.bf16.msra.mxu0 0
    %3518 = vmatprep.subr.bf16.mxu0 0
    %3519 = vmatpush2.bf16.msra.mxu0 0
    %3520 = vmatprep.subr.bf16.mxu0 0
    %3521 = vmatpush2.bf16.msra.mxu0 0
    %3522 = vmatprep.subr.bf16.mxu0 0
    %3523 = vmatpush2.bf16.msra.mxu0 0
    %3524 = vmatprep.mubr.bf16.mxu0 0
    %3525 = vmatmul.mubr.bf16.gmra.mxu0 %v1578
    %v3526 = vpop.f32.mrf.mxu0
    %v3527 = vadd.f32 0.0, %v3526
    %v3528 = vpop.f32.mrf.mxu0
    %v3529 = vpop.f32.mrf.mxu0
    %v3530 = vpop.f32.mrf.mxu0
    %3531 = vdwg.mxu0
    %v3533 = vsel %vm1211, %v3141, 0
    %3535 = vmatprep.subr.bf16.mxu0 0
    %3536 = vmatpush1.bf16.msra.mxu0 0
    %3537 = vmatprep.subr.bf16.mxu0 0
    %3538 = vmatpush1.bf16.msra.mxu0 0
    %3539 = vmatprep.subr.bf16.mxu0 0
    %3540 = vmatpush1.bf16.msra.mxu0 0
    %3541 = vmatprep.subr.bf16.mxu0 0
    %3542 = vmatpush1.bf16.msra.mxu0 0
    %3543 = vmatprep.subr.bf16.mxu0 0
    %3544 = vmatpush1.bf16.msra.mxu0 0
    %3545 = vmatprep.subr.bf16.mxu0 0
    %3546 = vmatpush1.bf16.msra.mxu0 0
    %3547 = vmatprep.subr.bf16.mxu0 0
    %3548 = vmatpush1.bf16.msra.mxu0 0
    %3549 = vmatprep.subr.bf16.mxu0 0
    %3550 = vmatpush1.bf16.msra.mxu0 %v3533
    %3551 = vmatprep.subr.bf16.mxu0 0
    %3552 = vmatpush2.bf16.msra.mxu0 0
    %3553 = vmatprep.subr.bf16.mxu0 0
    %3554 = vmatpush2.bf16.msra.mxu0 0
    %3555 = vmatprep.subr.bf16.mxu0 0
    %3556 = vmatpush2.bf16.msra.mxu0 0
    %3557 = vmatprep.subr.bf16.mxu0 0
    %3558 = vmatpush2.bf16.msra.mxu0 0
    %3559 = vmatprep.subr.bf16.mxu0 0
    %3560 = vmatpush2.bf16.msra.mxu0 0
    %3561 = vmatprep.subr.bf16.mxu0 0
    %3562 = vmatpush2.bf16.msra.mxu0 0
    %3563 = vmatprep.subr.bf16.mxu0 0
    %3564 = vmatpush2.bf16.msra.mxu0 0
    %3565 = vmatprep.subr.bf16.mxu0 0
    %3566 = vmatpush2.bf16.msra.mxu0 0
    %3567 = vmatprep.mubr.bf16.mxu0 0
    %3568 = vmatmul.mubr.bf16.gmra.mxu0 %v1624
    %v3569 = vpop.f32.mrf.mxu0
    %v3570 = vadd.f32 0.0, %v3569
    %v3571 = vpop.f32.mrf.mxu0
    %v3572 = vpop.f32.mrf.mxu0
    %v3573 = vpop.f32.mrf.mxu0
    %3574 = vdwg.mxu0
    %v3576 = vsel %vm1211, %v3122, 0
    %3578 = vmatprep.subr.bf16.mxu0 0
    %3579 = vmatpush1.bf16.msra.mxu0 0
    %3580 = vmatprep.subr.bf16.mxu0 0
    %3581 = vmatpush1.bf16.msra.mxu0 0
    %3582 = vmatprep.subr.bf16.mxu0 0
    %3583 = vmatpush1.bf16.msra.mxu0 0
    %3584 = vmatprep.subr.bf16.mxu0 0
    %3585 = vmatpush1.bf16.msra.mxu0 0
    %3586 = vmatprep.subr.bf16.mxu0 0
    %3587 = vmatpush1.bf16.msra.mxu0 0
    %3588 = vmatprep.subr.bf16.mxu0 0
    %3589 = vmatpush1.bf16.msra.mxu0 0
    %3590 = vmatprep.subr.bf16.mxu0 0
    %3591 = vmatpush1.bf16.msra.mxu0 0
    %3592 = vmatprep.subr.bf16.mxu0 0
    %3593 = vmatpush1.bf16.msra.mxu0 %v3576
    %3594 = vmatprep.subr.bf16.mxu0 0
    %3595 = vmatpush2.bf16.msra.mxu0 0
    %3596 = vmatprep.subr.bf16.mxu0 0
    %3597 = vmatpush2.bf16.msra.mxu0 0
    %3598 = vmatprep.subr.bf16.mxu0 0
    %3599 = vmatpush2.bf16.msra.mxu0 0
    %3600 = vmatprep.subr.bf16.mxu0 0
    %3601 = vmatpush2.bf16.msra.mxu0 0
    %3602 = vmatprep.subr.bf16.mxu0 0
    %3603 = vmatpush2.bf16.msra.mxu0 0
    %3604 = vmatprep.subr.bf16.mxu0 0
    %3605 = vmatpush2.bf16.msra.mxu0 0
    %3606 = vmatprep.subr.bf16.mxu0 0
    %3607 = vmatpush2.bf16.msra.mxu0 0
    %3608 = vmatprep.subr.bf16.mxu0 0
    %3609 = vmatpush2.bf16.msra.mxu0 0
    %3610 = vmatprep.mubr.bf16.mxu0 0
    %3611 = vmatmul.mubr.bf16.gmra.mxu0 %v1670
    %v3612 = vpop.f32.mrf.mxu0
    %v3613 = vadd.f32 0.0, %v3612
    %v3614 = vpop.f32.mrf.mxu0
    %v3615 = vpop.f32.mrf.mxu0
    %v3616 = vpop.f32.mrf.mxu0
    %3617 = vdwg.mxu0
    %v3619 = vsel %vm1211, %v3142, 0
    %3621 = vmatprep.subr.bf16.mxu0 0
    %3622 = vmatpush1.bf16.msra.mxu0 0
    %3623 = vmatprep.subr.bf16.mxu0 0
    %3624 = vmatpush1.bf16.msra.mxu0 0
    %3625 = vmatprep.subr.bf16.mxu0 0
    %3626 = vmatpush1.bf16.msra.mxu0 0
    %3627 = vmatprep.subr.bf16.mxu0 0
    %3628 = vmatpush1.bf16.msra.mxu0 0
    %3629 = vmatprep.subr.bf16.mxu0 0
    %3630 = vmatpush1.bf16.msra.mxu0 0
    %3631 = vmatprep.subr.bf16.mxu0 0
    %3632 = vmatpush1.bf16.msra.mxu0 0
    %3633 = vmatprep.subr.bf16.mxu0 0
    %3634 = vmatpush1.bf16.msra.mxu0 0
    %3635 = vmatprep.subr.bf16.mxu0 0
    %3636 = vmatpush1.bf16.msra.mxu0 %v3619
    %3637 = vmatprep.subr.bf16.mxu0 0
    %3638 = vmatpush2.bf16.msra.mxu0 0
    %3639 = vmatprep.subr.bf16.mxu0 0
    %3640 = vmatpush2.bf16.msra.mxu0 0
    %3641 = vmatprep.subr.bf16.mxu0 0
    %3642 = vmatpush2.bf16.msra.mxu0 0
    %3643 = vmatprep.subr.bf16.mxu0 0
    %3644 = vmatpush2.bf16.msra.mxu0 0
    %3645 = vmatprep.subr.bf16.mxu0 0
    %3646 = vmatpush2.bf16.msra.mxu0 0
    %3647 = vmatprep.subr.bf16.mxu0 0
    %3648 = vmatpush2.bf16.msra.mxu0 0
    %3649 = vmatprep.subr.bf16.mxu0 0
    %3650 = vmatpush2.bf16.msra.mxu0 0
    %3651 = vmatprep.subr.bf16.mxu0 0
    %3652 = vmatpush2.bf16.msra.mxu0 0
    %3653 = vmatprep.mubr.bf16.mxu0 0
    %3654 = vmatmul.mubr.bf16.gmra.mxu0 %v1716
    %v3655 = vpop.f32.mrf.mxu0
    %v3656 = vadd.f32 0.0, %v3655
    %v3657 = vpop.f32.mrf.mxu0
    %v3658 = vpop.f32.mrf.mxu0
    %v3659 = vpop.f32.mrf.mxu0
    %3660 = vdwg.mxu0
    %v3662 = vsel %vm1211, %v3123, 0
    %3664 = vmatprep.subr.bf16.mxu0 0
    %3665 = vmatpush1.bf16.msra.mxu0 0
    %3666 = vmatprep.subr.bf16.mxu0 0
    %3667 = vmatpush1.bf16.msra.mxu0 0
    %3668 = vmatprep.subr.bf16.mxu0 0
    %3669 = vmatpush1.bf16.msra.mxu0 0
    %3670 = vmatprep.subr.bf16.mxu0 0
    %3671 = vmatpush1.bf16.msra.mxu0 0
    %3672 = vmatprep.subr.bf16.mxu0 0
    %3673 = vmatpush1.bf16.msra.mxu0 0
    %3674 = vmatprep.subr.bf16.mxu0 0
    %3675 = vmatpush1.bf16.msra.mxu0 0
    %3676 = vmatprep.subr.bf16.mxu0 0
    %3677 = vmatpush1.bf16.msra.mxu0 0
    %3678 = vmatprep.subr.bf16.mxu0 0
    %3679 = vmatpush1.bf16.msra.mxu0 %v3662
    %3680 = vmatprep.subr.bf16.mxu0 0
    %3681 = vmatpush2.bf16.msra.mxu0 0
    %3682 = vmatprep.subr.bf16.mxu0 0
    %3683 = vmatpush2.bf16.msra.mxu0 0
    %3684 = vmatprep.subr.bf16.mxu0 0
    %3685 = vmatpush2.bf16.msra.mxu0 0
    %3686 = vmatprep.subr.bf16.mxu0 0
    %3687 = vmatpush2.bf16.msra.mxu0 0
    %3688 = vmatprep.subr.bf16.mxu0 0
    %3689 = vmatpush2.bf16.msra.mxu0 0
    %3690 = vmatprep.subr.bf16.mxu0 0
    %3691 = vmatpush2.bf16.msra.mxu0 0
    %3692 = vmatprep.subr.bf16.mxu0 0
    %3693 = vmatpush2.bf16.msra.mxu0 0
    %3694 = vmatprep.subr.bf16.mxu0 0
    %3695 = vmatpush2.bf16.msra.mxu0 0
    %3696 = vmatprep.mubr.bf16.mxu0 0
    %3697 = vmatmul.mubr.bf16.gmra.mxu0 %v1762
    %v3698 = vpop.f32.mrf.mxu0
    %v3699 = vadd.f32 0.0, %v3698
    %v3700 = vpop.f32.mrf.mxu0
    %v3701 = vpop.f32.mrf.mxu0
    %v3702 = vpop.f32.mrf.mxu0
    %3703 = vdwg.mxu0
    %v3705 = vsel %vm1211, %v3143, 0
    %3707 = vmatprep.subr.bf16.mxu0 0
    %3708 = vmatpush1.bf16.msra.mxu0 0
    %3709 = vmatprep.subr.bf16.mxu0 0
    %3710 = vmatpush1.bf16.msra.mxu0 0
    %3711 = vmatprep.subr.bf16.mxu0 0
    %3712 = vmatpush1.bf16.msra.mxu0 0
    %3713 = vmatprep.subr.bf16.mxu0 0
    %3714 = vmatpush1.bf16.msra.mxu0 0
    %3715 = vmatprep.subr.bf16.mxu0 0
    %3716 = vmatpush1.bf16.msra.mxu0 0
    %3717 = vmatprep.subr.bf16.mxu0 0
    %3718 = vmatpush1.bf16.msra.mxu0 0
    %3719 = vmatprep.subr.bf16.mxu0 0
    %3720 = vmatpush1.bf16.msra.mxu0 0
    %3721 = vmatprep.subr.bf16.mxu0 0
    %3722 = vmatpush1.bf16.msra.mxu0 %v3705
    %3723 = vmatprep.subr.bf16.mxu0 0
    %3724 = vmatpush2.bf16.msra.mxu0 0
    %3725 = vmatprep.subr.bf16.mxu0 0
    %3726 = vmatpush2.bf16.msra.mxu0 0
    %3727 = vmatprep.subr.bf16.mxu0 0
    %3728 = vmatpush2.bf16.msra.mxu0 0
    %3729 = vmatprep.subr.bf16.mxu0 0
    %3730 = vmatpush2.bf16.msra.mxu0 0
    %3731 = vmatprep.subr.bf16.mxu0 0
    %3732 = vmatpush2.bf16.msra.mxu0 0
    %3733 = vmatprep.subr.bf16.mxu0 0
    %3734 = vmatpush2.bf16.msra.mxu0 0
    %3735 = vmatprep.subr.bf16.mxu0 0
    %3736 = vmatpush2.bf16.msra.mxu0 0
    %3737 = vmatprep.subr.bf16.mxu0 0
    %3738 = vmatpush2.bf16.msra.mxu0 0
    %3739 = vmatprep.mubr.bf16.mxu0 0
    %3740 = vmatmul.mubr.bf16.gmra.mxu0 %v1808
    %v3741 = vpop.f32.mrf.mxu0
    %v3742 = vadd.f32 0.0, %v3741
    %v3743 = vpop.f32.mrf.mxu0
    %v3744 = vpop.f32.mrf.mxu0
    %v3745 = vpop.f32.mrf.mxu0
    %3746 = vdwg.mxu0
    %v3748 = vsel %vm1211, %v3124, 0
    %3750 = vmatprep.subr.bf16.mxu0 0
    %3751 = vmatpush1.bf16.msra.mxu0 0
    %3752 = vmatprep.subr.bf16.mxu0 0
    %3753 = vmatpush1.bf16.msra.mxu0 0
    %3754 = vmatprep.subr.bf16.mxu0 0
    %3755 = vmatpush1.bf16.msra.mxu0 0
    %3756 = vmatprep.subr.bf16.mxu0 0
    %3757 = vmatpush1.bf16.msra.mxu0 0
    %3758 = vmatprep.subr.bf16.mxu0 0
    %3759 = vmatpush1.bf16.msra.mxu0 0
    %3760 = vmatprep.subr.bf16.mxu0 0
    %3761 = vmatpush1.bf16.msra.mxu0 0
    %3762 = vmatprep.subr.bf16.mxu0 0
    %3763 = vmatpush1.bf16.msra.mxu0 0
    %3764 = vmatprep.subr.bf16.mxu0 0
    %3765 = vmatpush1.bf16.msra.mxu0 %v3748
    %3766 = vmatprep.subr.bf16.mxu0 0
    %3767 = vmatpush2.bf16.msra.mxu0 0
    %3768 = vmatprep.subr.bf16.mxu0 0
    %3769 = vmatpush2.bf16.msra.mxu0 0
    %3770 = vmatprep.subr.bf16.mxu0 0
    %3771 = vmatpush2.bf16.msra.mxu0 0
    %3772 = vmatprep.subr.bf16.mxu0 0
    %3773 = vmatpush2.bf16.msra.mxu0 0
    %3774 = vmatprep.subr.bf16.mxu0 0
    %3775 = vmatpush2.bf16.msra.mxu0 0
    %3776 = vmatprep.subr.bf16.mxu0 0
    %3777 = vmatpush2.bf16.msra.mxu0 0
    %3778 = vmatprep.subr.bf16.mxu0 0
    %3779 = vmatpush2.bf16.msra.mxu0 0
    %3780 = vmatprep.subr.bf16.mxu0 0
    %3781 = vmatpush2.bf16.msra.mxu0 0
    %3782 = vmatprep.mubr.bf16.mxu0 0
    %3783 = vmatmul.mubr.bf16.gmra.mxu0 %v1854
    %v3784 = vpop.f32.mrf.mxu0
    %v3785 = vadd.f32 0.0, %v3784
    %v3786 = vpop.f32.mrf.mxu0
    %v3787 = vpop.f32.mrf.mxu0
    %v3788 = vpop.f32.mrf.mxu0
    %3789 = vdwg.mxu0
    %v3791 = vsel %vm1211, %v3144, 0
    %3793 = vmatprep.subr.bf16.mxu0 0
    %3794 = vmatpush1.bf16.msra.mxu0 0
    %3795 = vmatprep.subr.bf16.mxu0 0
    %3796 = vmatpush1.bf16.msra.mxu0 0
    %3797 = vmatprep.subr.bf16.mxu0 0
    %3798 = vmatpush1.bf16.msra.mxu0 0
    %3799 = vmatprep.subr.bf16.mxu0 0
    %3800 = vmatpush1.bf16.msra.mxu0 0
    %3801 = vmatprep.subr.bf16.mxu0 0
    %3802 = vmatpush1.bf16.msra.mxu0 0
    %3803 = vmatprep.subr.bf16.mxu0 0
    %3804 = vmatpush1.bf16.msra.mxu0 0
    %3805 = vmatprep.subr.bf16.mxu0 0
    %3806 = vmatpush1.bf16.msra.mxu0 0
    %3807 = vmatprep.subr.bf16.mxu0 0
    %3808 = vmatpush1.bf16.msra.mxu0 %v3791
    %3809 = vmatprep.subr.bf16.mxu0 0
    %3810 = vmatpush2.bf16.msra.mxu0 0
    %3811 = vmatprep.subr.bf16.mxu0 0
    %3812 = vmatpush2.bf16.msra.mxu0 0
    %3813 = vmatprep.subr.bf16.mxu0 0
    %3814 = vmatpush2.bf16.msra.mxu0 0
    %3815 = vmatprep.subr.bf16.mxu0 0
    %3816 = vmatpush2.bf16.msra.mxu0 0
    %3817 = vmatprep.subr.bf16.mxu0 0
    %3818 = vmatpush2.bf16.msra.mxu0 0
    %3819 = vmatprep.subr.bf16.mxu0 0
    %3820 = vmatpush2.bf16.msra.mxu0 0
    %3821 = vmatprep.subr.bf16.mxu0 0
    %3822 = vmatpush2.bf16.msra.mxu0 0
    %3823 = vmatprep.subr.bf16.mxu0 0
    %3824 = vmatpush2.bf16.msra.mxu0 0
    %3825 = vmatprep.mubr.bf16.mxu0 0
    %3826 = vmatmul.mubr.bf16.gmra.mxu0 %v1900
    %v3827 = vpop.f32.mrf.mxu0
    %v3828 = vadd.f32 0.0, %v3827
    %v3829 = vpop.f32.mrf.mxu0
    %v3830 = vpop.f32.mrf.mxu0
    %v3831 = vpop.f32.mrf.mxu0
    %3832 = vdwg.mxu0
    %v3833 = vmax.f32 %v3183, 0.0
    %v3834 = vmax.f32 %v3226, 0.0
    %v3835 = vmax.f32 %v3269, 0.0
    %v3836 = vmax.f32 %v3312, 0.0
    %v3837 = vmax.f32 %v3355, 0.0
    %v3838 = vmax.f32 %v3398, 0.0
    %v3839 = vmax.f32 %v3441, 0.0
    %v3840 = vmax.f32 %v3484, 0.0
    %v3841 = vmax.f32 %v3527, 0.0
    %v3842 = vmax.f32 %v3570, 0.0
    %v3843 = vmax.f32 %v3613, 0.0
    %v3844 = vmax.f32 %v3656, 0.0
    %v3845 = vmax.f32 %v3699, 0.0
    %v3846 = vmax.f32 %v3742, 0.0
    %v3847 = vmax.f32 %v3785, 0.0
    %v3848 = vmax.f32 %v3828, 0.0
    %v3849 = vsel %vm87, %v3833, 0.0
    %v3850 = vsel %vm87, %v3834, 0.0
    %v3851 = vadd.f32 %v3849, %v3850
    %v3852 = vsel %vm87, %v3835, 0.0
    %v3853 = vsel %vm87, %v3836, 0.0
    %v3854 = vadd.f32 %v3852, %v3853
    %v3855 = vsel %vm87, %v3837, 0.0
    %v3856 = vsel %vm87, %v3838, 0.0
    %v3857 = vadd.f32 %v3855, %v3856
    %v3858 = vsel %vm87, %v3839, 0.0
    %v3859 = vsel %vm87, %v3840, 0.0
    %v3860 = vadd.f32 %v3858, %v3859
    %v3861 = vsel %vm87, %v3841, 0.0
    %v3862 = vsel %vm87, %v3842, 0.0
    %v3863 = vadd.f32 %v3861, %v3862
    %v3864 = vsel %vm87, %v3843, 0.0
    %v3865 = vsel %vm87, %v3844, 0.0
    %v3866 = vadd.f32 %v3864, %v3865
    %v3867 = vsel %vm87, %v3845, 0.0
    %v3868 = vsel %vm87, %v3846, 0.0
    %v3869 = vadd.f32 %v3867, %v3868
    %v3870 = vsel %vm87, %v3847, 0.0
    %v3871 = vsel %vm87, %v3848, 0.0
    %v3872 = vadd.f32 %v3870, %v3871
    %v3873 = vmul.f32 %v3851, 0.5
    %v3874 = vmul.f32 %v3854, 0.5
    %v3875 = vmul.f32 %v3857, 0.5
    %v3876 = vmul.f32 %v3860, 0.5
    %v3877 = vmul.f32 %v3863, 0.5
    %v3878 = vmul.f32 %v3866, 0.5
    %v3879 = vmul.f32 %v3869, 0.5
    %v3880 = vmul.f32 %v3872, 0.5
    %v3881 = vadd.f32 %v3873, %v1993
    %v3882 = vadd.f32 %v3874, %v1994
    %v3883 = vadd.f32 %v3875, %v1995
    %v3884 = vadd.f32 %v3876, %v1996
    %v3885 = vadd.f32 %v3877, %v1997
    %v3886 = vadd.f32 %v3878, %v1998
    %v3887 = vadd.f32 %v3879, %v1999
    %v3888 = vadd.f32 %v3880, %v2000
    %3889 = vst.msk [vmem:[%s8] sm:$0xff] %vm87, %v3881
    %3890 = vst.msk [vmem:[%s8 + $0x8] sm:$0xff] %vm87, %v3882
    %3891 = vst.msk [vmem:[%s8 + $0x10] sm:$0xff] %vm87, %v3883
    %3892 = vst.msk [vmem:[%s8 + $0x18] sm:$0xff] %vm87, %v3884
    %3893 = vst.msk [vmem:[%s8 + $0x20] sm:$0xff] %vm87, %v3885
    %3894 = vst.msk [vmem:[%s8 + $0x28] sm:$0xff] %vm87, %v3886
    %3895 = vst.msk [vmem:[%s8 + $0x30] sm:$0xff] %vm87, %v3887
    %3896 = vst.msk [vmem:[%s8 + $0x38] sm:$0xff] %vm87, %v3888
    // Predicated region
    $region38: #{tpu_custom_call.1} parent=1 // pred_check
      _
    $region39: #{tpu_custom_call.1} parent=1 // pred_check_branch
      %3898 = sbr.rel (0) target = $region41
    $region40: #{tpu_custom_call.1} parent=1 // pred_region
      _
    $region41: #{tpu_custom_call.1} parent=1 // pred_fallthru
      _
    // Predicated region
    $region42: #{tpu_custom_call.1} parent=1 // pred_check
      _
    $region43: #{tpu_custom_call.1} parent=1 // pred_check_branch
      %3900 = sbr.rel (0) target = $region45
    $region44: #{tpu_custom_call.1} parent=1 // pred_region
      _
    $region45: #{tpu_custom_call.1} parent=1 // pred_fallthru
      _
    %3901 = vsyncpa [#allocation3], 1

</llo_original>
